<compile_context>
chip_gen: v5e
topology: v5e:2x2
jax: 0.10.0
libtpu: 0.0.40
codegen_flags: <defaults>
</compile_context>

<pallas_src>
import functools
import math

import jax
import jax.numpy as jnp
import numpy as np
from jax import lax
from jax.experimental import pallas as pl
from jax.experimental.pallas import tpu as pltpu


def _round_up(x, m):
    return ((x + m - 1) // m) * m


# --------------------------------------------------------------------------
# Pallas kernels
# --------------------------------------------------------------------------
def _linear_relu_kernel(x_ref, w_ref, b_ref, o_ref):
    """o = relu(x @ w + b)  (conv-as-matmul on im2col patches, BN folded)."""
    y = jnp.dot(x_ref[...], w_ref[...], preferred_element_type=jnp.float32)
    o_ref[...] = jnp.maximum(y + b_ref[...], 0.0)


def _head_kernel(q_net, x_ref, w4_ref, b4_ref, w5_ref, b5_ref, w6_ref, b6_ref, o_ref):
    """Fused head: conv4(k10)->ReLU, Linear->ReLU, Linear (+softmax branch).

    w6/b6 are lane-padded to 128 columns; padded biases are -1e30 so the
    in-kernel softmax ignores them (exp underflows to exactly 0).
    """
    h = jnp.dot(x_ref[...], w4_ref[...], preferred_element_type=jnp.float32) + b4_ref[...]
    h = jnp.maximum(h, 0.0)
    h = jnp.dot(h, w5_ref[...], preferred_element_type=jnp.float32) + b5_ref[...]
    h = jnp.maximum(h, 0.0)
    logits = jnp.dot(h, w6_ref[...], preferred_element_type=jnp.float32) + b6_ref[...]
    if q_net:
        o_ref[...] = logits
    else:
        m = jnp.max(logits, axis=-1, keepdims=True)
        e = jnp.exp(logits - m)
        p = e / jnp.sum(e, axis=-1, keepdims=True)
        # pis + 1e-8 where pis == 0 (matches the PyTorch .where() expression)
        o_ref[...] = p + jnp.where(p == 0.0, jnp.float32(1e-8), jnp.float32(0.0))


# --------------------------------------------------------------------------
# Pallas-call wrappers
# --------------------------------------------------------------------------
def _fused_linear_relu(x, w, b, *, tile_m=512):
    """relu(x @ w + b) with a row grid; weights stay resident across steps."""
    M, K = x.shape
    N = w.shape[1]
    tm = min(tile_m, _round_up(M, 8))
    Mp = _round_up(M, tm)
    if Mp != M:
        x = jnp.pad(x, ((0, Mp - M), (0, 0)))
    grid = (Mp // tm,)

    flops = 2 * Mp * K * N
    bytes_accessed = 4 * (Mp * K + K * N + N + Mp * N)

    out = pl.pallas_call(
        _linear_relu_kernel,
        out_shape=jax.ShapeDtypeStruct((Mp, N), jnp.float32),
        grid=grid,
        in_specs=[
            pl.BlockSpec((tm, K), lambda i: (i, 0)),   # activations: tiled rows
            pl.BlockSpec((K, N), lambda i: (0, 0)),    # weights: resident
            pl.BlockSpec((1, N), lambda i: (0, 0)),    # bias: resident
        ],
        out_specs=pl.BlockSpec((tm, N), lambda i: (i, 0)),
        compiler_params=pltpu.CompilerParams(dimension_semantics=("parallel",)),
        cost_estimate=pl.CostEstimate(
            flops=flops, transcendentals=0, bytes_accessed=bytes_accessed),
    )(x, w, b)
    return out[:M]


def _extract_patches(x_nhwc, k, stride, pad):
    """im2col for a kxk / stride / pad conv. Wrapper-side layout plumbing."""
    B, H, W, C = x_nhwc.shape
    xp = jnp.pad(x_nhwc, ((0, 0), (pad, pad), (pad, pad), (0, 0)))
    OH = (H + 2 * pad - k) // stride + 1
    OW = (W + 2 * pad - k) // stride + 1
    cols = []
    for kh in range(k):
        for kw in range(k):
            sl = lax.slice(
                xp,
                (0, kh, kw, 0),
                (B, kh + stride * (OH - 1) + 1, kw + stride * (OW - 1) + 1, C),
                (1, stride, stride, 1),
            )
            cols.append(sl)                      # (B, OH, OW, C)
    patches = jnp.concatenate(cols, axis=-1)     # (B, OH, OW, k*k*C)
    return patches.reshape(B * OH * OW, k * k * C), (B, OH, OW)


def _conv_s2_block(x_nhwc, wf, bf):
    """k4/s2/p1 conv + folded BN + ReLU as an im2col matmul Pallas kernel."""
    patches, (B, OH, OW) = _extract_patches(x_nhwc, k=4, stride=2, pad=1)
    y = _fused_linear_relu(patches, wf, bf)
    return y.reshape(B, OH, OW, wf.shape[1])


def acnet_forward(state_nchw, kparams, num_actions, *, q_net=True):
    """Pallas-backed ACNet forward. state is NCHW float32, 80x80 spatial."""
    x = jnp.transpose(state_nchw, (0, 2, 3, 1)).astype(jnp.float32)  # -> NHWC
    B, H, W, _ = x.shape
    assert H == 80 and W == 80, "ACNet's k10/s1/p0 head conv requires 80x80 input"

    x = _conv_s2_block(x, kparams["w1f"], kparams["b1f"])   # (B, 40, 40, 32)
    x = _conv_s2_block(x, kparams["w2f"], kparams["b2f"])   # (B, 20, 20, 64)
    x = _conv_s2_block(x, kparams["w3f"], kparams["b3f"])   # (B, 10, 10, 128)

    x4 = x.reshape(B, -1)                                   # (B, 10*10*128)

    w4f, b4f = kparams["w4f"], kparams["b4f"]
    w5, b5 = kparams["w5"], kparams["b5"]
    w6p, b6p = kparams["w6p"], kparams["b6p"]
    K4, Hd = w4f.shape
    Ap = w6p.shape[1]

    flops = 2 * B * (K4 * Hd + Hd * Hd + Hd * Ap)
    bytes_accessed = 4 * (B * K4 + K4 * Hd + Hd + Hd * Hd + Hd + Hd * Ap + Ap + B * Ap)
    vmem = pl.BlockSpec(memory_space=pltpu.MemorySpace.VMEM)

    out = pl.pallas_call(
        functools.partial(_head_kernel, q_net),
        out_shape=jax.ShapeDtypeStruct((B, Ap), jnp.float32),
        in_specs=[vmem] * 7,
        out_specs=vmem,
        compiler_params=pltpu.CompilerParams(vmem_limit_bytes=32 * 1024 * 1024),
        cost_estimate=pl.CostEstimate(
            flops=flops,
            transcendentals=(B * Ap if not q_net else 0),
            bytes_accessed=bytes_accessed),
    )(x4, w4f, b4f, w5, b5, w6p, b6p)

    return out[:, :num_actions]


# --------------------------------------------------------------------------
# Parameters (PyTorch-like init), BN folding, and a pure-JAX reference
# --------------------------------------------------------------------------
def init_params(key, channels, num_actions, hidden_size, init_w=0.003):
    ks = iter(jax.random.split(key, 24))

    def conv_init(kw, kb, k, cin, cout):
        fan_in = cin * k * k
        bound = 1.0 / math.sqrt(fan_in)
        w = jax.random.uniform(kw, (k, k, cin, cout), jnp.float32, -bound, bound)  # HWIO
        b = jax.random.uniform(kb, (cout,), jnp.float32, -bound, bound)
        return w, b

    def bn_init(k, c):
        k1, k2, k3, k4 = jax.random.split(k, 4)
        gamma = jax.random.uniform(k1, (c,), jnp.float32, 0.5, 1.5)
        beta = 0.1 * jax.random.normal(k2, (c,), jnp.float32)
        mean = 0.1 * jax.random.normal(k3, (c,), jnp.float32)
        var = jax.random.uniform(k4, (c,), jnp.float32, 0.5, 1.5)
        return (gamma, beta, mean, var)

    def lin_init(kw, kb, fin, fout, bound=None):
        bound = (1.0 / math.sqrt(fin)) if bound is None else bound
        w = jax.random.uniform(kw, (fin, fout), jnp.float32, -bound, bound)
        b = jax.random.uniform(kb, (fout,), jnp.float32, -bound, bound)
        return w, b

    w1, b1 = conv_init(next(ks), next(ks), 4, channels, 32)
    bn1 = bn_init(next(ks), 32)
    w2, b2 = conv_init(next(ks), next(ks), 4, 32, 64)
    bn2 = bn_init(next(ks), 64)
    w3, b3 = conv_init(next(ks), next(ks), 4, 64, 128)
    bn3 = bn_init(next(ks), 128)
    w4, b4 = conv_init(next(ks), next(ks), 10, 128, hidden_size)
    w5, b5 = lin_init(next(ks), next(ks), hidden_size, hidden_size)
    w6, b6 = lin_init(next(ks), next(ks), hidden_size, num_actions, bound=init_w)
    return dict(w1=w1, b1=b1, bn1=bn1, w2=w2, b2=b2, bn2=bn2,
                w3=w3, b3=b3, bn3=bn3, w4=w4, b4=b4, w5=w5, b5=b5, w6=w6, b6=b6)


def fold_params(p, *, lane_pad=128, eps=1e-5):
    """Fold eval-mode BN into conv weights; flatten to (K, N) matmul layout;
    lane-pad the head so the final store is a full-128-lane write."""
    def fold_conv_bn(w, b, bn):
        g, beta, mean, var = bn
        scale = g / jnp.sqrt(var + eps)
        kh, kw, ci, co = w.shape
        wf = (w * scale).reshape(kh * kw * ci, co)
        bf = ((b - mean) * scale + beta).reshape(1, co)
        return wf, bf

    w1f, b1f = fold_conv_bn(p["w1"], p["b1"], p["bn1"])
    w2f, b2f = fold_conv_bn(p["w2"], p["b2"], p["bn2"])
    w3f, b3f = fold_conv_bn(p["w3"], p["b3"], p["bn3"])

    k4, _, ci4, co4 = p["w4"].shape
    w4f = p["w4"].reshape(k4 * k4 * ci4, co4)
    b4f = p["b4"].reshape(1, co4)
    w5 = p["w5"]
    b5 = p["b5"].reshape(1, -1)

    hid, a = p["w6"].shape
    ap = _round_up(max(a, lane_pad), lane_pad)
    w6p = jnp.zeros((hid, ap), jnp.float32).at[:, :a].set(p["w6"])
    b6p = jnp.full((1, ap), -1e30, jnp.float32).at[0, :a].set(p["b6"])

    return dict(w1f=w1f, b1f=b1f, w2f=w2f, b2f=b2f, w3f=w3f, b3f=b3f,
                w4f=w4f, b4f=b4f, w5=w5, b5=b5, w6p=w6p, b6p=b6p)


def acnet_reference(state_nchw, p, *, q_net=True, eps=1e-5):
    """Pure-JAX reference (eval-mode BN) for correctness checking."""
    x = jnp.transpose(state_nchw, (0, 2, 3, 1)).astype(jnp.float32)
    hi = lax.Precision.HIGHEST

    def conv(x, w, b, stride, pad):
        y = lax.conv_general_dilated(
            x, w, (stride, stride), [(pad, pad), (pad, pad)],
            dimension_numbers=("NHWC", "HWIO", "NHWC"), precision=hi)
        return y + b

    def bn(x, stats):
        g, beta, mean, var = stats
        return (x - mean) / jnp.sqrt(var + eps) * g + beta

    x = jax.nn.relu(bn(conv(x, p["w1"], p["b1"], 2, 1), p["bn1"]))
    x = jax.nn.relu(bn(conv(x, p["w2"], p["b2"], 2, 1), p["bn2"]))
    x = jax.nn.relu(bn(conv(x, p["w3"], p["b3"], 2, 1), p["bn3"]))
    x = jax.nn.relu(conv(x, p["w4"], p["b4"], 1, 0))
    x = x.reshape(x.shape[0], -1)
    x = jax.nn.relu(jnp.dot(x, p["w5"], precision=hi) + p["b5"])
    logits = jnp.dot(x, p["w6"], precision=hi) + p["b6"]
    if q_net:
        return logits
    pis = jax.nn.softmax(logits, axis=1)
    return pis + jnp.where(pis == 0.0, 1e-8, 0.0)


# --------------------------------------------------------------------------
if __name__ == "__main__":
    # Spatial size is fixed at 80x80 by the architecture (3x stride-2 convs
    # followed by the k10/s1/p0 conv). Other dims kept small.
    B, C, H, W = 2, 4, 80, 80
    NUM_ACTIONS, HIDDEN = 6, 64

    key = jax.random.PRNGKey(0)
    k_state, k_params = jax.random.split(key)
    state = jax.random.normal(k_state, (B, C, H, W), jnp.float32)

    params = init_params(k_params, C, NUM_ACTIONS, HIDDEN)
    kparams = fold_params(params)

    fwd_q = jax.jit(lambda s, p: acnet_forward(s, p, NUM_ACTIONS, q_net=True))
    fwd_pi = jax.jit(lambda s, p: acnet_forward(s, p, NUM_ACTIONS, q_net=False))

    q_out = fwd_q(state, kparams)
    pi_out = fwd_pi(state, kparams)
    jax.block_until_ready((q_out, pi_out))

    q_ref = acnet_reference(state, params, q_net=True)
    pi_ref = acnet_reference(state, params, q_net=False)

    assert q_out.shape == (B, NUM_ACTIONS) and pi_out.shape == (B, NUM_ACTIONS)
    np.testing.assert_allclose(np.asarray(q_out), np.asarray(q_ref), rtol=1e-3, atol=1e-4)
    np.testing.assert_allclose(np.asarray(pi_out), np.asarray(pi_ref), rtol=1e-3, atol=1e-4)

    print("KERNEL_OK")
</pallas_src>

<mosaic_0001>
module attributes {stable_mosaic.version = 11 : i64} {
  func.func @_linear_relu_kernel(%arg0: i32, %arg1: memref<512x64xf32, #tpu.memory_space<vmem>>, %arg2: memref<64x32xf32, #tpu.memory_space<vmem>>, %arg3: memref<1x32xf32, #tpu.memory_space<vmem>>, %arg4: memref<512x32xf32, #tpu.memory_space<vmem>>) attributes {dimension_semantics = [#tpu.dimension_semantics<parallel>], iteration_bounds = array<i64: 7>, scalar_prefetch = 0 : i64, scratch_operands = 0 : i64, tpu.core_type = #tpu.core_type<tc>, window_params = [{transform_indices = @transform_0, window_bounds = array<i64: 512, 64>}, {pipeline_mode = #tpu.pipeline_mode<synchronous>, transform_indices = @transform_1, window_bounds = array<i64: 64, 32>}, {pipeline_mode = #tpu.pipeline_mode<synchronous>, transform_indices = @transform_2, window_bounds = array<i64: 1, 32>}, {transform_indices = @transform_3, window_bounds = array<i64: 512, 32>}]} {
    %c0 = arith.constant 0 : index
    %c0_0 = arith.constant 0 : index
    %0 = vector.load %arg1[%c0, %c0_0] : memref<512x64xf32, #tpu.memory_space<vmem>>, vector<512x64xf32>
    %c0_1 = arith.constant 0 : index
    %c0_2 = arith.constant 0 : index
    %1 = vector.load %arg2[%c0_1, %c0_2] : memref<64x32xf32, #tpu.memory_space<vmem>>, vector<64x32xf32>
    %cst = arith.constant dense<0.000000e+00> : vector<512x32xf32>
    %2 = tpu.matmul %0, %1, %cst {dimension_numbers = #tpu.dot_dimension_numbers<[1], [0], [0], [1], [0, 0, 1, 1], [], []>} : vector<512x64xf32>, vector<64x32xf32>, vector<512x32xf32> -> vector<512x32xf32>
    %c0_3 = arith.constant 0 : index
    %c0_4 = arith.constant 0 : index
    %3 = vector.load %arg3[%c0_3, %c0_4] : memref<1x32xf32, #tpu.memory_space<vmem>>, vector<1x32xf32>
    %4 = vector.broadcast %3 : vector<1x32xf32> to vector<512x32xf32>
    %5 = arith.addf %2, %4 : vector<512x32xf32>
    %cst_5 = arith.constant 0.000000e+00 : f32
    %6 = vector.broadcast %cst_5 : f32 to vector<512x32xf32>
    %7 = arith.maximumf %5, %6 : vector<512x32xf32>
    %c0_6 = arith.constant 0 : index
    %c0_7 = arith.constant 0 : index
    %8 = vector.load %arg4[%c0_6, %c0_7] : memref<512x32xf32, #tpu.memory_space<vmem>>, vector<512x32xf32>
    tpu.vector_store %arg4[%c0_6, %c0_7], %7 {strides = array<i32>} : memref<512x32xf32, #tpu.memory_space<vmem>>, vector<512x32xf32>,
    return
  }
  func.func @transform_0(%arg0: i32) -> (i32, i32) {
    %c0_i32 = arith.constant 0 : i32
    %c0_i32_0 = arith.constant 0 : i32
    return %arg0, %c0_i32 : i32, i32
  }
  func.func @transform_1(%arg0: i32) -> (i32, i32) {
    %c0_i32 = arith.constant 0 : i32
    %c0_i32_0 = arith.constant 0 : i32
    %c0_i32_1 = arith.constant 0 : i32
    return %c0_i32, %c0_i32_0 : i32, i32
  }
  func.func @transform_2(%arg0: i32) -> (i32, i32) {
    %c0_i32 = arith.constant 0 : i32
    %c0_i32_0 = arith.constant 0 : i32
    %c0_i32_1 = arith.constant 0 : i32
    return %c0_i32, %c0_i32_0 : i32, i32
  }
  func.func @transform_3(%arg0: i32) -> (i32, i32) {
    %c0_i32 = arith.constant 0 : i32
    %c0_i32_0 = arith.constant 0 : i32
    return %arg0, %c0_i32 : i32, i32
  }
}

module attributes {stable_mosaic.version = 11 : i64} {
  func.func @_linear_relu_kernel(%arg0: i32, %arg1: memref<512x512xf32, #tpu.memory_space<vmem>>, %arg2: memref<512x64xf32, #tpu.memory_space<vmem>>, %arg3: memref<1x64xf32, #tpu.memory_space<vmem>>, %arg4: memref<512x64xf32, #tpu.memory_space<vmem>>) attributes {dimension_semantics = [#tpu.dimension_semantics<parallel>], iteration_bounds = array<i64: 2>, scalar_prefetch = 0 : i64, scratch_operands = 0 : i64, tpu.core_type = #tpu.core_type<tc>, window_params = [{transform_indices = @transform_0, window_bounds = array<i64: 512, 512>}, {pipeline_mode = #tpu.pipeline_mode<synchronous>, transform_indices = @transform_1, window_bounds = array<i64: 512, 64>}, {pipeline_mode = #tpu.pipeline_mode<synchronous>, transform_indices = @transform_2, window_bounds = array<i64: 1, 64>}, {transform_indices = @transform_3, window_bounds = array<i64: 512, 64>}]} {
    %c0 = arith.constant 0 : index
    %c0_0 = arith.constant 0 : index
    %0 = vector.load %arg1[%c0, %c0_0] : memref<512x512xf32, #tpu.memory_space<vmem>>, vector<512x512xf32>
    %c0_1 = arith.constant 0 : index
    %c0_2 = arith.constant 0 : index
    %1 = vector.load %arg2[%c0_1, %c0_2] : memref<512x64xf32, #tpu.memory_space<vmem>>, vector<512x64xf32>
    %cst = arith.constant dense<0.000000e+00> : vector<512x64xf32>
    %2 = tpu.matmul %0, %1, %cst {dimension_numbers = #tpu.dot_dimension_numbers<[1], [0], [0], [1], [0, 0, 1, 1], [], []>} : vector<512x512xf32>, vector<512x64xf32>, vector<512x64xf32> -> vector<512x64xf32>
    %c0_3 = arith.constant 0 : index
    %c0_4 = arith.constant 0 : index
    %3 = vector.load %arg3[%c0_3, %c0_4] : memref<1x64xf32, #tpu.memory_space<vmem>>, vector<1x64xf32>
    %4 = vector.broadcast %3 : vector<1x64xf32> to vector<512x64xf32>
    %5 = arith.addf %2, %4 : vector<512x64xf32>
    %cst_5 = arith.constant 0.000000e+00 : f32
    %6 = vector.broadcast %cst_5 : f32 to vector<512x64xf32>
    %7 = arith.maximumf %5, %6 : vector<512x64xf32>
    %c0_6 = arith.constant 0 : index
    %c0_7 = arith.constant 0 : index
    %8 = vector.load %arg4[%c0_6, %c0_7] : memref<512x64xf32, #tpu.memory_space<vmem>>, vector<512x64xf32>
    tpu.vector_store %arg4[%c0_6, %c0_7], %7 {strides = array<i32>} : memref<512x64xf32, #tpu.memory_space<vmem>>, vector<512x64xf32>,
    return
  }
  func.func @transform_0(%arg0: i32) -> (i32, i32) {
    %c0_i32 = arith.constant 0 : i32
    %c0_i32_0 = arith.constant 0 : i32
    return %arg0, %c0_i32 : i32, i32
  }
  func.func @transform_1(%arg0: i32) -> (i32, i32) {
    %c0_i32 = arith.constant 0 : i32
    %c0_i32_0 = arith.constant 0 : i32
    %c0_i32_1 = arith.constant 0 : i32
    return %c0_i32, %c0_i32_0 : i32, i32
  }
  func.func @transform_2(%arg0: i32) -> (i32, i32) {
    %c0_i32 = arith.constant 0 : i32
    %c0_i32_0 = arith.constant 0 : i32
    %c0_i32_1 = arith.constant 0 : i32
    return %c0_i32, %c0_i32_0 : i32, i32
  }
  func.func @transform_3(%arg0: i32) -> (i32, i32) {
    %c0_i32 = arith.constant 0 : i32
    %c0_i32_0 = arith.constant 0 : i32
    return %arg0, %c0_i32 : i32, i32
  }
}

module attributes {stable_mosaic.version = 11 : i64} {
  func.func @_linear_relu_kernel(%arg0: i32, %arg1: memref<200x1024xf32, #tpu.memory_space<vmem>>, %arg2: memref<1024x128xf32, #tpu.memory_space<vmem>>, %arg3: memref<1x128xf32, #tpu.memory_space<vmem>>, %arg4: memref<200x128xf32, #tpu.memory_space<vmem>>) attributes {dimension_semantics = [#tpu.dimension_semantics<parallel>], iteration_bounds = array<i64: 1>, scalar_prefetch = 0 : i64, scratch_operands = 0 : i64, tpu.core_type = #tpu.core_type<tc>, window_params = [{transform_indices = @transform_0, window_bounds = array<i64: 200, 1024>}, {pipeline_mode = #tpu.pipeline_mode<synchronous>, transform_indices = @transform_1, window_bounds = array<i64: 1024, 128>}, {pipeline_mode = #tpu.pipeline_mode<synchronous>, transform_indices = @transform_2, window_bounds = array<i64: 1, 128>}, {transform_indices = @transform_3, window_bounds = array<i64: 200, 128>}]} {
    %c0 = arith.constant 0 : index
    %c0_0 = arith.constant 0 : index
    %0 = vector.load %arg1[%c0, %c0_0] : memref<200x1024xf32, #tpu.memory_space<vmem>>, vector<200x1024xf32>
    %c0_1 = arith.constant 0 : index
    %c0_2 = arith.constant 0 : index
    %1 = vector.load %arg2[%c0_1, %c0_2] : memref<1024x128xf32, #tpu.memory_space<vmem>>, vector<1024x128xf32>
    %cst = arith.constant dense<0.000000e+00> : vector<200x128xf32>
    %2 = tpu.matmul %0, %1, %cst {dimension_numbers = #tpu.dot_dimension_numbers<[1], [0], [0], [1], [0, 0, 1, 1], [], []>} : vector<200x1024xf32>, vector<1024x128xf32>, vector<200x128xf32> -> vector<200x128xf32>
    %c0_3 = arith.constant 0 : index
    %c0_4 = arith.constant 0 : index
    %3 = vector.load %arg3[%c0_3, %c0_4] : memref<1x128xf32, #tpu.memory_space<vmem>>, vector<1x128xf32>
    %4 = vector.broadcast %3 : vector<1x128xf32> to vector<200x128xf32>
    %5 = arith.addf %2, %4 : vector<200x128xf32>
    %cst_5 = arith.constant 0.000000e+00 : f32
    %6 = vector.broadcast %cst_5 : f32 to vector<200x128xf32>
    %7 = arith.maximumf %5, %6 : vector<200x128xf32>
    %c0_6 = arith.constant 0 : index
    %c0_7 = arith.constant 0 : index
    %8 = vector.load %arg4[%c0_6, %c0_7] : memref<200x128xf32, #tpu.memory_space<vmem>>, vector<200x128xf32>
    tpu.vector_store %arg4[%c0_6, %c0_7], %7 {strides = array<i32>} : memref<200x128xf32, #tpu.memory_space<vmem>>, vector<200x128xf32>,
    return
  }
  func.func @transform_0(%arg0: i32) -> (i32, i32) {
    %c0_i32 = arith.constant 0 : i32
    %c0_i32_0 = arith.constant 0 : i32
    return %arg0, %c0_i32 : i32, i32
  }
  func.func @transform_1(%arg0: i32) -> (i32, i32) {
    %c0_i32 = arith.constant 0 : i32
    %c0_i32_0 = arith.constant 0 : i32
    %c0_i32_1 = arith.constant 0 : i32
    return %c0_i32, %c0_i32_0 : i32, i32
  }
  func.func @transform_2(%arg0: i32) -> (i32, i32) {
    %c0_i32 = arith.constant 0 : i32
    %c0_i32_0 = arith.constant 0 : i32
    %c0_i32_1 = arith.constant 0 : i32
    return %c0_i32, %c0_i32_0 : i32, i32
  }
  func.func @transform_3(%arg0: i32) -> (i32, i32) {
    %c0_i32 = arith.constant 0 : i32
    %c0_i32_0 = arith.constant 0 : i32
    return %arg0, %c0_i32 : i32, i32
  }
}

module attributes {stable_mosaic.version = 11 : i64} {
  func.func @_head_kernel(%arg0: memref<2x12800xf32, #tpu.memory_space<vmem>>, %arg1: memref<12800x64xf32, #tpu.memory_space<vmem>>, %arg2: memref<1x64xf32, #tpu.memory_space<vmem>>, %arg3: memref<64x64xf32, #tpu.memory_space<vmem>>, %arg4: memref<1x64xf32, #tpu.memory_space<vmem>>, %arg5: memref<64x128xf32, #tpu.memory_space<vmem>>, %arg6: memref<1x128xf32, #tpu.memory_space<vmem>>, %arg7: memref<2x128xf32, #tpu.memory_space<vmem>>) attributes {dimension_semantics = [], scalar_prefetch = 0 : i64, scratch_operands = 0 : i64, tpu.core_type = #tpu.core_type<tc>} {
    %c0 = arith.constant 0 : index
    %c0_0 = arith.constant 0 : index
    %0 = vector.load %arg0[%c0, %c0_0] : memref<2x12800xf32, #tpu.memory_space<vmem>>, vector<2x12800xf32>
    %c0_1 = arith.constant 0 : index
    %c0_2 = arith.constant 0 : index
    %1 = vector.load %arg1[%c0_1, %c0_2] : memref<12800x64xf32, #tpu.memory_space<vmem>>, vector<12800x64xf32>
    %cst = arith.constant dense<0.000000e+00> : vector<2x64xf32>
    %2 = tpu.matmul %0, %1, %cst {dimension_numbers = #tpu.dot_dimension_numbers<[1], [0], [0], [1], [0, 0, 1, 1], [], []>} : vector<2x12800xf32>, vector<12800x64xf32>, vector<2x64xf32> -> vector<2x64xf32>
    %c0_3 = arith.constant 0 : index
    %c0_4 = arith.constant 0 : index
    %3 = vector.load %arg2[%c0_3, %c0_4] : memref<1x64xf32, #tpu.memory_space<vmem>>, vector<1x64xf32>
    %4 = vector.broadcast %3 : vector<1x64xf32> to vector<2x64xf32>
    %5 = arith.addf %2, %4 : vector<2x64xf32>
    %cst_5 = arith.constant 0.000000e+00 : f32
    %6 = vector.broadcast %cst_5 : f32 to vector<2x64xf32>
    %7 = arith.maximumf %5, %6 : vector<2x64xf32>
    %c0_6 = arith.constant 0 : index
    %c0_7 = arith.constant 0 : index
    %8 = vector.load %arg3[%c0_6, %c0_7] : memref<64x64xf32, #tpu.memory_space<vmem>>, vector<64x64xf32>
    %cst_8 = arith.constant dense<0.000000e+00> : vector<2x64xf32>
    %9 = tpu.matmul %7, %8, %cst_8 {dimension_numbers = #tpu.dot_dimension_numbers<[1], [0], [0], [1], [0, 0, 1, 1], [], []>} : vector<2x64xf32>, vector<64x64xf32>, vector<2x64xf32> -> vector<2x64xf32>
    %c0_9 = arith.constant 0 : index
    %c0_10 = arith.constant 0 : index
    %10 = vector.load %arg4[%c0_9, %c0_10] : memref<1x64xf32, #tpu.memory_space<vmem>>, vector<1x64xf32>
    %11 = vector.broadcast %10 : vector<1x64xf32> to vector<2x64xf32>
    %12 = arith.addf %9, %11 : vector<2x64xf32>
    %cst_11 = arith.constant 0.000000e+00 : f32
    %13 = vector.broadcast %cst_11 : f32 to vector<2x64xf32>
    %14 = arith.maximumf %12, %13 : vector<2x64xf32>
    %c0_12 = arith.constant 0 : index
    %c0_13 = arith.constant 0 : index
    %15 = vector.load %arg5[%c0_12, %c0_13] : memref<64x128xf32, #tpu.memory_space<vmem>>, vector<64x128xf32>
    %cst_14 = arith.constant dense<0.000000e+00> : vector<2x128xf32>
    %16 = tpu.matmul %14, %15, %cst_14 {dimension_numbers = #tpu.dot_dimension_numbers<[1], [0], [0], [1], [0, 0, 1, 1], [], []>} : vector<2x64xf32>, vector<64x128xf32>, vector<2x128xf32> -> vector<2x128xf32>
    %c0_15 = arith.constant 0 : index
    %c0_16 = arith.constant 0 : index
    %17 = vector.load %arg6[%c0_15, %c0_16] : memref<1x128xf32, #tpu.memory_space<vmem>>, vector<1x128xf32>
    %18 = vector.broadcast %17 : vector<1x128xf32> to vector<2x128xf32>
    %19 = arith.addf %16, %18 : vector<2x128xf32>
    %c0_17 = arith.constant 0 : index
    %c0_18 = arith.constant 0 : index
    %20 = vector.load %arg7[%c0_17, %c0_18] : memref<2x128xf32, #tpu.memory_space<vmem>>, vector<2x128xf32>
    tpu.vector_store %arg7[%c0_17, %c0_18], %19 {strides = array<i32>} : memref<2x128xf32, #tpu.memory_space<vmem>>, vector<2x128xf32>,
    return
  }
}

</mosaic_0001>

<llo_original>
// kernel: _lambda_.4
$region0: #{_lambda_.4}
  #allocation0 [shape = 'u32[]', space=smem, size = 0x4, offset = 0x4, fixed_abs, tag = 'smem constant byte address 0x4 - core index']
  #allocation1 [shape = 'u32[72,128]{1,0:T(1,128)}', space=vmem, size = 0x9000, scoped, tag = 'internal scratch']
  %s0 = inlined_call_operand.vmem [shape: f32[3584,64], index: 0, kind: input, shape index: {}]
  %s1 = inlined_call_operand.vmem [shape: f32[64,32], index: 1, kind: input, shape index: {}]
  %s2 = inlined_call_operand.vmem [shape: f32[1,32], index: 2, kind: input, shape index: {}]
  %s3 = inlined_call_operand.vmem [shape: f32[3584,32], index: 3, kind: output, shape index: {}]
  %s4 = sld [smem:[#allocation0]]
  $region45: #{_lambda_.4} parent=0
    _
  %s6 = ssub.s32 1, %s4
  %s7 = scalar_select 0, %s6, %s4
  loop: start=0, step=1, limit=9
  $region2: #{_lambda_.4} parent=0 // loop_pre_header
    _
  $region3: #{_lambda_.4} parent=0 // loop_header
    %s9 = sphi 0, %s13
    %p10 = scmp.ge.s32.totalorder %s9, 9
    %s19 = sphi 0, %s21
    %s22 = sphi 0, %s19
    %s23 = sphi 0, %s22
    %s39 = sphi 0, %s23
    %s43 = sphi 0, %s43
    %s45 = sphi 0, %s43
    %s46 = sphi 0, %s45
    %s60 = sphi 0, %s46
    %s64 = sphi 0, %s64
    %s66 = sphi 0, %s64
    %s67 = sphi 0, %s66
    %s81 = sphi 0, %s67
    %s87 = sphi 0, %s89
    %s90 = sphi 0, %s87
    %s91 = sphi 0, %s90
    %s107 = sphi 0, %s91
  $region4: #{_lambda_.4} parent=0 // loop_header_branch
    %12 = sbr.rel (%p10) target = $region8
  $region5: #{_lambda_.4} parent=0 // loop_body
    %s14 = ssub.s32 %s9, 1
    %s15 = ssub.s32 %s9, 2
    %s16 = sadd.s32 %s9, 1
    %s17 = ssub.s32 %s9, %s16
    %p18 = scmp.eq.s32.totalorder %s17, 0
    %s20 = sadd.s32 %s19, 1
    %s21 = scalar_select %p18, %s19, %s20
    %p24 = pneg %p18
    %p25 = scmp.eq.s32.totalorder %s9, 6
    %p26 = por %p24, %p25
    %p27 = scmp.ne.s32.totalorder %s19, %s22
    %p28 = scmp.eq.s32.totalorder %s9, 0
    %p29 = por %p27, %p28
    %p30 = scmp.ne.s32.totalorder %s19, %s22
    %p31 = scmp.eq.s32.totalorder %s14, 6
    %p32 = por %p30, %p31
    %p33 = scmp.ne.s32.totalorder %s22, %s23
    %p34 = scmp.eq.s32.totalorder %s14, 0
    %p35 = por %p33, %p34
    %p36 = scmp.ne.s32.totalorder %s22, %s23
    %p37 = scmp.eq.s32.totalorder %s15, 6
    %p38 = por %p36, %p37
    %p40 = scmp.ne.s32.totalorder %s23, %s39
    %p41 = scmp.eq.s32.totalorder %s15, 0
    %p42 = por %p40, %p41
    %s44 = sadd.s32 %s43, 1
    %p47 = scmp.eq.s32.totalorder %s9, 6
    %p48 = scmp.ne.s32.totalorder %s43, %s45
    %p49 = scmp.eq.s32.totalorder %s9, 0
    %p50 = por %p48, %p49
    %p51 = scmp.ne.s32.totalorder %s43, %s45
    %p52 = scmp.eq.s32.totalorder %s14, 6
    %p53 = por %p51, %p52
    %p54 = scmp.ne.s32.totalorder %s45, %s46
    %p55 = scmp.eq.s32.totalorder %s14, 0
    %p56 = por %p54, %p55
    %p57 = scmp.ne.s32.totalorder %s45, %s46
    %p58 = scmp.eq.s32.totalorder %s15, 6
    %p59 = por %p57, %p58
    %p61 = scmp.ne.s32.totalorder %s46, %s60
    %p62 = scmp.eq.s32.totalorder %s15, 0
    %p63 = por %p61, %p62
    %s65 = sadd.s32 %s64, 1
    %p68 = scmp.eq.s32.totalorder %s9, 6
    %p69 = scmp.ne.s32.totalorder %s64, %s66
    %p70 = scmp.eq.s32.totalorder %s9, 0
    %p71 = por %p69, %p70
    %p72 = scmp.ne.s32.totalorder %s64, %s66
    %p73 = scmp.eq.s32.totalorder %s14, 6
    %p74 = por %p72, %p73
    %p75 = scmp.ne.s32.totalorder %s66, %s67
    %p76 = scmp.eq.s32.totalorder %s14, 0
    %p77 = por %p75, %p76
    %p78 = scmp.ne.s32.totalorder %s66, %s67
    %p79 = scmp.eq.s32.totalorder %s15, 6
    %p80 = por %p78, %p79
    %p82 = scmp.ne.s32.totalorder %s67, %s81
    %p83 = scmp.eq.s32.totalorder %s15, 0
    %p84 = por %p82, %p83
    %s85 = ssub.s32 %s9, %s16
    %p86 = scmp.eq.s32.totalorder %s85, 0
    %s88 = sadd.s32 %s87, 1
    %s89 = scalar_select %p86, %s87, %s88
    %p92 = pneg %p86
    %p93 = scmp.eq.s32.totalorder %s9, 6
    %p94 = por %p92, %p93
    %p95 = scmp.ne.s32.totalorder %s87, %s90
    %p96 = scmp.eq.s32.totalorder %s9, 0
    %p97 = por %p95, %p96
    %p98 = scmp.ne.s32.totalorder %s87, %s90
    %p99 = scmp.eq.s32.totalorder %s14, 6
    %p100 = por %p98, %p99
    %p101 = scmp.ne.s32.totalorder %s90, %s91
    %p102 = scmp.eq.s32.totalorder %s14, 0
    %p103 = por %p101, %p102
    %p104 = scmp.ne.s32.totalorder %s90, %s91
    %p105 = scmp.eq.s32.totalorder %s15, 6
    %p106 = por %p104, %p105
    %p108 = scmp.ne.s32.totalorder %s91, %s107
    %p109 = scmp.eq.s32.totalorder %s15, 0
    %p110 = por %p108, %p109
    %p111 = scmp.le.s32.totalorder 1, %s9
    %p112 = scmp.lt.s32.totalorder %s9, 8
    %p113 = pnand %p111, %p112
    %p114 = pneg %p113
    // Predicated region
    $region9: #{_lambda_.4} parent=5 // pred_check
      _
    $region10: #{_lambda_.4} parent=5 // pred_check_branch
      %116 = sbr.rel (%p113) target = $region12
    $region11: #{_lambda_.4} parent=5 // pred_region
      %s117 = ssub.s32 %s9, 1
      // Predicated region
      $region13: #{_lambda_.4} parent=11 // pred_check
        %p118 = pneg %p56
      $region14: #{_lambda_.4} parent=11 // pred_check_branch
        %120 = sbr.rel (%p118) target = $region16
      $region15: #{_lambda_.4} parent=11 // pred_region
        _
      $region16: #{_lambda_.4} parent=11 // pred_fallthru
        _
      // Predicated region
      $region17: #{_lambda_.4} parent=11 // pred_check
        %p121 = pneg %p77
      $region18: #{_lambda_.4} parent=11 // pred_check_branch
        %123 = sbr.rel (%p121) target = $region20
      $region19: #{_lambda_.4} parent=11 // pred_region
        _
      $region20: #{_lambda_.4} parent=11 // pred_fallthru
        _
    $region12: #{_lambda_.4} parent=5 // pred_fallthru
      _
    %p124 = scmp.lt.s32.totalorder %s9, 7
    // Predicated region
    $region21: #{_lambda_.4} parent=5 // pred_check
      %p125 = pneg %p124
    $region22: #{_lambda_.4} parent=5 // pred_check_branch
      %127 = sbr.rel (%p125) target = $region24
    $region23: #{_lambda_.4} parent=5 // pred_region
      // Predicated region
      $region25: #{_lambda_.4} parent=23 // pred_check
        %p128 = pneg %p29
      $region26: #{_lambda_.4} parent=23 // pred_check_branch
        %130 = sbr.rel (%p128) target = $region28
      $region27: #{_lambda_.4} parent=23 // pred_region
        %s131 = smul.u32 64, %s9
        %p132 = scmp.lt.s32.totalorder %s131, 447
        %s133 = scalar_select %p132, %s131, 447
        %s134 = smul.addr %s133, 8
        %s135 = scalar_lea.vmem %s0, %s134
        %s136 = smul.u32 64, %s9
      $region28: #{_lambda_.4} parent=23 // pred_fallthru
        _
    $region24: #{_lambda_.4} parent=5 // pred_fallthru
      _
    %p137 = scmp.le.s32.totalorder 1, %s9
    %p138 = scmp.lt.s32.totalorder %s9, 8
    %p139 = pnand %p137, %p138
    %p140 = pneg %p139
    // Predicated region
    $region29: #{_lambda_.4} parent=5 // pred_check
      _
    $region30: #{_lambda_.4} parent=5 // pred_check_branch
      %142 = sbr.rel (%p139) target = $region32
    $region31: #{_lambda_.4} parent=5 // pred_region
      %s143 = ssub.s32 %s9, 1
      %s144 = smul.u32 64, %s14
      %p145 = scmp.lt.s32.totalorder %s144, 447
      %s146 = scalar_select %p145, %s144, 447
      %s147 = smul.addr %s146, 8
      %s148 = scalar_lea.vmem %s0, %s147
      %p149 = pneg %p35
      %p150 = pneg %p32
      %p151 = pneg %p56
      %p152 = pneg %p53
      %p153 = pneg %p77
      %p154 = pneg %p74
      %p155 = pneg %p103
      %p156 = pneg %p100
      %s157 = smul.u32 64, %s14
      %p158 = scmp.lt.s32.totalorder %s157, 447
      %s159 = scalar_select %p158, %s157, 447
      %s160 = smul.addr %s159, 8
      %s161 = scalar_lea.vmem %s3, %s160
      %s162 = smul.u32 64, %s14
      %p163 = scmp.lt.s32.totalorder %s162, 447
      %s164 = scalar_select %p163, %s162, 447
      %s165 = smul.addr %s164, 8
      %s166 = scalar_lea.vmem %s0, %s165
      %s167 = smul.u32 64, %s14
      %s168 = smul.u32 64, %s14
      %p169 = scmp.lt.s32.totalorder %s168, 447
      %s170 = scalar_select %p169, %s168, 447
      %s171 = smul.addr %s170, 8
      %s172 = scalar_lea.vmem %s3, %s171
      %s173 = smul.u32 64, %s14
      %v174 = vld [vmem:[%s166] sm:$0xff]
      %v175 = vld [vmem:[%s166 + $0x8] sm:$0xff]
      %v176 = vld [vmem:[%s166 + $0x10] sm:$0xff]
      %v177 = vld [vmem:[%s166 + $0x18] sm:$0xff]
      %v178 = vld [vmem:[%s166 + $0x20] sm:$0xff]
      %v179 = vld [vmem:[%s166 + $0x28] sm:$0xff]
      %v180 = vld [vmem:[%s166 + $0x30] sm:$0xff]
      %v181 = vld [vmem:[%s166 + $0x38] sm:$0xff]
      %v182 = vld [vmem:[%s166 + $0x40] sm:$0xff]
      %v183 = vld [vmem:[%s166 + $0x48] sm:$0xff]
      %v184 = vld [vmem:[%s166 + $0x50] sm:$0xff]
      %v185 = vld [vmem:[%s166 + $0x58] sm:$0xff]
      %v186 = vld [vmem:[%s166 + $0x60] sm:$0xff]
      %v187 = vld [vmem:[%s166 + $0x68] sm:$0xff]
      %v188 = vld [vmem:[%s166 + $0x70] sm:$0xff]
      %v189 = vld [vmem:[%s166 + $0x78] sm:$0xff]
      %v190 = vld [vmem:[%s166 + $0x80] sm:$0xff]
      %v191 = vld [vmem:[%s166 + $0x88] sm:$0xff]
      %v192 = vld [vmem:[%s166 + $0x90] sm:$0xff]
      %v193 = vld [vmem:[%s166 + $0x98] sm:$0xff]
      %v194 = vld [vmem:[%s166 + $0xa0] sm:$0xff]
      %v195 = vld [vmem:[%s166 + $0xa8] sm:$0xff]
      %v196 = vld [vmem:[%s166 + $0xb0] sm:$0xff]
      %v197 = vld [vmem:[%s166 + $0xb8] sm:$0xff]
      %v198 = vld [vmem:[%s166 + $0xc0] sm:$0xff]
      %v199 = vld [vmem:[%s166 + $0xc8] sm:$0xff]
      %v200 = vld [vmem:[%s166 + $0xd0] sm:$0xff]
      %v201 = vld [vmem:[%s166 + $0xd8] sm:$0xff]
      %v202 = vld [vmem:[%s166 + $0xe0] sm:$0xff]
      %v203 = vld [vmem:[%s166 + $0xe8] sm:$0xff]
      %v204 = vld [vmem:[%s166 + $0xf0] sm:$0xff]
      %v205 = vld [vmem:[%s166 + $0xf8] sm:$0xff]
      %v206 = vld [vmem:[%s166 + $0x100] sm:$0xff]
      %v207 = vld [vmem:[%s166 + $0x108] sm:$0xff]
      %v208 = vld [vmem:[%s166 + $0x110] sm:$0xff]
      %v209 = vld [vmem:[%s166 + $0x118] sm:$0xff]
      %v210 = vld [vmem:[%s166 + $0x120] sm:$0xff]
      %v211 = vld [vmem:[%s166 + $0x128] sm:$0xff]
      %v212 = vld [vmem:[%s166 + $0x130] sm:$0xff]
      %v213 = vld [vmem:[%s166 + $0x138] sm:$0xff]
      %v214 = vld [vmem:[%s166 + $0x140] sm:$0xff]
      %v215 = vld [vmem:[%s166 + $0x148] sm:$0xff]
      %v216 = vld [vmem:[%s166 + $0x150] sm:$0xff]
      %v217 = vld [vmem:[%s166 + $0x158] sm:$0xff]
      %v218 = vld [vmem:[%s166 + $0x160] sm:$0xff]
      %v219 = vld [vmem:[%s166 + $0x168] sm:$0xff]
      %v220 = vld [vmem:[%s166 + $0x170] sm:$0xff]
      %v221 = vld [vmem:[%s166 + $0x178] sm:$0xff]
      %v222 = vld [vmem:[%s166 + $0x180] sm:$0xff]
      %v223 = vld [vmem:[%s166 + $0x188] sm:$0xff]
      %v224 = vld [vmem:[%s166 + $0x190] sm:$0xff]
      %v225 = vld [vmem:[%s166 + $0x198] sm:$0xff]
      %v226 = vld [vmem:[%s166 + $0x1a0] sm:$0xff]
      %v227 = vld [vmem:[%s166 + $0x1a8] sm:$0xff]
      %v228 = vld [vmem:[%s166 + $0x1b0] sm:$0xff]
      %v229 = vld [vmem:[%s166 + $0x1b8] sm:$0xff]
      %v230 = vld [vmem:[%s166 + $0x1c0] sm:$0xff]
      %v231 = vld [vmem:[%s166 + $0x1c8] sm:$0xff]
      %v232 = vld [vmem:[%s166 + $0x1d0] sm:$0xff]
      %v233 = vld [vmem:[%s166 + $0x1d8] sm:$0xff]
      %v234 = vld [vmem:[%s166 + $0x1e0] sm:$0xff]
      %v235 = vld [vmem:[%s166 + $0x1e8] sm:$0xff]
      %v236 = vld [vmem:[%s166 + $0x1f0] sm:$0xff]
      %v237 = vld [vmem:[%s166 + $0x1f8] sm:$0xff]
      %v238 = vld [vmem:[%s1] sm:$0xff]
      %v239 = vld [vmem:[%s1 + $0x8] sm:$0xff]
      %v240 = vld [vmem:[%s1 + $0x10] sm:$0xff]
      %v241 = vld [vmem:[%s1 + $0x18] sm:$0xff]
      %v242 = vld [vmem:[%s1 + $0x20] sm:$0xff]
      %v243 = vld [vmem:[%s1 + $0x28] sm:$0xff]
      %v244 = vld [vmem:[%s1 + $0x30] sm:$0xff]
      %v245 = vld [vmem:[%s1 + $0x38] sm:$0xff]
      %v246 = vld [vmem:[%s2] sm:$0x1]
      %v248 = vperm.slane %v246, 0
      %vm250 = vcmask 523264
      %v252 = vsel %vm250, %v174, 0
      %v255 = vsel %vm250, %v175, 0
      %v258 = vsel %vm250, %v176, 0
      %v261 = vsel %vm250, %v177, 0
      %v264 = vsel %vm250, %v178, 0
      %v267 = vsel %vm250, %v179, 0
      %v270 = vsel %vm250, %v180, 0
      %v273 = vsel %vm250, %v181, 0
      %v276 = vsel %vm250, %v182, 0
      %v279 = vsel %vm250, %v183, 0
      %v282 = vsel %vm250, %v184, 0
      %v285 = vsel %vm250, %v185, 0
      %v288 = vsel %vm250, %v186, 0
      %v291 = vsel %vm250, %v187, 0
      %v294 = vsel %vm250, %v188, 0
      %v297 = vsel %vm250, %v189, 0
      %v300 = vsel %vm250, %v190, 0
      %v303 = vsel %vm250, %v191, 0
      %v306 = vsel %vm250, %v192, 0
      %v309 = vsel %vm250, %v193, 0
      %v312 = vsel %vm250, %v194, 0
      %v315 = vsel %vm250, %v195, 0
      %v318 = vsel %vm250, %v196, 0
      %v321 = vsel %vm250, %v197, 0
      %v324 = vsel %vm250, %v198, 0
      %v327 = vsel %vm250, %v199, 0
      %v330 = vsel %vm250, %v200, 0
      %v333 = vsel %vm250, %v201, 0
      %v336 = vsel %vm250, %v202, 0
      %v339 = vsel %vm250, %v203, 0
      %v342 = vsel %vm250, %v204, 0
      %v345 = vsel %vm250, %v205, 0
      %v348 = vsel %vm250, %v206, 0
      %v351 = vsel %vm250, %v207, 0
      %v354 = vsel %vm250, %v208, 0
      %v357 = vsel %vm250, %v209, 0
      %v360 = vsel %vm250, %v210, 0
      %v363 = vsel %vm250, %v211, 0
      %v366 = vsel %vm250, %v212, 0
      %v369 = vsel %vm250, %v213, 0
      %v372 = vsel %vm250, %v214, 0
      %v375 = vsel %vm250, %v215, 0
      %v378 = vsel %vm250, %v216, 0
      %v381 = vsel %vm250, %v217, 0
      %v384 = vsel %vm250, %v218, 0
      %v387 = vsel %vm250, %v219, 0
      %v390 = vsel %vm250, %v220, 0
      %v393 = vsel %vm250, %v221, 0
      %v396 = vsel %vm250, %v222, 0
      %v399 = vsel %vm250, %v223, 0
      %v402 = vsel %vm250, %v224, 0
      %v405 = vsel %vm250, %v225, 0
      %v408 = vsel %vm250, %v226, 0
      %v411 = vsel %vm250, %v227, 0
      %v414 = vsel %vm250, %v228, 0
      %v417 = vsel %vm250, %v229, 0
      %v420 = vsel %vm250, %v230, 0
      %v423 = vsel %vm250, %v231, 0
      %v426 = vsel %vm250, %v232, 0
      %v429 = vsel %vm250, %v233, 0
      %v432 = vsel %vm250, %v234, 0
      %v435 = vsel %vm250, %v235, 0
      %v438 = vsel %vm250, %v236, 0
      %v441 = vsel %vm250, %v237, 0
      %443 = vmatpush.msra.mxu0 0.0
      %444 = vmatpush.msra.mxu0 0.0
      %445 = vmatpush.msra.mxu0 0.0
      %446 = vmatpush.msra.mxu0 0.0
      %447 = vmatpush.msra.mxu0 0.0
      %448 = vmatpush.msra.mxu0 0.0
      %449 = vmatpush.msra.mxu0 0.0
      %450 = vmatpush.msra.mxu0 0.0
      %451 = vmatpush.msra.mxu0 %v245
      %452 = vmatpush.msra.mxu0 %v244
      %453 = vmatpush.msra.mxu0 %v243
      %454 = vmatpush.msra.mxu0 %v242
      %455 = vmatpush.msra.mxu0 %v241
      %456 = vmatpush.msra.mxu0 %v240
      %457 = vmatpush.msra.mxu0 %v239
      %458 = vmatpush.msra.mxu0 %v238
      %459 = vmatmul.f32.gmra.mxu0 %v252
      %v460 = vpop.f32.mrf.mxu0
      %v461 = vadd.f32 %v248, %v460
      %462 = vmatmul.f32.gmra.mxu0 %v255
      %v463 = vpop.f32.mrf.mxu0
      %v464 = vadd.f32 %v248, %v463
      %465 = vmatmul.f32.gmra.mxu0 %v258
      %v466 = vpop.f32.mrf.mxu0
      %v467 = vadd.f32 %v248, %v466
      %468 = vmatmul.f32.gmra.mxu0 %v261
      %v469 = vpop.f32.mrf.mxu0
      %v470 = vadd.f32 %v248, %v469
      %471 = vmatmul.f32.gmra.mxu0 %v264
      %v472 = vpop.f32.mrf.mxu0
      %v473 = vadd.f32 %v248, %v472
      %474 = vmatmul.f32.gmra.mxu0 %v267
      %v475 = vpop.f32.mrf.mxu0
      %v476 = vadd.f32 %v248, %v475
      %477 = vmatmul.f32.gmra.mxu0 %v270
      %v478 = vpop.f32.mrf.mxu0
      %v479 = vadd.f32 %v248, %v478
      %480 = vmatmul.f32.gmra.mxu0 %v273
      %v481 = vpop.f32.mrf.mxu0
      %v482 = vadd.f32 %v248, %v481
      %483 = vmatmul.f32.gmra.mxu0 %v276
      %v484 = vpop.f32.mrf.mxu0
      %v485 = vadd.f32 %v248, %v484
      %486 = vmatmul.f32.gmra.mxu0 %v279
      %v487 = vpop.f32.mrf.mxu0
      %v488 = vadd.f32 %v248, %v487
      %489 = vmatmul.f32.gmra.mxu0 %v282
      %v490 = vpop.f32.mrf.mxu0
      %v491 = vadd.f32 %v248, %v490
      %492 = vmatmul.f32.gmra.mxu0 %v285
      %v493 = vpop.f32.mrf.mxu0
      %v494 = vadd.f32 %v248, %v493
      %495 = vmatmul.f32.gmra.mxu0 %v288
      %v496 = vpop.f32.mrf.mxu0
      %v497 = vadd.f32 %v248, %v496
      %498 = vmatmul.f32.gmra.mxu0 %v291
      %v499 = vpop.f32.mrf.mxu0
      %v500 = vadd.f32 %v248, %v499
      %501 = vmatmul.f32.gmra.mxu0 %v294
      %v502 = vpop.f32.mrf.mxu0
      %v503 = vadd.f32 %v248, %v502
      %504 = vmatmul.f32.gmra.mxu0 %v297
      %v505 = vpop.f32.mrf.mxu0
      %v506 = vadd.f32 %v248, %v505
      %507 = vmatmul.f32.gmra.mxu0 %v300
      %v508 = vpop.f32.mrf.mxu0
      %v509 = vadd.f32 %v248, %v508
      %510 = vmatmul.f32.gmra.mxu0 %v303
      %v511 = vpop.f32.mrf.mxu0
      %v512 = vadd.f32 %v248, %v511
      %513 = vmatmul.f32.gmra.mxu0 %v306
      %v514 = vpop.f32.mrf.mxu0
      %v515 = vadd.f32 %v248, %v514
      %516 = vmatmul.f32.gmra.mxu0 %v309
      %v517 = vpop.f32.mrf.mxu0
      %v518 = vadd.f32 %v248, %v517
      %519 = vmatmul.f32.gmra.mxu0 %v312
      %v520 = vpop.f32.mrf.mxu0
      %v521 = vadd.f32 %v248, %v520
      %522 = vmatmul.f32.gmra.mxu0 %v315
      %v523 = vpop.f32.mrf.mxu0
      %v524 = vadd.f32 %v248, %v523
      %525 = vmatmul.f32.gmra.mxu0 %v318
      %v526 = vpop.f32.mrf.mxu0
      %v527 = vadd.f32 %v248, %v526
      %528 = vmatmul.f32.gmra.mxu0 %v321
      %v529 = vpop.f32.mrf.mxu0
      %v530 = vadd.f32 %v248, %v529
      %531 = vmatmul.f32.gmra.mxu0 %v324
      %v532 = vpop.f32.mrf.mxu0
      %v533 = vadd.f32 %v248, %v532
      %534 = vmatmul.f32.gmra.mxu0 %v327
      %v535 = vpop.f32.mrf.mxu0
      %v536 = vadd.f32 %v248, %v535
      %537 = vmatmul.f32.gmra.mxu0 %v330
      %v538 = vpop.f32.mrf.mxu0
      %v539 = vadd.f32 %v248, %v538
      %540 = vmatmul.f32.gmra.mxu0 %v333
      %v541 = vpop.f32.mrf.mxu0
      %v542 = vadd.f32 %v248, %v541
      %543 = vmatmul.f32.gmra.mxu0 %v336
      %v544 = vpop.f32.mrf.mxu0
      %v545 = vadd.f32 %v248, %v544
      %546 = vmatmul.f32.gmra.mxu0 %v339
      %v547 = vpop.f32.mrf.mxu0
      %v548 = vadd.f32 %v248, %v547
      %549 = vmatmul.f32.gmra.mxu0 %v342
      %v550 = vpop.f32.mrf.mxu0
      %v551 = vadd.f32 %v248, %v550
      %552 = vmatmul.f32.gmra.mxu0 %v345
      %v553 = vpop.f32.mrf.mxu0
      %v554 = vadd.f32 %v248, %v553
      %555 = vmatmul.f32.gmra.mxu0 %v348
      %v556 = vpop.f32.mrf.mxu0
      %v557 = vadd.f32 %v248, %v556
      %558 = vmatmul.f32.gmra.mxu0 %v351
      %v559 = vpop.f32.mrf.mxu0
      %v560 = vadd.f32 %v248, %v559
      %561 = vmatmul.f32.gmra.mxu0 %v354
      %v562 = vpop.f32.mrf.mxu0
      %v563 = vadd.f32 %v248, %v562
      %564 = vmatmul.f32.gmra.mxu0 %v357
      %v565 = vpop.f32.mrf.mxu0
      %v566 = vadd.f32 %v248, %v565
      %567 = vmatmul.f32.gmra.mxu0 %v360
      %v568 = vpop.f32.mrf.mxu0
      %v569 = vadd.f32 %v248, %v568
      %570 = vmatmul.f32.gmra.mxu0 %v363
      %v571 = vpop.f32.mrf.mxu0
      %v572 = vadd.f32 %v248, %v571
      %573 = vmatmul.f32.gmra.mxu0 %v366
      %v574 = vpop.f32.mrf.mxu0
      %v575 = vadd.f32 %v248, %v574
      %576 = vmatmul.f32.gmra.mxu0 %v369
      %v577 = vpop.f32.mrf.mxu0
      %v578 = vadd.f32 %v248, %v577
      %579 = vmatmul.f32.gmra.mxu0 %v372
      %v580 = vpop.f32.mrf.mxu0
      %v581 = vadd.f32 %v248, %v580
      %582 = vmatmul.f32.gmra.mxu0 %v375
      %v583 = vpop.f32.mrf.mxu0
      %v584 = vadd.f32 %v248, %v583
      %585 = vmatmul.f32.gmra.mxu0 %v378
      %v586 = vpop.f32.mrf.mxu0
      %v587 = vadd.f32 %v248, %v586
      %588 = vmatmul.f32.gmra.mxu0 %v381
      %v589 = vpop.f32.mrf.mxu0
      %v590 = vadd.f32 %v248, %v589
      %591 = vmatmul.f32.gmra.mxu0 %v384
      %v592 = vpop.f32.mrf.mxu0
      %v593 = vadd.f32 %v248, %v592
      %594 = vmatmul.f32.gmra.mxu0 %v387
      %v595 = vpop.f32.mrf.mxu0
      %v596 = vadd.f32 %v248, %v595
      %597 = vmatmul.f32.gmra.mxu0 %v390
      %v598 = vpop.f32.mrf.mxu0
      %v599 = vadd.f32 %v248, %v598
      %600 = vmatmul.f32.gmra.mxu0 %v393
      %v601 = vpop.f32.mrf.mxu0
      %v602 = vadd.f32 %v248, %v601
      %603 = vmatmul.f32.gmra.mxu0 %v396
      %v604 = vpop.f32.mrf.mxu0
      %v605 = vadd.f32 %v248, %v604
      %606 = vmatmul.f32.gmra.mxu0 %v399
      %v607 = vpop.f32.mrf.mxu0
      %v608 = vadd.f32 %v248, %v607
      %609 = vmatmul.f32.gmra.mxu0 %v402
      %v610 = vpop.f32.mrf.mxu0
      %v611 = vadd.f32 %v248, %v610
      %612 = vmatmul.f32.gmra.mxu0 %v405
      %v613 = vpop.f32.mrf.mxu0
      %v614 = vadd.f32 %v248, %v613
      %615 = vmatmul.f32.gmra.mxu0 %v408
      %v616 = vpop.f32.mrf.mxu0
      %v617 = vadd.f32 %v248, %v616
      %618 = vmatmul.f32.gmra.mxu0 %v411
      %v619 = vpop.f32.mrf.mxu0
      %v620 = vadd.f32 %v248, %v619
      %621 = vmatmul.f32.gmra.mxu0 %v414
      %v622 = vpop.f32.mrf.mxu0
      %v623 = vadd.f32 %v248, %v622
      %624 = vmatmul.f32.gmra.mxu0 %v417
      %v625 = vpop.f32.mrf.mxu0
      %v626 = vadd.f32 %v248, %v625
      %627 = vmatmul.f32.gmra.mxu0 %v420
      %v628 = vpop.f32.mrf.mxu0
      %v629 = vadd.f32 %v248, %v628
      %630 = vmatmul.f32.gmra.mxu0 %v423
      %v631 = vpop.f32.mrf.mxu0
      %v632 = vadd.f32 %v248, %v631
      %633 = vmatmul.f32.gmra.mxu0 %v426
      %v634 = vpop.f32.mrf.mxu0
      %v635 = vadd.f32 %v248, %v634
      %636 = vmatmul.f32.gmra.mxu0 %v429
      %v637 = vpop.f32.mrf.mxu0
      %v638 = vadd.f32 %v248, %v637
      %639 = vmatmul.f32.gmra.mxu0 %v432
      %v640 = vpop.f32.mrf.mxu0
      %v641 = vadd.f32 %v248, %v640
      %642 = vmatmul.f32.gmra.mxu0 %v435
      %v643 = vpop.f32.mrf.mxu0
      %v644 = vadd.f32 %v248, %v643
      %645 = vmatmul.f32.gmra.mxu0 %v438
      %v646 = vpop.f32.mrf.mxu0
      %v647 = vadd.f32 %v248, %v646
      %648 = vmatmul.f32.gmra.mxu0 %v441
      %v649 = vpop.f32.mrf.mxu0
      %v650 = vadd.f32 %v248, %v649
      %651 = vdwg.mxu0
      %v652 = vmax.f32 %v461, 0.0
      %v653 = vmax.f32 %v464, 0.0
      %v654 = vmax.f32 %v467, 0.0
      %v655 = vmax.f32 %v470, 0.0
      %v656 = vmax.f32 %v473, 0.0
      %v657 = vmax.f32 %v476, 0.0
      %v658 = vmax.f32 %v479, 0.0
      %v659 = vmax.f32 %v482, 0.0
      %v660 = vmax.f32 %v485, 0.0
      %v661 = vmax.f32 %v488, 0.0
      %v662 = vmax.f32 %v491, 0.0
      %v663 = vmax.f32 %v494, 0.0
      %v664 = vmax.f32 %v497, 0.0
      %v665 = vmax.f32 %v500, 0.0
      %v666 = vmax.f32 %v503, 0.0
      %v667 = vmax.f32 %v506, 0.0
      %v668 = vmax.f32 %v509, 0.0
      %v669 = vmax.f32 %v512, 0.0
      %v670 = vmax.f32 %v515, 0.0
      %v671 = vmax.f32 %v518, 0.0
      %v672 = vmax.f32 %v521, 0.0
      %v673 = vmax.f32 %v524, 0.0
      %v674 = vmax.f32 %v527, 0.0
      %v675 = vmax.f32 %v530, 0.0
      %v676 = vmax.f32 %v533, 0.0
      %v677 = vmax.f32 %v536, 0.0
      %v678 = vmax.f32 %v539, 0.0
      %v679 = vmax.f32 %v542, 0.0
      %v680 = vmax.f32 %v545, 0.0
      %v681 = vmax.f32 %v548, 0.0
      %v682 = vmax.f32 %v551, 0.0
      %v683 = vmax.f32 %v554, 0.0
      %v684 = vmax.f32 %v557, 0.0
      %v685 = vmax.f32 %v560, 0.0
      %v686 = vmax.f32 %v563, 0.0
      %v687 = vmax.f32 %v566, 0.0
      %v688 = vmax.f32 %v569, 0.0
      %v689 = vmax.f32 %v572, 0.0
      %v690 = vmax.f32 %v575, 0.0
      %v691 = vmax.f32 %v578, 0.0
      %v692 = vmax.f32 %v581, 0.0
      %v693 = vmax.f32 %v584, 0.0
      %v694 = vmax.f32 %v587, 0.0
      %v695 = vmax.f32 %v590, 0.0
      %v696 = vmax.f32 %v593, 0.0
      %v697 = vmax.f32 %v596, 0.0
      %v698 = vmax.f32 %v599, 0.0
      %v699 = vmax.f32 %v602, 0.0
      %v700 = vmax.f32 %v605, 0.0
      %v701 = vmax.f32 %v608, 0.0
      %v702 = vmax.f32 %v611, 0.0
      %v703 = vmax.f32 %v614, 0.0
      %v704 = vmax.f32 %v617, 0.0
      %v705 = vmax.f32 %v620, 0.0
      %v706 = vmax.f32 %v623, 0.0
      %v707 = vmax.f32 %v626, 0.0
      %v708 = vmax.f32 %v629, 0.0
      %v709 = vmax.f32 %v632, 0.0
      %v710 = vmax.f32 %v635, 0.0
      %v711 = vmax.f32 %v638, 0.0
      %v712 = vmax.f32 %v641, 0.0
      %v713 = vmax.f32 %v644, 0.0
      %v714 = vmax.f32 %v647, 0.0
      %v715 = vmax.f32 %v650, 0.0
      %vm716 = vcmask 261120
      %717 = vst.msk [vmem:[%s172] sm:$0xff] %vm716, %v652
      %718 = vst.msk [vmem:[%s172 + $0x8] sm:$0xff] %vm716, %v653
      %719 = vst.msk [vmem:[%s172 + $0x10] sm:$0xff] %vm716, %v654
      %720 = vst.msk [vmem:[%s172 + $0x18] sm:$0xff] %vm716, %v655
      %721 = vst.msk [vmem:[%s172 + $0x20] sm:$0xff] %vm716, %v656
      %722 = vst.msk [vmem:[%s172 + $0x28] sm:$0xff] %vm716, %v657
      %723 = vst.msk [vmem:[%s172 + $0x30] sm:$0xff] %vm716, %v658
      %724 = vst.msk [vmem:[%s172 + $0x38] sm:$0xff] %vm716, %v659
      %725 = vst.msk [vmem:[%s172 + $0x40] sm:$0xff] %vm716, %v660
      %726 = vst.msk [vmem:[%s172 + $0x48] sm:$0xff] %vm716, %v661
      %727 = vst.msk [vmem:[%s172 + $0x50] sm:$0xff] %vm716, %v662
      %728 = vst.msk [vmem:[%s172 + $0x58] sm:$0xff] %vm716, %v663
      %729 = vst.msk [vmem:[%s172 + $0x60] sm:$0xff] %vm716, %v664
      %730 = vst.msk [vmem:[%s172 + $0x68] sm:$0xff] %vm716, %v665
      %731 = vst.msk [vmem:[%s172 + $0x70] sm:$0xff] %vm716, %v666
      %732 = vst.msk [vmem:[%s172 + $0x78] sm:$0xff] %vm716, %v667
      %733 = vst.msk [vmem:[%s172 + $0x80] sm:$0xff] %vm716, %v668
      %734 = vst.msk [vmem:[%s172 + $0x88] sm:$0xff] %vm716, %v669
      %735 = vst.msk [vmem:[%s172 + $0x90] sm:$0xff] %vm716, %v670
      %736 = vst.msk [vmem:[%s172 + $0x98] sm:$0xff] %vm716, %v671
      %737 = vst.msk [vmem:[%s172 + $0xa0] sm:$0xff] %vm716, %v672
      %738 = vst.msk [vmem:[%s172 + $0xa8] sm:$0xff] %vm716, %v673
      %739 = vst.msk [vmem:[%s172 + $0xb0] sm:$0xff] %vm716, %v674
      %740 = vst.msk [vmem:[%s172 + $0xb8] sm:$0xff] %vm716, %v675
      %741 = vst.msk [vmem:[%s172 + $0xc0] sm:$0xff] %vm716, %v676
      %742 = vst.msk [vmem:[%s172 + $0xc8] sm:$0xff] %vm716, %v677
      %743 = vst.msk [vmem:[%s172 + $0xd0] sm:$0xff] %vm716, %v678
      %744 = vst.msk [vmem:[%s172 + $0xd8] sm:$0xff] %vm716, %v679
      %745 = vst.msk [vmem:[%s172 + $0xe0] sm:$0xff] %vm716, %v680
      %746 = vst.msk [vmem:[%s172 + $0xe8] sm:$0xff] %vm716, %v681
      %747 = vst.msk [vmem:[%s172 + $0xf0] sm:$0xff] %vm716, %v682
      %748 = vst.msk [vmem:[%s172 + $0xf8] sm:$0xff] %vm716, %v683
      %749 = vst.msk [vmem:[%s172 + $0x100] sm:$0xff] %vm716, %v684
      %750 = vst.msk [vmem:[%s172 + $0x108] sm:$0xff] %vm716, %v685
      %751 = vst.msk [vmem:[%s172 + $0x110] sm:$0xff] %vm716, %v686
      %752 = vst.msk [vmem:[%s172 + $0x118] sm:$0xff] %vm716, %v687
      %753 = vst.msk [vmem:[%s172 + $0x120] sm:$0xff] %vm716, %v688
      %754 = vst.msk [vmem:[%s172 + $0x128] sm:$0xff] %vm716, %v689
      %755 = vst.msk [vmem:[%s172 + $0x130] sm:$0xff] %vm716, %v690
      %756 = vst.msk [vmem:[%s172 + $0x138] sm:$0xff] %vm716, %v691
      %757 = vst.msk [vmem:[%s172 + $0x140] sm:$0xff] %vm716, %v692
      %758 = vst.msk [vmem:[%s172 + $0x148] sm:$0xff] %vm716, %v693
      %759 = vst.msk [vmem:[%s172 + $0x150] sm:$0xff] %vm716, %v694
      %760 = vst.msk [vmem:[%s172 + $0x158] sm:$0xff] %vm716, %v695
      %761 = vst.msk [vmem:[%s172 + $0x160] sm:$0xff] %vm716, %v696
      %762 = vst.msk [vmem:[%s172 + $0x168] sm:$0xff] %vm716, %v697
      %763 = vst.msk [vmem:[%s172 + $0x170] sm:$0xff] %vm716, %v698
      %764 = vst.msk [vmem:[%s172 + $0x178] sm:$0xff] %vm716, %v699
      %765 = vst.msk [vmem:[%s172 + $0x180] sm:$0xff] %vm716, %v700
      %766 = vst.msk [vmem:[%s172 + $0x188] sm:$0xff] %vm716, %v701
      %767 = vst.msk [vmem:[%s172 + $0x190] sm:$0xff] %vm716, %v702
      %768 = vst.msk [vmem:[%s172 + $0x198] sm:$0xff] %vm716, %v703
      %769 = vst.msk [vmem:[%s172 + $0x1a0] sm:$0xff] %vm716, %v704
      %770 = vst.msk [vmem:[%s172 + $0x1a8] sm:$0xff] %vm716, %v705
      %771 = vst.msk [vmem:[%s172 + $0x1b0] sm:$0xff] %vm716, %v706
      %772 = vst.msk [vmem:[%s172 + $0x1b8] sm:$0xff] %vm716, %v707
      %773 = vst.msk [vmem:[%s172 + $0x1c0] sm:$0xff] %vm716, %v708
      %774 = vst.msk [vmem:[%s172 + $0x1c8] sm:$0xff] %vm716, %v709
      %775 = vst.msk [vmem:[%s172 + $0x1d0] sm:$0xff] %vm716, %v710
      %776 = vst.msk [vmem:[%s172 + $0x1d8] sm:$0xff] %vm716, %v711
      %777 = vst.msk [vmem:[%s172 + $0x1e0] sm:$0xff] %vm716, %v712
      %778 = vst.msk [vmem:[%s172 + $0x1e8] sm:$0xff] %vm716, %v713
      %779 = vst.msk [vmem:[%s172 + $0x1f0] sm:$0xff] %vm716, %v714
      %780 = vst.msk [vmem:[%s172 + $0x1f8] sm:$0xff] %vm716, %v715
      %s781 = smul.u32 64, %s14
      %p782 = scmp.lt.s32.totalorder %s781, 447
      %s783 = scalar_select %p782, %s781, 447
      %s784 = smul.addr %s783, 8
      %s785 = scalar_lea.vmem %s3, %s784
      // Predicated region
      $region33: #{_lambda_.4} parent=31 // pred_check
        %p786 = pneg %p100
      $region34: #{_lambda_.4} parent=31 // pred_check_branch
        %788 = sbr.rel (%p786) target = $region36
      $region35: #{_lambda_.4} parent=31 // pred_region
        %s789 = smul.u32 64, %s14
      $region36: #{_lambda_.4} parent=31 // pred_fallthru
        _
    $region32: #{_lambda_.4} parent=5 // pred_fallthru
      _
    %p790 = scmp.le.s32.totalorder 2, %s9
    // Predicated region
    $region37: #{_lambda_.4} parent=5 // pred_check
      %p791 = pneg %p790
    $region38: #{_lambda_.4} parent=5 // pred_check_branch
      %793 = sbr.rel (%p791) target = $region40
    $region39: #{_lambda_.4} parent=5 // pred_region
      %s794 = ssub.s32 %s9, 2
      // Predicated region
      $region41: #{_lambda_.4} parent=39 // pred_check
        %p795 = pneg %p106
      $region42: #{_lambda_.4} parent=39 // pred_check_branch
        %797 = sbr.rel (%p795) target = $region44
      $region43: #{_lambda_.4} parent=39 // pred_region
        %s798 = smul.u32 64, %s15
        %p799 = scmp.lt.s32.totalorder %s798, 447
        %s800 = scalar_select %p799, %s798, 447
        %s801 = smul.addr %s800, 8
        %s802 = scalar_lea.vmem %s3, %s801
      $region44: #{_lambda_.4} parent=39 // pred_fallthru
        _
    $region40: #{_lambda_.4} parent=5 // pred_fallthru
      _
  $region6: #{_lambda_.4} parent=0 // loop_footer
    %s13 = sadd.s32 1, %s9
  $region7: #{_lambda_.4} parent=0 // loop_footer_branch
    %8 = sbr.rel target = $region3
  $region8: #{_lambda_.4} parent=0 // loop_exit
    _

// kernel: _lambda_.5
$region0: #{_lambda_.5}
  #allocation0 [shape = 'u32[]', space=smem, size = 0x4, offset = 0x4, fixed_abs, tag = 'smem constant byte address 0x4 - core index']
  #allocation1 [shape = 'u32[72,128]{1,0:T(1,128)}', space=vmem, size = 0x9000, scoped, tag = 'internal scratch']
  %s0 = inlined_call_operand.vmem [shape: f32[1024,512], index: 0, kind: input, shape index: {}]
  %s1 = inlined_call_operand.vmem [shape: f32[512,64], index: 1, kind: input, shape index: {}]
  %s2 = inlined_call_operand.vmem [shape: f32[1,64], index: 2, kind: input, shape index: {}]
  %s3 = inlined_call_operand.vmem [shape: f32[1024,64], index: 3, kind: output, shape index: {}]
  %s4 = sld [smem:[#allocation0]]
  $region45: #{_lambda_.5} parent=0
    _
  %s6 = ssub.s32 1, %s4
  %s7 = scalar_select 0, %s6, %s4
  loop: start=0, step=1, limit=4
  $region2: #{_lambda_.5} parent=0 // loop_pre_header
    _
  $region3: #{_lambda_.5} parent=0 // loop_header
    %s9 = sphi 0, %s13
    %p10 = scmp.ge.s32.totalorder %s9, 4
    %s19 = sphi 0, %s21
    %s22 = sphi 0, %s19
    %s23 = sphi 0, %s22
    %s39 = sphi 0, %s23
    %s43 = sphi 0, %s43
    %s45 = sphi 0, %s43
    %s46 = sphi 0, %s45
    %s60 = sphi 0, %s46
    %s64 = sphi 0, %s64
    %s66 = sphi 0, %s64
    %s67 = sphi 0, %s66
    %s81 = sphi 0, %s67
    %s87 = sphi 0, %s89
    %s90 = sphi 0, %s87
    %s91 = sphi 0, %s90
    %s107 = sphi 0, %s91
  $region4: #{_lambda_.5} parent=0 // loop_header_branch
    %12 = sbr.rel (%p10) target = $region8
  $region5: #{_lambda_.5} parent=0 // loop_body
    %s14 = ssub.s32 %s9, 1
    %s15 = ssub.s32 %s9, 2
    %s16 = sadd.s32 %s9, 1
    %s17 = ssub.s32 %s9, %s16
    %p18 = scmp.eq.s32.totalorder %s17, 0
    %s20 = sadd.s32 %s19, 1
    %s21 = scalar_select %p18, %s19, %s20
    %p24 = pneg %p18
    %p25 = scmp.eq.s32.totalorder %s9, 1
    %p26 = por %p24, %p25
    %p27 = scmp.ne.s32.totalorder %s19, %s22
    %p28 = scmp.eq.s32.totalorder %s9, 0
    %p29 = por %p27, %p28
    %p30 = scmp.ne.s32.totalorder %s19, %s22
    %p31 = scmp.eq.s32.totalorder %s14, 1
    %p32 = por %p30, %p31
    %p33 = scmp.ne.s32.totalorder %s22, %s23
    %p34 = scmp.eq.s32.totalorder %s14, 0
    %p35 = por %p33, %p34
    %p36 = scmp.ne.s32.totalorder %s22, %s23
    %p37 = scmp.eq.s32.totalorder %s15, 1
    %p38 = por %p36, %p37
    %p40 = scmp.ne.s32.totalorder %s23, %s39
    %p41 = scmp.eq.s32.totalorder %s15, 0
    %p42 = por %p40, %p41
    %s44 = sadd.s32 %s43, 1
    %p47 = scmp.eq.s32.totalorder %s9, 1
    %p48 = scmp.ne.s32.totalorder %s43, %s45
    %p49 = scmp.eq.s32.totalorder %s9, 0
    %p50 = por %p48, %p49
    %p51 = scmp.ne.s32.totalorder %s43, %s45
    %p52 = scmp.eq.s32.totalorder %s14, 1
    %p53 = por %p51, %p52
    %p54 = scmp.ne.s32.totalorder %s45, %s46
    %p55 = scmp.eq.s32.totalorder %s14, 0
    %p56 = por %p54, %p55
    %p57 = scmp.ne.s32.totalorder %s45, %s46
    %p58 = scmp.eq.s32.totalorder %s15, 1
    %p59 = por %p57, %p58
    %p61 = scmp.ne.s32.totalorder %s46, %s60
    %p62 = scmp.eq.s32.totalorder %s15, 0
    %p63 = por %p61, %p62
    %s65 = sadd.s32 %s64, 1
    %p68 = scmp.eq.s32.totalorder %s9, 1
    %p69 = scmp.ne.s32.totalorder %s64, %s66
    %p70 = scmp.eq.s32.totalorder %s9, 0
    %p71 = por %p69, %p70
    %p72 = scmp.ne.s32.totalorder %s64, %s66
    %p73 = scmp.eq.s32.totalorder %s14, 1
    %p74 = por %p72, %p73
    %p75 = scmp.ne.s32.totalorder %s66, %s67
    %p76 = scmp.eq.s32.totalorder %s14, 0
    %p77 = por %p75, %p76
    %p78 = scmp.ne.s32.totalorder %s66, %s67
    %p79 = scmp.eq.s32.totalorder %s15, 1
    %p80 = por %p78, %p79
    %p82 = scmp.ne.s32.totalorder %s67, %s81
    %p83 = scmp.eq.s32.totalorder %s15, 0
    %p84 = por %p82, %p83
    %s85 = ssub.s32 %s9, %s16
    %p86 = scmp.eq.s32.totalorder %s85, 0
    %s88 = sadd.s32 %s87, 1
    %s89 = scalar_select %p86, %s87, %s88
    %p92 = pneg %p86
    %p93 = scmp.eq.s32.totalorder %s9, 1
    %p94 = por %p92, %p93
    %p95 = scmp.ne.s32.totalorder %s87, %s90
    %p96 = scmp.eq.s32.totalorder %s9, 0
    %p97 = por %p95, %p96
    %p98 = scmp.ne.s32.totalorder %s87, %s90
    %p99 = scmp.eq.s32.totalorder %s14, 1
    %p100 = por %p98, %p99
    %p101 = scmp.ne.s32.totalorder %s90, %s91
    %p102 = scmp.eq.s32.totalorder %s14, 0
    %p103 = por %p101, %p102
    %p104 = scmp.ne.s32.totalorder %s90, %s91
    %p105 = scmp.eq.s32.totalorder %s15, 1
    %p106 = por %p104, %p105
    %p108 = scmp.ne.s32.totalorder %s91, %s107
    %p109 = scmp.eq.s32.totalorder %s15, 0
    %p110 = por %p108, %p109
    %p111 = scmp.le.s32.totalorder 1, %s9
    %p112 = scmp.lt.s32.totalorder %s9, 3
    %p113 = pnand %p111, %p112
    %p114 = pneg %p113
    // Predicated region
    $region9: #{_lambda_.5} parent=5 // pred_check
      _
    $region10: #{_lambda_.5} parent=5 // pred_check_branch
      %116 = sbr.rel (%p113) target = $region12
    $region11: #{_lambda_.5} parent=5 // pred_region
      %s117 = ssub.s32 %s9, 1
      // Predicated region
      $region13: #{_lambda_.5} parent=11 // pred_check
        %p118 = pneg %p56
      $region14: #{_lambda_.5} parent=11 // pred_check_branch
        %120 = sbr.rel (%p118) target = $region16
      $region15: #{_lambda_.5} parent=11 // pred_region
        _
      $region16: #{_lambda_.5} parent=11 // pred_fallthru
        _
      // Predicated region
      $region17: #{_lambda_.5} parent=11 // pred_check
        %p121 = pneg %p77
      $region18: #{_lambda_.5} parent=11 // pred_check_branch
        %123 = sbr.rel (%p121) target = $region20
      $region19: #{_lambda_.5} parent=11 // pred_region
        _
      $region20: #{_lambda_.5} parent=11 // pred_fallthru
        _
    $region12: #{_lambda_.5} parent=5 // pred_fallthru
      _
    %p124 = scmp.lt.s32.totalorder %s9, 2
    // Predicated region
    $region21: #{_lambda_.5} parent=5 // pred_check
      %p125 = pneg %p124
    $region22: #{_lambda_.5} parent=5 // pred_check_branch
      %127 = sbr.rel (%p125) target = $region24
    $region23: #{_lambda_.5} parent=5 // pred_region
      // Predicated region
      $region25: #{_lambda_.5} parent=23 // pred_check
        %p128 = pneg %p29
      $region26: #{_lambda_.5} parent=23 // pred_check_branch
        %130 = sbr.rel (%p128) target = $region28
      $region27: #{_lambda_.5} parent=23 // pred_region
        %s131 = smul.u32 64, %s9
        %p132 = scmp.lt.s32.totalorder %s131, 127
        %s133 = scalar_select %p132, %s131, 127
        %s134 = smul.addr %s133, 4
        %s135 = smul.addr %s134, 8
        %s136 = scalar_lea.vmem %s0, %s135
        %s137 = smul.u32 64, %s9
      $region28: #{_lambda_.5} parent=23 // pred_fallthru
        _
    $region24: #{_lambda_.5} parent=5 // pred_fallthru
      _
    %p138 = scmp.le.s32.totalorder 1, %s9
    %p139 = scmp.lt.s32.totalorder %s9, 3
    %p140 = pnand %p138, %p139
    %p141 = pneg %p140
    // Predicated region
    $region29: #{_lambda_.5} parent=5 // pred_check
      _
    $region30: #{_lambda_.5} parent=5 // pred_check_branch
      %143 = sbr.rel (%p140) target = $region32
    $region31: #{_lambda_.5} parent=5 // pred_region
      %s144 = ssub.s32 %s9, 1
      %s145 = smul.u32 64, %s14
      %p146 = scmp.lt.s32.totalorder %s145, 127
      %s147 = scalar_select %p146, %s145, 127
      %s148 = smul.addr %s147, 4
      %s149 = smul.addr %s148, 8
      %s150 = scalar_lea.vmem %s0, %s149
      %p151 = pneg %p35
      %p152 = pneg %p32
      %p153 = pneg %p56
      %p154 = pneg %p53
      %p155 = pneg %p77
      %p156 = pneg %p74
      %p157 = pneg %p103
      %p158 = pneg %p100
      %s159 = smul.u32 64, %s14
      %p160 = scmp.lt.s32.totalorder %s159, 127
      %s161 = scalar_select %p160, %s159, 127
      %s162 = smul.addr %s161, 8
      %s163 = scalar_lea.vmem %s3, %s162
      %s164 = smul.u32 64, %s14
      %p165 = scmp.lt.s32.totalorder %s164, 127
      %s166 = scalar_select %p165, %s164, 127
      %s167 = smul.addr %s166, 4
      %s168 = smul.addr %s167, 8
      %s169 = scalar_lea.vmem %s0, %s168
      %s170 = smul.u32 64, %s14
      %s171 = smul.u32 64, %s14
      %p172 = scmp.lt.s32.totalorder %s171, 127
      %s173 = scalar_select %p172, %s171, 127
      %s174 = smul.addr %s173, 8
      %s175 = scalar_lea.vmem %s3, %s174
      %s176 = smul.u32 64, %s14
      %v177 = vld [vmem:[%s169] sm:$0xff]
      %v178 = vld [vmem:[%s169 + $0x8] sm:$0xff]
      %v179 = vld [vmem:[%s169 + $0x10] sm:$0xff]
      %v180 = vld [vmem:[%s169 + $0x18] sm:$0xff]
      %v181 = vld [vmem:[%s169 + $0x20] sm:$0xff]
      %v182 = vld [vmem:[%s169 + $0x28] sm:$0xff]
      %v183 = vld [vmem:[%s169 + $0x30] sm:$0xff]
      %v184 = vld [vmem:[%s169 + $0x38] sm:$0xff]
      %v185 = vld [vmem:[%s169 + $0x40] sm:$0xff]
      %v186 = vld [vmem:[%s169 + $0x48] sm:$0xff]
      %v187 = vld [vmem:[%s169 + $0x50] sm:$0xff]
      %v188 = vld [vmem:[%s169 + $0x58] sm:$0xff]
      %v189 = vld [vmem:[%s169 + $0x60] sm:$0xff]
      %v190 = vld [vmem:[%s169 + $0x68] sm:$0xff]
      %v191 = vld [vmem:[%s169 + $0x70] sm:$0xff]
      %v192 = vld [vmem:[%s169 + $0x78] sm:$0xff]
      %v193 = vld [vmem:[%s169 + $0x80] sm:$0xff]
      %v194 = vld [vmem:[%s169 + $0x88] sm:$0xff]
      %v195 = vld [vmem:[%s169 + $0x90] sm:$0xff]
      %v196 = vld [vmem:[%s169 + $0x98] sm:$0xff]
      %v197 = vld [vmem:[%s169 + $0xa0] sm:$0xff]
      %v198 = vld [vmem:[%s169 + $0xa8] sm:$0xff]
      %v199 = vld [vmem:[%s169 + $0xb0] sm:$0xff]
      %v200 = vld [vmem:[%s169 + $0xb8] sm:$0xff]
      %v201 = vld [vmem:[%s169 + $0xc0] sm:$0xff]
      %v202 = vld [vmem:[%s169 + $0xc8] sm:$0xff]
      %v203 = vld [vmem:[%s169 + $0xd0] sm:$0xff]
      %v204 = vld [vmem:[%s169 + $0xd8] sm:$0xff]
      %v205 = vld [vmem:[%s169 + $0xe0] sm:$0xff]
      %v206 = vld [vmem:[%s169 + $0xe8] sm:$0xff]
      %v207 = vld [vmem:[%s169 + $0xf0] sm:$0xff]
      %v208 = vld [vmem:[%s169 + $0xf8] sm:$0xff]
      %v209 = vld [vmem:[%s169 + $0x100] sm:$0xff]
      %v210 = vld [vmem:[%s169 + $0x108] sm:$0xff]
      %v211 = vld [vmem:[%s169 + $0x110] sm:$0xff]
      %v212 = vld [vmem:[%s169 + $0x118] sm:$0xff]
      %v213 = vld [vmem:[%s169 + $0x120] sm:$0xff]
      %v214 = vld [vmem:[%s169 + $0x128] sm:$0xff]
      %v215 = vld [vmem:[%s169 + $0x130] sm:$0xff]
      %v216 = vld [vmem:[%s169 + $0x138] sm:$0xff]
      %v217 = vld [vmem:[%s169 + $0x140] sm:$0xff]
      %v218 = vld [vmem:[%s169 + $0x148] sm:$0xff]
      %v219 = vld [vmem:[%s169 + $0x150] sm:$0xff]
      %v220 = vld [vmem:[%s169 + $0x158] sm:$0xff]
      %v221 = vld [vmem:[%s169 + $0x160] sm:$0xff]
      %v222 = vld [vmem:[%s169 + $0x168] sm:$0xff]
      %v223 = vld [vmem:[%s169 + $0x170] sm:$0xff]
      %v224 = vld [vmem:[%s169 + $0x178] sm:$0xff]
      %v225 = vld [vmem:[%s169 + $0x180] sm:$0xff]
      %v226 = vld [vmem:[%s169 + $0x188] sm:$0xff]
      %v227 = vld [vmem:[%s169 + $0x190] sm:$0xff]
      %v228 = vld [vmem:[%s169 + $0x198] sm:$0xff]
      %v229 = vld [vmem:[%s169 + $0x1a0] sm:$0xff]
      %v230 = vld [vmem:[%s169 + $0x1a8] sm:$0xff]
      %v231 = vld [vmem:[%s169 + $0x1b0] sm:$0xff]
      %v232 = vld [vmem:[%s169 + $0x1b8] sm:$0xff]
      %v233 = vld [vmem:[%s169 + $0x1c0] sm:$0xff]
      %v234 = vld [vmem:[%s169 + $0x1c8] sm:$0xff]
      %v235 = vld [vmem:[%s169 + $0x1d0] sm:$0xff]
      %v236 = vld [vmem:[%s169 + $0x1d8] sm:$0xff]
      %v237 = vld [vmem:[%s169 + $0x1e0] sm:$0xff]
      %v238 = vld [vmem:[%s169 + $0x1e8] sm:$0xff]
      %v239 = vld [vmem:[%s169 + $0x1f0] sm:$0xff]
      %v240 = vld [vmem:[%s169 + $0x1f8] sm:$0xff]
      %v241 = vld [vmem:[%s169 + $0x200] sm:$0xff]
      %v242 = vld [vmem:[%s169 + $0x208] sm:$0xff]
      %v243 = vld [vmem:[%s169 + $0x210] sm:$0xff]
      %v244 = vld [vmem:[%s169 + $0x218] sm:$0xff]
      %v245 = vld [vmem:[%s169 + $0x220] sm:$0xff]
      %v246 = vld [vmem:[%s169 + $0x228] sm:$0xff]
      %v247 = vld [vmem:[%s169 + $0x230] sm:$0xff]
      %v248 = vld [vmem:[%s169 + $0x238] sm:$0xff]
      %v249 = vld [vmem:[%s169 + $0x240] sm:$0xff]
      %v250 = vld [vmem:[%s169 + $0x248] sm:$0xff]
      %v251 = vld [vmem:[%s169 + $0x250] sm:$0xff]
      %v252 = vld [vmem:[%s169 + $0x258] sm:$0xff]
      %v253 = vld [vmem:[%s169 + $0x260] sm:$0xff]
      %v254 = vld [vmem:[%s169 + $0x268] sm:$0xff]
      %v255 = vld [vmem:[%s169 + $0x270] sm:$0xff]
      %v256 = vld [vmem:[%s169 + $0x278] sm:$0xff]
      %v257 = vld [vmem:[%s169 + $0x280] sm:$0xff]
      %v258 = vld [vmem:[%s169 + $0x288] sm:$0xff]
      %v259 = vld [vmem:[%s169 + $0x290] sm:$0xff]
      %v260 = vld [vmem:[%s169 + $0x298] sm:$0xff]
      %v261 = vld [vmem:[%s169 + $0x2a0] sm:$0xff]
      %v262 = vld [vmem:[%s169 + $0x2a8] sm:$0xff]
      %v263 = vld [vmem:[%s169 + $0x2b0] sm:$0xff]
      %v264 = vld [vmem:[%s169 + $0x2b8] sm:$0xff]
      %v265 = vld [vmem:[%s169 + $0x2c0] sm:$0xff]
      %v266 = vld [vmem:[%s169 + $0x2c8] sm:$0xff]
      %v267 = vld [vmem:[%s169 + $0x2d0] sm:$0xff]
      %v268 = vld [vmem:[%s169 + $0x2d8] sm:$0xff]
      %v269 = vld [vmem:[%s169 + $0x2e0] sm:$0xff]
      %v270 = vld [vmem:[%s169 + $0x2e8] sm:$0xff]
      %v271 = vld [vmem:[%s169 + $0x2f0] sm:$0xff]
      %v272 = vld [vmem:[%s169 + $0x2f8] sm:$0xff]
      %v273 = vld [vmem:[%s169 + $0x300] sm:$0xff]
      %v274 = vld [vmem:[%s169 + $0x308] sm:$0xff]
      %v275 = vld [vmem:[%s169 + $0x310] sm:$0xff]
      %v276 = vld [vmem:[%s169 + $0x318] sm:$0xff]
      %v277 = vld [vmem:[%s169 + $0x320] sm:$0xff]
      %v278 = vld [vmem:[%s169 + $0x328] sm:$0xff]
      %v279 = vld [vmem:[%s169 + $0x330] sm:$0xff]
      %v280 = vld [vmem:[%s169 + $0x338] sm:$0xff]
      %v281 = vld [vmem:[%s169 + $0x340] sm:$0xff]
      %v282 = vld [vmem:[%s169 + $0x348] sm:$0xff]
      %v283 = vld [vmem:[%s169 + $0x350] sm:$0xff]
      %v284 = vld [vmem:[%s169 + $0x358] sm:$0xff]
      %v285 = vld [vmem:[%s169 + $0x360] sm:$0xff]
      %v286 = vld [vmem:[%s169 + $0x368] sm:$0xff]
      %v287 = vld [vmem:[%s169 + $0x370] sm:$0xff]
      %v288 = vld [vmem:[%s169 + $0x378] sm:$0xff]
      %v289 = vld [vmem:[%s169 + $0x380] sm:$0xff]
      %v290 = vld [vmem:[%s169 + $0x388] sm:$0xff]
      %v291 = vld [vmem:[%s169 + $0x390] sm:$0xff]
      %v292 = vld [vmem:[%s169 + $0x398] sm:$0xff]
      %v293 = vld [vmem:[%s169 + $0x3a0] sm:$0xff]
      %v294 = vld [vmem:[%s169 + $0x3a8] sm:$0xff]
      %v295 = vld [vmem:[%s169 + $0x3b0] sm:$0xff]
      %v296 = vld [vmem:[%s169 + $0x3b8] sm:$0xff]
      %v297 = vld [vmem:[%s169 + $0x3c0] sm:$0xff]
      %v298 = vld [vmem:[%s169 + $0x3c8] sm:$0xff]
      %v299 = vld [vmem:[%s169 + $0x3d0] sm:$0xff]
      %v300 = vld [vmem:[%s169 + $0x3d8] sm:$0xff]
      %v301 = vld [vmem:[%s169 + $0x3e0] sm:$0xff]
      %v302 = vld [vmem:[%s169 + $0x3e8] sm:$0xff]
      %v303 = vld [vmem:[%s169 + $0x3f0] sm:$0xff]
      %v304 = vld [vmem:[%s169 + $0x3f8] sm:$0xff]
      %v305 = vld [vmem:[%s169 + $0x400] sm:$0xff]
      %v306 = vld [vmem:[%s169 + $0x408] sm:$0xff]
      %v307 = vld [vmem:[%s169 + $0x410] sm:$0xff]
      %v308 = vld [vmem:[%s169 + $0x418] sm:$0xff]
      %v309 = vld [vmem:[%s169 + $0x420] sm:$0xff]
      %v310 = vld [vmem:[%s169 + $0x428] sm:$0xff]
      %v311 = vld [vmem:[%s169 + $0x430] sm:$0xff]
      %v312 = vld [vmem:[%s169 + $0x438] sm:$0xff]
      %v313 = vld [vmem:[%s169 + $0x440] sm:$0xff]
      %v314 = vld [vmem:[%s169 + $0x448] sm:$0xff]
      %v315 = vld [vmem:[%s169 + $0x450] sm:$0xff]
      %v316 = vld [vmem:[%s169 + $0x458] sm:$0xff]
      %v317 = vld [vmem:[%s169 + $0x460] sm:$0xff]
      %v318 = vld [vmem:[%s169 + $0x468] sm:$0xff]
      %v319 = vld [vmem:[%s169 + $0x470] sm:$0xff]
      %v320 = vld [vmem:[%s169 + $0x478] sm:$0xff]
      %v321 = vld [vmem:[%s169 + $0x480] sm:$0xff]
      %v322 = vld [vmem:[%s169 + $0x488] sm:$0xff]
      %v323 = vld [vmem:[%s169 + $0x490] sm:$0xff]
      %v324 = vld [vmem:[%s169 + $0x498] sm:$0xff]
      %v325 = vld [vmem:[%s169 + $0x4a0] sm:$0xff]
      %v326 = vld [vmem:[%s169 + $0x4a8] sm:$0xff]
      %v327 = vld [vmem:[%s169 + $0x4b0] sm:$0xff]
      %v328 = vld [vmem:[%s169 + $0x4b8] sm:$0xff]
      %v329 = vld [vmem:[%s169 + $0x4c0] sm:$0xff]
      %v330 = vld [vmem:[%s169 + $0x4c8] sm:$0xff]
      %v331 = vld [vmem:[%s169 + $0x4d0] sm:$0xff]
      %v332 = vld [vmem:[%s169 + $0x4d8] sm:$0xff]
      %v333 = vld [vmem:[%s169 + $0x4e0] sm:$0xff]
      %v334 = vld [vmem:[%s169 + $0x4e8] sm:$0xff]
      %v335 = vld [vmem:[%s169 + $0x4f0] sm:$0xff]
      %v336 = vld [vmem:[%s169 + $0x4f8] sm:$0xff]
      %v337 = vld [vmem:[%s169 + $0x500] sm:$0xff]
      %v338 = vld [vmem:[%s169 + $0x508] sm:$0xff]
      %v339 = vld [vmem:[%s169 + $0x510] sm:$0xff]
      %v340 = vld [vmem:[%s169 + $0x518] sm:$0xff]
      %v341 = vld [vmem:[%s169 + $0x520] sm:$0xff]
      %v342 = vld [vmem:[%s169 + $0x528] sm:$0xff]
      %v343 = vld [vmem:[%s169 + $0x530] sm:$0xff]
      %v344 = vld [vmem:[%s169 + $0x538] sm:$0xff]
      %v345 = vld [vmem:[%s169 + $0x540] sm:$0xff]
      %v346 = vld [vmem:[%s169 + $0x548] sm:$0xff]
      %v347 = vld [vmem:[%s169 + $0x550] sm:$0xff]
      %v348 = vld [vmem:[%s169 + $0x558] sm:$0xff]
      %v349 = vld [vmem:[%s169 + $0x560] sm:$0xff]
      %v350 = vld [vmem:[%s169 + $0x568] sm:$0xff]
      %v351 = vld [vmem:[%s169 + $0x570] sm:$0xff]
      %v352 = vld [vmem:[%s169 + $0x578] sm:$0xff]
      %v353 = vld [vmem:[%s169 + $0x580] sm:$0xff]
      %v354 = vld [vmem:[%s169 + $0x588] sm:$0xff]
      %v355 = vld [vmem:[%s169 + $0x590] sm:$0xff]
      %v356 = vld [vmem:[%s169 + $0x598] sm:$0xff]
      %v357 = vld [vmem:[%s169 + $0x5a0] sm:$0xff]
      %v358 = vld [vmem:[%s169 + $0x5a8] sm:$0xff]
      %v359 = vld [vmem:[%s169 + $0x5b0] sm:$0xff]
      %v360 = vld [vmem:[%s169 + $0x5b8] sm:$0xff]
      %v361 = vld [vmem:[%s169 + $0x5c0] sm:$0xff]
      %v362 = vld [vmem:[%s169 + $0x5c8] sm:$0xff]
      %v363 = vld [vmem:[%s169 + $0x5d0] sm:$0xff]
      %v364 = vld [vmem:[%s169 + $0x5d8] sm:$0xff]
      %v365 = vld [vmem:[%s169 + $0x5e0] sm:$0xff]
      %v366 = vld [vmem:[%s169 + $0x5e8] sm:$0xff]
      %v367 = vld [vmem:[%s169 + $0x5f0] sm:$0xff]
      %v368 = vld [vmem:[%s169 + $0x5f8] sm:$0xff]
      %v369 = vld [vmem:[%s169 + $0x600] sm:$0xff]
      %v370 = vld [vmem:[%s169 + $0x608] sm:$0xff]
      %v371 = vld [vmem:[%s169 + $0x610] sm:$0xff]
      %v372 = vld [vmem:[%s169 + $0x618] sm:$0xff]
      %v373 = vld [vmem:[%s169 + $0x620] sm:$0xff]
      %v374 = vld [vmem:[%s169 + $0x628] sm:$0xff]
      %v375 = vld [vmem:[%s169 + $0x630] sm:$0xff]
      %v376 = vld [vmem:[%s169 + $0x638] sm:$0xff]
      %v377 = vld [vmem:[%s169 + $0x640] sm:$0xff]
      %v378 = vld [vmem:[%s169 + $0x648] sm:$0xff]
      %v379 = vld [vmem:[%s169 + $0x650] sm:$0xff]
      %v380 = vld [vmem:[%s169 + $0x658] sm:$0xff]
      %v381 = vld [vmem:[%s169 + $0x660] sm:$0xff]
      %v382 = vld [vmem:[%s169 + $0x668] sm:$0xff]
      %v383 = vld [vmem:[%s169 + $0x670] sm:$0xff]
      %v384 = vld [vmem:[%s169 + $0x678] sm:$0xff]
      %v385 = vld [vmem:[%s169 + $0x680] sm:$0xff]
      %v386 = vld [vmem:[%s169 + $0x688] sm:$0xff]
      %v387 = vld [vmem:[%s169 + $0x690] sm:$0xff]
      %v388 = vld [vmem:[%s169 + $0x698] sm:$0xff]
      %v389 = vld [vmem:[%s169 + $0x6a0] sm:$0xff]
      %v390 = vld [vmem:[%s169 + $0x6a8] sm:$0xff]
      %v391 = vld [vmem:[%s169 + $0x6b0] sm:$0xff]
      %v392 = vld [vmem:[%s169 + $0x6b8] sm:$0xff]
      %v393 = vld [vmem:[%s169 + $0x6c0] sm:$0xff]
      %v394 = vld [vmem:[%s169 + $0x6c8] sm:$0xff]
      %v395 = vld [vmem:[%s169 + $0x6d0] sm:$0xff]
      %v396 = vld [vmem:[%s169 + $0x6d8] sm:$0xff]
      %v397 = vld [vmem:[%s169 + $0x6e0] sm:$0xff]
      %v398 = vld [vmem:[%s169 + $0x6e8] sm:$0xff]
      %v399 = vld [vmem:[%s169 + $0x6f0] sm:$0xff]
      %v400 = vld [vmem:[%s169 + $0x6f8] sm:$0xff]
      %v401 = vld [vmem:[%s169 + $0x700] sm:$0xff]
      %v402 = vld [vmem:[%s169 + $0x708] sm:$0xff]
      %v403 = vld [vmem:[%s169 + $0x710] sm:$0xff]
      %v404 = vld [vmem:[%s169 + $0x718] sm:$0xff]
      %v405 = vld [vmem:[%s169 + $0x720] sm:$0xff]
      %v406 = vld [vmem:[%s169 + $0x728] sm:$0xff]
      %v407 = vld [vmem:[%s169 + $0x730] sm:$0xff]
      %v408 = vld [vmem:[%s169 + $0x738] sm:$0xff]
      %v409 = vld [vmem:[%s169 + $0x740] sm:$0xff]
      %v410 = vld [vmem:[%s169 + $0x748] sm:$0xff]
      %v411 = vld [vmem:[%s169 + $0x750] sm:$0xff]
      %v412 = vld [vmem:[%s169 + $0x758] sm:$0xff]
      %v413 = vld [vmem:[%s169 + $0x760] sm:$0xff]
      %v414 = vld [vmem:[%s169 + $0x768] sm:$0xff]
      %v415 = vld [vmem:[%s169 + $0x770] sm:$0xff]
      %v416 = vld [vmem:[%s169 + $0x778] sm:$0xff]
      %v417 = vld [vmem:[%s169 + $0x780] sm:$0xff]
      %v418 = vld [vmem:[%s169 + $0x788] sm:$0xff]
      %v419 = vld [vmem:[%s169 + $0x790] sm:$0xff]
      %v420 = vld [vmem:[%s169 + $0x798] sm:$0xff]
      %v421 = vld [vmem:[%s169 + $0x7a0] sm:$0xff]
      %v422 = vld [vmem:[%s169 + $0x7a8] sm:$0xff]
      %v423 = vld [vmem:[%s169 + $0x7b0] sm:$0xff]
      %v424 = vld [vmem:[%s169 + $0x7b8] sm:$0xff]
      %v425 = vld [vmem:[%s169 + $0x7c0] sm:$0xff]
      %v426 = vld [vmem:[%s169 + $0x7c8] sm:$0xff]
      %v427 = vld [vmem:[%s169 + $0x7d0] sm:$0xff]
      %v428 = vld [vmem:[%s169 + $0x7d8] sm:$0xff]
      %v429 = vld [vmem:[%s169 + $0x7e0] sm:$0xff]
      %v430 = vld [vmem:[%s169 + $0x7e8] sm:$0xff]
      %v431 = vld [vmem:[%s169 + $0x7f0] sm:$0xff]
      %v432 = vld [vmem:[%s169 + $0x7f8] sm:$0xff]
      %v433 = vld [vmem:[%s1] sm:$0xff]
      %v434 = vld [vmem:[%s1 + $0x8] sm:$0xff]
      %v435 = vld [vmem:[%s1 + $0x10] sm:$0xff]
      %v436 = vld [vmem:[%s1 + $0x18] sm:$0xff]
      %v437 = vld [vmem:[%s1 + $0x20] sm:$0xff]
      %v438 = vld [vmem:[%s1 + $0x28] sm:$0xff]
      %v439 = vld [vmem:[%s1 + $0x30] sm:$0xff]
      %v440 = vld [vmem:[%s1 + $0x38] sm:$0xff]
      %v441 = vld [vmem:[%s1 + $0x40] sm:$0xff]
      %v442 = vld [vmem:[%s1 + $0x48] sm:$0xff]
      %v443 = vld [vmem:[%s1 + $0x50] sm:$0xff]
      %v444 = vld [vmem:[%s1 + $0x58] sm:$0xff]
      %v445 = vld [vmem:[%s1 + $0x60] sm:$0xff]
      %v446 = vld [vmem:[%s1 + $0x68] sm:$0xff]
      %v447 = vld [vmem:[%s1 + $0x70] sm:$0xff]
      %v448 = vld [vmem:[%s1 + $0x78] sm:$0xff]
      %v449 = vld [vmem:[%s1 + $0x80] sm:$0xff]
      %v450 = vld [vmem:[%s1 + $0x88] sm:$0xff]
      %v451 = vld [vmem:[%s1 + $0x90] sm:$0xff]
      %v452 = vld [vmem:[%s1 + $0x98] sm:$0xff]
      %v453 = vld [vmem:[%s1 + $0xa0] sm:$0xff]
      %v454 = vld [vmem:[%s1 + $0xa8] sm:$0xff]
      %v455 = vld [vmem:[%s1 + $0xb0] sm:$0xff]
      %v456 = vld [vmem:[%s1 + $0xb8] sm:$0xff]
      %v457 = vld [vmem:[%s1 + $0xc0] sm:$0xff]
      %v458 = vld [vmem:[%s1 + $0xc8] sm:$0xff]
      %v459 = vld [vmem:[%s1 + $0xd0] sm:$0xff]
      %v460 = vld [vmem:[%s1 + $0xd8] sm:$0xff]
      %v461 = vld [vmem:[%s1 + $0xe0] sm:$0xff]
      %v462 = vld [vmem:[%s1 + $0xe8] sm:$0xff]
      %v463 = vld [vmem:[%s1 + $0xf0] sm:$0xff]
      %v464 = vld [vmem:[%s1 + $0xf8] sm:$0xff]
      %v465 = vld [vmem:[%s1 + $0x100] sm:$0xff]
      %v466 = vld [vmem:[%s1 + $0x108] sm:$0xff]
      %v467 = vld [vmem:[%s1 + $0x110] sm:$0xff]
      %v468 = vld [vmem:[%s1 + $0x118] sm:$0xff]
      %v469 = vld [vmem:[%s1 + $0x120] sm:$0xff]
      %v470 = vld [vmem:[%s1 + $0x128] sm:$0xff]
      %v471 = vld [vmem:[%s1 + $0x130] sm:$0xff]
      %v472 = vld [vmem:[%s1 + $0x138] sm:$0xff]
      %v473 = vld [vmem:[%s1 + $0x140] sm:$0xff]
      %v474 = vld [vmem:[%s1 + $0x148] sm:$0xff]
      %v475 = vld [vmem:[%s1 + $0x150] sm:$0xff]
      %v476 = vld [vmem:[%s1 + $0x158] sm:$0xff]
      %v477 = vld [vmem:[%s1 + $0x160] sm:$0xff]
      %v478 = vld [vmem:[%s1 + $0x168] sm:$0xff]
      %v479 = vld [vmem:[%s1 + $0x170] sm:$0xff]
      %v480 = vld [vmem:[%s1 + $0x178] sm:$0xff]
      %v481 = vld [vmem:[%s1 + $0x180] sm:$0xff]
      %v482 = vld [vmem:[%s1 + $0x188] sm:$0xff]
      %v483 = vld [vmem:[%s1 + $0x190] sm:$0xff]
      %v484 = vld [vmem:[%s1 + $0x198] sm:$0xff]
      %v485 = vld [vmem:[%s1 + $0x1a0] sm:$0xff]
      %v486 = vld [vmem:[%s1 + $0x1a8] sm:$0xff]
      %v487 = vld [vmem:[%s1 + $0x1b0] sm:$0xff]
      %v488 = vld [vmem:[%s1 + $0x1b8] sm:$0xff]
      %v489 = vld [vmem:[%s1 + $0x1c0] sm:$0xff]
      %v490 = vld [vmem:[%s1 + $0x1c8] sm:$0xff]
      %v491 = vld [vmem:[%s1 + $0x1d0] sm:$0xff]
      %v492 = vld [vmem:[%s1 + $0x1d8] sm:$0xff]
      %v493 = vld [vmem:[%s1 + $0x1e0] sm:$0xff]
      %v494 = vld [vmem:[%s1 + $0x1e8] sm:$0xff]
      %v495 = vld [vmem:[%s1 + $0x1f0] sm:$0xff]
      %v496 = vld [vmem:[%s1 + $0x1f8] sm:$0xff]
      %v497 = vld [vmem:[%s2] sm:$0x1]
      %v499 = vperm.slane %v497, 0
      %501 = vmatpush.msra.mxu0 %v448
      %502 = vmatpush.msra.mxu0 %v447
      %503 = vmatpush.msra.mxu0 %v446
      %504 = vmatpush.msra.mxu0 %v445
      %505 = vmatpush.msra.mxu0 %v444
      %506 = vmatpush.msra.mxu0 %v443
      %507 = vmatpush.msra.mxu0 %v442
      %508 = vmatpush.msra.mxu0 %v441
      %509 = vmatpush.msra.mxu0 %v440
      %510 = vmatpush.msra.mxu0 %v439
      %511 = vmatpush.msra.mxu0 %v438
      %512 = vmatpush.msra.mxu0 %v437
      %513 = vmatpush.msra.mxu0 %v436
      %514 = vmatpush.msra.mxu0 %v435
      %515 = vmatpush.msra.mxu0 %v434
      %516 = vmatpush.msra.mxu0 %v433
      %517 = vmatmul.f32.gmra.mxu0 %v177
      %v518 = vpop.f32.mrf.mxu0
      %v519 = vadd.f32 %v499, %v518
      %520 = vmatmul.f32.gmra.mxu0 %v181
      %v521 = vpop.f32.mrf.mxu0
      %v522 = vadd.f32 %v499, %v521
      %523 = vmatmul.f32.gmra.mxu0 %v185
      %v524 = vpop.f32.mrf.mxu0
      %v525 = vadd.f32 %v499, %v524
      %526 = vmatmul.f32.gmra.mxu0 %v189
      %v527 = vpop.f32.mrf.mxu0
      %v528 = vadd.f32 %v499, %v527
      %529 = vmatmul.f32.gmra.mxu0 %v193
      %v530 = vpop.f32.mrf.mxu0
      %v531 = vadd.f32 %v499, %v530
      %532 = vmatmul.f32.gmra.mxu0 %v197
      %v533 = vpop.f32.mrf.mxu0
      %v534 = vadd.f32 %v499, %v533
      %535 = vmatmul.f32.gmra.mxu0 %v201
      %v536 = vpop.f32.mrf.mxu0
      %v537 = vadd.f32 %v499, %v536
      %538 = vmatmul.f32.gmra.mxu0 %v205
      %v539 = vpop.f32.mrf.mxu0
      %v540 = vadd.f32 %v499, %v539
      %541 = vmatmul.f32.gmra.mxu0 %v209
      %v542 = vpop.f32.mrf.mxu0
      %v543 = vadd.f32 %v499, %v542
      %544 = vmatmul.f32.gmra.mxu0 %v213
      %v545 = vpop.f32.mrf.mxu0
      %v546 = vadd.f32 %v499, %v545
      %547 = vmatmul.f32.gmra.mxu0 %v217
      %v548 = vpop.f32.mrf.mxu0
      %v549 = vadd.f32 %v499, %v548
      %550 = vmatmul.f32.gmra.mxu0 %v221
      %v551 = vpop.f32.mrf.mxu0
      %v552 = vadd.f32 %v499, %v551
      %553 = vmatmul.f32.gmra.mxu0 %v225
      %v554 = vpop.f32.mrf.mxu0
      %v555 = vadd.f32 %v499, %v554
      %556 = vmatmul.f32.gmra.mxu0 %v229
      %v557 = vpop.f32.mrf.mxu0
      %v558 = vadd.f32 %v499, %v557
      %559 = vmatmul.f32.gmra.mxu0 %v233
      %v560 = vpop.f32.mrf.mxu0
      %v561 = vadd.f32 %v499, %v560
      %562 = vmatmul.f32.gmra.mxu0 %v237
      %v563 = vpop.f32.mrf.mxu0
      %v564 = vadd.f32 %v499, %v563
      %565 = vmatmul.f32.gmra.mxu0 %v241
      %v566 = vpop.f32.mrf.mxu0
      %v567 = vadd.f32 %v499, %v566
      %568 = vmatmul.f32.gmra.mxu0 %v245
      %v569 = vpop.f32.mrf.mxu0
      %v570 = vadd.f32 %v499, %v569
      %571 = vmatmul.f32.gmra.mxu0 %v249
      %v572 = vpop.f32.mrf.mxu0
      %v573 = vadd.f32 %v499, %v572
      %574 = vmatmul.f32.gmra.mxu0 %v253
      %v575 = vpop.f32.mrf.mxu0
      %v576 = vadd.f32 %v499, %v575
      %577 = vmatmul.f32.gmra.mxu0 %v257
      %v578 = vpop.f32.mrf.mxu0
      %v579 = vadd.f32 %v499, %v578
      %580 = vmatmul.f32.gmra.mxu0 %v261
      %v581 = vpop.f32.mrf.mxu0
      %v582 = vadd.f32 %v499, %v581
      %583 = vmatmul.f32.gmra.mxu0 %v265
      %v584 = vpop.f32.mrf.mxu0
      %v585 = vadd.f32 %v499, %v584
      %586 = vmatmul.f32.gmra.mxu0 %v269
      %v587 = vpop.f32.mrf.mxu0
      %v588 = vadd.f32 %v499, %v587
      %589 = vmatmul.f32.gmra.mxu0 %v273
      %v590 = vpop.f32.mrf.mxu0
      %v591 = vadd.f32 %v499, %v590
      %592 = vmatmul.f32.gmra.mxu0 %v277
      %v593 = vpop.f32.mrf.mxu0
      %v594 = vadd.f32 %v499, %v593
      %595 = vmatmul.f32.gmra.mxu0 %v281
      %v596 = vpop.f32.mrf.mxu0
      %v597 = vadd.f32 %v499, %v596
      %598 = vmatmul.f32.gmra.mxu0 %v285
      %v599 = vpop.f32.mrf.mxu0
      %v600 = vadd.f32 %v499, %v599
      %601 = vmatmul.f32.gmra.mxu0 %v289
      %v602 = vpop.f32.mrf.mxu0
      %v603 = vadd.f32 %v499, %v602
      %604 = vmatmul.f32.gmra.mxu0 %v293
      %v605 = vpop.f32.mrf.mxu0
      %v606 = vadd.f32 %v499, %v605
      %607 = vmatmul.f32.gmra.mxu0 %v297
      %v608 = vpop.f32.mrf.mxu0
      %v609 = vadd.f32 %v499, %v608
      %610 = vmatmul.f32.gmra.mxu0 %v301
      %v611 = vpop.f32.mrf.mxu0
      %v612 = vadd.f32 %v499, %v611
      %613 = vmatmul.f32.gmra.mxu0 %v305
      %v614 = vpop.f32.mrf.mxu0
      %v615 = vadd.f32 %v499, %v614
      %616 = vmatmul.f32.gmra.mxu0 %v309
      %v617 = vpop.f32.mrf.mxu0
      %v618 = vadd.f32 %v499, %v617
      %619 = vmatmul.f32.gmra.mxu0 %v313
      %v620 = vpop.f32.mrf.mxu0
      %v621 = vadd.f32 %v499, %v620
      %622 = vmatmul.f32.gmra.mxu0 %v317
      %v623 = vpop.f32.mrf.mxu0
      %v624 = vadd.f32 %v499, %v623
      %625 = vmatmul.f32.gmra.mxu0 %v321
      %v626 = vpop.f32.mrf.mxu0
      %v627 = vadd.f32 %v499, %v626
      %628 = vmatmul.f32.gmra.mxu0 %v325
      %v629 = vpop.f32.mrf.mxu0
      %v630 = vadd.f32 %v499, %v629
      %631 = vmatmul.f32.gmra.mxu0 %v329
      %v632 = vpop.f32.mrf.mxu0
      %v633 = vadd.f32 %v499, %v632
      %634 = vmatmul.f32.gmra.mxu0 %v333
      %v635 = vpop.f32.mrf.mxu0
      %v636 = vadd.f32 %v499, %v635
      %637 = vmatmul.f32.gmra.mxu0 %v337
      %v638 = vpop.f32.mrf.mxu0
      %v639 = vadd.f32 %v499, %v638
      %640 = vmatmul.f32.gmra.mxu0 %v341
      %v641 = vpop.f32.mrf.mxu0
      %v642 = vadd.f32 %v499, %v641
      %643 = vmatmul.f32.gmra.mxu0 %v345
      %v644 = vpop.f32.mrf.mxu0
      %v645 = vadd.f32 %v499, %v644
      %646 = vmatmul.f32.gmra.mxu0 %v349
      %v647 = vpop.f32.mrf.mxu0
      %v648 = vadd.f32 %v499, %v647
      %649 = vmatmul.f32.gmra.mxu0 %v353
      %v650 = vpop.f32.mrf.mxu0
      %v651 = vadd.f32 %v499, %v650
      %652 = vmatmul.f32.gmra.mxu0 %v357
      %v653 = vpop.f32.mrf.mxu0
      %v654 = vadd.f32 %v499, %v653
      %655 = vmatmul.f32.gmra.mxu0 %v361
      %v656 = vpop.f32.mrf.mxu0
      %v657 = vadd.f32 %v499, %v656
      %658 = vmatmul.f32.gmra.mxu0 %v365
      %v659 = vpop.f32.mrf.mxu0
      %v660 = vadd.f32 %v499, %v659
      %661 = vmatmul.f32.gmra.mxu0 %v369
      %v662 = vpop.f32.mrf.mxu0
      %v663 = vadd.f32 %v499, %v662
      %664 = vmatmul.f32.gmra.mxu0 %v373
      %v665 = vpop.f32.mrf.mxu0
      %v666 = vadd.f32 %v499, %v665
      %667 = vmatmul.f32.gmra.mxu0 %v377
      %v668 = vpop.f32.mrf.mxu0
      %v669 = vadd.f32 %v499, %v668
      %670 = vmatmul.f32.gmra.mxu0 %v381
      %v671 = vpop.f32.mrf.mxu0
      %v672 = vadd.f32 %v499, %v671
      %673 = vmatmul.f32.gmra.mxu0 %v385
      %v674 = vpop.f32.mrf.mxu0
      %v675 = vadd.f32 %v499, %v674
      %676 = vmatmul.f32.gmra.mxu0 %v389
      %v677 = vpop.f32.mrf.mxu0
      %v678 = vadd.f32 %v499, %v677
      %679 = vmatmul.f32.gmra.mxu0 %v393
      %v680 = vpop.f32.mrf.mxu0
      %v681 = vadd.f32 %v499, %v680
      %682 = vmatmul.f32.gmra.mxu0 %v397
      %v683 = vpop.f32.mrf.mxu0
      %v684 = vadd.f32 %v499, %v683
      %685 = vmatmul.f32.gmra.mxu0 %v401
      %v686 = vpop.f32.mrf.mxu0
      %v687 = vadd.f32 %v499, %v686
      %688 = vmatmul.f32.gmra.mxu0 %v405
      %v689 = vpop.f32.mrf.mxu0
      %v690 = vadd.f32 %v499, %v689
      %691 = vmatmul.f32.gmra.mxu0 %v409
      %v692 = vpop.f32.mrf.mxu0
      %v693 = vadd.f32 %v499, %v692
      %694 = vmatmul.f32.gmra.mxu0 %v413
      %v695 = vpop.f32.mrf.mxu0
      %v696 = vadd.f32 %v499, %v695
      %697 = vmatmul.f32.gmra.mxu0 %v417
      %v698 = vpop.f32.mrf.mxu0
      %v699 = vadd.f32 %v499, %v698
      %700 = vmatmul.f32.gmra.mxu0 %v421
      %v701 = vpop.f32.mrf.mxu0
      %v702 = vadd.f32 %v499, %v701
      %703 = vmatmul.f32.gmra.mxu0 %v425
      %v704 = vpop.f32.mrf.mxu0
      %v705 = vadd.f32 %v499, %v704
      %706 = vmatmul.f32.gmra.mxu0 %v429
      %v707 = vpop.f32.mrf.mxu0
      %v708 = vadd.f32 %v499, %v707
      %709 = vdwg.mxu0
      %710 = vmatpush.msra.mxu0 %v464
      %711 = vmatpush.msra.mxu0 %v463
      %712 = vmatpush.msra.mxu0 %v462
      %713 = vmatpush.msra.mxu0 %v461
      %714 = vmatpush.msra.mxu0 %v460
      %715 = vmatpush.msra.mxu0 %v459
      %716 = vmatpush.msra.mxu0 %v458
      %717 = vmatpush.msra.mxu0 %v457
      %718 = vmatpush.msra.mxu0 %v456
      %719 = vmatpush.msra.mxu0 %v455
      %720 = vmatpush.msra.mxu0 %v454
      %721 = vmatpush.msra.mxu0 %v453
      %722 = vmatpush.msra.mxu0 %v452
      %723 = vmatpush.msra.mxu0 %v451
      %724 = vmatpush.msra.mxu0 %v450
      %725 = vmatpush.msra.mxu0 %v449
      %726 = vmatmul.f32.gmra.mxu0 %v178
      %v727 = vpop.f32.mrf.mxu0
      %v728 = vadd.f32 %v519, %v727
      %729 = vmatmul.f32.gmra.mxu0 %v182
      %v730 = vpop.f32.mrf.mxu0
      %v731 = vadd.f32 %v522, %v730
      %732 = vmatmul.f32.gmra.mxu0 %v186
      %v733 = vpop.f32.mrf.mxu0
      %v734 = vadd.f32 %v525, %v733
      %735 = vmatmul.f32.gmra.mxu0 %v190
      %v736 = vpop.f32.mrf.mxu0
      %v737 = vadd.f32 %v528, %v736
      %738 = vmatmul.f32.gmra.mxu0 %v194
      %v739 = vpop.f32.mrf.mxu0
      %v740 = vadd.f32 %v531, %v739
      %741 = vmatmul.f32.gmra.mxu0 %v198
      %v742 = vpop.f32.mrf.mxu0
      %v743 = vadd.f32 %v534, %v742
      %744 = vmatmul.f32.gmra.mxu0 %v202
      %v745 = vpop.f32.mrf.mxu0
      %v746 = vadd.f32 %v537, %v745
      %747 = vmatmul.f32.gmra.mxu0 %v206
      %v748 = vpop.f32.mrf.mxu0
      %v749 = vadd.f32 %v540, %v748
      %750 = vmatmul.f32.gmra.mxu0 %v210
      %v751 = vpop.f32.mrf.mxu0
      %v752 = vadd.f32 %v543, %v751
      %753 = vmatmul.f32.gmra.mxu0 %v214
      %v754 = vpop.f32.mrf.mxu0
      %v755 = vadd.f32 %v546, %v754
      %756 = vmatmul.f32.gmra.mxu0 %v218
      %v757 = vpop.f32.mrf.mxu0
      %v758 = vadd.f32 %v549, %v757
      %759 = vmatmul.f32.gmra.mxu0 %v222
      %v760 = vpop.f32.mrf.mxu0
      %v761 = vadd.f32 %v552, %v760
      %762 = vmatmul.f32.gmra.mxu0 %v226
      %v763 = vpop.f32.mrf.mxu0
      %v764 = vadd.f32 %v555, %v763
      %765 = vmatmul.f32.gmra.mxu0 %v230
      %v766 = vpop.f32.mrf.mxu0
      %v767 = vadd.f32 %v558, %v766
      %768 = vmatmul.f32.gmra.mxu0 %v234
      %v769 = vpop.f32.mrf.mxu0
      %v770 = vadd.f32 %v561, %v769
      %771 = vmatmul.f32.gmra.mxu0 %v238
      %v772 = vpop.f32.mrf.mxu0
      %v773 = vadd.f32 %v564, %v772
      %774 = vmatmul.f32.gmra.mxu0 %v242
      %v775 = vpop.f32.mrf.mxu0
      %v776 = vadd.f32 %v567, %v775
      %777 = vmatmul.f32.gmra.mxu0 %v246
      %v778 = vpop.f32.mrf.mxu0
      %v779 = vadd.f32 %v570, %v778
      %780 = vmatmul.f32.gmra.mxu0 %v250
      %v781 = vpop.f32.mrf.mxu0
      %v782 = vadd.f32 %v573, %v781
      %783 = vmatmul.f32.gmra.mxu0 %v254
      %v784 = vpop.f32.mrf.mxu0
      %v785 = vadd.f32 %v576, %v784
      %786 = vmatmul.f32.gmra.mxu0 %v258
      %v787 = vpop.f32.mrf.mxu0
      %v788 = vadd.f32 %v579, %v787
      %789 = vmatmul.f32.gmra.mxu0 %v262
      %v790 = vpop.f32.mrf.mxu0
      %v791 = vadd.f32 %v582, %v790
      %792 = vmatmul.f32.gmra.mxu0 %v266
      %v793 = vpop.f32.mrf.mxu0
      %v794 = vadd.f32 %v585, %v793
      %795 = vmatmul.f32.gmra.mxu0 %v270
      %v796 = vpop.f32.mrf.mxu0
      %v797 = vadd.f32 %v588, %v796
      %798 = vmatmul.f32.gmra.mxu0 %v274
      %v799 = vpop.f32.mrf.mxu0
      %v800 = vadd.f32 %v591, %v799
      %801 = vmatmul.f32.gmra.mxu0 %v278
      %v802 = vpop.f32.mrf.mxu0
      %v803 = vadd.f32 %v594, %v802
      %804 = vmatmul.f32.gmra.mxu0 %v282
      %v805 = vpop.f32.mrf.mxu0
      %v806 = vadd.f32 %v597, %v805
      %807 = vmatmul.f32.gmra.mxu0 %v286
      %v808 = vpop.f32.mrf.mxu0
      %v809 = vadd.f32 %v600, %v808
      %810 = vmatmul.f32.gmra.mxu0 %v290
      %v811 = vpop.f32.mrf.mxu0
      %v812 = vadd.f32 %v603, %v811
      %813 = vmatmul.f32.gmra.mxu0 %v294
      %v814 = vpop.f32.mrf.mxu0
      %v815 = vadd.f32 %v606, %v814
      %816 = vmatmul.f32.gmra.mxu0 %v298
      %v817 = vpop.f32.mrf.mxu0
      %v818 = vadd.f32 %v609, %v817
      %819 = vmatmul.f32.gmra.mxu0 %v302
      %v820 = vpop.f32.mrf.mxu0
      %v821 = vadd.f32 %v612, %v820
      %822 = vmatmul.f32.gmra.mxu0 %v306
      %v823 = vpop.f32.mrf.mxu0
      %v824 = vadd.f32 %v615, %v823
      %825 = vmatmul.f32.gmra.mxu0 %v310
      %v826 = vpop.f32.mrf.mxu0
      %v827 = vadd.f32 %v618, %v826
      %828 = vmatmul.f32.gmra.mxu0 %v314
      %v829 = vpop.f32.mrf.mxu0
      %v830 = vadd.f32 %v621, %v829
      %831 = vmatmul.f32.gmra.mxu0 %v318
      %v832 = vpop.f32.mrf.mxu0
      %v833 = vadd.f32 %v624, %v832
      %834 = vmatmul.f32.gmra.mxu0 %v322
      %v835 = vpop.f32.mrf.mxu0
      %v836 = vadd.f32 %v627, %v835
      %837 = vmatmul.f32.gmra.mxu0 %v326
      %v838 = vpop.f32.mrf.mxu0
      %v839 = vadd.f32 %v630, %v838
      %840 = vmatmul.f32.gmra.mxu0 %v330
      %v841 = vpop.f32.mrf.mxu0
      %v842 = vadd.f32 %v633, %v841
      %843 = vmatmul.f32.gmra.mxu0 %v334
      %v844 = vpop.f32.mrf.mxu0
      %v845 = vadd.f32 %v636, %v844
      %846 = vmatmul.f32.gmra.mxu0 %v338
      %v847 = vpop.f32.mrf.mxu0
      %v848 = vadd.f32 %v639, %v847
      %849 = vmatmul.f32.gmra.mxu0 %v342
      %v850 = vpop.f32.mrf.mxu0
      %v851 = vadd.f32 %v642, %v850
      %852 = vmatmul.f32.gmra.mxu0 %v346
      %v853 = vpop.f32.mrf.mxu0
      %v854 = vadd.f32 %v645, %v853
      %855 = vmatmul.f32.gmra.mxu0 %v350
      %v856 = vpop.f32.mrf.mxu0
      %v857 = vadd.f32 %v648, %v856
      %858 = vmatmul.f32.gmra.mxu0 %v354
      %v859 = vpop.f32.mrf.mxu0
      %v860 = vadd.f32 %v651, %v859
      %861 = vmatmul.f32.gmra.mxu0 %v358
      %v862 = vpop.f32.mrf.mxu0
      %v863 = vadd.f32 %v654, %v862
      %864 = vmatmul.f32.gmra.mxu0 %v362
      %v865 = vpop.f32.mrf.mxu0
      %v866 = vadd.f32 %v657, %v865
      %867 = vmatmul.f32.gmra.mxu0 %v366
      %v868 = vpop.f32.mrf.mxu0
      %v869 = vadd.f32 %v660, %v868
      %870 = vmatmul.f32.gmra.mxu0 %v370
      %v871 = vpop.f32.mrf.mxu0
      %v872 = vadd.f32 %v663, %v871
      %873 = vmatmul.f32.gmra.mxu0 %v374
      %v874 = vpop.f32.mrf.mxu0
      %v875 = vadd.f32 %v666, %v874
      %876 = vmatmul.f32.gmra.mxu0 %v378
      %v877 = vpop.f32.mrf.mxu0
      %v878 = vadd.f32 %v669, %v877
      %879 = vmatmul.f32.gmra.mxu0 %v382
      %v880 = vpop.f32.mrf.mxu0
      %v881 = vadd.f32 %v672, %v880
      %882 = vmatmul.f32.gmra.mxu0 %v386
      %v883 = vpop.f32.mrf.mxu0
      %v884 = vadd.f32 %v675, %v883
      %885 = vmatmul.f32.gmra.mxu0 %v390
      %v886 = vpop.f32.mrf.mxu0
      %v887 = vadd.f32 %v678, %v886
      %888 = vmatmul.f32.gmra.mxu0 %v394
      %v889 = vpop.f32.mrf.mxu0
      %v890 = vadd.f32 %v681, %v889
      %891 = vmatmul.f32.gmra.mxu0 %v398
      %v892 = vpop.f32.mrf.mxu0
      %v893 = vadd.f32 %v684, %v892
      %894 = vmatmul.f32.gmra.mxu0 %v402
      %v895 = vpop.f32.mrf.mxu0
      %v896 = vadd.f32 %v687, %v895
      %897 = vmatmul.f32.gmra.mxu0 %v406
      %v898 = vpop.f32.mrf.mxu0
      %v899 = vadd.f32 %v690, %v898
      %900 = vmatmul.f32.gmra.mxu0 %v410
      %v901 = vpop.f32.mrf.mxu0
      %v902 = vadd.f32 %v693, %v901
      %903 = vmatmul.f32.gmra.mxu0 %v414
      %v904 = vpop.f32.mrf.mxu0
      %v905 = vadd.f32 %v696, %v904
      %906 = vmatmul.f32.gmra.mxu0 %v418
      %v907 = vpop.f32.mrf.mxu0
      %v908 = vadd.f32 %v699, %v907
      %909 = vmatmul.f32.gmra.mxu0 %v422
      %v910 = vpop.f32.mrf.mxu0
      %v911 = vadd.f32 %v702, %v910
      %912 = vmatmul.f32.gmra.mxu0 %v426
      %v913 = vpop.f32.mrf.mxu0
      %v914 = vadd.f32 %v705, %v913
      %915 = vmatmul.f32.gmra.mxu0 %v430
      %v916 = vpop.f32.mrf.mxu0
      %v917 = vadd.f32 %v708, %v916
      %918 = vdwg.mxu0
      %919 = vmatpush.msra.mxu0 %v480
      %920 = vmatpush.msra.mxu0 %v479
      %921 = vmatpush.msra.mxu0 %v478
      %922 = vmatpush.msra.mxu0 %v477
      %923 = vmatpush.msra.mxu0 %v476
      %924 = vmatpush.msra.mxu0 %v475
      %925 = vmatpush.msra.mxu0 %v474
      %926 = vmatpush.msra.mxu0 %v473
      %927 = vmatpush.msra.mxu0 %v472
      %928 = vmatpush.msra.mxu0 %v471
      %929 = vmatpush.msra.mxu0 %v470
      %930 = vmatpush.msra.mxu0 %v469
      %931 = vmatpush.msra.mxu0 %v468
      %932 = vmatpush.msra.mxu0 %v467
      %933 = vmatpush.msra.mxu0 %v466
      %934 = vmatpush.msra.mxu0 %v465
      %935 = vmatmul.f32.gmra.mxu0 %v179
      %v936 = vpop.f32.mrf.mxu0
      %v937 = vadd.f32 %v728, %v936
      %938 = vmatmul.f32.gmra.mxu0 %v183
      %v939 = vpop.f32.mrf.mxu0
      %v940 = vadd.f32 %v731, %v939
      %941 = vmatmul.f32.gmra.mxu0 %v187
      %v942 = vpop.f32.mrf.mxu0
      %v943 = vadd.f32 %v734, %v942
      %944 = vmatmul.f32.gmra.mxu0 %v191
      %v945 = vpop.f32.mrf.mxu0
      %v946 = vadd.f32 %v737, %v945
      %947 = vmatmul.f32.gmra.mxu0 %v195
      %v948 = vpop.f32.mrf.mxu0
      %v949 = vadd.f32 %v740, %v948
      %950 = vmatmul.f32.gmra.mxu0 %v199
      %v951 = vpop.f32.mrf.mxu0
      %v952 = vadd.f32 %v743, %v951
      %953 = vmatmul.f32.gmra.mxu0 %v203
      %v954 = vpop.f32.mrf.mxu0
      %v955 = vadd.f32 %v746, %v954
      %956 = vmatmul.f32.gmra.mxu0 %v207
      %v957 = vpop.f32.mrf.mxu0
      %v958 = vadd.f32 %v749, %v957
      %959 = vmatmul.f32.gmra.mxu0 %v211
      %v960 = vpop.f32.mrf.mxu0
      %v961 = vadd.f32 %v752, %v960
      %962 = vmatmul.f32.gmra.mxu0 %v215
      %v963 = vpop.f32.mrf.mxu0
      %v964 = vadd.f32 %v755, %v963
      %965 = vmatmul.f32.gmra.mxu0 %v219
      %v966 = vpop.f32.mrf.mxu0
      %v967 = vadd.f32 %v758, %v966
      %968 = vmatmul.f32.gmra.mxu0 %v223
      %v969 = vpop.f32.mrf.mxu0
      %v970 = vadd.f32 %v761, %v969
      %971 = vmatmul.f32.gmra.mxu0 %v227
      %v972 = vpop.f32.mrf.mxu0
      %v973 = vadd.f32 %v764, %v972
      %974 = vmatmul.f32.gmra.mxu0 %v231
      %v975 = vpop.f32.mrf.mxu0
      %v976 = vadd.f32 %v767, %v975
      %977 = vmatmul.f32.gmra.mxu0 %v235
      %v978 = vpop.f32.mrf.mxu0
      %v979 = vadd.f32 %v770, %v978
      %980 = vmatmul.f32.gmra.mxu0 %v239
      %v981 = vpop.f32.mrf.mxu0
      %v982 = vadd.f32 %v773, %v981
      %983 = vmatmul.f32.gmra.mxu0 %v243
      %v984 = vpop.f32.mrf.mxu0
      %v985 = vadd.f32 %v776, %v984
      %986 = vmatmul.f32.gmra.mxu0 %v247
      %v987 = vpop.f32.mrf.mxu0
      %v988 = vadd.f32 %v779, %v987
      %989 = vmatmul.f32.gmra.mxu0 %v251
      %v990 = vpop.f32.mrf.mxu0
      %v991 = vadd.f32 %v782, %v990
      %992 = vmatmul.f32.gmra.mxu0 %v255
      %v993 = vpop.f32.mrf.mxu0
      %v994 = vadd.f32 %v785, %v993
      %995 = vmatmul.f32.gmra.mxu0 %v259
      %v996 = vpop.f32.mrf.mxu0
      %v997 = vadd.f32 %v788, %v996
      %998 = vmatmul.f32.gmra.mxu0 %v263
      %v999 = vpop.f32.mrf.mxu0
      %v1000 = vadd.f32 %v791, %v999
      %1001 = vmatmul.f32.gmra.mxu0 %v267
      %v1002 = vpop.f32.mrf.mxu0
      %v1003 = vadd.f32 %v794, %v1002
      %1004 = vmatmul.f32.gmra.mxu0 %v271
      %v1005 = vpop.f32.mrf.mxu0
      %v1006 = vadd.f32 %v797, %v1005
      %1007 = vmatmul.f32.gmra.mxu0 %v275
      %v1008 = vpop.f32.mrf.mxu0
      %v1009 = vadd.f32 %v800, %v1008
      %1010 = vmatmul.f32.gmra.mxu0 %v279
      %v1011 = vpop.f32.mrf.mxu0
      %v1012 = vadd.f32 %v803, %v1011
      %1013 = vmatmul.f32.gmra.mxu0 %v283
      %v1014 = vpop.f32.mrf.mxu0
      %v1015 = vadd.f32 %v806, %v1014
      %1016 = vmatmul.f32.gmra.mxu0 %v287
      %v1017 = vpop.f32.mrf.mxu0
      %v1018 = vadd.f32 %v809, %v1017
      %1019 = vmatmul.f32.gmra.mxu0 %v291
      %v1020 = vpop.f32.mrf.mxu0
      %v1021 = vadd.f32 %v812, %v1020
      %1022 = vmatmul.f32.gmra.mxu0 %v295
      %v1023 = vpop.f32.mrf.mxu0
      %v1024 = vadd.f32 %v815, %v1023
      %1025 = vmatmul.f32.gmra.mxu0 %v299
      %v1026 = vpop.f32.mrf.mxu0
      %v1027 = vadd.f32 %v818, %v1026
      %1028 = vmatmul.f32.gmra.mxu0 %v303
      %v1029 = vpop.f32.mrf.mxu0
      %v1030 = vadd.f32 %v821, %v1029
      %1031 = vmatmul.f32.gmra.mxu0 %v307
      %v1032 = vpop.f32.mrf.mxu0
      %v1033 = vadd.f32 %v824, %v1032
      %1034 = vmatmul.f32.gmra.mxu0 %v311
      %v1035 = vpop.f32.mrf.mxu0
      %v1036 = vadd.f32 %v827, %v1035
      %1037 = vmatmul.f32.gmra.mxu0 %v315
      %v1038 = vpop.f32.mrf.mxu0
      %v1039 = vadd.f32 %v830, %v1038
      %1040 = vmatmul.f32.gmra.mxu0 %v319
      %v1041 = vpop.f32.mrf.mxu0
      %v1042 = vadd.f32 %v833, %v1041
      %1043 = vmatmul.f32.gmra.mxu0 %v323
      %v1044 = vpop.f32.mrf.mxu0
      %v1045 = vadd.f32 %v836, %v1044
      %1046 = vmatmul.f32.gmra.mxu0 %v327
      %v1047 = vpop.f32.mrf.mxu0
      %v1048 = vadd.f32 %v839, %v1047
      %1049 = vmatmul.f32.gmra.mxu0 %v331
      %v1050 = vpop.f32.mrf.mxu0
      %v1051 = vadd.f32 %v842, %v1050
      %1052 = vmatmul.f32.gmra.mxu0 %v335
      %v1053 = vpop.f32.mrf.mxu0
      %v1054 = vadd.f32 %v845, %v1053
      %1055 = vmatmul.f32.gmra.mxu0 %v339
      %v1056 = vpop.f32.mrf.mxu0
      %v1057 = vadd.f32 %v848, %v1056
      %1058 = vmatmul.f32.gmra.mxu0 %v343
      %v1059 = vpop.f32.mrf.mxu0
      %v1060 = vadd.f32 %v851, %v1059
      %1061 = vmatmul.f32.gmra.mxu0 %v347
      %v1062 = vpop.f32.mrf.mxu0
      %v1063 = vadd.f32 %v854, %v1062
      %1064 = vmatmul.f32.gmra.mxu0 %v351
      %v1065 = vpop.f32.mrf.mxu0
      %v1066 = vadd.f32 %v857, %v1065
      %1067 = vmatmul.f32.gmra.mxu0 %v355
      %v1068 = vpop.f32.mrf.mxu0
      %v1069 = vadd.f32 %v860, %v1068
      %1070 = vmatmul.f32.gmra.mxu0 %v359
      %v1071 = vpop.f32.mrf.mxu0
      %v1072 = vadd.f32 %v863, %v1071
      %1073 = vmatmul.f32.gmra.mxu0 %v363
      %v1074 = vpop.f32.mrf.mxu0
      %v1075 = vadd.f32 %v866, %v1074
      %1076 = vmatmul.f32.gmra.mxu0 %v367
      %v1077 = vpop.f32.mrf.mxu0
      %v1078 = vadd.f32 %v869, %v1077
      %1079 = vmatmul.f32.gmra.mxu0 %v371
      %v1080 = vpop.f32.mrf.mxu0
      %v1081 = vadd.f32 %v872, %v1080
      %1082 = vmatmul.f32.gmra.mxu0 %v375
      %v1083 = vpop.f32.mrf.mxu0
      %v1084 = vadd.f32 %v875, %v1083
      %1085 = vmatmul.f32.gmra.mxu0 %v379
      %v1086 = vpop.f32.mrf.mxu0
      %v1087 = vadd.f32 %v878, %v1086
      %1088 = vmatmul.f32.gmra.mxu0 %v383
      %v1089 = vpop.f32.mrf.mxu0
      %v1090 = vadd.f32 %v881, %v1089
      %1091 = vmatmul.f32.gmra.mxu0 %v387
      %v1092 = vpop.f32.mrf.mxu0
      %v1093 = vadd.f32 %v884, %v1092
      %1094 = vmatmul.f32.gmra.mxu0 %v391
      %v1095 = vpop.f32.mrf.mxu0
      %v1096 = vadd.f32 %v887, %v1095
      %1097 = vmatmul.f32.gmra.mxu0 %v395
      %v1098 = vpop.f32.mrf.mxu0
      %v1099 = vadd.f32 %v890, %v1098
      %1100 = vmatmul.f32.gmra.mxu0 %v399
      %v1101 = vpop.f32.mrf.mxu0
      %v1102 = vadd.f32 %v893, %v1101
      %1103 = vmatmul.f32.gmra.mxu0 %v403
      %v1104 = vpop.f32.mrf.mxu0
      %v1105 = vadd.f32 %v896, %v1104
      %1106 = vmatmul.f32.gmra.mxu0 %v407
      %v1107 = vpop.f32.mrf.mxu0
      %v1108 = vadd.f32 %v899, %v1107
      %1109 = vmatmul.f32.gmra.mxu0 %v411
      %v1110 = vpop.f32.mrf.mxu0
      %v1111 = vadd.f32 %v902, %v1110
      %1112 = vmatmul.f32.gmra.mxu0 %v415
      %v1113 = vpop.f32.mrf.mxu0
      %v1114 = vadd.f32 %v905, %v1113
      %1115 = vmatmul.f32.gmra.mxu0 %v419
      %v1116 = vpop.f32.mrf.mxu0
      %v1117 = vadd.f32 %v908, %v1116
      %1118 = vmatmul.f32.gmra.mxu0 %v423
      %v1119 = vpop.f32.mrf.mxu0
      %v1120 = vadd.f32 %v911, %v1119
      %1121 = vmatmul.f32.gmra.mxu0 %v427
      %v1122 = vpop.f32.mrf.mxu0
      %v1123 = vadd.f32 %v914, %v1122
      %1124 = vmatmul.f32.gmra.mxu0 %v431
      %v1125 = vpop.f32.mrf.mxu0
      %v1126 = vadd.f32 %v917, %v1125
      %1127 = vdwg.mxu0
      %1128 = vmatpush.msra.mxu0 %v496
      %1129 = vmatpush.msra.mxu0 %v495
      %1130 = vmatpush.msra.mxu0 %v494
      %1131 = vmatpush.msra.mxu0 %v493
      %1132 = vmatpush.msra.mxu0 %v492
      %1133 = vmatpush.msra.mxu0 %v491
      %1134 = vmatpush.msra.mxu0 %v490
      %1135 = vmatpush.msra.mxu0 %v489
      %1136 = vmatpush.msra.mxu0 %v488
      %1137 = vmatpush.msra.mxu0 %v487
      %1138 = vmatpush.msra.mxu0 %v486
      %1139 = vmatpush.msra.mxu0 %v485
      %1140 = vmatpush.msra.mxu0 %v484
      %1141 = vmatpush.msra.mxu0 %v483
      %1142 = vmatpush.msra.mxu0 %v482
      %1143 = vmatpush.msra.mxu0 %v481
      %1144 = vmatmul.f32.gmra.mxu0 %v180
      %v1145 = vpop.f32.mrf.mxu0
      %v1146 = vadd.f32 %v937, %v1145
      %1147 = vmatmul.f32.gmra.mxu0 %v184
      %v1148 = vpop.f32.mrf.mxu0
      %v1149 = vadd.f32 %v940, %v1148
      %1150 = vmatmul.f32.gmra.mxu0 %v188
      %v1151 = vpop.f32.mrf.mxu0
      %v1152 = vadd.f32 %v943, %v1151
      %1153 = vmatmul.f32.gmra.mxu0 %v192
      %v1154 = vpop.f32.mrf.mxu0
      %v1155 = vadd.f32 %v946, %v1154
      %1156 = vmatmul.f32.gmra.mxu0 %v196
      %v1157 = vpop.f32.mrf.mxu0
      %v1158 = vadd.f32 %v949, %v1157
      %1159 = vmatmul.f32.gmra.mxu0 %v200
      %v1160 = vpop.f32.mrf.mxu0
      %v1161 = vadd.f32 %v952, %v1160
      %1162 = vmatmul.f32.gmra.mxu0 %v204
      %v1163 = vpop.f32.mrf.mxu0
      %v1164 = vadd.f32 %v955, %v1163
      %1165 = vmatmul.f32.gmra.mxu0 %v208
      %v1166 = vpop.f32.mrf.mxu0
      %v1167 = vadd.f32 %v958, %v1166
      %1168 = vmatmul.f32.gmra.mxu0 %v212
      %v1169 = vpop.f32.mrf.mxu0
      %v1170 = vadd.f32 %v961, %v1169
      %1171 = vmatmul.f32.gmra.mxu0 %v216
      %v1172 = vpop.f32.mrf.mxu0
      %v1173 = vadd.f32 %v964, %v1172
      %1174 = vmatmul.f32.gmra.mxu0 %v220
      %v1175 = vpop.f32.mrf.mxu0
      %v1176 = vadd.f32 %v967, %v1175
      %1177 = vmatmul.f32.gmra.mxu0 %v224
      %v1178 = vpop.f32.mrf.mxu0
      %v1179 = vadd.f32 %v970, %v1178
      %1180 = vmatmul.f32.gmra.mxu0 %v228
      %v1181 = vpop.f32.mrf.mxu0
      %v1182 = vadd.f32 %v973, %v1181
      %1183 = vmatmul.f32.gmra.mxu0 %v232
      %v1184 = vpop.f32.mrf.mxu0
      %v1185 = vadd.f32 %v976, %v1184
      %1186 = vmatmul.f32.gmra.mxu0 %v236
      %v1187 = vpop.f32.mrf.mxu0
      %v1188 = vadd.f32 %v979, %v1187
      %1189 = vmatmul.f32.gmra.mxu0 %v240
      %v1190 = vpop.f32.mrf.mxu0
      %v1191 = vadd.f32 %v982, %v1190
      %1192 = vmatmul.f32.gmra.mxu0 %v244
      %v1193 = vpop.f32.mrf.mxu0
      %v1194 = vadd.f32 %v985, %v1193
      %1195 = vmatmul.f32.gmra.mxu0 %v248
      %v1196 = vpop.f32.mrf.mxu0
      %v1197 = vadd.f32 %v988, %v1196
      %1198 = vmatmul.f32.gmra.mxu0 %v252
      %v1199 = vpop.f32.mrf.mxu0
      %v1200 = vadd.f32 %v991, %v1199
      %1201 = vmatmul.f32.gmra.mxu0 %v256
      %v1202 = vpop.f32.mrf.mxu0
      %v1203 = vadd.f32 %v994, %v1202
      %1204 = vmatmul.f32.gmra.mxu0 %v260
      %v1205 = vpop.f32.mrf.mxu0
      %v1206 = vadd.f32 %v997, %v1205
      %1207 = vmatmul.f32.gmra.mxu0 %v264
      %v1208 = vpop.f32.mrf.mxu0
      %v1209 = vadd.f32 %v1000, %v1208
      %1210 = vmatmul.f32.gmra.mxu0 %v268
      %v1211 = vpop.f32.mrf.mxu0
      %v1212 = vadd.f32 %v1003, %v1211
      %1213 = vmatmul.f32.gmra.mxu0 %v272
      %v1214 = vpop.f32.mrf.mxu0
      %v1215 = vadd.f32 %v1006, %v1214
      %1216 = vmatmul.f32.gmra.mxu0 %v276
      %v1217 = vpop.f32.mrf.mxu0
      %v1218 = vadd.f32 %v1009, %v1217
      %1219 = vmatmul.f32.gmra.mxu0 %v280
      %v1220 = vpop.f32.mrf.mxu0
      %v1221 = vadd.f32 %v1012, %v1220
      %1222 = vmatmul.f32.gmra.mxu0 %v284
      %v1223 = vpop.f32.mrf.mxu0
      %v1224 = vadd.f32 %v1015, %v1223
      %1225 = vmatmul.f32.gmra.mxu0 %v288
      %v1226 = vpop.f32.mrf.mxu0
      %v1227 = vadd.f32 %v1018, %v1226
      %1228 = vmatmul.f32.gmra.mxu0 %v292
      %v1229 = vpop.f32.mrf.mxu0
      %v1230 = vadd.f32 %v1021, %v1229
      %1231 = vmatmul.f32.gmra.mxu0 %v296
      %v1232 = vpop.f32.mrf.mxu0
      %v1233 = vadd.f32 %v1024, %v1232
      %1234 = vmatmul.f32.gmra.mxu0 %v300
      %v1235 = vpop.f32.mrf.mxu0
      %v1236 = vadd.f32 %v1027, %v1235
      %1237 = vmatmul.f32.gmra.mxu0 %v304
      %v1238 = vpop.f32.mrf.mxu0
      %v1239 = vadd.f32 %v1030, %v1238
      %1240 = vmatmul.f32.gmra.mxu0 %v308
      %v1241 = vpop.f32.mrf.mxu0
      %v1242 = vadd.f32 %v1033, %v1241
      %1243 = vmatmul.f32.gmra.mxu0 %v312
      %v1244 = vpop.f32.mrf.mxu0
      %v1245 = vadd.f32 %v1036, %v1244
      %1246 = vmatmul.f32.gmra.mxu0 %v316
      %v1247 = vpop.f32.mrf.mxu0
      %v1248 = vadd.f32 %v1039, %v1247
      %1249 = vmatmul.f32.gmra.mxu0 %v320
      %v1250 = vpop.f32.mrf.mxu0
      %v1251 = vadd.f32 %v1042, %v1250
      %1252 = vmatmul.f32.gmra.mxu0 %v324
      %v1253 = vpop.f32.mrf.mxu0
      %v1254 = vadd.f32 %v1045, %v1253
      %1255 = vmatmul.f32.gmra.mxu0 %v328
      %v1256 = vpop.f32.mrf.mxu0
      %v1257 = vadd.f32 %v1048, %v1256
      %1258 = vmatmul.f32.gmra.mxu0 %v332
      %v1259 = vpop.f32.mrf.mxu0
      %v1260 = vadd.f32 %v1051, %v1259
      %1261 = vmatmul.f32.gmra.mxu0 %v336
      %v1262 = vpop.f32.mrf.mxu0
      %v1263 = vadd.f32 %v1054, %v1262
      %1264 = vmatmul.f32.gmra.mxu0 %v340
      %v1265 = vpop.f32.mrf.mxu0
      %v1266 = vadd.f32 %v1057, %v1265
      %1267 = vmatmul.f32.gmra.mxu0 %v344
      %v1268 = vpop.f32.mrf.mxu0
      %v1269 = vadd.f32 %v1060, %v1268
      %1270 = vmatmul.f32.gmra.mxu0 %v348
      %v1271 = vpop.f32.mrf.mxu0
      %v1272 = vadd.f32 %v1063, %v1271
      %1273 = vmatmul.f32.gmra.mxu0 %v352
      %v1274 = vpop.f32.mrf.mxu0
      %v1275 = vadd.f32 %v1066, %v1274
      %1276 = vmatmul.f32.gmra.mxu0 %v356
      %v1277 = vpop.f32.mrf.mxu0
      %v1278 = vadd.f32 %v1069, %v1277
      %1279 = vmatmul.f32.gmra.mxu0 %v360
      %v1280 = vpop.f32.mrf.mxu0
      %v1281 = vadd.f32 %v1072, %v1280
      %1282 = vmatmul.f32.gmra.mxu0 %v364
      %v1283 = vpop.f32.mrf.mxu0
      %v1284 = vadd.f32 %v1075, %v1283
      %1285 = vmatmul.f32.gmra.mxu0 %v368
      %v1286 = vpop.f32.mrf.mxu0
      %v1287 = vadd.f32 %v1078, %v1286
      %1288 = vmatmul.f32.gmra.mxu0 %v372
      %v1289 = vpop.f32.mrf.mxu0
      %v1290 = vadd.f32 %v1081, %v1289
      %1291 = vmatmul.f32.gmra.mxu0 %v376
      %v1292 = vpop.f32.mrf.mxu0
      %v1293 = vadd.f32 %v1084, %v1292
      %1294 = vmatmul.f32.gmra.mxu0 %v380
      %v1295 = vpop.f32.mrf.mxu0
      %v1296 = vadd.f32 %v1087, %v1295
      %1297 = vmatmul.f32.gmra.mxu0 %v384
      %v1298 = vpop.f32.mrf.mxu0
      %v1299 = vadd.f32 %v1090, %v1298
      %1300 = vmatmul.f32.gmra.mxu0 %v388
      %v1301 = vpop.f32.mrf.mxu0
      %v1302 = vadd.f32 %v1093, %v1301
      %1303 = vmatmul.f32.gmra.mxu0 %v392
      %v1304 = vpop.f32.mrf.mxu0
      %v1305 = vadd.f32 %v1096, %v1304
      %1306 = vmatmul.f32.gmra.mxu0 %v396
      %v1307 = vpop.f32.mrf.mxu0
      %v1308 = vadd.f32 %v1099, %v1307
      %1309 = vmatmul.f32.gmra.mxu0 %v400
      %v1310 = vpop.f32.mrf.mxu0
      %v1311 = vadd.f32 %v1102, %v1310
      %1312 = vmatmul.f32.gmra.mxu0 %v404
      %v1313 = vpop.f32.mrf.mxu0
      %v1314 = vadd.f32 %v1105, %v1313
      %1315 = vmatmul.f32.gmra.mxu0 %v408
      %v1316 = vpop.f32.mrf.mxu0
      %v1317 = vadd.f32 %v1108, %v1316
      %1318 = vmatmul.f32.gmra.mxu0 %v412
      %v1319 = vpop.f32.mrf.mxu0
      %v1320 = vadd.f32 %v1111, %v1319
      %1321 = vmatmul.f32.gmra.mxu0 %v416
      %v1322 = vpop.f32.mrf.mxu0
      %v1323 = vadd.f32 %v1114, %v1322
      %1324 = vmatmul.f32.gmra.mxu0 %v420
      %v1325 = vpop.f32.mrf.mxu0
      %v1326 = vadd.f32 %v1117, %v1325
      %1327 = vmatmul.f32.gmra.mxu0 %v424
      %v1328 = vpop.f32.mrf.mxu0
      %v1329 = vadd.f32 %v1120, %v1328
      %1330 = vmatmul.f32.gmra.mxu0 %v428
      %v1331 = vpop.f32.mrf.mxu0
      %v1332 = vadd.f32 %v1123, %v1331
      %1333 = vmatmul.f32.gmra.mxu0 %v432
      %v1334 = vpop.f32.mrf.mxu0
      %v1335 = vadd.f32 %v1126, %v1334
      %1336 = vdwg.mxu0
      %v1337 = vmax.f32 %v1146, 0.0
      %v1338 = vmax.f32 %v1149, 0.0
      %v1339 = vmax.f32 %v1152, 0.0
      %v1340 = vmax.f32 %v1155, 0.0
      %v1341 = vmax.f32 %v1158, 0.0
      %v1342 = vmax.f32 %v1161, 0.0
      %v1343 = vmax.f32 %v1164, 0.0
      %v1344 = vmax.f32 %v1167, 0.0
      %v1345 = vmax.f32 %v1170, 0.0
      %v1346 = vmax.f32 %v1173, 0.0
      %v1347 = vmax.f32 %v1176, 0.0
      %v1348 = vmax.f32 %v1179, 0.0
      %v1349 = vmax.f32 %v1182, 0.0
      %v1350 = vmax.f32 %v1185, 0.0
      %v1351 = vmax.f32 %v1188, 0.0
      %v1352 = vmax.f32 %v1191, 0.0
      %v1353 = vmax.f32 %v1194, 0.0
      %v1354 = vmax.f32 %v1197, 0.0
      %v1355 = vmax.f32 %v1200, 0.0
      %v1356 = vmax.f32 %v1203, 0.0
      %v1357 = vmax.f32 %v1206, 0.0
      %v1358 = vmax.f32 %v1209, 0.0
      %v1359 = vmax.f32 %v1212, 0.0
      %v1360 = vmax.f32 %v1215, 0.0
      %v1361 = vmax.f32 %v1218, 0.0
      %v1362 = vmax.f32 %v1221, 0.0
      %v1363 = vmax.f32 %v1224, 0.0
      %v1364 = vmax.f32 %v1227, 0.0
      %v1365 = vmax.f32 %v1230, 0.0
      %v1366 = vmax.f32 %v1233, 0.0
      %v1367 = vmax.f32 %v1236, 0.0
      %v1368 = vmax.f32 %v1239, 0.0
      %v1369 = vmax.f32 %v1242, 0.0
      %v1370 = vmax.f32 %v1245, 0.0
      %v1371 = vmax.f32 %v1248, 0.0
      %v1372 = vmax.f32 %v1251, 0.0
      %v1373 = vmax.f32 %v1254, 0.0
      %v1374 = vmax.f32 %v1257, 0.0
      %v1375 = vmax.f32 %v1260, 0.0
      %v1376 = vmax.f32 %v1263, 0.0
      %v1377 = vmax.f32 %v1266, 0.0
      %v1378 = vmax.f32 %v1269, 0.0
      %v1379 = vmax.f32 %v1272, 0.0
      %v1380 = vmax.f32 %v1275, 0.0
      %v1381 = vmax.f32 %v1278, 0.0
      %v1382 = vmax.f32 %v1281, 0.0
      %v1383 = vmax.f32 %v1284, 0.0
      %v1384 = vmax.f32 %v1287, 0.0
      %v1385 = vmax.f32 %v1290, 0.0
      %v1386 = vmax.f32 %v1293, 0.0
      %v1387 = vmax.f32 %v1296, 0.0
      %v1388 = vmax.f32 %v1299, 0.0
      %v1389 = vmax.f32 %v1302, 0.0
      %v1390 = vmax.f32 %v1305, 0.0
      %v1391 = vmax.f32 %v1308, 0.0
      %v1392 = vmax.f32 %v1311, 0.0
      %v1393 = vmax.f32 %v1314, 0.0
      %v1394 = vmax.f32 %v1317, 0.0
      %v1395 = vmax.f32 %v1320, 0.0
      %v1396 = vmax.f32 %v1323, 0.0
      %v1397 = vmax.f32 %v1326, 0.0
      %v1398 = vmax.f32 %v1329, 0.0
      %v1399 = vmax.f32 %v1332, 0.0
      %v1400 = vmax.f32 %v1335, 0.0
      %vm1401 = vcmask 523264
      %1402 = vst.msk [vmem:[%s175] sm:$0xff] %vm1401, %v1337
      %1403 = vst.msk [vmem:[%s175 + $0x8] sm:$0xff] %vm1401, %v1338
      %1404 = vst.msk [vmem:[%s175 + $0x10] sm:$0xff] %vm1401, %v1339
      %1405 = vst.msk [vmem:[%s175 + $0x18] sm:$0xff] %vm1401, %v1340
      %1406 = vst.msk [vmem:[%s175 + $0x20] sm:$0xff] %vm1401, %v1341
      %1407 = vst.msk [vmem:[%s175 + $0x28] sm:$0xff] %vm1401, %v1342
      %1408 = vst.msk [vmem:[%s175 + $0x30] sm:$0xff] %vm1401, %v1343
      %1409 = vst.msk [vmem:[%s175 + $0x38] sm:$0xff] %vm1401, %v1344
      %1410 = vst.msk [vmem:[%s175 + $0x40] sm:$0xff] %vm1401, %v1345
      %1411 = vst.msk [vmem:[%s175 + $0x48] sm:$0xff] %vm1401, %v1346
      %1412 = vst.msk [vmem:[%s175 + $0x50] sm:$0xff] %vm1401, %v1347
      %1413 = vst.msk [vmem:[%s175 + $0x58] sm:$0xff] %vm1401, %v1348
      %1414 = vst.msk [vmem:[%s175 + $0x60] sm:$0xff] %vm1401, %v1349
      %1415 = vst.msk [vmem:[%s175 + $0x68] sm:$0xff] %vm1401, %v1350
      %1416 = vst.msk [vmem:[%s175 + $0x70] sm:$0xff] %vm1401, %v1351
      %1417 = vst.msk [vmem:[%s175 + $0x78] sm:$0xff] %vm1401, %v1352
      %1418 = vst.msk [vmem:[%s175 + $0x80] sm:$0xff] %vm1401, %v1353
      %1419 = vst.msk [vmem:[%s175 + $0x88] sm:$0xff] %vm1401, %v1354
      %1420 = vst.msk [vmem:[%s175 + $0x90] sm:$0xff] %vm1401, %v1355
      %1421 = vst.msk [vmem:[%s175 + $0x98] sm:$0xff] %vm1401, %v1356
      %1422 = vst.msk [vmem:[%s175 + $0xa0] sm:$0xff] %vm1401, %v1357
      %1423 = vst.msk [vmem:[%s175 + $0xa8] sm:$0xff] %vm1401, %v1358
      %1424 = vst.msk [vmem:[%s175 + $0xb0] sm:$0xff] %vm1401, %v1359
      %1425 = vst.msk [vmem:[%s175 + $0xb8] sm:$0xff] %vm1401, %v1360
      %1426 = vst.msk [vmem:[%s175 + $0xc0] sm:$0xff] %vm1401, %v1361
      %1427 = vst.msk [vmem:[%s175 + $0xc8] sm:$0xff] %vm1401, %v1362
      %1428 = vst.msk [vmem:[%s175 + $0xd0] sm:$0xff] %vm1401, %v1363
      %1429 = vst.msk [vmem:[%s175 + $0xd8] sm:$0xff] %vm1401, %v1364
      %1430 = vst.msk [vmem:[%s175 + $0xe0] sm:$0xff] %vm1401, %v1365
      %1431 = vst.msk [vmem:[%s175 + $0xe8] sm:$0xff] %vm1401, %v1366
      %1432 = vst.msk [vmem:[%s175 + $0xf0] sm:$0xff] %vm1401, %v1367
      %1433 = vst.msk [vmem:[%s175 + $0xf8] sm:$0xff] %vm1401, %v1368
      %1434 = vst.msk [vmem:[%s175 + $0x100] sm:$0xff] %vm1401, %v1369
      %1435 = vst.msk [vmem:[%s175 + $0x108] sm:$0xff] %vm1401, %v1370
      %1436 = vst.msk [vmem:[%s175 + $0x110] sm:$0xff] %vm1401, %v1371
      %1437 = vst.msk [vmem:[%s175 + $0x118] sm:$0xff] %vm1401, %v1372
      %1438 = vst.msk [vmem:[%s175 + $0x120] sm:$0xff] %vm1401, %v1373
      %1439 = vst.msk [vmem:[%s175 + $0x128] sm:$0xff] %vm1401, %v1374
      %1440 = vst.msk [vmem:[%s175 + $0x130] sm:$0xff] %vm1401, %v1375
      %1441 = vst.msk [vmem:[%s175 + $0x138] sm:$0xff] %vm1401, %v1376
      %1442 = vst.msk [vmem:[%s175 + $0x140] sm:$0xff] %vm1401, %v1377
      %1443 = vst.msk [vmem:[%s175 + $0x148] sm:$0xff] %vm1401, %v1378
      %1444 = vst.msk [vmem:[%s175 + $0x150] sm:$0xff] %vm1401, %v1379
      %1445 = vst.msk [vmem:[%s175 + $0x158] sm:$0xff] %vm1401, %v1380
      %1446 = vst.msk [vmem:[%s175 + $0x160] sm:$0xff] %vm1401, %v1381
      %1447 = vst.msk [vmem:[%s175 + $0x168] sm:$0xff] %vm1401, %v1382
      %1448 = vst.msk [vmem:[%s175 + $0x170] sm:$0xff] %vm1401, %v1383
      %1449 = vst.msk [vmem:[%s175 + $0x178] sm:$0xff] %vm1401, %v1384
      %1450 = vst.msk [vmem:[%s175 + $0x180] sm:$0xff] %vm1401, %v1385
      %1451 = vst.msk [vmem:[%s175 + $0x188] sm:$0xff] %vm1401, %v1386
      %1452 = vst.msk [vmem:[%s175 + $0x190] sm:$0xff] %vm1401, %v1387
      %1453 = vst.msk [vmem:[%s175 + $0x198] sm:$0xff] %vm1401, %v1388
      %1454 = vst.msk [vmem:[%s175 + $0x1a0] sm:$0xff] %vm1401, %v1389
      %1455 = vst.msk [vmem:[%s175 + $0x1a8] sm:$0xff] %vm1401, %v1390
      %1456 = vst.msk [vmem:[%s175 + $0x1b0] sm:$0xff] %vm1401, %v1391
      %1457 = vst.msk [vmem:[%s175 + $0x1b8] sm:$0xff] %vm1401, %v1392
      %1458 = vst.msk [vmem:[%s175 + $0x1c0] sm:$0xff] %vm1401, %v1393
      %1459 = vst.msk [vmem:[%s175 + $0x1c8] sm:$0xff] %vm1401, %v1394
      %1460 = vst.msk [vmem:[%s175 + $0x1d0] sm:$0xff] %vm1401, %v1395
      %1461 = vst.msk [vmem:[%s175 + $0x1d8] sm:$0xff] %vm1401, %v1396
      %1462 = vst.msk [vmem:[%s175 + $0x1e0] sm:$0xff] %vm1401, %v1397
      %1463 = vst.msk [vmem:[%s175 + $0x1e8] sm:$0xff] %vm1401, %v1398
      %1464 = vst.msk [vmem:[%s175 + $0x1f0] sm:$0xff] %vm1401, %v1399
      %1465 = vst.msk [vmem:[%s175 + $0x1f8] sm:$0xff] %vm1401, %v1400
      %s1466 = smul.u32 64, %s14
      %p1467 = scmp.lt.s32.totalorder %s1466, 127
      %s1468 = scalar_select %p1467, %s1466, 127
      %s1469 = smul.addr %s1468, 8
      %s1470 = scalar_lea.vmem %s3, %s1469
      // Predicated region
      $region33: #{_lambda_.5} parent=31 // pred_check
        %p1471 = pneg %p100
      $region34: #{_lambda_.5} parent=31 // pred_check_branch
        %1473 = sbr.rel (%p1471) target = $region36
      $region35: #{_lambda_.5} parent=31 // pred_region
        %s1474 = smul.u32 64, %s14
      $region36: #{_lambda_.5} parent=31 // pred_fallthru
        _
    $region32: #{_lambda_.5} parent=5 // pred_fallthru
      _
    %p1475 = scmp.le.s32.totalorder 2, %s9
    // Predicated region
    $region37: #{_lambda_.5} parent=5 // pred_check
      %p1476 = pneg %p1475
    $region38: #{_lambda_.5} parent=5 // pred_check_branch
      %1478 = sbr.rel (%p1476) target = $region40
    $region39: #{_lambda_.5} parent=5 // pred_region
      %s1479 = ssub.s32 %s9, 2
      // Predicated region
      $region41: #{_lambda_.5} parent=39 // pred_check
        %p1480 = pneg %p106
      $region42: #{_lambda_.5} parent=39 // pred_check_branch
        %1482 = sbr.rel (%p1480) target = $region44
      $region43: #{_lambda_.5} parent=39 // pred_region
        %s1483 = smul.u32 64, %s15
        %p1484 = scmp.lt.s32.totalorder %s1483, 127
        %s1485 = scalar_select %p1484, %s1483, 127
        %s1486 = smul.addr %s1485, 8
        %s1487 = scalar_lea.vmem %s3, %s1486
      $region44: #{_lambda_.5} parent=39 // pred_fallthru
        _
    $region40: #{_lambda_.5} parent=5 // pred_fallthru
      _
  $region6: #{_lambda_.5} parent=0 // loop_footer
    %s13 = sadd.s32 1, %s9
  $region7: #{_lambda_.5} parent=0 // loop_footer_branch
    %8 = sbr.rel target = $region3
  $region8: #{_lambda_.5} parent=0 // loop_exit
    _

// kernel: _lambda_.6
$region0: #{_lambda_.6}
  #allocation0 [shape = 'u32[]', space=smem, size = 0x4, offset = 0x4, fixed_abs, tag = 'smem constant byte address 0x4 - core index']
  #allocation1 [shape = 'u32[72,128]{1,0:T(1,128)}', space=vmem, size = 0x9000, scoped, tag = 'internal scratch']
  %s0 = inlined_call_operand.vmem [shape: f32[200,1024], index: 0, kind: input, shape index: {}]
  %s1 = inlined_call_operand.vmem [shape: f32[1024,128], index: 1, kind: input, shape index: {}]
  %s2 = inlined_call_operand.vmem [shape: f32[1,128], index: 2, kind: input, shape index: {}]
  %s3 = inlined_call_operand.vmem [shape: f32[200,128], index: 3, kind: output, shape index: {}]
  %s4 = sld [smem:[#allocation0]]
  $region22: #{_lambda_.6} parent=0
    _
  %s6 = ssub.s32 1, %s4
  %s7 = scalar_select 0, %s6, %s4
  // Predicated region
  $region2: #{_lambda_.6} parent=0 // pred_check
    _
  $region3: #{_lambda_.6} parent=0 // pred_check_branch
    %9 = sbr.rel (0) target = $region5
  $region4: #{_lambda_.6} parent=0 // pred_region
    _
  $region5: #{_lambda_.6} parent=0 // pred_fallthru
    _
  // Predicated region
  $region6: #{_lambda_.6} parent=0 // pred_check
    _
  $region7: #{_lambda_.6} parent=0 // pred_check_branch
    %11 = sbr.rel (0) target = $region9
  $region8: #{_lambda_.6} parent=0 // pred_region
    _
  $region9: #{_lambda_.6} parent=0 // pred_fallthru
    _
  // Predicated region
  $region10: #{_lambda_.6} parent=0 // pred_check
    _
  $region11: #{_lambda_.6} parent=0 // pred_check_branch
    %13 = sbr.rel (0) target = $region13
  $region12: #{_lambda_.6} parent=0 // pred_region
    _
  $region13: #{_lambda_.6} parent=0 // pred_fallthru
    _
  %v14 = vld [vmem:[%s0] sm:$0xff]
  %v15 = vld [vmem:[%s0 + $0x8] sm:$0xff]
  %v16 = vld [vmem:[%s0 + $0x10] sm:$0xff]
  %v17 = vld [vmem:[%s0 + $0x18] sm:$0xff]
  %v18 = vld [vmem:[%s0 + $0x20] sm:$0xff]
  %v19 = vld [vmem:[%s0 + $0x28] sm:$0xff]
  %v20 = vld [vmem:[%s0 + $0x30] sm:$0xff]
  %v21 = vld [vmem:[%s0 + $0x38] sm:$0xff]
  %v22 = vld [vmem:[%s0 + $0x40] sm:$0xff]
  %v23 = vld [vmem:[%s0 + $0x48] sm:$0xff]
  %v24 = vld [vmem:[%s0 + $0x50] sm:$0xff]
  %v25 = vld [vmem:[%s0 + $0x58] sm:$0xff]
  %v26 = vld [vmem:[%s0 + $0x60] sm:$0xff]
  %v27 = vld [vmem:[%s0 + $0x68] sm:$0xff]
  %v28 = vld [vmem:[%s0 + $0x70] sm:$0xff]
  %v29 = vld [vmem:[%s0 + $0x78] sm:$0xff]
  %v30 = vld [vmem:[%s0 + $0x80] sm:$0xff]
  %v31 = vld [vmem:[%s0 + $0x88] sm:$0xff]
  %v32 = vld [vmem:[%s0 + $0x90] sm:$0xff]
  %v33 = vld [vmem:[%s0 + $0x98] sm:$0xff]
  %v34 = vld [vmem:[%s0 + $0xa0] sm:$0xff]
  %v35 = vld [vmem:[%s0 + $0xa8] sm:$0xff]
  %v36 = vld [vmem:[%s0 + $0xb0] sm:$0xff]
  %v37 = vld [vmem:[%s0 + $0xb8] sm:$0xff]
  %v38 = vld [vmem:[%s0 + $0xc0] sm:$0xff]
  %v39 = vld [vmem:[%s0 + $0xc8] sm:$0xff]
  %v40 = vld [vmem:[%s0 + $0xd0] sm:$0xff]
  %v41 = vld [vmem:[%s0 + $0xd8] sm:$0xff]
  %v42 = vld [vmem:[%s0 + $0xe0] sm:$0xff]
  %v43 = vld [vmem:[%s0 + $0xe8] sm:$0xff]
  %v44 = vld [vmem:[%s0 + $0xf0] sm:$0xff]
  %v45 = vld [vmem:[%s0 + $0xf8] sm:$0xff]
  %v46 = vld [vmem:[%s0 + $0x100] sm:$0xff]
  %v47 = vld [vmem:[%s0 + $0x108] sm:$0xff]
  %v48 = vld [vmem:[%s0 + $0x110] sm:$0xff]
  %v49 = vld [vmem:[%s0 + $0x118] sm:$0xff]
  %v50 = vld [vmem:[%s0 + $0x120] sm:$0xff]
  %v51 = vld [vmem:[%s0 + $0x128] sm:$0xff]
  %v52 = vld [vmem:[%s0 + $0x130] sm:$0xff]
  %v53 = vld [vmem:[%s0 + $0x138] sm:$0xff]
  %v54 = vld [vmem:[%s0 + $0x140] sm:$0xff]
  %v55 = vld [vmem:[%s0 + $0x148] sm:$0xff]
  %v56 = vld [vmem:[%s0 + $0x150] sm:$0xff]
  %v57 = vld [vmem:[%s0 + $0x158] sm:$0xff]
  %v58 = vld [vmem:[%s0 + $0x160] sm:$0xff]
  %v59 = vld [vmem:[%s0 + $0x168] sm:$0xff]
  %v60 = vld [vmem:[%s0 + $0x170] sm:$0xff]
  %v61 = vld [vmem:[%s0 + $0x178] sm:$0xff]
  %v62 = vld [vmem:[%s0 + $0x180] sm:$0xff]
  %v63 = vld [vmem:[%s0 + $0x188] sm:$0xff]
  %v64 = vld [vmem:[%s0 + $0x190] sm:$0xff]
  %v65 = vld [vmem:[%s0 + $0x198] sm:$0xff]
  %v66 = vld [vmem:[%s0 + $0x1a0] sm:$0xff]
  %v67 = vld [vmem:[%s0 + $0x1a8] sm:$0xff]
  %v68 = vld [vmem:[%s0 + $0x1b0] sm:$0xff]
  %v69 = vld [vmem:[%s0 + $0x1b8] sm:$0xff]
  %v70 = vld [vmem:[%s0 + $0x1c0] sm:$0xff]
  %v71 = vld [vmem:[%s0 + $0x1c8] sm:$0xff]
  %v72 = vld [vmem:[%s0 + $0x1d0] sm:$0xff]
  %v73 = vld [vmem:[%s0 + $0x1d8] sm:$0xff]
  %v74 = vld [vmem:[%s0 + $0x1e0] sm:$0xff]
  %v75 = vld [vmem:[%s0 + $0x1e8] sm:$0xff]
  %v76 = vld [vmem:[%s0 + $0x1f0] sm:$0xff]
  %v77 = vld [vmem:[%s0 + $0x1f8] sm:$0xff]
  %v78 = vld [vmem:[%s0 + $0x200] sm:$0xff]
  %v79 = vld [vmem:[%s0 + $0x208] sm:$0xff]
  %v80 = vld [vmem:[%s0 + $0x210] sm:$0xff]
  %v81 = vld [vmem:[%s0 + $0x218] sm:$0xff]
  %v82 = vld [vmem:[%s0 + $0x220] sm:$0xff]
  %v83 = vld [vmem:[%s0 + $0x228] sm:$0xff]
  %v84 = vld [vmem:[%s0 + $0x230] sm:$0xff]
  %v85 = vld [vmem:[%s0 + $0x238] sm:$0xff]
  %v86 = vld [vmem:[%s0 + $0x240] sm:$0xff]
  %v87 = vld [vmem:[%s0 + $0x248] sm:$0xff]
  %v88 = vld [vmem:[%s0 + $0x250] sm:$0xff]
  %v89 = vld [vmem:[%s0 + $0x258] sm:$0xff]
  %v90 = vld [vmem:[%s0 + $0x260] sm:$0xff]
  %v91 = vld [vmem:[%s0 + $0x268] sm:$0xff]
  %v92 = vld [vmem:[%s0 + $0x270] sm:$0xff]
  %v93 = vld [vmem:[%s0 + $0x278] sm:$0xff]
  %v94 = vld [vmem:[%s0 + $0x280] sm:$0xff]
  %v95 = vld [vmem:[%s0 + $0x288] sm:$0xff]
  %v96 = vld [vmem:[%s0 + $0x290] sm:$0xff]
  %v97 = vld [vmem:[%s0 + $0x298] sm:$0xff]
  %v98 = vld [vmem:[%s0 + $0x2a0] sm:$0xff]
  %v99 = vld [vmem:[%s0 + $0x2a8] sm:$0xff]
  %v100 = vld [vmem:[%s0 + $0x2b0] sm:$0xff]
  %v101 = vld [vmem:[%s0 + $0x2b8] sm:$0xff]
  %v102 = vld [vmem:[%s0 + $0x2c0] sm:$0xff]
  %v103 = vld [vmem:[%s0 + $0x2c8] sm:$0xff]
  %v104 = vld [vmem:[%s0 + $0x2d0] sm:$0xff]
  %v105 = vld [vmem:[%s0 + $0x2d8] sm:$0xff]
  %v106 = vld [vmem:[%s0 + $0x2e0] sm:$0xff]
  %v107 = vld [vmem:[%s0 + $0x2e8] sm:$0xff]
  %v108 = vld [vmem:[%s0 + $0x2f0] sm:$0xff]
  %v109 = vld [vmem:[%s0 + $0x2f8] sm:$0xff]
  %v110 = vld [vmem:[%s0 + $0x300] sm:$0xff]
  %v111 = vld [vmem:[%s0 + $0x308] sm:$0xff]
  %v112 = vld [vmem:[%s0 + $0x310] sm:$0xff]
  %v113 = vld [vmem:[%s0 + $0x318] sm:$0xff]
  %v114 = vld [vmem:[%s0 + $0x320] sm:$0xff]
  %v115 = vld [vmem:[%s0 + $0x328] sm:$0xff]
  %v116 = vld [vmem:[%s0 + $0x330] sm:$0xff]
  %v117 = vld [vmem:[%s0 + $0x338] sm:$0xff]
  %v118 = vld [vmem:[%s0 + $0x340] sm:$0xff]
  %v119 = vld [vmem:[%s0 + $0x348] sm:$0xff]
  %v120 = vld [vmem:[%s0 + $0x350] sm:$0xff]
  %v121 = vld [vmem:[%s0 + $0x358] sm:$0xff]
  %v122 = vld [vmem:[%s0 + $0x360] sm:$0xff]
  %v123 = vld [vmem:[%s0 + $0x368] sm:$0xff]
  %v124 = vld [vmem:[%s0 + $0x370] sm:$0xff]
  %v125 = vld [vmem:[%s0 + $0x378] sm:$0xff]
  %v126 = vld [vmem:[%s0 + $0x380] sm:$0xff]
  %v127 = vld [vmem:[%s0 + $0x388] sm:$0xff]
  %v128 = vld [vmem:[%s0 + $0x390] sm:$0xff]
  %v129 = vld [vmem:[%s0 + $0x398] sm:$0xff]
  %v130 = vld [vmem:[%s0 + $0x3a0] sm:$0xff]
  %v131 = vld [vmem:[%s0 + $0x3a8] sm:$0xff]
  %v132 = vld [vmem:[%s0 + $0x3b0] sm:$0xff]
  %v133 = vld [vmem:[%s0 + $0x3b8] sm:$0xff]
  %v134 = vld [vmem:[%s0 + $0x3c0] sm:$0xff]
  %v135 = vld [vmem:[%s0 + $0x3c8] sm:$0xff]
  %v136 = vld [vmem:[%s0 + $0x3d0] sm:$0xff]
  %v137 = vld [vmem:[%s0 + $0x3d8] sm:$0xff]
  %v138 = vld [vmem:[%s0 + $0x3e0] sm:$0xff]
  %v139 = vld [vmem:[%s0 + $0x3e8] sm:$0xff]
  %v140 = vld [vmem:[%s0 + $0x3f0] sm:$0xff]
  %v141 = vld [vmem:[%s0 + $0x3f8] sm:$0xff]
  %v142 = vld [vmem:[%s0 + $0x400] sm:$0xff]
  %v143 = vld [vmem:[%s0 + $0x408] sm:$0xff]
  %v144 = vld [vmem:[%s0 + $0x410] sm:$0xff]
  %v145 = vld [vmem:[%s0 + $0x418] sm:$0xff]
  %v146 = vld [vmem:[%s0 + $0x420] sm:$0xff]
  %v147 = vld [vmem:[%s0 + $0x428] sm:$0xff]
  %v148 = vld [vmem:[%s0 + $0x430] sm:$0xff]
  %v149 = vld [vmem:[%s0 + $0x438] sm:$0xff]
  %v150 = vld [vmem:[%s0 + $0x440] sm:$0xff]
  %v151 = vld [vmem:[%s0 + $0x448] sm:$0xff]
  %v152 = vld [vmem:[%s0 + $0x450] sm:$0xff]
  %v153 = vld [vmem:[%s0 + $0x458] sm:$0xff]
  %v154 = vld [vmem:[%s0 + $0x460] sm:$0xff]
  %v155 = vld [vmem:[%s0 + $0x468] sm:$0xff]
  %v156 = vld [vmem:[%s0 + $0x470] sm:$0xff]
  %v157 = vld [vmem:[%s0 + $0x478] sm:$0xff]
  %v158 = vld [vmem:[%s0 + $0x480] sm:$0xff]
  %v159 = vld [vmem:[%s0 + $0x488] sm:$0xff]
  %v160 = vld [vmem:[%s0 + $0x490] sm:$0xff]
  %v161 = vld [vmem:[%s0 + $0x498] sm:$0xff]
  %v162 = vld [vmem:[%s0 + $0x4a0] sm:$0xff]
  %v163 = vld [vmem:[%s0 + $0x4a8] sm:$0xff]
  %v164 = vld [vmem:[%s0 + $0x4b0] sm:$0xff]
  %v165 = vld [vmem:[%s0 + $0x4b8] sm:$0xff]
  %v166 = vld [vmem:[%s0 + $0x4c0] sm:$0xff]
  %v167 = vld [vmem:[%s0 + $0x4c8] sm:$0xff]
  %v168 = vld [vmem:[%s0 + $0x4d0] sm:$0xff]
  %v169 = vld [vmem:[%s0 + $0x4d8] sm:$0xff]
  %v170 = vld [vmem:[%s0 + $0x4e0] sm:$0xff]
  %v171 = vld [vmem:[%s0 + $0x4e8] sm:$0xff]
  %v172 = vld [vmem:[%s0 + $0x4f0] sm:$0xff]
  %v173 = vld [vmem:[%s0 + $0x4f8] sm:$0xff]
  %v174 = vld [vmem:[%s0 + $0x500] sm:$0xff]
  %v175 = vld [vmem:[%s0 + $0x508] sm:$0xff]
  %v176 = vld [vmem:[%s0 + $0x510] sm:$0xff]
  %v177 = vld [vmem:[%s0 + $0x518] sm:$0xff]
  %v178 = vld [vmem:[%s0 + $0x520] sm:$0xff]
  %v179 = vld [vmem:[%s0 + $0x528] sm:$0xff]
  %v180 = vld [vmem:[%s0 + $0x530] sm:$0xff]
  %v181 = vld [vmem:[%s0 + $0x538] sm:$0xff]
  %v182 = vld [vmem:[%s0 + $0x540] sm:$0xff]
  %v183 = vld [vmem:[%s0 + $0x548] sm:$0xff]
  %v184 = vld [vmem:[%s0 + $0x550] sm:$0xff]
  %v185 = vld [vmem:[%s0 + $0x558] sm:$0xff]
  %v186 = vld [vmem:[%s0 + $0x560] sm:$0xff]
  %v187 = vld [vmem:[%s0 + $0x568] sm:$0xff]
  %v188 = vld [vmem:[%s0 + $0x570] sm:$0xff]
  %v189 = vld [vmem:[%s0 + $0x578] sm:$0xff]
  %v190 = vld [vmem:[%s0 + $0x580] sm:$0xff]
  %v191 = vld [vmem:[%s0 + $0x588] sm:$0xff]
  %v192 = vld [vmem:[%s0 + $0x590] sm:$0xff]
  %v193 = vld [vmem:[%s0 + $0x598] sm:$0xff]
  %v194 = vld [vmem:[%s0 + $0x5a0] sm:$0xff]
  %v195 = vld [vmem:[%s0 + $0x5a8] sm:$0xff]
  %v196 = vld [vmem:[%s0 + $0x5b0] sm:$0xff]
  %v197 = vld [vmem:[%s0 + $0x5b8] sm:$0xff]
  %v198 = vld [vmem:[%s0 + $0x5c0] sm:$0xff]
  %v199 = vld [vmem:[%s0 + $0x5c8] sm:$0xff]
  %v200 = vld [vmem:[%s0 + $0x5d0] sm:$0xff]
  %v201 = vld [vmem:[%s0 + $0x5d8] sm:$0xff]
  %v202 = vld [vmem:[%s0 + $0x5e0] sm:$0xff]
  %v203 = vld [vmem:[%s0 + $0x5e8] sm:$0xff]
  %v204 = vld [vmem:[%s0 + $0x5f0] sm:$0xff]
  %v205 = vld [vmem:[%s0 + $0x5f8] sm:$0xff]
  %v206 = vld [vmem:[%s0 + $0x600] sm:$0xff]
  %v207 = vld [vmem:[%s0 + $0x608] sm:$0xff]
  %v208 = vld [vmem:[%s0 + $0x610] sm:$0xff]
  %v209 = vld [vmem:[%s0 + $0x618] sm:$0xff]
  %v210 = vld [vmem:[%s0 + $0x620] sm:$0xff]
  %v211 = vld [vmem:[%s0 + $0x628] sm:$0xff]
  %v212 = vld [vmem:[%s0 + $0x630] sm:$0xff]
  %v213 = vld [vmem:[%s0 + $0x638] sm:$0xff]
  %v214 = vld [vmem:[%s1] sm:$0xff]
  %v215 = vld [vmem:[%s1 + $0x8] sm:$0xff]
  %v216 = vld [vmem:[%s1 + $0x10] sm:$0xff]
  %v217 = vld [vmem:[%s1 + $0x18] sm:$0xff]
  %v218 = vld [vmem:[%s1 + $0x20] sm:$0xff]
  %v219 = vld [vmem:[%s1 + $0x28] sm:$0xff]
  %v220 = vld [vmem:[%s1 + $0x30] sm:$0xff]
  %v221 = vld [vmem:[%s1 + $0x38] sm:$0xff]
  %v222 = vld [vmem:[%s1 + $0x40] sm:$0xff]
  %v223 = vld [vmem:[%s1 + $0x48] sm:$0xff]
  %v224 = vld [vmem:[%s1 + $0x50] sm:$0xff]
  %v225 = vld [vmem:[%s1 + $0x58] sm:$0xff]
  %v226 = vld [vmem:[%s1 + $0x60] sm:$0xff]
  %v227 = vld [vmem:[%s1 + $0x68] sm:$0xff]
  %v228 = vld [vmem:[%s1 + $0x70] sm:$0xff]
  %v229 = vld [vmem:[%s1 + $0x78] sm:$0xff]
  %v230 = vld [vmem:[%s1 + $0x80] sm:$0xff]
  %v231 = vld [vmem:[%s1 + $0x88] sm:$0xff]
  %v232 = vld [vmem:[%s1 + $0x90] sm:$0xff]
  %v233 = vld [vmem:[%s1 + $0x98] sm:$0xff]
  %v234 = vld [vmem:[%s1 + $0xa0] sm:$0xff]
  %v235 = vld [vmem:[%s1 + $0xa8] sm:$0xff]
  %v236 = vld [vmem:[%s1 + $0xb0] sm:$0xff]
  %v237 = vld [vmem:[%s1 + $0xb8] sm:$0xff]
  %v238 = vld [vmem:[%s1 + $0xc0] sm:$0xff]
  %v239 = vld [vmem:[%s1 + $0xc8] sm:$0xff]
  %v240 = vld [vmem:[%s1 + $0xd0] sm:$0xff]
  %v241 = vld [vmem:[%s1 + $0xd8] sm:$0xff]
  %v242 = vld [vmem:[%s1 + $0xe0] sm:$0xff]
  %v243 = vld [vmem:[%s1 + $0xe8] sm:$0xff]
  %v244 = vld [vmem:[%s1 + $0xf0] sm:$0xff]
  %v245 = vld [vmem:[%s1 + $0xf8] sm:$0xff]
  %v246 = vld [vmem:[%s1 + $0x100] sm:$0xff]
  %v247 = vld [vmem:[%s1 + $0x108] sm:$0xff]
  %v248 = vld [vmem:[%s1 + $0x110] sm:$0xff]
  %v249 = vld [vmem:[%s1 + $0x118] sm:$0xff]
  %v250 = vld [vmem:[%s1 + $0x120] sm:$0xff]
  %v251 = vld [vmem:[%s1 + $0x128] sm:$0xff]
  %v252 = vld [vmem:[%s1 + $0x130] sm:$0xff]
  %v253 = vld [vmem:[%s1 + $0x138] sm:$0xff]
  %v254 = vld [vmem:[%s1 + $0x140] sm:$0xff]
  %v255 = vld [vmem:[%s1 + $0x148] sm:$0xff]
  %v256 = vld [vmem:[%s1 + $0x150] sm:$0xff]
  %v257 = vld [vmem:[%s1 + $0x158] sm:$0xff]
  %v258 = vld [vmem:[%s1 + $0x160] sm:$0xff]
  %v259 = vld [vmem:[%s1 + $0x168] sm:$0xff]
  %v260 = vld [vmem:[%s1 + $0x170] sm:$0xff]
  %v261 = vld [vmem:[%s1 + $0x178] sm:$0xff]
  %v262 = vld [vmem:[%s1 + $0x180] sm:$0xff]
  %v263 = vld [vmem:[%s1 + $0x188] sm:$0xff]
  %v264 = vld [vmem:[%s1 + $0x190] sm:$0xff]
  %v265 = vld [vmem:[%s1 + $0x198] sm:$0xff]
  %v266 = vld [vmem:[%s1 + $0x1a0] sm:$0xff]
  %v267 = vld [vmem:[%s1 + $0x1a8] sm:$0xff]
  %v268 = vld [vmem:[%s1 + $0x1b0] sm:$0xff]
  %v269 = vld [vmem:[%s1 + $0x1b8] sm:$0xff]
  %v270 = vld [vmem:[%s1 + $0x1c0] sm:$0xff]
  %v271 = vld [vmem:[%s1 + $0x1c8] sm:$0xff]
  %v272 = vld [vmem:[%s1 + $0x1d0] sm:$0xff]
  %v273 = vld [vmem:[%s1 + $0x1d8] sm:$0xff]
  %v274 = vld [vmem:[%s1 + $0x1e0] sm:$0xff]
  %v275 = vld [vmem:[%s1 + $0x1e8] sm:$0xff]
  %v276 = vld [vmem:[%s1 + $0x1f0] sm:$0xff]
  %v277 = vld [vmem:[%s1 + $0x1f8] sm:$0xff]
  %v278 = vld [vmem:[%s1 + $0x200] sm:$0xff]
  %v279 = vld [vmem:[%s1 + $0x208] sm:$0xff]
  %v280 = vld [vmem:[%s1 + $0x210] sm:$0xff]
  %v281 = vld [vmem:[%s1 + $0x218] sm:$0xff]
  %v282 = vld [vmem:[%s1 + $0x220] sm:$0xff]
  %v283 = vld [vmem:[%s1 + $0x228] sm:$0xff]
  %v284 = vld [vmem:[%s1 + $0x230] sm:$0xff]
  %v285 = vld [vmem:[%s1 + $0x238] sm:$0xff]
  %v286 = vld [vmem:[%s1 + $0x240] sm:$0xff]
  %v287 = vld [vmem:[%s1 + $0x248] sm:$0xff]
  %v288 = vld [vmem:[%s1 + $0x250] sm:$0xff]
  %v289 = vld [vmem:[%s1 + $0x258] sm:$0xff]
  %v290 = vld [vmem:[%s1 + $0x260] sm:$0xff]
  %v291 = vld [vmem:[%s1 + $0x268] sm:$0xff]
  %v292 = vld [vmem:[%s1 + $0x270] sm:$0xff]
  %v293 = vld [vmem:[%s1 + $0x278] sm:$0xff]
  %v294 = vld [vmem:[%s1 + $0x280] sm:$0xff]
  %v295 = vld [vmem:[%s1 + $0x288] sm:$0xff]
  %v296 = vld [vmem:[%s1 + $0x290] sm:$0xff]
  %v297 = vld [vmem:[%s1 + $0x298] sm:$0xff]
  %v298 = vld [vmem:[%s1 + $0x2a0] sm:$0xff]
  %v299 = vld [vmem:[%s1 + $0x2a8] sm:$0xff]
  %v300 = vld [vmem:[%s1 + $0x2b0] sm:$0xff]
  %v301 = vld [vmem:[%s1 + $0x2b8] sm:$0xff]
  %v302 = vld [vmem:[%s1 + $0x2c0] sm:$0xff]
  %v303 = vld [vmem:[%s1 + $0x2c8] sm:$0xff]
  %v304 = vld [vmem:[%s1 + $0x2d0] sm:$0xff]
  %v305 = vld [vmem:[%s1 + $0x2d8] sm:$0xff]
  %v306 = vld [vmem:[%s1 + $0x2e0] sm:$0xff]
  %v307 = vld [vmem:[%s1 + $0x2e8] sm:$0xff]
  %v308 = vld [vmem:[%s1 + $0x2f0] sm:$0xff]
  %v309 = vld [vmem:[%s1 + $0x2f8] sm:$0xff]
  %v310 = vld [vmem:[%s1 + $0x300] sm:$0xff]
  %v311 = vld [vmem:[%s1 + $0x308] sm:$0xff]
  %v312 = vld [vmem:[%s1 + $0x310] sm:$0xff]
  %v313 = vld [vmem:[%s1 + $0x318] sm:$0xff]
  %v314 = vld [vmem:[%s1 + $0x320] sm:$0xff]
  %v315 = vld [vmem:[%s1 + $0x328] sm:$0xff]
  %v316 = vld [vmem:[%s1 + $0x330] sm:$0xff]
  %v317 = vld [vmem:[%s1 + $0x338] sm:$0xff]
  %v318 = vld [vmem:[%s1 + $0x340] sm:$0xff]
  %v319 = vld [vmem:[%s1 + $0x348] sm:$0xff]
  %v320 = vld [vmem:[%s1 + $0x350] sm:$0xff]
  %v321 = vld [vmem:[%s1 + $0x358] sm:$0xff]
  %v322 = vld [vmem:[%s1 + $0x360] sm:$0xff]
  %v323 = vld [vmem:[%s1 + $0x368] sm:$0xff]
  %v324 = vld [vmem:[%s1 + $0x370] sm:$0xff]
  %v325 = vld [vmem:[%s1 + $0x378] sm:$0xff]
  %v326 = vld [vmem:[%s1 + $0x380] sm:$0xff]
  %v327 = vld [vmem:[%s1 + $0x388] sm:$0xff]
  %v328 = vld [vmem:[%s1 + $0x390] sm:$0xff]
  %v329 = vld [vmem:[%s1 + $0x398] sm:$0xff]
  %v330 = vld [vmem:[%s1 + $0x3a0] sm:$0xff]
  %v331 = vld [vmem:[%s1 + $0x3a8] sm:$0xff]
  %v332 = vld [vmem:[%s1 + $0x3b0] sm:$0xff]
  %v333 = vld [vmem:[%s1 + $0x3b8] sm:$0xff]
  %v334 = vld [vmem:[%s1 + $0x3c0] sm:$0xff]
  %v335 = vld [vmem:[%s1 + $0x3c8] sm:$0xff]
  %v336 = vld [vmem:[%s1 + $0x3d0] sm:$0xff]
  %v337 = vld [vmem:[%s1 + $0x3d8] sm:$0xff]
  %v338 = vld [vmem:[%s1 + $0x3e0] sm:$0xff]
  %v339 = vld [vmem:[%s1 + $0x3e8] sm:$0xff]
  %v340 = vld [vmem:[%s1 + $0x3f0] sm:$0xff]
  %v341 = vld [vmem:[%s1 + $0x3f8] sm:$0xff]
  %v342 = vld [vmem:[%s2] sm:$0x1]
  %v344 = vperm.slane %v342, 0
  %346 = vmatpush.msra.mxu0 %v229
  %347 = vmatpush.msra.mxu0 %v228
  %348 = vmatpush.msra.mxu0 %v227
  %349 = vmatpush.msra.mxu0 %v226
  %350 = vmatpush.msra.mxu0 %v225
  %351 = vmatpush.msra.mxu0 %v224
  %352 = vmatpush.msra.mxu0 %v223
  %353 = vmatpush.msra.mxu0 %v222
  %354 = vmatpush.msra.mxu0 %v221
  %355 = vmatpush.msra.mxu0 %v220
  %356 = vmatpush.msra.mxu0 %v219
  %357 = vmatpush.msra.mxu0 %v218
  %358 = vmatpush.msra.mxu0 %v217
  %359 = vmatpush.msra.mxu0 %v216
  %360 = vmatpush.msra.mxu0 %v215
  %361 = vmatpush.msra.mxu0 %v214
  %362 = vmatmul.f32.gmra.mxu0 %v14
  %v363 = vpop.f32.mrf.mxu0
  %v364 = vadd.f32 %v344, %v363
  %365 = vmatmul.f32.gmra.mxu0 %v22
  %v366 = vpop.f32.mrf.mxu0
  %v367 = vadd.f32 %v344, %v366
  %368 = vmatmul.f32.gmra.mxu0 %v30
  %v369 = vpop.f32.mrf.mxu0
  %v370 = vadd.f32 %v344, %v369
  %371 = vmatmul.f32.gmra.mxu0 %v38
  %v372 = vpop.f32.mrf.mxu0
  %v373 = vadd.f32 %v344, %v372
  %374 = vmatmul.f32.gmra.mxu0 %v46
  %v375 = vpop.f32.mrf.mxu0
  %v376 = vadd.f32 %v344, %v375
  %377 = vmatmul.f32.gmra.mxu0 %v54
  %v378 = vpop.f32.mrf.mxu0
  %v379 = vadd.f32 %v344, %v378
  %380 = vmatmul.f32.gmra.mxu0 %v62
  %v381 = vpop.f32.mrf.mxu0
  %v382 = vadd.f32 %v344, %v381
  %383 = vmatmul.f32.gmra.mxu0 %v70
  %v384 = vpop.f32.mrf.mxu0
  %v385 = vadd.f32 %v344, %v384
  %386 = vmatmul.f32.gmra.mxu0 %v78
  %v387 = vpop.f32.mrf.mxu0
  %v388 = vadd.f32 %v344, %v387
  %389 = vmatmul.f32.gmra.mxu0 %v86
  %v390 = vpop.f32.mrf.mxu0
  %v391 = vadd.f32 %v344, %v390
  %392 = vmatmul.f32.gmra.mxu0 %v94
  %v393 = vpop.f32.mrf.mxu0
  %v394 = vadd.f32 %v344, %v393
  %395 = vmatmul.f32.gmra.mxu0 %v102
  %v396 = vpop.f32.mrf.mxu0
  %v397 = vadd.f32 %v344, %v396
  %398 = vmatmul.f32.gmra.mxu0 %v110
  %v399 = vpop.f32.mrf.mxu0
  %v400 = vadd.f32 %v344, %v399
  %401 = vmatmul.f32.gmra.mxu0 %v118
  %v402 = vpop.f32.mrf.mxu0
  %v403 = vadd.f32 %v344, %v402
  %404 = vmatmul.f32.gmra.mxu0 %v126
  %v405 = vpop.f32.mrf.mxu0
  %v406 = vadd.f32 %v344, %v405
  %407 = vmatmul.f32.gmra.mxu0 %v134
  %v408 = vpop.f32.mrf.mxu0
  %v409 = vadd.f32 %v344, %v408
  %410 = vmatmul.f32.gmra.mxu0 %v142
  %v411 = vpop.f32.mrf.mxu0
  %v412 = vadd.f32 %v344, %v411
  %413 = vmatmul.f32.gmra.mxu0 %v150
  %v414 = vpop.f32.mrf.mxu0
  %v415 = vadd.f32 %v344, %v414
  %416 = vmatmul.f32.gmra.mxu0 %v158
  %v417 = vpop.f32.mrf.mxu0
  %v418 = vadd.f32 %v344, %v417
  %419 = vmatmul.f32.gmra.mxu0 %v166
  %v420 = vpop.f32.mrf.mxu0
  %v421 = vadd.f32 %v344, %v420
  %422 = vmatmul.f32.gmra.mxu0 %v174
  %v423 = vpop.f32.mrf.mxu0
  %v424 = vadd.f32 %v344, %v423
  %425 = vmatmul.f32.gmra.mxu0 %v182
  %v426 = vpop.f32.mrf.mxu0
  %v427 = vadd.f32 %v344, %v426
  %428 = vmatmul.f32.gmra.mxu0 %v190
  %v429 = vpop.f32.mrf.mxu0
  %v430 = vadd.f32 %v344, %v429
  %431 = vmatmul.f32.gmra.mxu0 %v198
  %v432 = vpop.f32.mrf.mxu0
  %v433 = vadd.f32 %v344, %v432
  %434 = vmatmul.f32.gmra.mxu0 %v206
  %v435 = vpop.f32.mrf.mxu0
  %v436 = vadd.f32 %v344, %v435
  %437 = vdwg.mxu0
  %438 = vmatpush.msra.mxu0 %v245
  %439 = vmatpush.msra.mxu0 %v244
  %440 = vmatpush.msra.mxu0 %v243
  %441 = vmatpush.msra.mxu0 %v242
  %442 = vmatpush.msra.mxu0 %v241
  %443 = vmatpush.msra.mxu0 %v240
  %444 = vmatpush.msra.mxu0 %v239
  %445 = vmatpush.msra.mxu0 %v238
  %446 = vmatpush.msra.mxu0 %v237
  %447 = vmatpush.msra.mxu0 %v236
  %448 = vmatpush.msra.mxu0 %v235
  %449 = vmatpush.msra.mxu0 %v234
  %450 = vmatpush.msra.mxu0 %v233
  %451 = vmatpush.msra.mxu0 %v232
  %452 = vmatpush.msra.mxu0 %v231
  %453 = vmatpush.msra.mxu0 %v230
  %454 = vmatmul.f32.gmra.mxu0 %v15
  %v455 = vpop.f32.mrf.mxu0
  %v456 = vadd.f32 %v364, %v455
  %457 = vmatmul.f32.gmra.mxu0 %v23
  %v458 = vpop.f32.mrf.mxu0
  %v459 = vadd.f32 %v367, %v458
  %460 = vmatmul.f32.gmra.mxu0 %v31
  %v461 = vpop.f32.mrf.mxu0
  %v462 = vadd.f32 %v370, %v461
  %463 = vmatmul.f32.gmra.mxu0 %v39
  %v464 = vpop.f32.mrf.mxu0
  %v465 = vadd.f32 %v373, %v464
  %466 = vmatmul.f32.gmra.mxu0 %v47
  %v467 = vpop.f32.mrf.mxu0
  %v468 = vadd.f32 %v376, %v467
  %469 = vmatmul.f32.gmra.mxu0 %v55
  %v470 = vpop.f32.mrf.mxu0
  %v471 = vadd.f32 %v379, %v470
  %472 = vmatmul.f32.gmra.mxu0 %v63
  %v473 = vpop.f32.mrf.mxu0
  %v474 = vadd.f32 %v382, %v473
  %475 = vmatmul.f32.gmra.mxu0 %v71
  %v476 = vpop.f32.mrf.mxu0
  %v477 = vadd.f32 %v385, %v476
  %478 = vmatmul.f32.gmra.mxu0 %v79
  %v479 = vpop.f32.mrf.mxu0
  %v480 = vadd.f32 %v388, %v479
  %481 = vmatmul.f32.gmra.mxu0 %v87
  %v482 = vpop.f32.mrf.mxu0
  %v483 = vadd.f32 %v391, %v482
  %484 = vmatmul.f32.gmra.mxu0 %v95
  %v485 = vpop.f32.mrf.mxu0
  %v486 = vadd.f32 %v394, %v485
  %487 = vmatmul.f32.gmra.mxu0 %v103
  %v488 = vpop.f32.mrf.mxu0
  %v489 = vadd.f32 %v397, %v488
  %490 = vmatmul.f32.gmra.mxu0 %v111
  %v491 = vpop.f32.mrf.mxu0
  %v492 = vadd.f32 %v400, %v491
  %493 = vmatmul.f32.gmra.mxu0 %v119
  %v494 = vpop.f32.mrf.mxu0
  %v495 = vadd.f32 %v403, %v494
  %496 = vmatmul.f32.gmra.mxu0 %v127
  %v497 = vpop.f32.mrf.mxu0
  %v498 = vadd.f32 %v406, %v497
  %499 = vmatmul.f32.gmra.mxu0 %v135
  %v500 = vpop.f32.mrf.mxu0
  %v501 = vadd.f32 %v409, %v500
  %502 = vmatmul.f32.gmra.mxu0 %v143
  %v503 = vpop.f32.mrf.mxu0
  %v504 = vadd.f32 %v412, %v503
  %505 = vmatmul.f32.gmra.mxu0 %v151
  %v506 = vpop.f32.mrf.mxu0
  %v507 = vadd.f32 %v415, %v506
  %508 = vmatmul.f32.gmra.mxu0 %v159
  %v509 = vpop.f32.mrf.mxu0
  %v510 = vadd.f32 %v418, %v509
  %511 = vmatmul.f32.gmra.mxu0 %v167
  %v512 = vpop.f32.mrf.mxu0
  %v513 = vadd.f32 %v421, %v512
  %514 = vmatmul.f32.gmra.mxu0 %v175
  %v515 = vpop.f32.mrf.mxu0
  %v516 = vadd.f32 %v424, %v515
  %517 = vmatmul.f32.gmra.mxu0 %v183
  %v518 = vpop.f32.mrf.mxu0
  %v519 = vadd.f32 %v427, %v518
  %520 = vmatmul.f32.gmra.mxu0 %v191
  %v521 = vpop.f32.mrf.mxu0
  %v522 = vadd.f32 %v430, %v521
  %523 = vmatmul.f32.gmra.mxu0 %v199
  %v524 = vpop.f32.mrf.mxu0
  %v525 = vadd.f32 %v433, %v524
  %526 = vmatmul.f32.gmra.mxu0 %v207
  %v527 = vpop.f32.mrf.mxu0
  %v528 = vadd.f32 %v436, %v527
  %529 = vdwg.mxu0
  %530 = vmatpush.msra.mxu0 %v261
  %531 = vmatpush.msra.mxu0 %v260
  %532 = vmatpush.msra.mxu0 %v259
  %533 = vmatpush.msra.mxu0 %v258
  %534 = vmatpush.msra.mxu0 %v257
  %535 = vmatpush.msra.mxu0 %v256
  %536 = vmatpush.msra.mxu0 %v255
  %537 = vmatpush.msra.mxu0 %v254
  %538 = vmatpush.msra.mxu0 %v253
  %539 = vmatpush.msra.mxu0 %v252
  %540 = vmatpush.msra.mxu0 %v251
  %541 = vmatpush.msra.mxu0 %v250
  %542 = vmatpush.msra.mxu0 %v249
  %543 = vmatpush.msra.mxu0 %v248
  %544 = vmatpush.msra.mxu0 %v247
  %545 = vmatpush.msra.mxu0 %v246
  %546 = vmatmul.f32.gmra.mxu0 %v16
  %v547 = vpop.f32.mrf.mxu0
  %v548 = vadd.f32 %v456, %v547
  %549 = vmatmul.f32.gmra.mxu0 %v24
  %v550 = vpop.f32.mrf.mxu0
  %v551 = vadd.f32 %v459, %v550
  %552 = vmatmul.f32.gmra.mxu0 %v32
  %v553 = vpop.f32.mrf.mxu0
  %v554 = vadd.f32 %v462, %v553
  %555 = vmatmul.f32.gmra.mxu0 %v40
  %v556 = vpop.f32.mrf.mxu0
  %v557 = vadd.f32 %v465, %v556
  %558 = vmatmul.f32.gmra.mxu0 %v48
  %v559 = vpop.f32.mrf.mxu0
  %v560 = vadd.f32 %v468, %v559
  %561 = vmatmul.f32.gmra.mxu0 %v56
  %v562 = vpop.f32.mrf.mxu0
  %v563 = vadd.f32 %v471, %v562
  %564 = vmatmul.f32.gmra.mxu0 %v64
  %v565 = vpop.f32.mrf.mxu0
  %v566 = vadd.f32 %v474, %v565
  %567 = vmatmul.f32.gmra.mxu0 %v72
  %v568 = vpop.f32.mrf.mxu0
  %v569 = vadd.f32 %v477, %v568
  %570 = vmatmul.f32.gmra.mxu0 %v80
  %v571 = vpop.f32.mrf.mxu0
  %v572 = vadd.f32 %v480, %v571
  %573 = vmatmul.f32.gmra.mxu0 %v88
  %v574 = vpop.f32.mrf.mxu0
  %v575 = vadd.f32 %v483, %v574
  %576 = vmatmul.f32.gmra.mxu0 %v96
  %v577 = vpop.f32.mrf.mxu0
  %v578 = vadd.f32 %v486, %v577
  %579 = vmatmul.f32.gmra.mxu0 %v104
  %v580 = vpop.f32.mrf.mxu0
  %v581 = vadd.f32 %v489, %v580
  %582 = vmatmul.f32.gmra.mxu0 %v112
  %v583 = vpop.f32.mrf.mxu0
  %v584 = vadd.f32 %v492, %v583
  %585 = vmatmul.f32.gmra.mxu0 %v120
  %v586 = vpop.f32.mrf.mxu0
  %v587 = vadd.f32 %v495, %v586
  %588 = vmatmul.f32.gmra.mxu0 %v128
  %v589 = vpop.f32.mrf.mxu0
  %v590 = vadd.f32 %v498, %v589
  %591 = vmatmul.f32.gmra.mxu0 %v136
  %v592 = vpop.f32.mrf.mxu0
  %v593 = vadd.f32 %v501, %v592
  %594 = vmatmul.f32.gmra.mxu0 %v144
  %v595 = vpop.f32.mrf.mxu0
  %v596 = vadd.f32 %v504, %v595
  %597 = vmatmul.f32.gmra.mxu0 %v152
  %v598 = vpop.f32.mrf.mxu0
  %v599 = vadd.f32 %v507, %v598
  %600 = vmatmul.f32.gmra.mxu0 %v160
  %v601 = vpop.f32.mrf.mxu0
  %v602 = vadd.f32 %v510, %v601
  %603 = vmatmul.f32.gmra.mxu0 %v168
  %v604 = vpop.f32.mrf.mxu0
  %v605 = vadd.f32 %v513, %v604
  %606 = vmatmul.f32.gmra.mxu0 %v176
  %v607 = vpop.f32.mrf.mxu0
  %v608 = vadd.f32 %v516, %v607
  %609 = vmatmul.f32.gmra.mxu0 %v184
  %v610 = vpop.f32.mrf.mxu0
  %v611 = vadd.f32 %v519, %v610
  %612 = vmatmul.f32.gmra.mxu0 %v192
  %v613 = vpop.f32.mrf.mxu0
  %v614 = vadd.f32 %v522, %v613
  %615 = vmatmul.f32.gmra.mxu0 %v200
  %v616 = vpop.f32.mrf.mxu0
  %v617 = vadd.f32 %v525, %v616
  %618 = vmatmul.f32.gmra.mxu0 %v208
  %v619 = vpop.f32.mrf.mxu0
  %v620 = vadd.f32 %v528, %v619
  %621 = vdwg.mxu0
  %622 = vmatpush.msra.mxu0 %v277
  %623 = vmatpush.msra.mxu0 %v276
  %624 = vmatpush.msra.mxu0 %v275
  %625 = vmatpush.msra.mxu0 %v274
  %626 = vmatpush.msra.mxu0 %v273
  %627 = vmatpush.msra.mxu0 %v272
  %628 = vmatpush.msra.mxu0 %v271
  %629 = vmatpush.msra.mxu0 %v270
  %630 = vmatpush.msra.mxu0 %v269
  %631 = vmatpush.msra.mxu0 %v268
  %632 = vmatpush.msra.mxu0 %v267
  %633 = vmatpush.msra.mxu0 %v266
  %634 = vmatpush.msra.mxu0 %v265
  %635 = vmatpush.msra.mxu0 %v264
  %636 = vmatpush.msra.mxu0 %v263
  %637 = vmatpush.msra.mxu0 %v262
  %638 = vmatmul.f32.gmra.mxu0 %v17
  %v639 = vpop.f32.mrf.mxu0
  %v640 = vadd.f32 %v548, %v639
  %641 = vmatmul.f32.gmra.mxu0 %v25
  %v642 = vpop.f32.mrf.mxu0
  %v643 = vadd.f32 %v551, %v642
  %644 = vmatmul.f32.gmra.mxu0 %v33
  %v645 = vpop.f32.mrf.mxu0
  %v646 = vadd.f32 %v554, %v645
  %647 = vmatmul.f32.gmra.mxu0 %v41
  %v648 = vpop.f32.mrf.mxu0
  %v649 = vadd.f32 %v557, %v648
  %650 = vmatmul.f32.gmra.mxu0 %v49
  %v651 = vpop.f32.mrf.mxu0
  %v652 = vadd.f32 %v560, %v651
  %653 = vmatmul.f32.gmra.mxu0 %v57
  %v654 = vpop.f32.mrf.mxu0
  %v655 = vadd.f32 %v563, %v654
  %656 = vmatmul.f32.gmra.mxu0 %v65
  %v657 = vpop.f32.mrf.mxu0
  %v658 = vadd.f32 %v566, %v657
  %659 = vmatmul.f32.gmra.mxu0 %v73
  %v660 = vpop.f32.mrf.mxu0
  %v661 = vadd.f32 %v569, %v660
  %662 = vmatmul.f32.gmra.mxu0 %v81
  %v663 = vpop.f32.mrf.mxu0
  %v664 = vadd.f32 %v572, %v663
  %665 = vmatmul.f32.gmra.mxu0 %v89
  %v666 = vpop.f32.mrf.mxu0
  %v667 = vadd.f32 %v575, %v666
  %668 = vmatmul.f32.gmra.mxu0 %v97
  %v669 = vpop.f32.mrf.mxu0
  %v670 = vadd.f32 %v578, %v669
  %671 = vmatmul.f32.gmra.mxu0 %v105
  %v672 = vpop.f32.mrf.mxu0
  %v673 = vadd.f32 %v581, %v672
  %674 = vmatmul.f32.gmra.mxu0 %v113
  %v675 = vpop.f32.mrf.mxu0
  %v676 = vadd.f32 %v584, %v675
  %677 = vmatmul.f32.gmra.mxu0 %v121
  %v678 = vpop.f32.mrf.mxu0
  %v679 = vadd.f32 %v587, %v678
  %680 = vmatmul.f32.gmra.mxu0 %v129
  %v681 = vpop.f32.mrf.mxu0
  %v682 = vadd.f32 %v590, %v681
  %683 = vmatmul.f32.gmra.mxu0 %v137
  %v684 = vpop.f32.mrf.mxu0
  %v685 = vadd.f32 %v593, %v684
  %686 = vmatmul.f32.gmra.mxu0 %v145
  %v687 = vpop.f32.mrf.mxu0
  %v688 = vadd.f32 %v596, %v687
  %689 = vmatmul.f32.gmra.mxu0 %v153
  %v690 = vpop.f32.mrf.mxu0
  %v691 = vadd.f32 %v599, %v690
  %692 = vmatmul.f32.gmra.mxu0 %v161
  %v693 = vpop.f32.mrf.mxu0
  %v694 = vadd.f32 %v602, %v693
  %695 = vmatmul.f32.gmra.mxu0 %v169
  %v696 = vpop.f32.mrf.mxu0
  %v697 = vadd.f32 %v605, %v696
  %698 = vmatmul.f32.gmra.mxu0 %v177
  %v699 = vpop.f32.mrf.mxu0
  %v700 = vadd.f32 %v608, %v699
  %701 = vmatmul.f32.gmra.mxu0 %v185
  %v702 = vpop.f32.mrf.mxu0
  %v703 = vadd.f32 %v611, %v702
  %704 = vmatmul.f32.gmra.mxu0 %v193
  %v705 = vpop.f32.mrf.mxu0
  %v706 = vadd.f32 %v614, %v705
  %707 = vmatmul.f32.gmra.mxu0 %v201
  %v708 = vpop.f32.mrf.mxu0
  %v709 = vadd.f32 %v617, %v708
  %710 = vmatmul.f32.gmra.mxu0 %v209
  %v711 = vpop.f32.mrf.mxu0
  %v712 = vadd.f32 %v620, %v711
  %713 = vdwg.mxu0
  %714 = vmatpush.msra.mxu0 %v293
  %715 = vmatpush.msra.mxu0 %v292
  %716 = vmatpush.msra.mxu0 %v291
  %717 = vmatpush.msra.mxu0 %v290
  %718 = vmatpush.msra.mxu0 %v289
  %719 = vmatpush.msra.mxu0 %v288
  %720 = vmatpush.msra.mxu0 %v287
  %721 = vmatpush.msra.mxu0 %v286
  %722 = vmatpush.msra.mxu0 %v285
  %723 = vmatpush.msra.mxu0 %v284
  %724 = vmatpush.msra.mxu0 %v283
  %725 = vmatpush.msra.mxu0 %v282
  %726 = vmatpush.msra.mxu0 %v281
  %727 = vmatpush.msra.mxu0 %v280
  %728 = vmatpush.msra.mxu0 %v279
  %729 = vmatpush.msra.mxu0 %v278
  %730 = vmatmul.f32.gmra.mxu0 %v18
  %v731 = vpop.f32.mrf.mxu0
  %v732 = vadd.f32 %v640, %v731
  %733 = vmatmul.f32.gmra.mxu0 %v26
  %v734 = vpop.f32.mrf.mxu0
  %v735 = vadd.f32 %v643, %v734
  %736 = vmatmul.f32.gmra.mxu0 %v34
  %v737 = vpop.f32.mrf.mxu0
  %v738 = vadd.f32 %v646, %v737
  %739 = vmatmul.f32.gmra.mxu0 %v42
  %v740 = vpop.f32.mrf.mxu0
  %v741 = vadd.f32 %v649, %v740
  %742 = vmatmul.f32.gmra.mxu0 %v50
  %v743 = vpop.f32.mrf.mxu0
  %v744 = vadd.f32 %v652, %v743
  %745 = vmatmul.f32.gmra.mxu0 %v58
  %v746 = vpop.f32.mrf.mxu0
  %v747 = vadd.f32 %v655, %v746
  %748 = vmatmul.f32.gmra.mxu0 %v66
  %v749 = vpop.f32.mrf.mxu0
  %v750 = vadd.f32 %v658, %v749
  %751 = vmatmul.f32.gmra.mxu0 %v74
  %v752 = vpop.f32.mrf.mxu0
  %v753 = vadd.f32 %v661, %v752
  %754 = vmatmul.f32.gmra.mxu0 %v82
  %v755 = vpop.f32.mrf.mxu0
  %v756 = vadd.f32 %v664, %v755
  %757 = vmatmul.f32.gmra.mxu0 %v90
  %v758 = vpop.f32.mrf.mxu0
  %v759 = vadd.f32 %v667, %v758
  %760 = vmatmul.f32.gmra.mxu0 %v98
  %v761 = vpop.f32.mrf.mxu0
  %v762 = vadd.f32 %v670, %v761
  %763 = vmatmul.f32.gmra.mxu0 %v106
  %v764 = vpop.f32.mrf.mxu0
  %v765 = vadd.f32 %v673, %v764
  %766 = vmatmul.f32.gmra.mxu0 %v114
  %v767 = vpop.f32.mrf.mxu0
  %v768 = vadd.f32 %v676, %v767
  %769 = vmatmul.f32.gmra.mxu0 %v122
  %v770 = vpop.f32.mrf.mxu0
  %v771 = vadd.f32 %v679, %v770
  %772 = vmatmul.f32.gmra.mxu0 %v130
  %v773 = vpop.f32.mrf.mxu0
  %v774 = vadd.f32 %v682, %v773
  %775 = vmatmul.f32.gmra.mxu0 %v138
  %v776 = vpop.f32.mrf.mxu0
  %v777 = vadd.f32 %v685, %v776
  %778 = vmatmul.f32.gmra.mxu0 %v146
  %v779 = vpop.f32.mrf.mxu0
  %v780 = vadd.f32 %v688, %v779
  %781 = vmatmul.f32.gmra.mxu0 %v154
  %v782 = vpop.f32.mrf.mxu0
  %v783 = vadd.f32 %v691, %v782
  %784 = vmatmul.f32.gmra.mxu0 %v162
  %v785 = vpop.f32.mrf.mxu0
  %v786 = vadd.f32 %v694, %v785
  %787 = vmatmul.f32.gmra.mxu0 %v170
  %v788 = vpop.f32.mrf.mxu0
  %v789 = vadd.f32 %v697, %v788
  %790 = vmatmul.f32.gmra.mxu0 %v178
  %v791 = vpop.f32.mrf.mxu0
  %v792 = vadd.f32 %v700, %v791
  %793 = vmatmul.f32.gmra.mxu0 %v186
  %v794 = vpop.f32.mrf.mxu0
  %v795 = vadd.f32 %v703, %v794
  %796 = vmatmul.f32.gmra.mxu0 %v194
  %v797 = vpop.f32.mrf.mxu0
  %v798 = vadd.f32 %v706, %v797
  %799 = vmatmul.f32.gmra.mxu0 %v202
  %v800 = vpop.f32.mrf.mxu0
  %v801 = vadd.f32 %v709, %v800
  %802 = vmatmul.f32.gmra.mxu0 %v210
  %v803 = vpop.f32.mrf.mxu0
  %v804 = vadd.f32 %v712, %v803
  %805 = vdwg.mxu0
  %806 = vmatpush.msra.mxu0 %v309
  %807 = vmatpush.msra.mxu0 %v308
  %808 = vmatpush.msra.mxu0 %v307
  %809 = vmatpush.msra.mxu0 %v306
  %810 = vmatpush.msra.mxu0 %v305
  %811 = vmatpush.msra.mxu0 %v304
  %812 = vmatpush.msra.mxu0 %v303
  %813 = vmatpush.msra.mxu0 %v302
  %814 = vmatpush.msra.mxu0 %v301
  %815 = vmatpush.msra.mxu0 %v300
  %816 = vmatpush.msra.mxu0 %v299
  %817 = vmatpush.msra.mxu0 %v298
  %818 = vmatpush.msra.mxu0 %v297
  %819 = vmatpush.msra.mxu0 %v296
  %820 = vmatpush.msra.mxu0 %v295
  %821 = vmatpush.msra.mxu0 %v294
  %822 = vmatmul.f32.gmra.mxu0 %v19
  %v823 = vpop.f32.mrf.mxu0
  %v824 = vadd.f32 %v732, %v823
  %825 = vmatmul.f32.gmra.mxu0 %v27
  %v826 = vpop.f32.mrf.mxu0
  %v827 = vadd.f32 %v735, %v826
  %828 = vmatmul.f32.gmra.mxu0 %v35
  %v829 = vpop.f32.mrf.mxu0
  %v830 = vadd.f32 %v738, %v829
  %831 = vmatmul.f32.gmra.mxu0 %v43
  %v832 = vpop.f32.mrf.mxu0
  %v833 = vadd.f32 %v741, %v832
  %834 = vmatmul.f32.gmra.mxu0 %v51
  %v835 = vpop.f32.mrf.mxu0
  %v836 = vadd.f32 %v744, %v835
  %837 = vmatmul.f32.gmra.mxu0 %v59
  %v838 = vpop.f32.mrf.mxu0
  %v839 = vadd.f32 %v747, %v838
  %840 = vmatmul.f32.gmra.mxu0 %v67
  %v841 = vpop.f32.mrf.mxu0
  %v842 = vadd.f32 %v750, %v841
  %843 = vmatmul.f32.gmra.mxu0 %v75
  %v844 = vpop.f32.mrf.mxu0
  %v845 = vadd.f32 %v753, %v844
  %846 = vmatmul.f32.gmra.mxu0 %v83
  %v847 = vpop.f32.mrf.mxu0
  %v848 = vadd.f32 %v756, %v847
  %849 = vmatmul.f32.gmra.mxu0 %v91
  %v850 = vpop.f32.mrf.mxu0
  %v851 = vadd.f32 %v759, %v850
  %852 = vmatmul.f32.gmra.mxu0 %v99
  %v853 = vpop.f32.mrf.mxu0
  %v854 = vadd.f32 %v762, %v853
  %855 = vmatmul.f32.gmra.mxu0 %v107
  %v856 = vpop.f32.mrf.mxu0
  %v857 = vadd.f32 %v765, %v856
  %858 = vmatmul.f32.gmra.mxu0 %v115
  %v859 = vpop.f32.mrf.mxu0
  %v860 = vadd.f32 %v768, %v859
  %861 = vmatmul.f32.gmra.mxu0 %v123
  %v862 = vpop.f32.mrf.mxu0
  %v863 = vadd.f32 %v771, %v862
  %864 = vmatmul.f32.gmra.mxu0 %v131
  %v865 = vpop.f32.mrf.mxu0
  %v866 = vadd.f32 %v774, %v865
  %867 = vmatmul.f32.gmra.mxu0 %v139
  %v868 = vpop.f32.mrf.mxu0
  %v869 = vadd.f32 %v777, %v868
  %870 = vmatmul.f32.gmra.mxu0 %v147
  %v871 = vpop.f32.mrf.mxu0
  %v872 = vadd.f32 %v780, %v871
  %873 = vmatmul.f32.gmra.mxu0 %v155
  %v874 = vpop.f32.mrf.mxu0
  %v875 = vadd.f32 %v783, %v874
  %876 = vmatmul.f32.gmra.mxu0 %v163
  %v877 = vpop.f32.mrf.mxu0
  %v878 = vadd.f32 %v786, %v877
  %879 = vmatmul.f32.gmra.mxu0 %v171
  %v880 = vpop.f32.mrf.mxu0
  %v881 = vadd.f32 %v789, %v880
  %882 = vmatmul.f32.gmra.mxu0 %v179
  %v883 = vpop.f32.mrf.mxu0
  %v884 = vadd.f32 %v792, %v883
  %885 = vmatmul.f32.gmra.mxu0 %v187
  %v886 = vpop.f32.mrf.mxu0
  %v887 = vadd.f32 %v795, %v886
  %888 = vmatmul.f32.gmra.mxu0 %v195
  %v889 = vpop.f32.mrf.mxu0
  %v890 = vadd.f32 %v798, %v889
  %891 = vmatmul.f32.gmra.mxu0 %v203
  %v892 = vpop.f32.mrf.mxu0
  %v893 = vadd.f32 %v801, %v892
  %894 = vmatmul.f32.gmra.mxu0 %v211
  %v895 = vpop.f32.mrf.mxu0
  %v896 = vadd.f32 %v804, %v895
  %897 = vdwg.mxu0
  %898 = vmatpush.msra.mxu0 %v325
  %899 = vmatpush.msra.mxu0 %v324
  %900 = vmatpush.msra.mxu0 %v323
  %901 = vmatpush.msra.mxu0 %v322
  %902 = vmatpush.msra.mxu0 %v321
  %903 = vmatpush.msra.mxu0 %v320
  %904 = vmatpush.msra.mxu0 %v319
  %905 = vmatpush.msra.mxu0 %v318
  %906 = vmatpush.msra.mxu0 %v317
  %907 = vmatpush.msra.mxu0 %v316
  %908 = vmatpush.msra.mxu0 %v315
  %909 = vmatpush.msra.mxu0 %v314
  %910 = vmatpush.msra.mxu0 %v313
  %911 = vmatpush.msra.mxu0 %v312
  %912 = vmatpush.msra.mxu0 %v311
  %913 = vmatpush.msra.mxu0 %v310
  %914 = vmatmul.f32.gmra.mxu0 %v20
  %v915 = vpop.f32.mrf.mxu0
  %v916 = vadd.f32 %v824, %v915
  %917 = vmatmul.f32.gmra.mxu0 %v28
  %v918 = vpop.f32.mrf.mxu0
  %v919 = vadd.f32 %v827, %v918
  %920 = vmatmul.f32.gmra.mxu0 %v36
  %v921 = vpop.f32.mrf.mxu0
  %v922 = vadd.f32 %v830, %v921
  %923 = vmatmul.f32.gmra.mxu0 %v44
  %v924 = vpop.f32.mrf.mxu0
  %v925 = vadd.f32 %v833, %v924
  %926 = vmatmul.f32.gmra.mxu0 %v52
  %v927 = vpop.f32.mrf.mxu0
  %v928 = vadd.f32 %v836, %v927
  %929 = vmatmul.f32.gmra.mxu0 %v60
  %v930 = vpop.f32.mrf.mxu0
  %v931 = vadd.f32 %v839, %v930
  %932 = vmatmul.f32.gmra.mxu0 %v68
  %v933 = vpop.f32.mrf.mxu0
  %v934 = vadd.f32 %v842, %v933
  %935 = vmatmul.f32.gmra.mxu0 %v76
  %v936 = vpop.f32.mrf.mxu0
  %v937 = vadd.f32 %v845, %v936
  %938 = vmatmul.f32.gmra.mxu0 %v84
  %v939 = vpop.f32.mrf.mxu0
  %v940 = vadd.f32 %v848, %v939
  %941 = vmatmul.f32.gmra.mxu0 %v92
  %v942 = vpop.f32.mrf.mxu0
  %v943 = vadd.f32 %v851, %v942
  %944 = vmatmul.f32.gmra.mxu0 %v100
  %v945 = vpop.f32.mrf.mxu0
  %v946 = vadd.f32 %v854, %v945
  %947 = vmatmul.f32.gmra.mxu0 %v108
  %v948 = vpop.f32.mrf.mxu0
  %v949 = vadd.f32 %v857, %v948
  %950 = vmatmul.f32.gmra.mxu0 %v116
  %v951 = vpop.f32.mrf.mxu0
  %v952 = vadd.f32 %v860, %v951
  %953 = vmatmul.f32.gmra.mxu0 %v124
  %v954 = vpop.f32.mrf.mxu0
  %v955 = vadd.f32 %v863, %v954
  %956 = vmatmul.f32.gmra.mxu0 %v132
  %v957 = vpop.f32.mrf.mxu0
  %v958 = vadd.f32 %v866, %v957
  %959 = vmatmul.f32.gmra.mxu0 %v140
  %v960 = vpop.f32.mrf.mxu0
  %v961 = vadd.f32 %v869, %v960
  %962 = vmatmul.f32.gmra.mxu0 %v148
  %v963 = vpop.f32.mrf.mxu0
  %v964 = vadd.f32 %v872, %v963
  %965 = vmatmul.f32.gmra.mxu0 %v156
  %v966 = vpop.f32.mrf.mxu0
  %v967 = vadd.f32 %v875, %v966
  %968 = vmatmul.f32.gmra.mxu0 %v164
  %v969 = vpop.f32.mrf.mxu0
  %v970 = vadd.f32 %v878, %v969
  %971 = vmatmul.f32.gmra.mxu0 %v172
  %v972 = vpop.f32.mrf.mxu0
  %v973 = vadd.f32 %v881, %v972
  %974 = vmatmul.f32.gmra.mxu0 %v180
  %v975 = vpop.f32.mrf.mxu0
  %v976 = vadd.f32 %v884, %v975
  %977 = vmatmul.f32.gmra.mxu0 %v188
  %v978 = vpop.f32.mrf.mxu0
  %v979 = vadd.f32 %v887, %v978
  %980 = vmatmul.f32.gmra.mxu0 %v196
  %v981 = vpop.f32.mrf.mxu0
  %v982 = vadd.f32 %v890, %v981
  %983 = vmatmul.f32.gmra.mxu0 %v204
  %v984 = vpop.f32.mrf.mxu0
  %v985 = vadd.f32 %v893, %v984
  %986 = vmatmul.f32.gmra.mxu0 %v212
  %v987 = vpop.f32.mrf.mxu0
  %v988 = vadd.f32 %v896, %v987
  %989 = vdwg.mxu0
  %990 = vmatpush.msra.mxu0 %v341
  %991 = vmatpush.msra.mxu0 %v340
  %992 = vmatpush.msra.mxu0 %v339
  %993 = vmatpush.msra.mxu0 %v338
  %994 = vmatpush.msra.mxu0 %v337
  %995 = vmatpush.msra.mxu0 %v336
  %996 = vmatpush.msra.mxu0 %v335
  %997 = vmatpush.msra.mxu0 %v334
  %998 = vmatpush.msra.mxu0 %v333
  %999 = vmatpush.msra.mxu0 %v332
  %1000 = vmatpush.msra.mxu0 %v331
  %1001 = vmatpush.msra.mxu0 %v330
  %1002 = vmatpush.msra.mxu0 %v329
  %1003 = vmatpush.msra.mxu0 %v328
  %1004 = vmatpush.msra.mxu0 %v327
  %1005 = vmatpush.msra.mxu0 %v326
  %1006 = vmatmul.f32.gmra.mxu0 %v21
  %v1007 = vpop.f32.mrf.mxu0
  %v1008 = vadd.f32 %v916, %v1007
  %1009 = vmatmul.f32.gmra.mxu0 %v29
  %v1010 = vpop.f32.mrf.mxu0
  %v1011 = vadd.f32 %v919, %v1010
  %1012 = vmatmul.f32.gmra.mxu0 %v37
  %v1013 = vpop.f32.mrf.mxu0
  %v1014 = vadd.f32 %v922, %v1013
  %1015 = vmatmul.f32.gmra.mxu0 %v45
  %v1016 = vpop.f32.mrf.mxu0
  %v1017 = vadd.f32 %v925, %v1016
  %1018 = vmatmul.f32.gmra.mxu0 %v53
  %v1019 = vpop.f32.mrf.mxu0
  %v1020 = vadd.f32 %v928, %v1019
  %1021 = vmatmul.f32.gmra.mxu0 %v61
  %v1022 = vpop.f32.mrf.mxu0
  %v1023 = vadd.f32 %v931, %v1022
  %1024 = vmatmul.f32.gmra.mxu0 %v69
  %v1025 = vpop.f32.mrf.mxu0
  %v1026 = vadd.f32 %v934, %v1025
  %1027 = vmatmul.f32.gmra.mxu0 %v77
  %v1028 = vpop.f32.mrf.mxu0
  %v1029 = vadd.f32 %v937, %v1028
  %1030 = vmatmul.f32.gmra.mxu0 %v85
  %v1031 = vpop.f32.mrf.mxu0
  %v1032 = vadd.f32 %v940, %v1031
  %1033 = vmatmul.f32.gmra.mxu0 %v93
  %v1034 = vpop.f32.mrf.mxu0
  %v1035 = vadd.f32 %v943, %v1034
  %1036 = vmatmul.f32.gmra.mxu0 %v101
  %v1037 = vpop.f32.mrf.mxu0
  %v1038 = vadd.f32 %v946, %v1037
  %1039 = vmatmul.f32.gmra.mxu0 %v109
  %v1040 = vpop.f32.mrf.mxu0
  %v1041 = vadd.f32 %v949, %v1040
  %1042 = vmatmul.f32.gmra.mxu0 %v117
  %v1043 = vpop.f32.mrf.mxu0
  %v1044 = vadd.f32 %v952, %v1043
  %1045 = vmatmul.f32.gmra.mxu0 %v125
  %v1046 = vpop.f32.mrf.mxu0
  %v1047 = vadd.f32 %v955, %v1046
  %1048 = vmatmul.f32.gmra.mxu0 %v133
  %v1049 = vpop.f32.mrf.mxu0
  %v1050 = vadd.f32 %v958, %v1049
  %1051 = vmatmul.f32.gmra.mxu0 %v141
  %v1052 = vpop.f32.mrf.mxu0
  %v1053 = vadd.f32 %v961, %v1052
  %1054 = vmatmul.f32.gmra.mxu0 %v149
  %v1055 = vpop.f32.mrf.mxu0
  %v1056 = vadd.f32 %v964, %v1055
  %1057 = vmatmul.f32.gmra.mxu0 %v157
  %v1058 = vpop.f32.mrf.mxu0
  %v1059 = vadd.f32 %v967, %v1058
  %1060 = vmatmul.f32.gmra.mxu0 %v165
  %v1061 = vpop.f32.mrf.mxu0
  %v1062 = vadd.f32 %v970, %v1061
  %1063 = vmatmul.f32.gmra.mxu0 %v173
  %v1064 = vpop.f32.mrf.mxu0
  %v1065 = vadd.f32 %v973, %v1064
  %1066 = vmatmul.f32.gmra.mxu0 %v181
  %v1067 = vpop.f32.mrf.mxu0
  %v1068 = vadd.f32 %v976, %v1067
  %1069 = vmatmul.f32.gmra.mxu0 %v189
  %v1070 = vpop.f32.mrf.mxu0
  %v1071 = vadd.f32 %v979, %v1070
  %1072 = vmatmul.f32.gmra.mxu0 %v197
  %v1073 = vpop.f32.mrf.mxu0
  %v1074 = vadd.f32 %v982, %v1073
  %1075 = vmatmul.f32.gmra.mxu0 %v205
  %v1076 = vpop.f32.mrf.mxu0
  %v1077 = vadd.f32 %v985, %v1076
  %1078 = vmatmul.f32.gmra.mxu0 %v213
  %v1079 = vpop.f32.mrf.mxu0
  %v1080 = vadd.f32 %v988, %v1079
  %1081 = vdwg.mxu0
  %v1082 = vmax.f32 %v1008, 0.0
  %v1083 = vmax.f32 %v1011, 0.0
  %v1084 = vmax.f32 %v1014, 0.0
  %v1085 = vmax.f32 %v1017, 0.0
  %v1086 = vmax.f32 %v1020, 0.0
  %v1087 = vmax.f32 %v1023, 0.0
  %v1088 = vmax.f32 %v1026, 0.0
  %v1089 = vmax.f32 %v1029, 0.0
  %v1090 = vmax.f32 %v1032, 0.0
  %v1091 = vmax.f32 %v1035, 0.0
  %v1092 = vmax.f32 %v1038, 0.0
  %v1093 = vmax.f32 %v1041, 0.0
  %v1094 = vmax.f32 %v1044, 0.0
  %v1095 = vmax.f32 %v1047, 0.0
  %v1096 = vmax.f32 %v1050, 0.0
  %v1097 = vmax.f32 %v1053, 0.0
  %v1098 = vmax.f32 %v1056, 0.0
  %v1099 = vmax.f32 %v1059, 0.0
  %v1100 = vmax.f32 %v1062, 0.0
  %v1101 = vmax.f32 %v1065, 0.0
  %v1102 = vmax.f32 %v1068, 0.0
  %v1103 = vmax.f32 %v1071, 0.0
  %v1104 = vmax.f32 %v1074, 0.0
  %v1105 = vmax.f32 %v1077, 0.0
  %v1106 = vmax.f32 %v1080, 0.0
  %1107 = vst [vmem:[%s3] sm:$0xff] %v1082
  %1108 = vst [vmem:[%s3 + $0x8] sm:$0xff] %v1083
  %1109 = vst [vmem:[%s3 + $0x10] sm:$0xff] %v1084
  %1110 = vst [vmem:[%s3 + $0x18] sm:$0xff] %v1085
  %1111 = vst [vmem:[%s3 + $0x20] sm:$0xff] %v1086
  %1112 = vst [vmem:[%s3 + $0x28] sm:$0xff] %v1087
  %1113 = vst [vmem:[%s3 + $0x30] sm:$0xff] %v1088
  %1114 = vst [vmem:[%s3 + $0x38] sm:$0xff] %v1089
  %1115 = vst [vmem:[%s3 + $0x40] sm:$0xff] %v1090
  %1116 = vst [vmem:[%s3 + $0x48] sm:$0xff] %v1091
  %1117 = vst [vmem:[%s3 + $0x50] sm:$0xff] %v1092
  %1118 = vst [vmem:[%s3 + $0x58] sm:$0xff] %v1093
  %1119 = vst [vmem:[%s3 + $0x60] sm:$0xff] %v1094
  %1120 = vst [vmem:[%s3 + $0x68] sm:$0xff] %v1095
  %1121 = vst [vmem:[%s3 + $0x70] sm:$0xff] %v1096
  %1122 = vst [vmem:[%s3 + $0x78] sm:$0xff] %v1097
  %1123 = vst [vmem:[%s3 + $0x80] sm:$0xff] %v1098
  %1124 = vst [vmem:[%s3 + $0x88] sm:$0xff] %v1099
  %1125 = vst [vmem:[%s3 + $0x90] sm:$0xff] %v1100
  %1126 = vst [vmem:[%s3 + $0x98] sm:$0xff] %v1101
  %1127 = vst [vmem:[%s3 + $0xa0] sm:$0xff] %v1102
  %1128 = vst [vmem:[%s3 + $0xa8] sm:$0xff] %v1103
  %1129 = vst [vmem:[%s3 + $0xb0] sm:$0xff] %v1104
  %1130 = vst [vmem:[%s3 + $0xb8] sm:$0xff] %v1105
  %1131 = vst [vmem:[%s3 + $0xc0] sm:$0xff] %v1106
  // Predicated region
  $region14: #{_lambda_.6} parent=0 // pred_check
    _
  $region15: #{_lambda_.6} parent=0 // pred_check_branch
    %1133 = sbr.rel (0) target = $region17
  $region16: #{_lambda_.6} parent=0 // pred_region
    _
  $region17: #{_lambda_.6} parent=0 // pred_fallthru
    _
  // Predicated region
  $region18: #{_lambda_.6} parent=0 // pred_check
    _
  $region19: #{_lambda_.6} parent=0 // pred_check_branch
    %1135 = sbr.rel (0) target = $region21
  $region20: #{_lambda_.6} parent=0 // pred_region
    _
  $region21: #{_lambda_.6} parent=0 // pred_fallthru
    _

// kernel: _lambda_.7
$region0: #{_lambda_.7}
  #allocation0 [shape = 'u32[]', space=smem, size = 0x4, offset = 0x4, fixed_abs, tag = 'smem constant byte address 0x4 - core index']
  #allocation1 [shape = 'u32[72,128]{1,0:T(1,128)}', space=vmem, size = 0x9000, scoped, tag = 'internal scratch']
  %s0 = inlined_call_operand.vmem [shape: f32[2,12800], index: 0, kind: input, shape index: {}]
  %s1 = inlined_call_operand.vmem [shape: f32[12800,64], index: 1, kind: input, shape index: {}]
  %s2 = inlined_call_operand.vmem [shape: f32[1,64], index: 2, kind: input, shape index: {}]
  %s3 = inlined_call_operand.vmem [shape: f32[64,64], index: 3, kind: input, shape index: {}]
  %s4 = inlined_call_operand.vmem [shape: f32[1,64], index: 4, kind: input, shape index: {}]
  %s5 = inlined_call_operand.vmem [shape: f32[64,128], index: 5, kind: input, shape index: {}]
  %s6 = inlined_call_operand.vmem [shape: f32[1,128], index: 6, kind: input, shape index: {}]
  %s7 = inlined_call_operand.hbm [shape: f32[2,128], index: 7, kind: output, shape index: {}]
  %s8 = sld [smem:[#allocation0]]
  $region38: #{_lambda_.7} parent=0
    _
  %s10 = ssub.s32 1, %s8
  %s11 = scalar_select 0, %s10, %s8
  $region1: #{_lambda_.7} parent=0
    #allocation2 [shape = 'u8[1024]{0}', space=vmem, size = 0x400, scoped, tag = 'output window, operand 0, single buffered']
    #allocation3 [shape = 's32[1]{0}', space=sflag, size = 0x4, scoped, tag = 'scoped memory for _lambda_.7']
    %12 = vsyncpa [#allocation3], 0
    // Predicated region
    $region2: #{_lambda_.7} parent=1 // pred_check
      _
    $region3: #{_lambda_.7} parent=1 // pred_check_branch
      %14 = sbr.rel (0) target = $region5
    $region4: #{_lambda_.7} parent=1 // pred_region
      _
    $region5: #{_lambda_.7} parent=1 // pred_fallthru
      _
    // Predicated region
    $region6: #{_lambda_.7} parent=1 // pred_check
      _
    $region7: #{_lambda_.7} parent=1 // pred_check_branch
      %16 = sbr.rel (0) target = $region9
    $region8: #{_lambda_.7} parent=1 // pred_region
      _
    $region9: #{_lambda_.7} parent=1 // pred_fallthru
      _
    // Predicated region
    $region10: #{_lambda_.7} parent=1 // pred_check
      _
    $region11: #{_lambda_.7} parent=1 // pred_check_branch
      %18 = sbr.rel (0) target = $region13
    $region12: #{_lambda_.7} parent=1 // pred_region
      _
    $region13: #{_lambda_.7} parent=1 // pred_fallthru
      _
    // Predicated region
    $region14: #{_lambda_.7} parent=1 // pred_check
      _
    $region15: #{_lambda_.7} parent=1 // pred_check_branch
      %20 = sbr.rel (0) target = $region17
    $region16: #{_lambda_.7} parent=1 // pred_region
      _
    $region17: #{_lambda_.7} parent=1 // pred_fallthru
      _
    // Predicated region
    $region18: #{_lambda_.7} parent=1 // pred_check
      _
    $region19: #{_lambda_.7} parent=1 // pred_check_branch
      %22 = sbr.rel (0) target = $region21
    $region20: #{_lambda_.7} parent=1 // pred_region
      _
    $region21: #{_lambda_.7} parent=1 // pred_fallthru
      _
    // Predicated region
    $region22: #{_lambda_.7} parent=1 // pred_check
      _
    $region23: #{_lambda_.7} parent=1 // pred_check_branch
      %24 = sbr.rel (0) target = $region25
    $region24: #{_lambda_.7} parent=1 // pred_region
      _
    $region25: #{_lambda_.7} parent=1 // pred_fallthru
      _
    // Predicated region
    $region26: #{_lambda_.7} parent=1 // pred_check
      _
    $region27: #{_lambda_.7} parent=1 // pred_check_branch
      %26 = sbr.rel (0) target = $region29
    $region28: #{_lambda_.7} parent=1 // pred_region
      _
    $region29: #{_lambda_.7} parent=1 // pred_fallthru
      _
    %v27 = vld [vmem:[%s0] sm:$0xff]
    %v28 = vld [vmem:[%s0 + $0x8] sm:$0xff]
    %v29 = vld [vmem:[%s0 + $0x10] sm:$0xff]
    %v30 = vld [vmem:[%s0 + $0x18] sm:$0xff]
    %v31 = vld [vmem:[%s0 + $0x20] sm:$0xff]
    %v32 = vld [vmem:[%s0 + $0x28] sm:$0xff]
    %v33 = vld [vmem:[%s0 + $0x30] sm:$0xff]
    %v34 = vld [vmem:[%s0 + $0x38] sm:$0xff]
    %v35 = vld [vmem:[%s0 + $0x40] sm:$0xff]
    %v36 = vld [vmem:[%s0 + $0x48] sm:$0xff]
    %v37 = vld [vmem:[%s0 + $0x50] sm:$0xff]
    %v38 = vld [vmem:[%s0 + $0x58] sm:$0xff]
    %v39 = vld [vmem:[%s0 + $0x60] sm:$0xff]
    %v40 = vld [vmem:[%s0 + $0x68] sm:$0xff]
    %v41 = vld [vmem:[%s0 + $0x70] sm:$0xff]
    %v42 = vld [vmem:[%s0 + $0x78] sm:$0xff]
    %v43 = vld [vmem:[%s0 + $0x80] sm:$0xff]
    %v44 = vld [vmem:[%s0 + $0x88] sm:$0xff]
    %v45 = vld [vmem:[%s0 + $0x90] sm:$0xff]
    %v46 = vld [vmem:[%s0 + $0x98] sm:$0xff]
    %v47 = vld [vmem:[%s0 + $0xa0] sm:$0xff]
    %v48 = vld [vmem:[%s0 + $0xa8] sm:$0xff]
    %v49 = vld [vmem:[%s0 + $0xb0] sm:$0xff]
    %v50 = vld [vmem:[%s0 + $0xb8] sm:$0xff]
    %v51 = vld [vmem:[%s0 + $0xc0] sm:$0xff]
    %v52 = vld [vmem:[%s1] sm:$0xff]
    %v53 = vld [vmem:[%s1 + $0x8] sm:$0xff]
    %v54 = vld [vmem:[%s1 + $0x10] sm:$0xff]
    %v55 = vld [vmem:[%s1 + $0x18] sm:$0xff]
    %v56 = vld [vmem:[%s1 + $0x20] sm:$0xff]
    %v57 = vld [vmem:[%s1 + $0x28] sm:$0xff]
    %v58 = vld [vmem:[%s1 + $0x30] sm:$0xff]
    %v59 = vld [vmem:[%s1 + $0x38] sm:$0xff]
    %v60 = vld [vmem:[%s1 + $0x40] sm:$0xff]
    %v61 = vld [vmem:[%s1 + $0x48] sm:$0xff]
    %v62 = vld [vmem:[%s1 + $0x50] sm:$0xff]
    %v63 = vld [vmem:[%s1 + $0x58] sm:$0xff]
    %v64 = vld [vmem:[%s1 + $0x60] sm:$0xff]
    %v65 = vld [vmem:[%s1 + $0x68] sm:$0xff]
    %v66 = vld [vmem:[%s1 + $0x70] sm:$0xff]
    %v67 = vld [vmem:[%s1 + $0x78] sm:$0xff]
    %v68 = vld [vmem:[%s1 + $0x80] sm:$0xff]
    %v69 = vld [vmem:[%s1 + $0x88] sm:$0xff]
    %v70 = vld [vmem:[%s1 + $0x90] sm:$0xff]
    %v71 = vld [vmem:[%s1 + $0x98] sm:$0xff]
    %v72 = vld [vmem:[%s1 + $0xa0] sm:$0xff]
    %v73 = vld [vmem:[%s1 + $0xa8] sm:$0xff]
    %v74 = vld [vmem:[%s1 + $0xb0] sm:$0xff]
    %v75 = vld [vmem:[%s1 + $0xb8] sm:$0xff]
    %v76 = vld [vmem:[%s1 + $0xc0] sm:$0xff]
    %v77 = vld [vmem:[%s1 + $0xc8] sm:$0xff]
    %v78 = vld [vmem:[%s1 + $0xd0] sm:$0xff]
    %v79 = vld [vmem:[%s1 + $0xd8] sm:$0xff]
    %v80 = vld [vmem:[%s1 + $0xe0] sm:$0xff]
    %v81 = vld [vmem:[%s1 + $0xe8] sm:$0xff]
    %v82 = vld [vmem:[%s1 + $0xf0] sm:$0xff]
    %v83 = vld [vmem:[%s1 + $0xf8] sm:$0xff]
    %v84 = vld [vmem:[%s1 + $0x100] sm:$0xff]
    %v85 = vld [vmem:[%s1 + $0x108] sm:$0xff]
    %v86 = vld [vmem:[%s1 + $0x110] sm:$0xff]
    %v87 = vld [vmem:[%s1 + $0x118] sm:$0xff]
    %v88 = vld [vmem:[%s1 + $0x120] sm:$0xff]
    %v89 = vld [vmem:[%s1 + $0x128] sm:$0xff]
    %v90 = vld [vmem:[%s1 + $0x130] sm:$0xff]
    %v91 = vld [vmem:[%s1 + $0x138] sm:$0xff]
    %v92 = vld [vmem:[%s1 + $0x140] sm:$0xff]
    %v93 = vld [vmem:[%s1 + $0x148] sm:$0xff]
    %v94 = vld [vmem:[%s1 + $0x150] sm:$0xff]
    %v95 = vld [vmem:[%s1 + $0x158] sm:$0xff]
    %v96 = vld [vmem:[%s1 + $0x160] sm:$0xff]
    %v97 = vld [vmem:[%s1 + $0x168] sm:$0xff]
    %v98 = vld [vmem:[%s1 + $0x170] sm:$0xff]
    %v99 = vld [vmem:[%s1 + $0x178] sm:$0xff]
    %v100 = vld [vmem:[%s1 + $0x180] sm:$0xff]
    %v101 = vld [vmem:[%s1 + $0x188] sm:$0xff]
    %v102 = vld [vmem:[%s1 + $0x190] sm:$0xff]
    %v103 = vld [vmem:[%s1 + $0x198] sm:$0xff]
    %v104 = vld [vmem:[%s1 + $0x1a0] sm:$0xff]
    %v105 = vld [vmem:[%s1 + $0x1a8] sm:$0xff]
    %v106 = vld [vmem:[%s1 + $0x1b0] sm:$0xff]
    %v107 = vld [vmem:[%s1 + $0x1b8] sm:$0xff]
    %v108 = vld [vmem:[%s1 + $0x1c0] sm:$0xff]
    %v109 = vld [vmem:[%s1 + $0x1c8] sm:$0xff]
    %v110 = vld [vmem:[%s1 + $0x1d0] sm:$0xff]
    %v111 = vld [vmem:[%s1 + $0x1d8] sm:$0xff]
    %v112 = vld [vmem:[%s1 + $0x1e0] sm:$0xff]
    %v113 = vld [vmem:[%s1 + $0x1e8] sm:$0xff]
    %v114 = vld [vmem:[%s1 + $0x1f0] sm:$0xff]
    %v115 = vld [vmem:[%s1 + $0x1f8] sm:$0xff]
    %v116 = vld [vmem:[%s1 + $0x200] sm:$0xff]
    %v117 = vld [vmem:[%s1 + $0x208] sm:$0xff]
    %v118 = vld [vmem:[%s1 + $0x210] sm:$0xff]
    %v119 = vld [vmem:[%s1 + $0x218] sm:$0xff]
    %v120 = vld [vmem:[%s1 + $0x220] sm:$0xff]
    %v121 = vld [vmem:[%s1 + $0x228] sm:$0xff]
    %v122 = vld [vmem:[%s1 + $0x230] sm:$0xff]
    %v123 = vld [vmem:[%s1 + $0x238] sm:$0xff]
    %v124 = vld [vmem:[%s1 + $0x240] sm:$0xff]
    %v125 = vld [vmem:[%s1 + $0x248] sm:$0xff]
    %v126 = vld [vmem:[%s1 + $0x250] sm:$0xff]
    %v127 = vld [vmem:[%s1 + $0x258] sm:$0xff]
    %v128 = vld [vmem:[%s1 + $0x260] sm:$0xff]
    %v129 = vld [vmem:[%s1 + $0x268] sm:$0xff]
    %v130 = vld [vmem:[%s1 + $0x270] sm:$0xff]
    %v131 = vld [vmem:[%s1 + $0x278] sm:$0xff]
    %v132 = vld [vmem:[%s1 + $0x280] sm:$0xff]
    %v133 = vld [vmem:[%s1 + $0x288] sm:$0xff]
    %v134 = vld [vmem:[%s1 + $0x290] sm:$0xff]
    %v135 = vld [vmem:[%s1 + $0x298] sm:$0xff]
    %v136 = vld [vmem:[%s1 + $0x2a0] sm:$0xff]
    %v137 = vld [vmem:[%s1 + $0x2a8] sm:$0xff]
    %v138 = vld [vmem:[%s1 + $0x2b0] sm:$0xff]
    %v139 = vld [vmem:[%s1 + $0x2b8] sm:$0xff]
    %v140 = vld [vmem:[%s1 + $0x2c0] sm:$0xff]
    %v141 = vld [vmem:[%s1 + $0x2c8] sm:$0xff]
    %v142 = vld [vmem:[%s1 + $0x2d0] sm:$0xff]
    %v143 = vld [vmem:[%s1 + $0x2d8] sm:$0xff]
    %v144 = vld [vmem:[%s1 + $0x2e0] sm:$0xff]
    %v145 = vld [vmem:[%s1 + $0x2e8] sm:$0xff]
    %v146 = vld [vmem:[%s1 + $0x2f0] sm:$0xff]
    %v147 = vld [vmem:[%s1 + $0x2f8] sm:$0xff]
    %v148 = vld [vmem:[%s1 + $0x300] sm:$0xff]
    %v149 = vld [vmem:[%s1 + $0x308] sm:$0xff]
    %v150 = vld [vmem:[%s1 + $0x310] sm:$0xff]
    %v151 = vld [vmem:[%s1 + $0x318] sm:$0xff]
    %v152 = vld [vmem:[%s1 + $0x320] sm:$0xff]
    %v153 = vld [vmem:[%s1 + $0x328] sm:$0xff]
    %v154 = vld [vmem:[%s1 + $0x330] sm:$0xff]
    %v155 = vld [vmem:[%s1 + $0x338] sm:$0xff]
    %v156 = vld [vmem:[%s1 + $0x340] sm:$0xff]
    %v157 = vld [vmem:[%s1 + $0x348] sm:$0xff]
    %v158 = vld [vmem:[%s1 + $0x350] sm:$0xff]
    %v159 = vld [vmem:[%s1 + $0x358] sm:$0xff]
    %v160 = vld [vmem:[%s1 + $0x360] sm:$0xff]
    %v161 = vld [vmem:[%s1 + $0x368] sm:$0xff]
    %v162 = vld [vmem:[%s1 + $0x370] sm:$0xff]
    %v163 = vld [vmem:[%s1 + $0x378] sm:$0xff]
    %v164 = vld [vmem:[%s1 + $0x380] sm:$0xff]
    %v165 = vld [vmem:[%s1 + $0x388] sm:$0xff]
    %v166 = vld [vmem:[%s1 + $0x390] sm:$0xff]
    %v167 = vld [vmem:[%s1 + $0x398] sm:$0xff]
    %v168 = vld [vmem:[%s1 + $0x3a0] sm:$0xff]
    %v169 = vld [vmem:[%s1 + $0x3a8] sm:$0xff]
    %v170 = vld [vmem:[%s1 + $0x3b0] sm:$0xff]
    %v171 = vld [vmem:[%s1 + $0x3b8] sm:$0xff]
    %v172 = vld [vmem:[%s1 + $0x3c0] sm:$0xff]
    %v173 = vld [vmem:[%s1 + $0x3c8] sm:$0xff]
    %v174 = vld [vmem:[%s1 + $0x3d0] sm:$0xff]
    %v175 = vld [vmem:[%s1 + $0x3d8] sm:$0xff]
    %v176 = vld [vmem:[%s1 + $0x3e0] sm:$0xff]
    %v177 = vld [vmem:[%s1 + $0x3e8] sm:$0xff]
    %v178 = vld [vmem:[%s1 + $0x3f0] sm:$0xff]
    %v179 = vld [vmem:[%s1 + $0x3f8] sm:$0xff]
    %v180 = vld [vmem:[%s1 + $0x400] sm:$0xff]
    %v181 = vld [vmem:[%s1 + $0x408] sm:$0xff]
    %v182 = vld [vmem:[%s1 + $0x410] sm:$0xff]
    %v183 = vld [vmem:[%s1 + $0x418] sm:$0xff]
    %v184 = vld [vmem:[%s1 + $0x420] sm:$0xff]
    %v185 = vld [vmem:[%s1 + $0x428] sm:$0xff]
    %v186 = vld [vmem:[%s1 + $0x430] sm:$0xff]
    %v187 = vld [vmem:[%s1 + $0x438] sm:$0xff]
    %v188 = vld [vmem:[%s1 + $0x440] sm:$0xff]
    %v189 = vld [vmem:[%s1 + $0x448] sm:$0xff]
    %v190 = vld [vmem:[%s1 + $0x450] sm:$0xff]
    %v191 = vld [vmem:[%s1 + $0x458] sm:$0xff]
    %v192 = vld [vmem:[%s1 + $0x460] sm:$0xff]
    %v193 = vld [vmem:[%s1 + $0x468] sm:$0xff]
    %v194 = vld [vmem:[%s1 + $0x470] sm:$0xff]
    %v195 = vld [vmem:[%s1 + $0x478] sm:$0xff]
    %v196 = vld [vmem:[%s1 + $0x480] sm:$0xff]
    %v197 = vld [vmem:[%s1 + $0x488] sm:$0xff]
    %v198 = vld [vmem:[%s1 + $0x490] sm:$0xff]
    %v199 = vld [vmem:[%s1 + $0x498] sm:$0xff]
    %v200 = vld [vmem:[%s1 + $0x4a0] sm:$0xff]
    %v201 = vld [vmem:[%s1 + $0x4a8] sm:$0xff]
    %v202 = vld [vmem:[%s1 + $0x4b0] sm:$0xff]
    %v203 = vld [vmem:[%s1 + $0x4b8] sm:$0xff]
    %v204 = vld [vmem:[%s1 + $0x4c0] sm:$0xff]
    %v205 = vld [vmem:[%s1 + $0x4c8] sm:$0xff]
    %v206 = vld [vmem:[%s1 + $0x4d0] sm:$0xff]
    %v207 = vld [vmem:[%s1 + $0x4d8] sm:$0xff]
    %v208 = vld [vmem:[%s1 + $0x4e0] sm:$0xff]
    %v209 = vld [vmem:[%s1 + $0x4e8] sm:$0xff]
    %v210 = vld [vmem:[%s1 + $0x4f0] sm:$0xff]
    %v211 = vld [vmem:[%s1 + $0x4f8] sm:$0xff]
    %v212 = vld [vmem:[%s1 + $0x500] sm:$0xff]
    %v213 = vld [vmem:[%s1 + $0x508] sm:$0xff]
    %v214 = vld [vmem:[%s1 + $0x510] sm:$0xff]
    %v215 = vld [vmem:[%s1 + $0x518] sm:$0xff]
    %v216 = vld [vmem:[%s1 + $0x520] sm:$0xff]
    %v217 = vld [vmem:[%s1 + $0x528] sm:$0xff]
    %v218 = vld [vmem:[%s1 + $0x530] sm:$0xff]
    %v219 = vld [vmem:[%s1 + $0x538] sm:$0xff]
    %v220 = vld [vmem:[%s1 + $0x540] sm:$0xff]
    %v221 = vld [vmem:[%s1 + $0x548] sm:$0xff]
    %v222 = vld [vmem:[%s1 + $0x550] sm:$0xff]
    %v223 = vld [vmem:[%s1 + $0x558] sm:$0xff]
    %v224 = vld [vmem:[%s1 + $0x560] sm:$0xff]
    %v225 = vld [vmem:[%s1 + $0x568] sm:$0xff]
    %v226 = vld [vmem:[%s1 + $0x570] sm:$0xff]
    %v227 = vld [vmem:[%s1 + $0x578] sm:$0xff]
    %v228 = vld [vmem:[%s1 + $0x580] sm:$0xff]
    %v229 = vld [vmem:[%s1 + $0x588] sm:$0xff]
    %v230 = vld [vmem:[%s1 + $0x590] sm:$0xff]
    %v231 = vld [vmem:[%s1 + $0x598] sm:$0xff]
    %v232 = vld [vmem:[%s1 + $0x5a0] sm:$0xff]
    %v233 = vld [vmem:[%s1 + $0x5a8] sm:$0xff]
    %v234 = vld [vmem:[%s1 + $0x5b0] sm:$0xff]
    %v235 = vld [vmem:[%s1 + $0x5b8] sm:$0xff]
    %v236 = vld [vmem:[%s1 + $0x5c0] sm:$0xff]
    %v237 = vld [vmem:[%s1 + $0x5c8] sm:$0xff]
    %v238 = vld [vmem:[%s1 + $0x5d0] sm:$0xff]
    %v239 = vld [vmem:[%s1 + $0x5d8] sm:$0xff]
    %v240 = vld [vmem:[%s1 + $0x5e0] sm:$0xff]
    %v241 = vld [vmem:[%s1 + $0x5e8] sm:$0xff]
    %v242 = vld [vmem:[%s1 + $0x5f0] sm:$0xff]
    %v243 = vld [vmem:[%s1 + $0x5f8] sm:$0xff]
    %v244 = vld [vmem:[%s1 + $0x600] sm:$0xff]
    %v245 = vld [vmem:[%s1 + $0x608] sm:$0xff]
    %v246 = vld [vmem:[%s1 + $0x610] sm:$0xff]
    %v247 = vld [vmem:[%s1 + $0x618] sm:$0xff]
    %v248 = vld [vmem:[%s1 + $0x620] sm:$0xff]
    %v249 = vld [vmem:[%s1 + $0x628] sm:$0xff]
    %v250 = vld [vmem:[%s1 + $0x630] sm:$0xff]
    %v251 = vld [vmem:[%s1 + $0x638] sm:$0xff]
    %v252 = vld [vmem:[%s1 + $0x640] sm:$0xff]
    %v253 = vld [vmem:[%s1 + $0x648] sm:$0xff]
    %v254 = vld [vmem:[%s1 + $0x650] sm:$0xff]
    %v255 = vld [vmem:[%s1 + $0x658] sm:$0xff]
    %v256 = vld [vmem:[%s1 + $0x660] sm:$0xff]
    %v257 = vld [vmem:[%s1 + $0x668] sm:$0xff]
    %v258 = vld [vmem:[%s1 + $0x670] sm:$0xff]
    %v259 = vld [vmem:[%s1 + $0x678] sm:$0xff]
    %v260 = vld [vmem:[%s1 + $0x680] sm:$0xff]
    %v261 = vld [vmem:[%s1 + $0x688] sm:$0xff]
    %v262 = vld [vmem:[%s1 + $0x690] sm:$0xff]
    %v263 = vld [vmem:[%s1 + $0x698] sm:$0xff]
    %v264 = vld [vmem:[%s1 + $0x6a0] sm:$0xff]
    %v265 = vld [vmem:[%s1 + $0x6a8] sm:$0xff]
    %v266 = vld [vmem:[%s1 + $0x6b0] sm:$0xff]
    %v267 = vld [vmem:[%s1 + $0x6b8] sm:$0xff]
    %v268 = vld [vmem:[%s1 + $0x6c0] sm:$0xff]
    %v269 = vld [vmem:[%s1 + $0x6c8] sm:$0xff]
    %v270 = vld [vmem:[%s1 + $0x6d0] sm:$0xff]
    %v271 = vld [vmem:[%s1 + $0x6d8] sm:$0xff]
    %v272 = vld [vmem:[%s1 + $0x6e0] sm:$0xff]
    %v273 = vld [vmem:[%s1 + $0x6e8] sm:$0xff]
    %v274 = vld [vmem:[%s1 + $0x6f0] sm:$0xff]
    %v275 = vld [vmem:[%s1 + $0x6f8] sm:$0xff]
    %v276 = vld [vmem:[%s1 + $0x700] sm:$0xff]
    %v277 = vld [vmem:[%s1 + $0x708] sm:$0xff]
    %v278 = vld [vmem:[%s1 + $0x710] sm:$0xff]
    %v279 = vld [vmem:[%s1 + $0x718] sm:$0xff]
    %v280 = vld [vmem:[%s1 + $0x720] sm:$0xff]
    %v281 = vld [vmem:[%s1 + $0x728] sm:$0xff]
    %v282 = vld [vmem:[%s1 + $0x730] sm:$0xff]
    %v283 = vld [vmem:[%s1 + $0x738] sm:$0xff]
    %v284 = vld [vmem:[%s1 + $0x740] sm:$0xff]
    %v285 = vld [vmem:[%s1 + $0x748] sm:$0xff]
    %v286 = vld [vmem:[%s1 + $0x750] sm:$0xff]
    %v287 = vld [vmem:[%s1 + $0x758] sm:$0xff]
    %v288 = vld [vmem:[%s1 + $0x760] sm:$0xff]
    %v289 = vld [vmem:[%s1 + $0x768] sm:$0xff]
    %v290 = vld [vmem:[%s1 + $0x770] sm:$0xff]
    %v291 = vld [vmem:[%s1 + $0x778] sm:$0xff]
    %v292 = vld [vmem:[%s1 + $0x780] sm:$0xff]
    %v293 = vld [vmem:[%s1 + $0x788] sm:$0xff]
    %v294 = vld [vmem:[%s1 + $0x790] sm:$0xff]
    %v295 = vld [vmem:[%s1 + $0x798] sm:$0xff]
    %v296 = vld [vmem:[%s1 + $0x7a0] sm:$0xff]
    %v297 = vld [vmem:[%s1 + $0x7a8] sm:$0xff]
    %v298 = vld [vmem:[%s1 + $0x7b0] sm:$0xff]
    %v299 = vld [vmem:[%s1 + $0x7b8] sm:$0xff]
    %v300 = vld [vmem:[%s1 + $0x7c0] sm:$0xff]
    %v301 = vld [vmem:[%s1 + $0x7c8] sm:$0xff]
    %v302 = vld [vmem:[%s1 + $0x7d0] sm:$0xff]
    %v303 = vld [vmem:[%s1 + $0x7d8] sm:$0xff]
    %v304 = vld [vmem:[%s1 + $0x7e0] sm:$0xff]
    %v305 = vld [vmem:[%s1 + $0x7e8] sm:$0xff]
    %v306 = vld [vmem:[%s1 + $0x7f0] sm:$0xff]
    %v307 = vld [vmem:[%s1 + $0x7f8] sm:$0xff]
    %v308 = vld [vmem:[%s1 + $0x800] sm:$0xff]
    %v309 = vld [vmem:[%s1 + $0x808] sm:$0xff]
    %v310 = vld [vmem:[%s1 + $0x810] sm:$0xff]
    %v311 = vld [vmem:[%s1 + $0x818] sm:$0xff]
    %v312 = vld [vmem:[%s1 + $0x820] sm:$0xff]
    %v313 = vld [vmem:[%s1 + $0x828] sm:$0xff]
    %v314 = vld [vmem:[%s1 + $0x830] sm:$0xff]
    %v315 = vld [vmem:[%s1 + $0x838] sm:$0xff]
    %v316 = vld [vmem:[%s1 + $0x840] sm:$0xff]
    %v317 = vld [vmem:[%s1 + $0x848] sm:$0xff]
    %v318 = vld [vmem:[%s1 + $0x850] sm:$0xff]
    %v319 = vld [vmem:[%s1 + $0x858] sm:$0xff]
    %v320 = vld [vmem:[%s1 + $0x860] sm:$0xff]
    %v321 = vld [vmem:[%s1 + $0x868] sm:$0xff]
    %v322 = vld [vmem:[%s1 + $0x870] sm:$0xff]
    %v323 = vld [vmem:[%s1 + $0x878] sm:$0xff]
    %v324 = vld [vmem:[%s1 + $0x880] sm:$0xff]
    %v325 = vld [vmem:[%s1 + $0x888] sm:$0xff]
    %v326 = vld [vmem:[%s1 + $0x890] sm:$0xff]
    %v327 = vld [vmem:[%s1 + $0x898] sm:$0xff]
    %v328 = vld [vmem:[%s1 + $0x8a0] sm:$0xff]
    %v329 = vld [vmem:[%s1 + $0x8a8] sm:$0xff]
    %v330 = vld [vmem:[%s1 + $0x8b0] sm:$0xff]
    %v331 = vld [vmem:[%s1 + $0x8b8] sm:$0xff]
    %v332 = vld [vmem:[%s1 + $0x8c0] sm:$0xff]
    %v333 = vld [vmem:[%s1 + $0x8c8] sm:$0xff]
    %v334 = vld [vmem:[%s1 + $0x8d0] sm:$0xff]
    %v335 = vld [vmem:[%s1 + $0x8d8] sm:$0xff]
    %v336 = vld [vmem:[%s1 + $0x8e0] sm:$0xff]
    %v337 = vld [vmem:[%s1 + $0x8e8] sm:$0xff]
    %v338 = vld [vmem:[%s1 + $0x8f0] sm:$0xff]
    %v339 = vld [vmem:[%s1 + $0x8f8] sm:$0xff]
    %v340 = vld [vmem:[%s1 + $0x900] sm:$0xff]
    %v341 = vld [vmem:[%s1 + $0x908] sm:$0xff]
    %v342 = vld [vmem:[%s1 + $0x910] sm:$0xff]
    %v343 = vld [vmem:[%s1 + $0x918] sm:$0xff]
    %v344 = vld [vmem:[%s1 + $0x920] sm:$0xff]
    %v345 = vld [vmem:[%s1 + $0x928] sm:$0xff]
    %v346 = vld [vmem:[%s1 + $0x930] sm:$0xff]
    %v347 = vld [vmem:[%s1 + $0x938] sm:$0xff]
    %v348 = vld [vmem:[%s1 + $0x940] sm:$0xff]
    %v349 = vld [vmem:[%s1 + $0x948] sm:$0xff]
    %v350 = vld [vmem:[%s1 + $0x950] sm:$0xff]
    %v351 = vld [vmem:[%s1 + $0x958] sm:$0xff]
    %v352 = vld [vmem:[%s1 + $0x960] sm:$0xff]
    %v353 = vld [vmem:[%s1 + $0x968] sm:$0xff]
    %v354 = vld [vmem:[%s1 + $0x970] sm:$0xff]
    %v355 = vld [vmem:[%s1 + $0x978] sm:$0xff]
    %v356 = vld [vmem:[%s1 + $0x980] sm:$0xff]
    %v357 = vld [vmem:[%s1 + $0x988] sm:$0xff]
    %v358 = vld [vmem:[%s1 + $0x990] sm:$0xff]
    %v359 = vld [vmem:[%s1 + $0x998] sm:$0xff]
    %v360 = vld [vmem:[%s1 + $0x9a0] sm:$0xff]
    %v361 = vld [vmem:[%s1 + $0x9a8] sm:$0xff]
    %v362 = vld [vmem:[%s1 + $0x9b0] sm:$0xff]
    %v363 = vld [vmem:[%s1 + $0x9b8] sm:$0xff]
    %v364 = vld [vmem:[%s1 + $0x9c0] sm:$0xff]
    %v365 = vld [vmem:[%s1 + $0x9c8] sm:$0xff]
    %v366 = vld [vmem:[%s1 + $0x9d0] sm:$0xff]
    %v367 = vld [vmem:[%s1 + $0x9d8] sm:$0xff]
    %v368 = vld [vmem:[%s1 + $0x9e0] sm:$0xff]
    %v369 = vld [vmem:[%s1 + $0x9e8] sm:$0xff]
    %v370 = vld [vmem:[%s1 + $0x9f0] sm:$0xff]
    %v371 = vld [vmem:[%s1 + $0x9f8] sm:$0xff]
    %v372 = vld [vmem:[%s1 + $0xa00] sm:$0xff]
    %v373 = vld [vmem:[%s1 + $0xa08] sm:$0xff]
    %v374 = vld [vmem:[%s1 + $0xa10] sm:$0xff]
    %v375 = vld [vmem:[%s1 + $0xa18] sm:$0xff]
    %v376 = vld [vmem:[%s1 + $0xa20] sm:$0xff]
    %v377 = vld [vmem:[%s1 + $0xa28] sm:$0xff]
    %v378 = vld [vmem:[%s1 + $0xa30] sm:$0xff]
    %v379 = vld [vmem:[%s1 + $0xa38] sm:$0xff]
    %v380 = vld [vmem:[%s1 + $0xa40] sm:$0xff]
    %v381 = vld [vmem:[%s1 + $0xa48] sm:$0xff]
    %v382 = vld [vmem:[%s1 + $0xa50] sm:$0xff]
    %v383 = vld [vmem:[%s1 + $0xa58] sm:$0xff]
    %v384 = vld [vmem:[%s1 + $0xa60] sm:$0xff]
    %v385 = vld [vmem:[%s1 + $0xa68] sm:$0xff]
    %v386 = vld [vmem:[%s1 + $0xa70] sm:$0xff]
    %v387 = vld [vmem:[%s1 + $0xa78] sm:$0xff]
    %v388 = vld [vmem:[%s1 + $0xa80] sm:$0xff]
    %v389 = vld [vmem:[%s1 + $0xa88] sm:$0xff]
    %v390 = vld [vmem:[%s1 + $0xa90] sm:$0xff]
    %v391 = vld [vmem:[%s1 + $0xa98] sm:$0xff]
    %v392 = vld [vmem:[%s1 + $0xaa0] sm:$0xff]
    %v393 = vld [vmem:[%s1 + $0xaa8] sm:$0xff]
    %v394 = vld [vmem:[%s1 + $0xab0] sm:$0xff]
    %v395 = vld [vmem:[%s1 + $0xab8] sm:$0xff]
    %v396 = vld [vmem:[%s1 + $0xac0] sm:$0xff]
    %v397 = vld [vmem:[%s1 + $0xac8] sm:$0xff]
    %v398 = vld [vmem:[%s1 + $0xad0] sm:$0xff]
    %v399 = vld [vmem:[%s1 + $0xad8] sm:$0xff]
    %v400 = vld [vmem:[%s1 + $0xae0] sm:$0xff]
    %v401 = vld [vmem:[%s1 + $0xae8] sm:$0xff]
    %v402 = vld [vmem:[%s1 + $0xaf0] sm:$0xff]
    %v403 = vld [vmem:[%s1 + $0xaf8] sm:$0xff]
    %v404 = vld [vmem:[%s1 + $0xb00] sm:$0xff]
    %v405 = vld [vmem:[%s1 + $0xb08] sm:$0xff]
    %v406 = vld [vmem:[%s1 + $0xb10] sm:$0xff]
    %v407 = vld [vmem:[%s1 + $0xb18] sm:$0xff]
    %v408 = vld [vmem:[%s1 + $0xb20] sm:$0xff]
    %v409 = vld [vmem:[%s1 + $0xb28] sm:$0xff]
    %v410 = vld [vmem:[%s1 + $0xb30] sm:$0xff]
    %v411 = vld [vmem:[%s1 + $0xb38] sm:$0xff]
    %v412 = vld [vmem:[%s1 + $0xb40] sm:$0xff]
    %v413 = vld [vmem:[%s1 + $0xb48] sm:$0xff]
    %v414 = vld [vmem:[%s1 + $0xb50] sm:$0xff]
    %v415 = vld [vmem:[%s1 + $0xb58] sm:$0xff]
    %v416 = vld [vmem:[%s1 + $0xb60] sm:$0xff]
    %v417 = vld [vmem:[%s1 + $0xb68] sm:$0xff]
    %v418 = vld [vmem:[%s1 + $0xb70] sm:$0xff]
    %v419 = vld [vmem:[%s1 + $0xb78] sm:$0xff]
    %v420 = vld [vmem:[%s1 + $0xb80] sm:$0xff]
    %v421 = vld [vmem:[%s1 + $0xb88] sm:$0xff]
    %v422 = vld [vmem:[%s1 + $0xb90] sm:$0xff]
    %v423 = vld [vmem:[%s1 + $0xb98] sm:$0xff]
    %v424 = vld [vmem:[%s1 + $0xba0] sm:$0xff]
    %v425 = vld [vmem:[%s1 + $0xba8] sm:$0xff]
    %v426 = vld [vmem:[%s1 + $0xbb0] sm:$0xff]
    %v427 = vld [vmem:[%s1 + $0xbb8] sm:$0xff]
    %v428 = vld [vmem:[%s1 + $0xbc0] sm:$0xff]
    %v429 = vld [vmem:[%s1 + $0xbc8] sm:$0xff]
    %v430 = vld [vmem:[%s1 + $0xbd0] sm:$0xff]
    %v431 = vld [vmem:[%s1 + $0xbd8] sm:$0xff]
    %v432 = vld [vmem:[%s1 + $0xbe0] sm:$0xff]
    %v433 = vld [vmem:[%s1 + $0xbe8] sm:$0xff]
    %v434 = vld [vmem:[%s1 + $0xbf0] sm:$0xff]
    %v435 = vld [vmem:[%s1 + $0xbf8] sm:$0xff]
    %v436 = vld [vmem:[%s1 + $0xc00] sm:$0xff]
    %v437 = vld [vmem:[%s1 + $0xc08] sm:$0xff]
    %v438 = vld [vmem:[%s1 + $0xc10] sm:$0xff]
    %v439 = vld [vmem:[%s1 + $0xc18] sm:$0xff]
    %v440 = vld [vmem:[%s1 + $0xc20] sm:$0xff]
    %v441 = vld [vmem:[%s1 + $0xc28] sm:$0xff]
    %v442 = vld [vmem:[%s1 + $0xc30] sm:$0xff]
    %v443 = vld [vmem:[%s1 + $0xc38] sm:$0xff]
    %v444 = vld [vmem:[%s1 + $0xc40] sm:$0xff]
    %v445 = vld [vmem:[%s1 + $0xc48] sm:$0xff]
    %v446 = vld [vmem:[%s1 + $0xc50] sm:$0xff]
    %v447 = vld [vmem:[%s1 + $0xc58] sm:$0xff]
    %v448 = vld [vmem:[%s1 + $0xc60] sm:$0xff]
    %v449 = vld [vmem:[%s1 + $0xc68] sm:$0xff]
    %v450 = vld [vmem:[%s1 + $0xc70] sm:$0xff]
    %v451 = vld [vmem:[%s1 + $0xc78] sm:$0xff]
    %v452 = vld [vmem:[%s1 + $0xc80] sm:$0xff]
    %v453 = vld [vmem:[%s1 + $0xc88] sm:$0xff]
    %v454 = vld [vmem:[%s1 + $0xc90] sm:$0xff]
    %v455 = vld [vmem:[%s1 + $0xc98] sm:$0xff]
    %v456 = vld [vmem:[%s1 + $0xca0] sm:$0xff]
    %v457 = vld [vmem:[%s1 + $0xca8] sm:$0xff]
    %v458 = vld [vmem:[%s1 + $0xcb0] sm:$0xff]
    %v459 = vld [vmem:[%s1 + $0xcb8] sm:$0xff]
    %v460 = vld [vmem:[%s1 + $0xcc0] sm:$0xff]
    %v461 = vld [vmem:[%s1 + $0xcc8] sm:$0xff]
    %v462 = vld [vmem:[%s1 + $0xcd0] sm:$0xff]
    %v463 = vld [vmem:[%s1 + $0xcd8] sm:$0xff]
    %v464 = vld [vmem:[%s1 + $0xce0] sm:$0xff]
    %v465 = vld [vmem:[%s1 + $0xce8] sm:$0xff]
    %v466 = vld [vmem:[%s1 + $0xcf0] sm:$0xff]
    %v467 = vld [vmem:[%s1 + $0xcf8] sm:$0xff]
    %v468 = vld [vmem:[%s1 + $0xd00] sm:$0xff]
    %v469 = vld [vmem:[%s1 + $0xd08] sm:$0xff]
    %v470 = vld [vmem:[%s1 + $0xd10] sm:$0xff]
    %v471 = vld [vmem:[%s1 + $0xd18] sm:$0xff]
    %v472 = vld [vmem:[%s1 + $0xd20] sm:$0xff]
    %v473 = vld [vmem:[%s1 + $0xd28] sm:$0xff]
    %v474 = vld [vmem:[%s1 + $0xd30] sm:$0xff]
    %v475 = vld [vmem:[%s1 + $0xd38] sm:$0xff]
    %v476 = vld [vmem:[%s1 + $0xd40] sm:$0xff]
    %v477 = vld [vmem:[%s1 + $0xd48] sm:$0xff]
    %v478 = vld [vmem:[%s1 + $0xd50] sm:$0xff]
    %v479 = vld [vmem:[%s1 + $0xd58] sm:$0xff]
    %v480 = vld [vmem:[%s1 + $0xd60] sm:$0xff]
    %v481 = vld [vmem:[%s1 + $0xd68] sm:$0xff]
    %v482 = vld [vmem:[%s1 + $0xd70] sm:$0xff]
    %v483 = vld [vmem:[%s1 + $0xd78] sm:$0xff]
    %v484 = vld [vmem:[%s1 + $0xd80] sm:$0xff]
    %v485 = vld [vmem:[%s1 + $0xd88] sm:$0xff]
    %v486 = vld [vmem:[%s1 + $0xd90] sm:$0xff]
    %v487 = vld [vmem:[%s1 + $0xd98] sm:$0xff]
    %v488 = vld [vmem:[%s1 + $0xda0] sm:$0xff]
    %v489 = vld [vmem:[%s1 + $0xda8] sm:$0xff]
    %v490 = vld [vmem:[%s1 + $0xdb0] sm:$0xff]
    %v491 = vld [vmem:[%s1 + $0xdb8] sm:$0xff]
    %v492 = vld [vmem:[%s1 + $0xdc0] sm:$0xff]
    %v493 = vld [vmem:[%s1 + $0xdc8] sm:$0xff]
    %v494 = vld [vmem:[%s1 + $0xdd0] sm:$0xff]
    %v495 = vld [vmem:[%s1 + $0xdd8] sm:$0xff]
    %v496 = vld [vmem:[%s1 + $0xde0] sm:$0xff]
    %v497 = vld [vmem:[%s1 + $0xde8] sm:$0xff]
    %v498 = vld [vmem:[%s1 + $0xdf0] sm:$0xff]
    %v499 = vld [vmem:[%s1 + $0xdf8] sm:$0xff]
    %v500 = vld [vmem:[%s1 + $0xe00] sm:$0xff]
    %v501 = vld [vmem:[%s1 + $0xe08] sm:$0xff]
    %v502 = vld [vmem:[%s1 + $0xe10] sm:$0xff]
    %v503 = vld [vmem:[%s1 + $0xe18] sm:$0xff]
    %v504 = vld [vmem:[%s1 + $0xe20] sm:$0xff]
    %v505 = vld [vmem:[%s1 + $0xe28] sm:$0xff]
    %v506 = vld [vmem:[%s1 + $0xe30] sm:$0xff]
    %v507 = vld [vmem:[%s1 + $0xe38] sm:$0xff]
    %v508 = vld [vmem:[%s1 + $0xe40] sm:$0xff]
    %v509 = vld [vmem:[%s1 + $0xe48] sm:$0xff]
    %v510 = vld [vmem:[%s1 + $0xe50] sm:$0xff]
    %v511 = vld [vmem:[%s1 + $0xe58] sm:$0xff]
    %v512 = vld [vmem:[%s1 + $0xe60] sm:$0xff]
    %v513 = vld [vmem:[%s1 + $0xe68] sm:$0xff]
    %v514 = vld [vmem:[%s1 + $0xe70] sm:$0xff]
    %v515 = vld [vmem:[%s1 + $0xe78] sm:$0xff]
    %v516 = vld [vmem:[%s1 + $0xe80] sm:$0xff]
    %v517 = vld [vmem:[%s1 + $0xe88] sm:$0xff]
    %v518 = vld [vmem:[%s1 + $0xe90] sm:$0xff]
    %v519 = vld [vmem:[%s1 + $0xe98] sm:$0xff]
    %v520 = vld [vmem:[%s1 + $0xea0] sm:$0xff]
    %v521 = vld [vmem:[%s1 + $0xea8] sm:$0xff]
    %v522 = vld [vmem:[%s1 + $0xeb0] sm:$0xff]
    %v523 = vld [vmem:[%s1 + $0xeb8] sm:$0xff]
    %v524 = vld [vmem:[%s1 + $0xec0] sm:$0xff]
    %v525 = vld [vmem:[%s1 + $0xec8] sm:$0xff]
    %v526 = vld [vmem:[%s1 + $0xed0] sm:$0xff]
    %v527 = vld [vmem:[%s1 + $0xed8] sm:$0xff]
    %v528 = vld [vmem:[%s1 + $0xee0] sm:$0xff]
    %v529 = vld [vmem:[%s1 + $0xee8] sm:$0xff]
    %v530 = vld [vmem:[%s1 + $0xef0] sm:$0xff]
    %v531 = vld [vmem:[%s1 + $0xef8] sm:$0xff]
    %v532 = vld [vmem:[%s1 + $0xf00] sm:$0xff]
    %v533 = vld [vmem:[%s1 + $0xf08] sm:$0xff]
    %v534 = vld [vmem:[%s1 + $0xf10] sm:$0xff]
    %v535 = vld [vmem:[%s1 + $0xf18] sm:$0xff]
    %v536 = vld [vmem:[%s1 + $0xf20] sm:$0xff]
    %v537 = vld [vmem:[%s1 + $0xf28] sm:$0xff]
    %v538 = vld [vmem:[%s1 + $0xf30] sm:$0xff]
    %v539 = vld [vmem:[%s1 + $0xf38] sm:$0xff]
    %v540 = vld [vmem:[%s1 + $0xf40] sm:$0xff]
    %v541 = vld [vmem:[%s1 + $0xf48] sm:$0xff]
    %v542 = vld [vmem:[%s1 + $0xf50] sm:$0xff]
    %v543 = vld [vmem:[%s1 + $0xf58] sm:$0xff]
    %v544 = vld [vmem:[%s1 + $0xf60] sm:$0xff]
    %v545 = vld [vmem:[%s1 + $0xf68] sm:$0xff]
    %v546 = vld [vmem:[%s1 + $0xf70] sm:$0xff]
    %v547 = vld [vmem:[%s1 + $0xf78] sm:$0xff]
    %v548 = vld [vmem:[%s1 + $0xf80] sm:$0xff]
    %v549 = vld [vmem:[%s1 + $0xf88] sm:$0xff]
    %v550 = vld [vmem:[%s1 + $0xf90] sm:$0xff]
    %v551 = vld [vmem:[%s1 + $0xf98] sm:$0xff]
    %v552 = vld [vmem:[%s1 + $0xfa0] sm:$0xff]
    %v553 = vld [vmem:[%s1 + $0xfa8] sm:$0xff]
    %v554 = vld [vmem:[%s1 + $0xfb0] sm:$0xff]
    %v555 = vld [vmem:[%s1 + $0xfb8] sm:$0xff]
    %v556 = vld [vmem:[%s1 + $0xfc0] sm:$0xff]
    %v557 = vld [vmem:[%s1 + $0xfc8] sm:$0xff]
    %v558 = vld [vmem:[%s1 + $0xfd0] sm:$0xff]
    %v559 = vld [vmem:[%s1 + $0xfd8] sm:$0xff]
    %v560 = vld [vmem:[%s1 + $0xfe0] sm:$0xff]
    %v561 = vld [vmem:[%s1 + $0xfe8] sm:$0xff]
    %v562 = vld [vmem:[%s1 + $0xff0] sm:$0xff]
    %v563 = vld [vmem:[%s1 + $0xff8] sm:$0xff]
    %v564 = vld [vmem:[%s1 + $0x1000] sm:$0xff]
    %v565 = vld [vmem:[%s1 + $0x1008] sm:$0xff]
    %v566 = vld [vmem:[%s1 + $0x1010] sm:$0xff]
    %v567 = vld [vmem:[%s1 + $0x1018] sm:$0xff]
    %v568 = vld [vmem:[%s1 + $0x1020] sm:$0xff]
    %v569 = vld [vmem:[%s1 + $0x1028] sm:$0xff]
    %v570 = vld [vmem:[%s1 + $0x1030] sm:$0xff]
    %v571 = vld [vmem:[%s1 + $0x1038] sm:$0xff]
    %v572 = vld [vmem:[%s1 + $0x1040] sm:$0xff]
    %v573 = vld [vmem:[%s1 + $0x1048] sm:$0xff]
    %v574 = vld [vmem:[%s1 + $0x1050] sm:$0xff]
    %v575 = vld [vmem:[%s1 + $0x1058] sm:$0xff]
    %v576 = vld [vmem:[%s1 + $0x1060] sm:$0xff]
    %v577 = vld [vmem:[%s1 + $0x1068] sm:$0xff]
    %v578 = vld [vmem:[%s1 + $0x1070] sm:$0xff]
    %v579 = vld [vmem:[%s1 + $0x1078] sm:$0xff]
    %v580 = vld [vmem:[%s1 + $0x1080] sm:$0xff]
    %v581 = vld [vmem:[%s1 + $0x1088] sm:$0xff]
    %v582 = vld [vmem:[%s1 + $0x1090] sm:$0xff]
    %v583 = vld [vmem:[%s1 + $0x1098] sm:$0xff]
    %v584 = vld [vmem:[%s1 + $0x10a0] sm:$0xff]
    %v585 = vld [vmem:[%s1 + $0x10a8] sm:$0xff]
    %v586 = vld [vmem:[%s1 + $0x10b0] sm:$0xff]
    %v587 = vld [vmem:[%s1 + $0x10b8] sm:$0xff]
    %v588 = vld [vmem:[%s1 + $0x10c0] sm:$0xff]
    %v589 = vld [vmem:[%s1 + $0x10c8] sm:$0xff]
    %v590 = vld [vmem:[%s1 + $0x10d0] sm:$0xff]
    %v591 = vld [vmem:[%s1 + $0x10d8] sm:$0xff]
    %v592 = vld [vmem:[%s1 + $0x10e0] sm:$0xff]
    %v593 = vld [vmem:[%s1 + $0x10e8] sm:$0xff]
    %v594 = vld [vmem:[%s1 + $0x10f0] sm:$0xff]
    %v595 = vld [vmem:[%s1 + $0x10f8] sm:$0xff]
    %v596 = vld [vmem:[%s1 + $0x1100] sm:$0xff]
    %v597 = vld [vmem:[%s1 + $0x1108] sm:$0xff]
    %v598 = vld [vmem:[%s1 + $0x1110] sm:$0xff]
    %v599 = vld [vmem:[%s1 + $0x1118] sm:$0xff]
    %v600 = vld [vmem:[%s1 + $0x1120] sm:$0xff]
    %v601 = vld [vmem:[%s1 + $0x1128] sm:$0xff]
    %v602 = vld [vmem:[%s1 + $0x1130] sm:$0xff]
    %v603 = vld [vmem:[%s1 + $0x1138] sm:$0xff]
    %v604 = vld [vmem:[%s1 + $0x1140] sm:$0xff]
    %v605 = vld [vmem:[%s1 + $0x1148] sm:$0xff]
    %v606 = vld [vmem:[%s1 + $0x1150] sm:$0xff]
    %v607 = vld [vmem:[%s1 + $0x1158] sm:$0xff]
    %v608 = vld [vmem:[%s1 + $0x1160] sm:$0xff]
    %v609 = vld [vmem:[%s1 + $0x1168] sm:$0xff]
    %v610 = vld [vmem:[%s1 + $0x1170] sm:$0xff]
    %v611 = vld [vmem:[%s1 + $0x1178] sm:$0xff]
    %v612 = vld [vmem:[%s1 + $0x1180] sm:$0xff]
    %v613 = vld [vmem:[%s1 + $0x1188] sm:$0xff]
    %v614 = vld [vmem:[%s1 + $0x1190] sm:$0xff]
    %v615 = vld [vmem:[%s1 + $0x1198] sm:$0xff]
    %v616 = vld [vmem:[%s1 + $0x11a0] sm:$0xff]
    %v617 = vld [vmem:[%s1 + $0x11a8] sm:$0xff]
    %v618 = vld [vmem:[%s1 + $0x11b0] sm:$0xff]
    %v619 = vld [vmem:[%s1 + $0x11b8] sm:$0xff]
    %v620 = vld [vmem:[%s1 + $0x11c0] sm:$0xff]
    %v621 = vld [vmem:[%s1 + $0x11c8] sm:$0xff]
    %v622 = vld [vmem:[%s1 + $0x11d0] sm:$0xff]
    %v623 = vld [vmem:[%s1 + $0x11d8] sm:$0xff]
    %v624 = vld [vmem:[%s1 + $0x11e0] sm:$0xff]
    %v625 = vld [vmem:[%s1 + $0x11e8] sm:$0xff]
    %v626 = vld [vmem:[%s1 + $0x11f0] sm:$0xff]
    %v627 = vld [vmem:[%s1 + $0x11f8] sm:$0xff]
    %v628 = vld [vmem:[%s1 + $0x1200] sm:$0xff]
    %v629 = vld [vmem:[%s1 + $0x1208] sm:$0xff]
    %v630 = vld [vmem:[%s1 + $0x1210] sm:$0xff]
    %v631 = vld [vmem:[%s1 + $0x1218] sm:$0xff]
    %v632 = vld [vmem:[%s1 + $0x1220] sm:$0xff]
    %v633 = vld [vmem:[%s1 + $0x1228] sm:$0xff]
    %v634 = vld [vmem:[%s1 + $0x1230] sm:$0xff]
    %v635 = vld [vmem:[%s1 + $0x1238] sm:$0xff]
    %v636 = vld [vmem:[%s1 + $0x1240] sm:$0xff]
    %v637 = vld [vmem:[%s1 + $0x1248] sm:$0xff]
    %v638 = vld [vmem:[%s1 + $0x1250] sm:$0xff]
    %v639 = vld [vmem:[%s1 + $0x1258] sm:$0xff]
    %v640 = vld [vmem:[%s1 + $0x1260] sm:$0xff]
    %v641 = vld [vmem:[%s1 + $0x1268] sm:$0xff]
    %v642 = vld [vmem:[%s1 + $0x1270] sm:$0xff]
    %v643 = vld [vmem:[%s1 + $0x1278] sm:$0xff]
    %v644 = vld [vmem:[%s1 + $0x1280] sm:$0xff]
    %v645 = vld [vmem:[%s1 + $0x1288] sm:$0xff]
    %v646 = vld [vmem:[%s1 + $0x1290] sm:$0xff]
    %v647 = vld [vmem:[%s1 + $0x1298] sm:$0xff]
    %v648 = vld [vmem:[%s1 + $0x12a0] sm:$0xff]
    %v649 = vld [vmem:[%s1 + $0x12a8] sm:$0xff]
    %v650 = vld [vmem:[%s1 + $0x12b0] sm:$0xff]
    %v651 = vld [vmem:[%s1 + $0x12b8] sm:$0xff]
    %v652 = vld [vmem:[%s1 + $0x12c0] sm:$0xff]
    %v653 = vld [vmem:[%s1 + $0x12c8] sm:$0xff]
    %v654 = vld [vmem:[%s1 + $0x12d0] sm:$0xff]
    %v655 = vld [vmem:[%s1 + $0x12d8] sm:$0xff]
    %v656 = vld [vmem:[%s1 + $0x12e0] sm:$0xff]
    %v657 = vld [vmem:[%s1 + $0x12e8] sm:$0xff]
    %v658 = vld [vmem:[%s1 + $0x12f0] sm:$0xff]
    %v659 = vld [vmem:[%s1 + $0x12f8] sm:$0xff]
    %v660 = vld [vmem:[%s1 + $0x1300] sm:$0xff]
    %v661 = vld [vmem:[%s1 + $0x1308] sm:$0xff]
    %v662 = vld [vmem:[%s1 + $0x1310] sm:$0xff]
    %v663 = vld [vmem:[%s1 + $0x1318] sm:$0xff]
    %v664 = vld [vmem:[%s1 + $0x1320] sm:$0xff]
    %v665 = vld [vmem:[%s1 + $0x1328] sm:$0xff]
    %v666 = vld [vmem:[%s1 + $0x1330] sm:$0xff]
    %v667 = vld [vmem:[%s1 + $0x1338] sm:$0xff]
    %v668 = vld [vmem:[%s1 + $0x1340] sm:$0xff]
    %v669 = vld [vmem:[%s1 + $0x1348] sm:$0xff]
    %v670 = vld [vmem:[%s1 + $0x1350] sm:$0xff]
    %v671 = vld [vmem:[%s1 + $0x1358] sm:$0xff]
    %v672 = vld [vmem:[%s1 + $0x1360] sm:$0xff]
    %v673 = vld [vmem:[%s1 + $0x1368] sm:$0xff]
    %v674 = vld [vmem:[%s1 + $0x1370] sm:$0xff]
    %v675 = vld [vmem:[%s1 + $0x1378] sm:$0xff]
    %v676 = vld [vmem:[%s1 + $0x1380] sm:$0xff]
    %v677 = vld [vmem:[%s1 + $0x1388] sm:$0xff]
    %v678 = vld [vmem:[%s1 + $0x1390] sm:$0xff]
    %v679 = vld [vmem:[%s1 + $0x1398] sm:$0xff]
    %v680 = vld [vmem:[%s1 + $0x13a0] sm:$0xff]
    %v681 = vld [vmem:[%s1 + $0x13a8] sm:$0xff]
    %v682 = vld [vmem:[%s1 + $0x13b0] sm:$0xff]
    %v683 = vld [vmem:[%s1 + $0x13b8] sm:$0xff]
    %v684 = vld [vmem:[%s1 + $0x13c0] sm:$0xff]
    %v685 = vld [vmem:[%s1 + $0x13c8] sm:$0xff]
    %v686 = vld [vmem:[%s1 + $0x13d0] sm:$0xff]
    %v687 = vld [vmem:[%s1 + $0x13d8] sm:$0xff]
    %v688 = vld [vmem:[%s1 + $0x13e0] sm:$0xff]
    %v689 = vld [vmem:[%s1 + $0x13e8] sm:$0xff]
    %v690 = vld [vmem:[%s1 + $0x13f0] sm:$0xff]
    %v691 = vld [vmem:[%s1 + $0x13f8] sm:$0xff]
    %v692 = vld [vmem:[%s1 + $0x1400] sm:$0xff]
    %v693 = vld [vmem:[%s1 + $0x1408] sm:$0xff]
    %v694 = vld [vmem:[%s1 + $0x1410] sm:$0xff]
    %v695 = vld [vmem:[%s1 + $0x1418] sm:$0xff]
    %v696 = vld [vmem:[%s1 + $0x1420] sm:$0xff]
    %v697 = vld [vmem:[%s1 + $0x1428] sm:$0xff]
    %v698 = vld [vmem:[%s1 + $0x1430] sm:$0xff]
    %v699 = vld [vmem:[%s1 + $0x1438] sm:$0xff]
    %v700 = vld [vmem:[%s1 + $0x1440] sm:$0xff]
    %v701 = vld [vmem:[%s1 + $0x1448] sm:$0xff]
    %v702 = vld [vmem:[%s1 + $0x1450] sm:$0xff]
    %v703 = vld [vmem:[%s1 + $0x1458] sm:$0xff]
    %v704 = vld [vmem:[%s1 + $0x1460] sm:$0xff]
    %v705 = vld [vmem:[%s1 + $0x1468] sm:$0xff]
    %v706 = vld [vmem:[%s1 + $0x1470] sm:$0xff]
    %v707 = vld [vmem:[%s1 + $0x1478] sm:$0xff]
    %v708 = vld [vmem:[%s1 + $0x1480] sm:$0xff]
    %v709 = vld [vmem:[%s1 + $0x1488] sm:$0xff]
    %v710 = vld [vmem:[%s1 + $0x1490] sm:$0xff]
    %v711 = vld [vmem:[%s1 + $0x1498] sm:$0xff]
    %v712 = vld [vmem:[%s1 + $0x14a0] sm:$0xff]
    %v713 = vld [vmem:[%s1 + $0x14a8] sm:$0xff]
    %v714 = vld [vmem:[%s1 + $0x14b0] sm:$0xff]
    %v715 = vld [vmem:[%s1 + $0x14b8] sm:$0xff]
    %v716 = vld [vmem:[%s1 + $0x14c0] sm:$0xff]
    %v717 = vld [vmem:[%s1 + $0x14c8] sm:$0xff]
    %v718 = vld [vmem:[%s1 + $0x14d0] sm:$0xff]
    %v719 = vld [vmem:[%s1 + $0x14d8] sm:$0xff]
    %v720 = vld [vmem:[%s1 + $0x14e0] sm:$0xff]
    %v721 = vld [vmem:[%s1 + $0x14e8] sm:$0xff]
    %v722 = vld [vmem:[%s1 + $0x14f0] sm:$0xff]
    %v723 = vld [vmem:[%s1 + $0x14f8] sm:$0xff]
    %v724 = vld [vmem:[%s1 + $0x1500] sm:$0xff]
    %v725 = vld [vmem:[%s1 + $0x1508] sm:$0xff]
    %v726 = vld [vmem:[%s1 + $0x1510] sm:$0xff]
    %v727 = vld [vmem:[%s1 + $0x1518] sm:$0xff]
    %v728 = vld [vmem:[%s1 + $0x1520] sm:$0xff]
    %v729 = vld [vmem:[%s1 + $0x1528] sm:$0xff]
    %v730 = vld [vmem:[%s1 + $0x1530] sm:$0xff]
    %v731 = vld [vmem:[%s1 + $0x1538] sm:$0xff]
    %v732 = vld [vmem:[%s1 + $0x1540] sm:$0xff]
    %v733 = vld [vmem:[%s1 + $0x1548] sm:$0xff]
    %v734 = vld [vmem:[%s1 + $0x1550] sm:$0xff]
    %v735 = vld [vmem:[%s1 + $0x1558] sm:$0xff]
    %v736 = vld [vmem:[%s1 + $0x1560] sm:$0xff]
    %v737 = vld [vmem:[%s1 + $0x1568] sm:$0xff]
    %v738 = vld [vmem:[%s1 + $0x1570] sm:$0xff]
    %v739 = vld [vmem:[%s1 + $0x1578] sm:$0xff]
    %v740 = vld [vmem:[%s1 + $0x1580] sm:$0xff]
    %v741 = vld [vmem:[%s1 + $0x1588] sm:$0xff]
    %v742 = vld [vmem:[%s1 + $0x1590] sm:$0xff]
    %v743 = vld [vmem:[%s1 + $0x1598] sm:$0xff]
    %v744 = vld [vmem:[%s1 + $0x15a0] sm:$0xff]
    %v745 = vld [vmem:[%s1 + $0x15a8] sm:$0xff]
    %v746 = vld [vmem:[%s1 + $0x15b0] sm:$0xff]
    %v747 = vld [vmem:[%s1 + $0x15b8] sm:$0xff]
    %v748 = vld [vmem:[%s1 + $0x15c0] sm:$0xff]
    %v749 = vld [vmem:[%s1 + $0x15c8] sm:$0xff]
    %v750 = vld [vmem:[%s1 + $0x15d0] sm:$0xff]
    %v751 = vld [vmem:[%s1 + $0x15d8] sm:$0xff]
    %v752 = vld [vmem:[%s1 + $0x15e0] sm:$0xff]
    %v753 = vld [vmem:[%s1 + $0x15e8] sm:$0xff]
    %v754 = vld [vmem:[%s1 + $0x15f0] sm:$0xff]
    %v755 = vld [vmem:[%s1 + $0x15f8] sm:$0xff]
    %v756 = vld [vmem:[%s1 + $0x1600] sm:$0xff]
    %v757 = vld [vmem:[%s1 + $0x1608] sm:$0xff]
    %v758 = vld [vmem:[%s1 + $0x1610] sm:$0xff]
    %v759 = vld [vmem:[%s1 + $0x1618] sm:$0xff]
    %v760 = vld [vmem:[%s1 + $0x1620] sm:$0xff]
    %v761 = vld [vmem:[%s1 + $0x1628] sm:$0xff]
    %v762 = vld [vmem:[%s1 + $0x1630] sm:$0xff]
    %v763 = vld [vmem:[%s1 + $0x1638] sm:$0xff]
    %v764 = vld [vmem:[%s1 + $0x1640] sm:$0xff]
    %v765 = vld [vmem:[%s1 + $0x1648] sm:$0xff]
    %v766 = vld [vmem:[%s1 + $0x1650] sm:$0xff]
    %v767 = vld [vmem:[%s1 + $0x1658] sm:$0xff]
    %v768 = vld [vmem:[%s1 + $0x1660] sm:$0xff]
    %v769 = vld [vmem:[%s1 + $0x1668] sm:$0xff]
    %v770 = vld [vmem:[%s1 + $0x1670] sm:$0xff]
    %v771 = vld [vmem:[%s1 + $0x1678] sm:$0xff]
    %v772 = vld [vmem:[%s1 + $0x1680] sm:$0xff]
    %v773 = vld [vmem:[%s1 + $0x1688] sm:$0xff]
    %v774 = vld [vmem:[%s1 + $0x1690] sm:$0xff]
    %v775 = vld [vmem:[%s1 + $0x1698] sm:$0xff]
    %v776 = vld [vmem:[%s1 + $0x16a0] sm:$0xff]
    %v777 = vld [vmem:[%s1 + $0x16a8] sm:$0xff]
    %v778 = vld [vmem:[%s1 + $0x16b0] sm:$0xff]
    %v779 = vld [vmem:[%s1 + $0x16b8] sm:$0xff]
    %v780 = vld [vmem:[%s1 + $0x16c0] sm:$0xff]
    %v781 = vld [vmem:[%s1 + $0x16c8] sm:$0xff]
    %v782 = vld [vmem:[%s1 + $0x16d0] sm:$0xff]
    %v783 = vld [vmem:[%s1 + $0x16d8] sm:$0xff]
    %v784 = vld [vmem:[%s1 + $0x16e0] sm:$0xff]
    %v785 = vld [vmem:[%s1 + $0x16e8] sm:$0xff]
    %v786 = vld [vmem:[%s1 + $0x16f0] sm:$0xff]
    %v787 = vld [vmem:[%s1 + $0x16f8] sm:$0xff]
    %v788 = vld [vmem:[%s1 + $0x1700] sm:$0xff]
    %v789 = vld [vmem:[%s1 + $0x1708] sm:$0xff]
    %v790 = vld [vmem:[%s1 + $0x1710] sm:$0xff]
    %v791 = vld [vmem:[%s1 + $0x1718] sm:$0xff]
    %v792 = vld [vmem:[%s1 + $0x1720] sm:$0xff]
    %v793 = vld [vmem:[%s1 + $0x1728] sm:$0xff]
    %v794 = vld [vmem:[%s1 + $0x1730] sm:$0xff]
    %v795 = vld [vmem:[%s1 + $0x1738] sm:$0xff]
    %v796 = vld [vmem:[%s1 + $0x1740] sm:$0xff]
    %v797 = vld [vmem:[%s1 + $0x1748] sm:$0xff]
    %v798 = vld [vmem:[%s1 + $0x1750] sm:$0xff]
    %v799 = vld [vmem:[%s1 + $0x1758] sm:$0xff]
    %v800 = vld [vmem:[%s1 + $0x1760] sm:$0xff]
    %v801 = vld [vmem:[%s1 + $0x1768] sm:$0xff]
    %v802 = vld [vmem:[%s1 + $0x1770] sm:$0xff]
    %v803 = vld [vmem:[%s1 + $0x1778] sm:$0xff]
    %v804 = vld [vmem:[%s1 + $0x1780] sm:$0xff]
    %v805 = vld [vmem:[%s1 + $0x1788] sm:$0xff]
    %v806 = vld [vmem:[%s1 + $0x1790] sm:$0xff]
    %v807 = vld [vmem:[%s1 + $0x1798] sm:$0xff]
    %v808 = vld [vmem:[%s1 + $0x17a0] sm:$0xff]
    %v809 = vld [vmem:[%s1 + $0x17a8] sm:$0xff]
    %v810 = vld [vmem:[%s1 + $0x17b0] sm:$0xff]
    %v811 = vld [vmem:[%s1 + $0x17b8] sm:$0xff]
    %v812 = vld [vmem:[%s1 + $0x17c0] sm:$0xff]
    %v813 = vld [vmem:[%s1 + $0x17c8] sm:$0xff]
    %v814 = vld [vmem:[%s1 + $0x17d0] sm:$0xff]
    %v815 = vld [vmem:[%s1 + $0x17d8] sm:$0xff]
    %v816 = vld [vmem:[%s1 + $0x17e0] sm:$0xff]
    %v817 = vld [vmem:[%s1 + $0x17e8] sm:$0xff]
    %v818 = vld [vmem:[%s1 + $0x17f0] sm:$0xff]
    %v819 = vld [vmem:[%s1 + $0x17f8] sm:$0xff]
    %v820 = vld [vmem:[%s1 + $0x1800] sm:$0xff]
    %v821 = vld [vmem:[%s1 + $0x1808] sm:$0xff]
    %v822 = vld [vmem:[%s1 + $0x1810] sm:$0xff]
    %v823 = vld [vmem:[%s1 + $0x1818] sm:$0xff]
    %v824 = vld [vmem:[%s1 + $0x1820] sm:$0xff]
    %v825 = vld [vmem:[%s1 + $0x1828] sm:$0xff]
    %v826 = vld [vmem:[%s1 + $0x1830] sm:$0xff]
    %v827 = vld [vmem:[%s1 + $0x1838] sm:$0xff]
    %v828 = vld [vmem:[%s1 + $0x1840] sm:$0xff]
    %v829 = vld [vmem:[%s1 + $0x1848] sm:$0xff]
    %v830 = vld [vmem:[%s1 + $0x1850] sm:$0xff]
    %v831 = vld [vmem:[%s1 + $0x1858] sm:$0xff]
    %v832 = vld [vmem:[%s1 + $0x1860] sm:$0xff]
    %v833 = vld [vmem:[%s1 + $0x1868] sm:$0xff]
    %v834 = vld [vmem:[%s1 + $0x1870] sm:$0xff]
    %v835 = vld [vmem:[%s1 + $0x1878] sm:$0xff]
    %v836 = vld [vmem:[%s1 + $0x1880] sm:$0xff]
    %v837 = vld [vmem:[%s1 + $0x1888] sm:$0xff]
    %v838 = vld [vmem:[%s1 + $0x1890] sm:$0xff]
    %v839 = vld [vmem:[%s1 + $0x1898] sm:$0xff]
    %v840 = vld [vmem:[%s1 + $0x18a0] sm:$0xff]
    %v841 = vld [vmem:[%s1 + $0x18a8] sm:$0xff]
    %v842 = vld [vmem:[%s1 + $0x18b0] sm:$0xff]
    %v843 = vld [vmem:[%s1 + $0x18b8] sm:$0xff]
    %v844 = vld [vmem:[%s1 + $0x18c0] sm:$0xff]
    %v845 = vld [vmem:[%s1 + $0x18c8] sm:$0xff]
    %v846 = vld [vmem:[%s1 + $0x18d0] sm:$0xff]
    %v847 = vld [vmem:[%s1 + $0x18d8] sm:$0xff]
    %v848 = vld [vmem:[%s1 + $0x18e0] sm:$0xff]
    %v849 = vld [vmem:[%s1 + $0x18e8] sm:$0xff]
    %v850 = vld [vmem:[%s1 + $0x18f0] sm:$0xff]
    %v851 = vld [vmem:[%s1 + $0x18f8] sm:$0xff]
    %v852 = vld [vmem:[%s1 + $0x1900] sm:$0xff]
    %v853 = vld [vmem:[%s1 + $0x1908] sm:$0xff]
    %v854 = vld [vmem:[%s1 + $0x1910] sm:$0xff]
    %v855 = vld [vmem:[%s1 + $0x1918] sm:$0xff]
    %v856 = vld [vmem:[%s1 + $0x1920] sm:$0xff]
    %v857 = vld [vmem:[%s1 + $0x1928] sm:$0xff]
    %v858 = vld [vmem:[%s1 + $0x1930] sm:$0xff]
    %v859 = vld [vmem:[%s1 + $0x1938] sm:$0xff]
    %v860 = vld [vmem:[%s1 + $0x1940] sm:$0xff]
    %v861 = vld [vmem:[%s1 + $0x1948] sm:$0xff]
    %v862 = vld [vmem:[%s1 + $0x1950] sm:$0xff]
    %v863 = vld [vmem:[%s1 + $0x1958] sm:$0xff]
    %v864 = vld [vmem:[%s1 + $0x1960] sm:$0xff]
    %v865 = vld [vmem:[%s1 + $0x1968] sm:$0xff]
    %v866 = vld [vmem:[%s1 + $0x1970] sm:$0xff]
    %v867 = vld [vmem:[%s1 + $0x1978] sm:$0xff]
    %v868 = vld [vmem:[%s1 + $0x1980] sm:$0xff]
    %v869 = vld [vmem:[%s1 + $0x1988] sm:$0xff]
    %v870 = vld [vmem:[%s1 + $0x1990] sm:$0xff]
    %v871 = vld [vmem:[%s1 + $0x1998] sm:$0xff]
    %v872 = vld [vmem:[%s1 + $0x19a0] sm:$0xff]
    %v873 = vld [vmem:[%s1 + $0x19a8] sm:$0xff]
    %v874 = vld [vmem:[%s1 + $0x19b0] sm:$0xff]
    %v875 = vld [vmem:[%s1 + $0x19b8] sm:$0xff]
    %v876 = vld [vmem:[%s1 + $0x19c0] sm:$0xff]
    %v877 = vld [vmem:[%s1 + $0x19c8] sm:$0xff]
    %v878 = vld [vmem:[%s1 + $0x19d0] sm:$0xff]
    %v879 = vld [vmem:[%s1 + $0x19d8] sm:$0xff]
    %v880 = vld [vmem:[%s1 + $0x19e0] sm:$0xff]
    %v881 = vld [vmem:[%s1 + $0x19e8] sm:$0xff]
    %v882 = vld [vmem:[%s1 + $0x19f0] sm:$0xff]
    %v883 = vld [vmem:[%s1 + $0x19f8] sm:$0xff]
    %v884 = vld [vmem:[%s1 + $0x1a00] sm:$0xff]
    %v885 = vld [vmem:[%s1 + $0x1a08] sm:$0xff]
    %v886 = vld [vmem:[%s1 + $0x1a10] sm:$0xff]
    %v887 = vld [vmem:[%s1 + $0x1a18] sm:$0xff]
    %v888 = vld [vmem:[%s1 + $0x1a20] sm:$0xff]
    %v889 = vld [vmem:[%s1 + $0x1a28] sm:$0xff]
    %v890 = vld [vmem:[%s1 + $0x1a30] sm:$0xff]
    %v891 = vld [vmem:[%s1 + $0x1a38] sm:$0xff]
    %v892 = vld [vmem:[%s1 + $0x1a40] sm:$0xff]
    %v893 = vld [vmem:[%s1 + $0x1a48] sm:$0xff]
    %v894 = vld [vmem:[%s1 + $0x1a50] sm:$0xff]
    %v895 = vld [vmem:[%s1 + $0x1a58] sm:$0xff]
    %v896 = vld [vmem:[%s1 + $0x1a60] sm:$0xff]
    %v897 = vld [vmem:[%s1 + $0x1a68] sm:$0xff]
    %v898 = vld [vmem:[%s1 + $0x1a70] sm:$0xff]
    %v899 = vld [vmem:[%s1 + $0x1a78] sm:$0xff]
    %v900 = vld [vmem:[%s1 + $0x1a80] sm:$0xff]
    %v901 = vld [vmem:[%s1 + $0x1a88] sm:$0xff]
    %v902 = vld [vmem:[%s1 + $0x1a90] sm:$0xff]
    %v903 = vld [vmem:[%s1 + $0x1a98] sm:$0xff]
    %v904 = vld [vmem:[%s1 + $0x1aa0] sm:$0xff]
    %v905 = vld [vmem:[%s1 + $0x1aa8] sm:$0xff]
    %v906 = vld [vmem:[%s1 + $0x1ab0] sm:$0xff]
    %v907 = vld [vmem:[%s1 + $0x1ab8] sm:$0xff]
    %v908 = vld [vmem:[%s1 + $0x1ac0] sm:$0xff]
    %v909 = vld [vmem:[%s1 + $0x1ac8] sm:$0xff]
    %v910 = vld [vmem:[%s1 + $0x1ad0] sm:$0xff]
    %v911 = vld [vmem:[%s1 + $0x1ad8] sm:$0xff]
    %v912 = vld [vmem:[%s1 + $0x1ae0] sm:$0xff]
    %v913 = vld [vmem:[%s1 + $0x1ae8] sm:$0xff]
    %v914 = vld [vmem:[%s1 + $0x1af0] sm:$0xff]
    %v915 = vld [vmem:[%s1 + $0x1af8] sm:$0xff]
    %v916 = vld [vmem:[%s1 + $0x1b00] sm:$0xff]
    %v917 = vld [vmem:[%s1 + $0x1b08] sm:$0xff]
    %v918 = vld [vmem:[%s1 + $0x1b10] sm:$0xff]
    %v919 = vld [vmem:[%s1 + $0x1b18] sm:$0xff]
    %v920 = vld [vmem:[%s1 + $0x1b20] sm:$0xff]
    %v921 = vld [vmem:[%s1 + $0x1b28] sm:$0xff]
    %v922 = vld [vmem:[%s1 + $0x1b30] sm:$0xff]
    %v923 = vld [vmem:[%s1 + $0x1b38] sm:$0xff]
    %v924 = vld [vmem:[%s1 + $0x1b40] sm:$0xff]
    %v925 = vld [vmem:[%s1 + $0x1b48] sm:$0xff]
    %v926 = vld [vmem:[%s1 + $0x1b50] sm:$0xff]
    %v927 = vld [vmem:[%s1 + $0x1b58] sm:$0xff]
    %v928 = vld [vmem:[%s1 + $0x1b60] sm:$0xff]
    %v929 = vld [vmem:[%s1 + $0x1b68] sm:$0xff]
    %v930 = vld [vmem:[%s1 + $0x1b70] sm:$0xff]
    %v931 = vld [vmem:[%s1 + $0x1b78] sm:$0xff]
    %v932 = vld [vmem:[%s1 + $0x1b80] sm:$0xff]
    %v933 = vld [vmem:[%s1 + $0x1b88] sm:$0xff]
    %v934 = vld [vmem:[%s1 + $0x1b90] sm:$0xff]
    %v935 = vld [vmem:[%s1 + $0x1b98] sm:$0xff]
    %v936 = vld [vmem:[%s1 + $0x1ba0] sm:$0xff]
    %v937 = vld [vmem:[%s1 + $0x1ba8] sm:$0xff]
    %v938 = vld [vmem:[%s1 + $0x1bb0] sm:$0xff]
    %v939 = vld [vmem:[%s1 + $0x1bb8] sm:$0xff]
    %v940 = vld [vmem:[%s1 + $0x1bc0] sm:$0xff]
    %v941 = vld [vmem:[%s1 + $0x1bc8] sm:$0xff]
    %v942 = vld [vmem:[%s1 + $0x1bd0] sm:$0xff]
    %v943 = vld [vmem:[%s1 + $0x1bd8] sm:$0xff]
    %v944 = vld [vmem:[%s1 + $0x1be0] sm:$0xff]
    %v945 = vld [vmem:[%s1 + $0x1be8] sm:$0xff]
    %v946 = vld [vmem:[%s1 + $0x1bf0] sm:$0xff]
    %v947 = vld [vmem:[%s1 + $0x1bf8] sm:$0xff]
    %v948 = vld [vmem:[%s1 + $0x1c00] sm:$0xff]
    %v949 = vld [vmem:[%s1 + $0x1c08] sm:$0xff]
    %v950 = vld [vmem:[%s1 + $0x1c10] sm:$0xff]
    %v951 = vld [vmem:[%s1 + $0x1c18] sm:$0xff]
    %v952 = vld [vmem:[%s1 + $0x1c20] sm:$0xff]
    %v953 = vld [vmem:[%s1 + $0x1c28] sm:$0xff]
    %v954 = vld [vmem:[%s1 + $0x1c30] sm:$0xff]
    %v955 = vld [vmem:[%s1 + $0x1c38] sm:$0xff]
    %v956 = vld [vmem:[%s1 + $0x1c40] sm:$0xff]
    %v957 = vld [vmem:[%s1 + $0x1c48] sm:$0xff]
    %v958 = vld [vmem:[%s1 + $0x1c50] sm:$0xff]
    %v959 = vld [vmem:[%s1 + $0x1c58] sm:$0xff]
    %v960 = vld [vmem:[%s1 + $0x1c60] sm:$0xff]
    %v961 = vld [vmem:[%s1 + $0x1c68] sm:$0xff]
    %v962 = vld [vmem:[%s1 + $0x1c70] sm:$0xff]
    %v963 = vld [vmem:[%s1 + $0x1c78] sm:$0xff]
    %v964 = vld [vmem:[%s1 + $0x1c80] sm:$0xff]
    %v965 = vld [vmem:[%s1 + $0x1c88] sm:$0xff]
    %v966 = vld [vmem:[%s1 + $0x1c90] sm:$0xff]
    %v967 = vld [vmem:[%s1 + $0x1c98] sm:$0xff]
    %v968 = vld [vmem:[%s1 + $0x1ca0] sm:$0xff]
    %v969 = vld [vmem:[%s1 + $0x1ca8] sm:$0xff]
    %v970 = vld [vmem:[%s1 + $0x1cb0] sm:$0xff]
    %v971 = vld [vmem:[%s1 + $0x1cb8] sm:$0xff]
    %v972 = vld [vmem:[%s1 + $0x1cc0] sm:$0xff]
    %v973 = vld [vmem:[%s1 + $0x1cc8] sm:$0xff]
    %v974 = vld [vmem:[%s1 + $0x1cd0] sm:$0xff]
    %v975 = vld [vmem:[%s1 + $0x1cd8] sm:$0xff]
    %v976 = vld [vmem:[%s1 + $0x1ce0] sm:$0xff]
    %v977 = vld [vmem:[%s1 + $0x1ce8] sm:$0xff]
    %v978 = vld [vmem:[%s1 + $0x1cf0] sm:$0xff]
    %v979 = vld [vmem:[%s1 + $0x1cf8] sm:$0xff]
    %v980 = vld [vmem:[%s1 + $0x1d00] sm:$0xff]
    %v981 = vld [vmem:[%s1 + $0x1d08] sm:$0xff]
    %v982 = vld [vmem:[%s1 + $0x1d10] sm:$0xff]
    %v983 = vld [vmem:[%s1 + $0x1d18] sm:$0xff]
    %v984 = vld [vmem:[%s1 + $0x1d20] sm:$0xff]
    %v985 = vld [vmem:[%s1 + $0x1d28] sm:$0xff]
    %v986 = vld [vmem:[%s1 + $0x1d30] sm:$0xff]
    %v987 = vld [vmem:[%s1 + $0x1d38] sm:$0xff]
    %v988 = vld [vmem:[%s1 + $0x1d40] sm:$0xff]
    %v989 = vld [vmem:[%s1 + $0x1d48] sm:$0xff]
    %v990 = vld [vmem:[%s1 + $0x1d50] sm:$0xff]
    %v991 = vld [vmem:[%s1 + $0x1d58] sm:$0xff]
    %v992 = vld [vmem:[%s1 + $0x1d60] sm:$0xff]
    %v993 = vld [vmem:[%s1 + $0x1d68] sm:$0xff]
    %v994 = vld [vmem:[%s1 + $0x1d70] sm:$0xff]
    %v995 = vld [vmem:[%s1 + $0x1d78] sm:$0xff]
    %v996 = vld [vmem:[%s1 + $0x1d80] sm:$0xff]
    %v997 = vld [vmem:[%s1 + $0x1d88] sm:$0xff]
    %v998 = vld [vmem:[%s1 + $0x1d90] sm:$0xff]
    %v999 = vld [vmem:[%s1 + $0x1d98] sm:$0xff]
    %v1000 = vld [vmem:[%s1 + $0x1da0] sm:$0xff]
    %v1001 = vld [vmem:[%s1 + $0x1da8] sm:$0xff]
    %v1002 = vld [vmem:[%s1 + $0x1db0] sm:$0xff]
    %v1003 = vld [vmem:[%s1 + $0x1db8] sm:$0xff]
    %v1004 = vld [vmem:[%s1 + $0x1dc0] sm:$0xff]
    %v1005 = vld [vmem:[%s1 + $0x1dc8] sm:$0xff]
    %v1006 = vld [vmem:[%s1 + $0x1dd0] sm:$0xff]
    %v1007 = vld [vmem:[%s1 + $0x1dd8] sm:$0xff]
    %v1008 = vld [vmem:[%s1 + $0x1de0] sm:$0xff]
    %v1009 = vld [vmem:[%s1 + $0x1de8] sm:$0xff]
    %v1010 = vld [vmem:[%s1 + $0x1df0] sm:$0xff]
    %v1011 = vld [vmem:[%s1 + $0x1df8] sm:$0xff]
    %v1012 = vld [vmem:[%s1 + $0x1e00] sm:$0xff]
    %v1013 = vld [vmem:[%s1 + $0x1e08] sm:$0xff]
    %v1014 = vld [vmem:[%s1 + $0x1e10] sm:$0xff]
    %v1015 = vld [vmem:[%s1 + $0x1e18] sm:$0xff]
    %v1016 = vld [vmem:[%s1 + $0x1e20] sm:$0xff]
    %v1017 = vld [vmem:[%s1 + $0x1e28] sm:$0xff]
    %v1018 = vld [vmem:[%s1 + $0x1e30] sm:$0xff]
    %v1019 = vld [vmem:[%s1 + $0x1e38] sm:$0xff]
    %v1020 = vld [vmem:[%s1 + $0x1e40] sm:$0xff]
    %v1021 = vld [vmem:[%s1 + $0x1e48] sm:$0xff]
    %v1022 = vld [vmem:[%s1 + $0x1e50] sm:$0xff]
    %v1023 = vld [vmem:[%s1 + $0x1e58] sm:$0xff]
    %v1024 = vld [vmem:[%s1 + $0x1e60] sm:$0xff]
    %v1025 = vld [vmem:[%s1 + $0x1e68] sm:$0xff]
    %v1026 = vld [vmem:[%s1 + $0x1e70] sm:$0xff]
    %v1027 = vld [vmem:[%s1 + $0x1e78] sm:$0xff]
    %v1028 = vld [vmem:[%s1 + $0x1e80] sm:$0xff]
    %v1029 = vld [vmem:[%s1 + $0x1e88] sm:$0xff]
    %v1030 = vld [vmem:[%s1 + $0x1e90] sm:$0xff]
    %v1031 = vld [vmem:[%s1 + $0x1e98] sm:$0xff]
    %v1032 = vld [vmem:[%s1 + $0x1ea0] sm:$0xff]
    %v1033 = vld [vmem:[%s1 + $0x1ea8] sm:$0xff]
    %v1034 = vld [vmem:[%s1 + $0x1eb0] sm:$0xff]
    %v1035 = vld [vmem:[%s1 + $0x1eb8] sm:$0xff]
    %v1036 = vld [vmem:[%s1 + $0x1ec0] sm:$0xff]
    %v1037 = vld [vmem:[%s1 + $0x1ec8] sm:$0xff]
    %v1038 = vld [vmem:[%s1 + $0x1ed0] sm:$0xff]
    %v1039 = vld [vmem:[%s1 + $0x1ed8] sm:$0xff]
    %v1040 = vld [vmem:[%s1 + $0x1ee0] sm:$0xff]
    %v1041 = vld [vmem:[%s1 + $0x1ee8] sm:$0xff]
    %v1042 = vld [vmem:[%s1 + $0x1ef0] sm:$0xff]
    %v1043 = vld [vmem:[%s1 + $0x1ef8] sm:$0xff]
    %v1044 = vld [vmem:[%s1 + $0x1f00] sm:$0xff]
    %v1045 = vld [vmem:[%s1 + $0x1f08] sm:$0xff]
    %v1046 = vld [vmem:[%s1 + $0x1f10] sm:$0xff]
    %v1047 = vld [vmem:[%s1 + $0x1f18] sm:$0xff]
    %v1048 = vld [vmem:[%s1 + $0x1f20] sm:$0xff]
    %v1049 = vld [vmem:[%s1 + $0x1f28] sm:$0xff]
    %v1050 = vld [vmem:[%s1 + $0x1f30] sm:$0xff]
    %v1051 = vld [vmem:[%s1 + $0x1f38] sm:$0xff]
    %v1052 = vld [vmem:[%s1 + $0x1f40] sm:$0xff]
    %v1053 = vld [vmem:[%s1 + $0x1f48] sm:$0xff]
    %v1054 = vld [vmem:[%s1 + $0x1f50] sm:$0xff]
    %v1055 = vld [vmem:[%s1 + $0x1f58] sm:$0xff]
    %v1056 = vld [vmem:[%s1 + $0x1f60] sm:$0xff]
    %v1057 = vld [vmem:[%s1 + $0x1f68] sm:$0xff]
    %v1058 = vld [vmem:[%s1 + $0x1f70] sm:$0xff]
    %v1059 = vld [vmem:[%s1 + $0x1f78] sm:$0xff]
    %v1060 = vld [vmem:[%s1 + $0x1f80] sm:$0xff]
    %v1061 = vld [vmem:[%s1 + $0x1f88] sm:$0xff]
    %v1062 = vld [vmem:[%s1 + $0x1f90] sm:$0xff]
    %v1063 = vld [vmem:[%s1 + $0x1f98] sm:$0xff]
    %v1064 = vld [vmem:[%s1 + $0x1fa0] sm:$0xff]
    %v1065 = vld [vmem:[%s1 + $0x1fa8] sm:$0xff]
    %v1066 = vld [vmem:[%s1 + $0x1fb0] sm:$0xff]
    %v1067 = vld [vmem:[%s1 + $0x1fb8] sm:$0xff]
    %v1068 = vld [vmem:[%s1 + $0x1fc0] sm:$0xff]
    %v1069 = vld [vmem:[%s1 + $0x1fc8] sm:$0xff]
    %v1070 = vld [vmem:[%s1 + $0x1fd0] sm:$0xff]
    %v1071 = vld [vmem:[%s1 + $0x1fd8] sm:$0xff]
    %v1072 = vld [vmem:[%s1 + $0x1fe0] sm:$0xff]
    %v1073 = vld [vmem:[%s1 + $0x1fe8] sm:$0xff]
    %v1074 = vld [vmem:[%s1 + $0x1ff0] sm:$0xff]
    %v1075 = vld [vmem:[%s1 + $0x1ff8] sm:$0xff]
    %v1076 = vld [vmem:[%s1 + $0x2000] sm:$0xff]
    %v1077 = vld [vmem:[%s1 + $0x2008] sm:$0xff]
    %v1078 = vld [vmem:[%s1 + $0x2010] sm:$0xff]
    %v1079 = vld [vmem:[%s1 + $0x2018] sm:$0xff]
    %v1080 = vld [vmem:[%s1 + $0x2020] sm:$0xff]
    %v1081 = vld [vmem:[%s1 + $0x2028] sm:$0xff]
    %v1082 = vld [vmem:[%s1 + $0x2030] sm:$0xff]
    %v1083 = vld [vmem:[%s1 + $0x2038] sm:$0xff]
    %v1084 = vld [vmem:[%s1 + $0x2040] sm:$0xff]
    %v1085 = vld [vmem:[%s1 + $0x2048] sm:$0xff]
    %v1086 = vld [vmem:[%s1 + $0x2050] sm:$0xff]
    %v1087 = vld [vmem:[%s1 + $0x2058] sm:$0xff]
    %v1088 = vld [vmem:[%s1 + $0x2060] sm:$0xff]
    %v1089 = vld [vmem:[%s1 + $0x2068] sm:$0xff]
    %v1090 = vld [vmem:[%s1 + $0x2070] sm:$0xff]
    %v1091 = vld [vmem:[%s1 + $0x2078] sm:$0xff]
    %v1092 = vld [vmem:[%s1 + $0x2080] sm:$0xff]
    %v1093 = vld [vmem:[%s1 + $0x2088] sm:$0xff]
    %v1094 = vld [vmem:[%s1 + $0x2090] sm:$0xff]
    %v1095 = vld [vmem:[%s1 + $0x2098] sm:$0xff]
    %v1096 = vld [vmem:[%s1 + $0x20a0] sm:$0xff]
    %v1097 = vld [vmem:[%s1 + $0x20a8] sm:$0xff]
    %v1098 = vld [vmem:[%s1 + $0x20b0] sm:$0xff]
    %v1099 = vld [vmem:[%s1 + $0x20b8] sm:$0xff]
    %v1100 = vld [vmem:[%s1 + $0x20c0] sm:$0xff]
    %v1101 = vld [vmem:[%s1 + $0x20c8] sm:$0xff]
    %v1102 = vld [vmem:[%s1 + $0x20d0] sm:$0xff]
    %v1103 = vld [vmem:[%s1 + $0x20d8] sm:$0xff]
    %v1104 = vld [vmem:[%s1 + $0x20e0] sm:$0xff]
    %v1105 = vld [vmem:[%s1 + $0x20e8] sm:$0xff]
    %v1106 = vld [vmem:[%s1 + $0x20f0] sm:$0xff]
    %v1107 = vld [vmem:[%s1 + $0x20f8] sm:$0xff]
    %v1108 = vld [vmem:[%s1 + $0x2100] sm:$0xff]
    %v1109 = vld [vmem:[%s1 + $0x2108] sm:$0xff]
    %v1110 = vld [vmem:[%s1 + $0x2110] sm:$0xff]
    %v1111 = vld [vmem:[%s1 + $0x2118] sm:$0xff]
    %v1112 = vld [vmem:[%s1 + $0x2120] sm:$0xff]
    %v1113 = vld [vmem:[%s1 + $0x2128] sm:$0xff]
    %v1114 = vld [vmem:[%s1 + $0x2130] sm:$0xff]
    %v1115 = vld [vmem:[%s1 + $0x2138] sm:$0xff]
    %v1116 = vld [vmem:[%s1 + $0x2140] sm:$0xff]
    %v1117 = vld [vmem:[%s1 + $0x2148] sm:$0xff]
    %v1118 = vld [vmem:[%s1 + $0x2150] sm:$0xff]
    %v1119 = vld [vmem:[%s1 + $0x2158] sm:$0xff]
    %v1120 = vld [vmem:[%s1 + $0x2160] sm:$0xff]
    %v1121 = vld [vmem:[%s1 + $0x2168] sm:$0xff]
    %v1122 = vld [vmem:[%s1 + $0x2170] sm:$0xff]
    %v1123 = vld [vmem:[%s1 + $0x2178] sm:$0xff]
    %v1124 = vld [vmem:[%s1 + $0x2180] sm:$0xff]
    %v1125 = vld [vmem:[%s1 + $0x2188] sm:$0xff]
    %v1126 = vld [vmem:[%s1 + $0x2190] sm:$0xff]
    %v1127 = vld [vmem:[%s1 + $0x2198] sm:$0xff]
    %v1128 = vld [vmem:[%s1 + $0x21a0] sm:$0xff]
    %v1129 = vld [vmem:[%s1 + $0x21a8] sm:$0xff]
    %v1130 = vld [vmem:[%s1 + $0x21b0] sm:$0xff]
    %v1131 = vld [vmem:[%s1 + $0x21b8] sm:$0xff]
    %v1132 = vld [vmem:[%s1 + $0x21c0] sm:$0xff]
    %v1133 = vld [vmem:[%s1 + $0x21c8] sm:$0xff]
    %v1134 = vld [vmem:[%s1 + $0x21d0] sm:$0xff]
    %v1135 = vld [vmem:[%s1 + $0x21d8] sm:$0xff]
    %v1136 = vld [vmem:[%s1 + $0x21e0] sm:$0xff]
    %v1137 = vld [vmem:[%s1 + $0x21e8] sm:$0xff]
    %v1138 = vld [vmem:[%s1 + $0x21f0] sm:$0xff]
    %v1139 = vld [vmem:[%s1 + $0x21f8] sm:$0xff]
    %v1140 = vld [vmem:[%s1 + $0x2200] sm:$0xff]
    %v1141 = vld [vmem:[%s1 + $0x2208] sm:$0xff]
    %v1142 = vld [vmem:[%s1 + $0x2210] sm:$0xff]
    %v1143 = vld [vmem:[%s1 + $0x2218] sm:$0xff]
    %v1144 = vld [vmem:[%s1 + $0x2220] sm:$0xff]
    %v1145 = vld [vmem:[%s1 + $0x2228] sm:$0xff]
    %v1146 = vld [vmem:[%s1 + $0x2230] sm:$0xff]
    %v1147 = vld [vmem:[%s1 + $0x2238] sm:$0xff]
    %v1148 = vld [vmem:[%s1 + $0x2240] sm:$0xff]
    %v1149 = vld [vmem:[%s1 + $0x2248] sm:$0xff]
    %v1150 = vld [vmem:[%s1 + $0x2250] sm:$0xff]
    %v1151 = vld [vmem:[%s1 + $0x2258] sm:$0xff]
    %v1152 = vld [vmem:[%s1 + $0x2260] sm:$0xff]
    %v1153 = vld [vmem:[%s1 + $0x2268] sm:$0xff]
    %v1154 = vld [vmem:[%s1 + $0x2270] sm:$0xff]
    %v1155 = vld [vmem:[%s1 + $0x2278] sm:$0xff]
    %v1156 = vld [vmem:[%s1 + $0x2280] sm:$0xff]
    %v1157 = vld [vmem:[%s1 + $0x2288] sm:$0xff]
    %v1158 = vld [vmem:[%s1 + $0x2290] sm:$0xff]
    %v1159 = vld [vmem:[%s1 + $0x2298] sm:$0xff]
    %v1160 = vld [vmem:[%s1 + $0x22a0] sm:$0xff]
    %v1161 = vld [vmem:[%s1 + $0x22a8] sm:$0xff]
    %v1162 = vld [vmem:[%s1 + $0x22b0] sm:$0xff]
    %v1163 = vld [vmem:[%s1 + $0x22b8] sm:$0xff]
    %v1164 = vld [vmem:[%s1 + $0x22c0] sm:$0xff]
    %v1165 = vld [vmem:[%s1 + $0x22c8] sm:$0xff]
    %v1166 = vld [vmem:[%s1 + $0x22d0] sm:$0xff]
    %v1167 = vld [vmem:[%s1 + $0x22d8] sm:$0xff]
    %v1168 = vld [vmem:[%s1 + $0x22e0] sm:$0xff]
    %v1169 = vld [vmem:[%s1 + $0x22e8] sm:$0xff]
    %v1170 = vld [vmem:[%s1 + $0x22f0] sm:$0xff]
    %v1171 = vld [vmem:[%s1 + $0x22f8] sm:$0xff]
    %v1172 = vld [vmem:[%s1 + $0x2300] sm:$0xff]
    %v1173 = vld [vmem:[%s1 + $0x2308] sm:$0xff]
    %v1174 = vld [vmem:[%s1 + $0x2310] sm:$0xff]
    %v1175 = vld [vmem:[%s1 + $0x2318] sm:$0xff]
    %v1176 = vld [vmem:[%s1 + $0x2320] sm:$0xff]
    %v1177 = vld [vmem:[%s1 + $0x2328] sm:$0xff]
    %v1178 = vld [vmem:[%s1 + $0x2330] sm:$0xff]
    %v1179 = vld [vmem:[%s1 + $0x2338] sm:$0xff]
    %v1180 = vld [vmem:[%s1 + $0x2340] sm:$0xff]
    %v1181 = vld [vmem:[%s1 + $0x2348] sm:$0xff]
    %v1182 = vld [vmem:[%s1 + $0x2350] sm:$0xff]
    %v1183 = vld [vmem:[%s1 + $0x2358] sm:$0xff]
    %v1184 = vld [vmem:[%s1 + $0x2360] sm:$0xff]
    %v1185 = vld [vmem:[%s1 + $0x2368] sm:$0xff]
    %v1186 = vld [vmem:[%s1 + $0x2370] sm:$0xff]
    %v1187 = vld [vmem:[%s1 + $0x2378] sm:$0xff]
    %v1188 = vld [vmem:[%s1 + $0x2380] sm:$0xff]
    %v1189 = vld [vmem:[%s1 + $0x2388] sm:$0xff]
    %v1190 = vld [vmem:[%s1 + $0x2390] sm:$0xff]
    %v1191 = vld [vmem:[%s1 + $0x2398] sm:$0xff]
    %v1192 = vld [vmem:[%s1 + $0x23a0] sm:$0xff]
    %v1193 = vld [vmem:[%s1 + $0x23a8] sm:$0xff]
    %v1194 = vld [vmem:[%s1 + $0x23b0] sm:$0xff]
    %v1195 = vld [vmem:[%s1 + $0x23b8] sm:$0xff]
    %v1196 = vld [vmem:[%s1 + $0x23c0] sm:$0xff]
    %v1197 = vld [vmem:[%s1 + $0x23c8] sm:$0xff]
    %v1198 = vld [vmem:[%s1 + $0x23d0] sm:$0xff]
    %v1199 = vld [vmem:[%s1 + $0x23d8] sm:$0xff]
    %v1200 = vld [vmem:[%s1 + $0x23e0] sm:$0xff]
    %v1201 = vld [vmem:[%s1 + $0x23e8] sm:$0xff]
    %v1202 = vld [vmem:[%s1 + $0x23f0] sm:$0xff]
    %v1203 = vld [vmem:[%s1 + $0x23f8] sm:$0xff]
    %v1204 = vld [vmem:[%s1 + $0x2400] sm:$0xff]
    %v1205 = vld [vmem:[%s1 + $0x2408] sm:$0xff]
    %v1206 = vld [vmem:[%s1 + $0x2410] sm:$0xff]
    %v1207 = vld [vmem:[%s1 + $0x2418] sm:$0xff]
    %v1208 = vld [vmem:[%s1 + $0x2420] sm:$0xff]
    %v1209 = vld [vmem:[%s1 + $0x2428] sm:$0xff]
    %v1210 = vld [vmem:[%s1 + $0x2430] sm:$0xff]
    %v1211 = vld [vmem:[%s1 + $0x2438] sm:$0xff]
    %v1212 = vld [vmem:[%s1 + $0x2440] sm:$0xff]
    %v1213 = vld [vmem:[%s1 + $0x2448] sm:$0xff]
    %v1214 = vld [vmem:[%s1 + $0x2450] sm:$0xff]
    %v1215 = vld [vmem:[%s1 + $0x2458] sm:$0xff]
    %v1216 = vld [vmem:[%s1 + $0x2460] sm:$0xff]
    %v1217 = vld [vmem:[%s1 + $0x2468] sm:$0xff]
    %v1218 = vld [vmem:[%s1 + $0x2470] sm:$0xff]
    %v1219 = vld [vmem:[%s1 + $0x2478] sm:$0xff]
    %v1220 = vld [vmem:[%s1 + $0x2480] sm:$0xff]
    %v1221 = vld [vmem:[%s1 + $0x2488] sm:$0xff]
    %v1222 = vld [vmem:[%s1 + $0x2490] sm:$0xff]
    %v1223 = vld [vmem:[%s1 + $0x2498] sm:$0xff]
    %v1224 = vld [vmem:[%s1 + $0x24a0] sm:$0xff]
    %v1225 = vld [vmem:[%s1 + $0x24a8] sm:$0xff]
    %v1226 = vld [vmem:[%s1 + $0x24b0] sm:$0xff]
    %v1227 = vld [vmem:[%s1 + $0x24b8] sm:$0xff]
    %v1228 = vld [vmem:[%s1 + $0x24c0] sm:$0xff]
    %v1229 = vld [vmem:[%s1 + $0x24c8] sm:$0xff]
    %v1230 = vld [vmem:[%s1 + $0x24d0] sm:$0xff]
    %v1231 = vld [vmem:[%s1 + $0x24d8] sm:$0xff]
    %v1232 = vld [vmem:[%s1 + $0x24e0] sm:$0xff]
    %v1233 = vld [vmem:[%s1 + $0x24e8] sm:$0xff]
    %v1234 = vld [vmem:[%s1 + $0x24f0] sm:$0xff]
    %v1235 = vld [vmem:[%s1 + $0x24f8] sm:$0xff]
    %v1236 = vld [vmem:[%s1 + $0x2500] sm:$0xff]
    %v1237 = vld [vmem:[%s1 + $0x2508] sm:$0xff]
    %v1238 = vld [vmem:[%s1 + $0x2510] sm:$0xff]
    %v1239 = vld [vmem:[%s1 + $0x2518] sm:$0xff]
    %v1240 = vld [vmem:[%s1 + $0x2520] sm:$0xff]
    %v1241 = vld [vmem:[%s1 + $0x2528] sm:$0xff]
    %v1242 = vld [vmem:[%s1 + $0x2530] sm:$0xff]
    %v1243 = vld [vmem:[%s1 + $0x2538] sm:$0xff]
    %v1244 = vld [vmem:[%s1 + $0x2540] sm:$0xff]
    %v1245 = vld [vmem:[%s1 + $0x2548] sm:$0xff]
    %v1246 = vld [vmem:[%s1 + $0x2550] sm:$0xff]
    %v1247 = vld [vmem:[%s1 + $0x2558] sm:$0xff]
    %v1248 = vld [vmem:[%s1 + $0x2560] sm:$0xff]
    %v1249 = vld [vmem:[%s1 + $0x2568] sm:$0xff]
    %v1250 = vld [vmem:[%s1 + $0x2570] sm:$0xff]
    %v1251 = vld [vmem:[%s1 + $0x2578] sm:$0xff]
    %v1252 = vld [vmem:[%s1 + $0x2580] sm:$0xff]
    %v1253 = vld [vmem:[%s1 + $0x2588] sm:$0xff]
    %v1254 = vld [vmem:[%s1 + $0x2590] sm:$0xff]
    %v1255 = vld [vmem:[%s1 + $0x2598] sm:$0xff]
    %v1256 = vld [vmem:[%s1 + $0x25a0] sm:$0xff]
    %v1257 = vld [vmem:[%s1 + $0x25a8] sm:$0xff]
    %v1258 = vld [vmem:[%s1 + $0x25b0] sm:$0xff]
    %v1259 = vld [vmem:[%s1 + $0x25b8] sm:$0xff]
    %v1260 = vld [vmem:[%s1 + $0x25c0] sm:$0xff]
    %v1261 = vld [vmem:[%s1 + $0x25c8] sm:$0xff]
    %v1262 = vld [vmem:[%s1 + $0x25d0] sm:$0xff]
    %v1263 = vld [vmem:[%s1 + $0x25d8] sm:$0xff]
    %v1264 = vld [vmem:[%s1 + $0x25e0] sm:$0xff]
    %v1265 = vld [vmem:[%s1 + $0x25e8] sm:$0xff]
    %v1266 = vld [vmem:[%s1 + $0x25f0] sm:$0xff]
    %v1267 = vld [vmem:[%s1 + $0x25f8] sm:$0xff]
    %v1268 = vld [vmem:[%s1 + $0x2600] sm:$0xff]
    %v1269 = vld [vmem:[%s1 + $0x2608] sm:$0xff]
    %v1270 = vld [vmem:[%s1 + $0x2610] sm:$0xff]
    %v1271 = vld [vmem:[%s1 + $0x2618] sm:$0xff]
    %v1272 = vld [vmem:[%s1 + $0x2620] sm:$0xff]
    %v1273 = vld [vmem:[%s1 + $0x2628] sm:$0xff]
    %v1274 = vld [vmem:[%s1 + $0x2630] sm:$0xff]
    %v1275 = vld [vmem:[%s1 + $0x2638] sm:$0xff]
    %v1276 = vld [vmem:[%s1 + $0x2640] sm:$0xff]
    %v1277 = vld [vmem:[%s1 + $0x2648] sm:$0xff]
    %v1278 = vld [vmem:[%s1 + $0x2650] sm:$0xff]
    %v1279 = vld [vmem:[%s1 + $0x2658] sm:$0xff]
    %v1280 = vld [vmem:[%s1 + $0x2660] sm:$0xff]
    %v1281 = vld [vmem:[%s1 + $0x2668] sm:$0xff]
    %v1282 = vld [vmem:[%s1 + $0x2670] sm:$0xff]
    %v1283 = vld [vmem:[%s1 + $0x2678] sm:$0xff]
    %v1284 = vld [vmem:[%s1 + $0x2680] sm:$0xff]
    %v1285 = vld [vmem:[%s1 + $0x2688] sm:$0xff]
    %v1286 = vld [vmem:[%s1 + $0x2690] sm:$0xff]
    %v1287 = vld [vmem:[%s1 + $0x2698] sm:$0xff]
    %v1288 = vld [vmem:[%s1 + $0x26a0] sm:$0xff]
    %v1289 = vld [vmem:[%s1 + $0x26a8] sm:$0xff]
    %v1290 = vld [vmem:[%s1 + $0x26b0] sm:$0xff]
    %v1291 = vld [vmem:[%s1 + $0x26b8] sm:$0xff]
    %v1292 = vld [vmem:[%s1 + $0x26c0] sm:$0xff]
    %v1293 = vld [vmem:[%s1 + $0x26c8] sm:$0xff]
    %v1294 = vld [vmem:[%s1 + $0x26d0] sm:$0xff]
    %v1295 = vld [vmem:[%s1 + $0x26d8] sm:$0xff]
    %v1296 = vld [vmem:[%s1 + $0x26e0] sm:$0xff]
    %v1297 = vld [vmem:[%s1 + $0x26e8] sm:$0xff]
    %v1298 = vld [vmem:[%s1 + $0x26f0] sm:$0xff]
    %v1299 = vld [vmem:[%s1 + $0x26f8] sm:$0xff]
    %v1300 = vld [vmem:[%s1 + $0x2700] sm:$0xff]
    %v1301 = vld [vmem:[%s1 + $0x2708] sm:$0xff]
    %v1302 = vld [vmem:[%s1 + $0x2710] sm:$0xff]
    %v1303 = vld [vmem:[%s1 + $0x2718] sm:$0xff]
    %v1304 = vld [vmem:[%s1 + $0x2720] sm:$0xff]
    %v1305 = vld [vmem:[%s1 + $0x2728] sm:$0xff]
    %v1306 = vld [vmem:[%s1 + $0x2730] sm:$0xff]
    %v1307 = vld [vmem:[%s1 + $0x2738] sm:$0xff]
    %v1308 = vld [vmem:[%s1 + $0x2740] sm:$0xff]
    %v1309 = vld [vmem:[%s1 + $0x2748] sm:$0xff]
    %v1310 = vld [vmem:[%s1 + $0x2750] sm:$0xff]
    %v1311 = vld [vmem:[%s1 + $0x2758] sm:$0xff]
    %v1312 = vld [vmem:[%s1 + $0x2760] sm:$0xff]
    %v1313 = vld [vmem:[%s1 + $0x2768] sm:$0xff]
    %v1314 = vld [vmem:[%s1 + $0x2770] sm:$0xff]
    %v1315 = vld [vmem:[%s1 + $0x2778] sm:$0xff]
    %v1316 = vld [vmem:[%s1 + $0x2780] sm:$0xff]
    %v1317 = vld [vmem:[%s1 + $0x2788] sm:$0xff]
    %v1318 = vld [vmem:[%s1 + $0x2790] sm:$0xff]
    %v1319 = vld [vmem:[%s1 + $0x2798] sm:$0xff]
    %v1320 = vld [vmem:[%s1 + $0x27a0] sm:$0xff]
    %v1321 = vld [vmem:[%s1 + $0x27a8] sm:$0xff]
    %v1322 = vld [vmem:[%s1 + $0x27b0] sm:$0xff]
    %v1323 = vld [vmem:[%s1 + $0x27b8] sm:$0xff]
    %v1324 = vld [vmem:[%s1 + $0x27c0] sm:$0xff]
    %v1325 = vld [vmem:[%s1 + $0x27c8] sm:$0xff]
    %v1326 = vld [vmem:[%s1 + $0x27d0] sm:$0xff]
    %v1327 = vld [vmem:[%s1 + $0x27d8] sm:$0xff]
    %v1328 = vld [vmem:[%s1 + $0x27e0] sm:$0xff]
    %v1329 = vld [vmem:[%s1 + $0x27e8] sm:$0xff]
    %v1330 = vld [vmem:[%s1 + $0x27f0] sm:$0xff]
    %v1331 = vld [vmem:[%s1 + $0x27f8] sm:$0xff]
    %v1332 = vld [vmem:[%s1 + $0x2800] sm:$0xff]
    %v1333 = vld [vmem:[%s1 + $0x2808] sm:$0xff]
    %v1334 = vld [vmem:[%s1 + $0x2810] sm:$0xff]
    %v1335 = vld [vmem:[%s1 + $0x2818] sm:$0xff]
    %v1336 = vld [vmem:[%s1 + $0x2820] sm:$0xff]
    %v1337 = vld [vmem:[%s1 + $0x2828] sm:$0xff]
    %v1338 = vld [vmem:[%s1 + $0x2830] sm:$0xff]
    %v1339 = vld [vmem:[%s1 + $0x2838] sm:$0xff]
    %v1340 = vld [vmem:[%s1 + $0x2840] sm:$0xff]
    %v1341 = vld [vmem:[%s1 + $0x2848] sm:$0xff]
    %v1342 = vld [vmem:[%s1 + $0x2850] sm:$0xff]
    %v1343 = vld [vmem:[%s1 + $0x2858] sm:$0xff]
    %v1344 = vld [vmem:[%s1 + $0x2860] sm:$0xff]
    %v1345 = vld [vmem:[%s1 + $0x2868] sm:$0xff]
    %v1346 = vld [vmem:[%s1 + $0x2870] sm:$0xff]
    %v1347 = vld [vmem:[%s1 + $0x2878] sm:$0xff]
    %v1348 = vld [vmem:[%s1 + $0x2880] sm:$0xff]
    %v1349 = vld [vmem:[%s1 + $0x2888] sm:$0xff]
    %v1350 = vld [vmem:[%s1 + $0x2890] sm:$0xff]
    %v1351 = vld [vmem:[%s1 + $0x2898] sm:$0xff]
    %v1352 = vld [vmem:[%s1 + $0x28a0] sm:$0xff]
    %v1353 = vld [vmem:[%s1 + $0x28a8] sm:$0xff]
    %v1354 = vld [vmem:[%s1 + $0x28b0] sm:$0xff]
    %v1355 = vld [vmem:[%s1 + $0x28b8] sm:$0xff]
    %v1356 = vld [vmem:[%s1 + $0x28c0] sm:$0xff]
    %v1357 = vld [vmem:[%s1 + $0x28c8] sm:$0xff]
    %v1358 = vld [vmem:[%s1 + $0x28d0] sm:$0xff]
    %v1359 = vld [vmem:[%s1 + $0x28d8] sm:$0xff]
    %v1360 = vld [vmem:[%s1 + $0x28e0] sm:$0xff]
    %v1361 = vld [vmem:[%s1 + $0x28e8] sm:$0xff]
    %v1362 = vld [vmem:[%s1 + $0x28f0] sm:$0xff]
    %v1363 = vld [vmem:[%s1 + $0x28f8] sm:$0xff]
    %v1364 = vld [vmem:[%s1 + $0x2900] sm:$0xff]
    %v1365 = vld [vmem:[%s1 + $0x2908] sm:$0xff]
    %v1366 = vld [vmem:[%s1 + $0x2910] sm:$0xff]
    %v1367 = vld [vmem:[%s1 + $0x2918] sm:$0xff]
    %v1368 = vld [vmem:[%s1 + $0x2920] sm:$0xff]
    %v1369 = vld [vmem:[%s1 + $0x2928] sm:$0xff]
    %v1370 = vld [vmem:[%s1 + $0x2930] sm:$0xff]
    %v1371 = vld [vmem:[%s1 + $0x2938] sm:$0xff]
    %v1372 = vld [vmem:[%s1 + $0x2940] sm:$0xff]
    %v1373 = vld [vmem:[%s1 + $0x2948] sm:$0xff]
    %v1374 = vld [vmem:[%s1 + $0x2950] sm:$0xff]
    %v1375 = vld [vmem:[%s1 + $0x2958] sm:$0xff]
    %v1376 = vld [vmem:[%s1 + $0x2960] sm:$0xff]
    %v1377 = vld [vmem:[%s1 + $0x2968] sm:$0xff]
    %v1378 = vld [vmem:[%s1 + $0x2970] sm:$0xff]
    %v1379 = vld [vmem:[%s1 + $0x2978] sm:$0xff]
    %v1380 = vld [vmem:[%s1 + $0x2980] sm:$0xff]
    %v1381 = vld [vmem:[%s1 + $0x2988] sm:$0xff]
    %v1382 = vld [vmem:[%s1 + $0x2990] sm:$0xff]
    %v1383 = vld [vmem:[%s1 + $0x2998] sm:$0xff]
    %v1384 = vld [vmem:[%s1 + $0x29a0] sm:$0xff]
    %v1385 = vld [vmem:[%s1 + $0x29a8] sm:$0xff]
    %v1386 = vld [vmem:[%s1 + $0x29b0] sm:$0xff]
    %v1387 = vld [vmem:[%s1 + $0x29b8] sm:$0xff]
    %v1388 = vld [vmem:[%s1 + $0x29c0] sm:$0xff]
    %v1389 = vld [vmem:[%s1 + $0x29c8] sm:$0xff]
    %v1390 = vld [vmem:[%s1 + $0x29d0] sm:$0xff]
    %v1391 = vld [vmem:[%s1 + $0x29d8] sm:$0xff]
    %v1392 = vld [vmem:[%s1 + $0x29e0] sm:$0xff]
    %v1393 = vld [vmem:[%s1 + $0x29e8] sm:$0xff]
    %v1394 = vld [vmem:[%s1 + $0x29f0] sm:$0xff]
    %v1395 = vld [vmem:[%s1 + $0x29f8] sm:$0xff]
    %v1396 = vld [vmem:[%s1 + $0x2a00] sm:$0xff]
    %v1397 = vld [vmem:[%s1 + $0x2a08] sm:$0xff]
    %v1398 = vld [vmem:[%s1 + $0x2a10] sm:$0xff]
    %v1399 = vld [vmem:[%s1 + $0x2a18] sm:$0xff]
    %v1400 = vld [vmem:[%s1 + $0x2a20] sm:$0xff]
    %v1401 = vld [vmem:[%s1 + $0x2a28] sm:$0xff]
    %v1402 = vld [vmem:[%s1 + $0x2a30] sm:$0xff]
    %v1403 = vld [vmem:[%s1 + $0x2a38] sm:$0xff]
    %v1404 = vld [vmem:[%s1 + $0x2a40] sm:$0xff]
    %v1405 = vld [vmem:[%s1 + $0x2a48] sm:$0xff]
    %v1406 = vld [vmem:[%s1 + $0x2a50] sm:$0xff]
    %v1407 = vld [vmem:[%s1 + $0x2a58] sm:$0xff]
    %v1408 = vld [vmem:[%s1 + $0x2a60] sm:$0xff]
    %v1409 = vld [vmem:[%s1 + $0x2a68] sm:$0xff]
    %v1410 = vld [vmem:[%s1 + $0x2a70] sm:$0xff]
    %v1411 = vld [vmem:[%s1 + $0x2a78] sm:$0xff]
    %v1412 = vld [vmem:[%s1 + $0x2a80] sm:$0xff]
    %v1413 = vld [vmem:[%s1 + $0x2a88] sm:$0xff]
    %v1414 = vld [vmem:[%s1 + $0x2a90] sm:$0xff]
    %v1415 = vld [vmem:[%s1 + $0x2a98] sm:$0xff]
    %v1416 = vld [vmem:[%s1 + $0x2aa0] sm:$0xff]
    %v1417 = vld [vmem:[%s1 + $0x2aa8] sm:$0xff]
    %v1418 = vld [vmem:[%s1 + $0x2ab0] sm:$0xff]
    %v1419 = vld [vmem:[%s1 + $0x2ab8] sm:$0xff]
    %v1420 = vld [vmem:[%s1 + $0x2ac0] sm:$0xff]
    %v1421 = vld [vmem:[%s1 + $0x2ac8] sm:$0xff]
    %v1422 = vld [vmem:[%s1 + $0x2ad0] sm:$0xff]
    %v1423 = vld [vmem:[%s1 + $0x2ad8] sm:$0xff]
    %v1424 = vld [vmem:[%s1 + $0x2ae0] sm:$0xff]
    %v1425 = vld [vmem:[%s1 + $0x2ae8] sm:$0xff]
    %v1426 = vld [vmem:[%s1 + $0x2af0] sm:$0xff]
    %v1427 = vld [vmem:[%s1 + $0x2af8] sm:$0xff]
    %v1428 = vld [vmem:[%s1 + $0x2b00] sm:$0xff]
    %v1429 = vld [vmem:[%s1 + $0x2b08] sm:$0xff]
    %v1430 = vld [vmem:[%s1 + $0x2b10] sm:$0xff]
    %v1431 = vld [vmem:[%s1 + $0x2b18] sm:$0xff]
    %v1432 = vld [vmem:[%s1 + $0x2b20] sm:$0xff]
    %v1433 = vld [vmem:[%s1 + $0x2b28] sm:$0xff]
    %v1434 = vld [vmem:[%s1 + $0x2b30] sm:$0xff]
    %v1435 = vld [vmem:[%s1 + $0x2b38] sm:$0xff]
    %v1436 = vld [vmem:[%s1 + $0x2b40] sm:$0xff]
    %v1437 = vld [vmem:[%s1 + $0x2b48] sm:$0xff]
    %v1438 = vld [vmem:[%s1 + $0x2b50] sm:$0xff]
    %v1439 = vld [vmem:[%s1 + $0x2b58] sm:$0xff]
    %v1440 = vld [vmem:[%s1 + $0x2b60] sm:$0xff]
    %v1441 = vld [vmem:[%s1 + $0x2b68] sm:$0xff]
    %v1442 = vld [vmem:[%s1 + $0x2b70] sm:$0xff]
    %v1443 = vld [vmem:[%s1 + $0x2b78] sm:$0xff]
    %v1444 = vld [vmem:[%s1 + $0x2b80] sm:$0xff]
    %v1445 = vld [vmem:[%s1 + $0x2b88] sm:$0xff]
    %v1446 = vld [vmem:[%s1 + $0x2b90] sm:$0xff]
    %v1447 = vld [vmem:[%s1 + $0x2b98] sm:$0xff]
    %v1448 = vld [vmem:[%s1 + $0x2ba0] sm:$0xff]
    %v1449 = vld [vmem:[%s1 + $0x2ba8] sm:$0xff]
    %v1450 = vld [vmem:[%s1 + $0x2bb0] sm:$0xff]
    %v1451 = vld [vmem:[%s1 + $0x2bb8] sm:$0xff]
    %v1452 = vld [vmem:[%s1 + $0x2bc0] sm:$0xff]
    %v1453 = vld [vmem:[%s1 + $0x2bc8] sm:$0xff]
    %v1454 = vld [vmem:[%s1 + $0x2bd0] sm:$0xff]
    %v1455 = vld [vmem:[%s1 + $0x2bd8] sm:$0xff]
    %v1456 = vld [vmem:[%s1 + $0x2be0] sm:$0xff]
    %v1457 = vld [vmem:[%s1 + $0x2be8] sm:$0xff]
    %v1458 = vld [vmem:[%s1 + $0x2bf0] sm:$0xff]
    %v1459 = vld [vmem:[%s1 + $0x2bf8] sm:$0xff]
    %v1460 = vld [vmem:[%s1 + $0x2c00] sm:$0xff]
    %v1461 = vld [vmem:[%s1 + $0x2c08] sm:$0xff]
    %v1462 = vld [vmem:[%s1 + $0x2c10] sm:$0xff]
    %v1463 = vld [vmem:[%s1 + $0x2c18] sm:$0xff]
    %v1464 = vld [vmem:[%s1 + $0x2c20] sm:$0xff]
    %v1465 = vld [vmem:[%s1 + $0x2c28] sm:$0xff]
    %v1466 = vld [vmem:[%s1 + $0x2c30] sm:$0xff]
    %v1467 = vld [vmem:[%s1 + $0x2c38] sm:$0xff]
    %v1468 = vld [vmem:[%s1 + $0x2c40] sm:$0xff]
    %v1469 = vld [vmem:[%s1 + $0x2c48] sm:$0xff]
    %v1470 = vld [vmem:[%s1 + $0x2c50] sm:$0xff]
    %v1471 = vld [vmem:[%s1 + $0x2c58] sm:$0xff]
    %v1472 = vld [vmem:[%s1 + $0x2c60] sm:$0xff]
    %v1473 = vld [vmem:[%s1 + $0x2c68] sm:$0xff]
    %v1474 = vld [vmem:[%s1 + $0x2c70] sm:$0xff]
    %v1475 = vld [vmem:[%s1 + $0x2c78] sm:$0xff]
    %v1476 = vld [vmem:[%s1 + $0x2c80] sm:$0xff]
    %v1477 = vld [vmem:[%s1 + $0x2c88] sm:$0xff]
    %v1478 = vld [vmem:[%s1 + $0x2c90] sm:$0xff]
    %v1479 = vld [vmem:[%s1 + $0x2c98] sm:$0xff]
    %v1480 = vld [vmem:[%s1 + $0x2ca0] sm:$0xff]
    %v1481 = vld [vmem:[%s1 + $0x2ca8] sm:$0xff]
    %v1482 = vld [vmem:[%s1 + $0x2cb0] sm:$0xff]
    %v1483 = vld [vmem:[%s1 + $0x2cb8] sm:$0xff]
    %v1484 = vld [vmem:[%s1 + $0x2cc0] sm:$0xff]
    %v1485 = vld [vmem:[%s1 + $0x2cc8] sm:$0xff]
    %v1486 = vld [vmem:[%s1 + $0x2cd0] sm:$0xff]
    %v1487 = vld [vmem:[%s1 + $0x2cd8] sm:$0xff]
    %v1488 = vld [vmem:[%s1 + $0x2ce0] sm:$0xff]
    %v1489 = vld [vmem:[%s1 + $0x2ce8] sm:$0xff]
    %v1490 = vld [vmem:[%s1 + $0x2cf0] sm:$0xff]
    %v1491 = vld [vmem:[%s1 + $0x2cf8] sm:$0xff]
    %v1492 = vld [vmem:[%s1 + $0x2d00] sm:$0xff]
    %v1493 = vld [vmem:[%s1 + $0x2d08] sm:$0xff]
    %v1494 = vld [vmem:[%s1 + $0x2d10] sm:$0xff]
    %v1495 = vld [vmem:[%s1 + $0x2d18] sm:$0xff]
    %v1496 = vld [vmem:[%s1 + $0x2d20] sm:$0xff]
    %v1497 = vld [vmem:[%s1 + $0x2d28] sm:$0xff]
    %v1498 = vld [vmem:[%s1 + $0x2d30] sm:$0xff]
    %v1499 = vld [vmem:[%s1 + $0x2d38] sm:$0xff]
    %v1500 = vld [vmem:[%s1 + $0x2d40] sm:$0xff]
    %v1501 = vld [vmem:[%s1 + $0x2d48] sm:$0xff]
    %v1502 = vld [vmem:[%s1 + $0x2d50] sm:$0xff]
    %v1503 = vld [vmem:[%s1 + $0x2d58] sm:$0xff]
    %v1504 = vld [vmem:[%s1 + $0x2d60] sm:$0xff]
    %v1505 = vld [vmem:[%s1 + $0x2d68] sm:$0xff]
    %v1506 = vld [vmem:[%s1 + $0x2d70] sm:$0xff]
    %v1507 = vld [vmem:[%s1 + $0x2d78] sm:$0xff]
    %v1508 = vld [vmem:[%s1 + $0x2d80] sm:$0xff]
    %v1509 = vld [vmem:[%s1 + $0x2d88] sm:$0xff]
    %v1510 = vld [vmem:[%s1 + $0x2d90] sm:$0xff]
    %v1511 = vld [vmem:[%s1 + $0x2d98] sm:$0xff]
    %v1512 = vld [vmem:[%s1 + $0x2da0] sm:$0xff]
    %v1513 = vld [vmem:[%s1 + $0x2da8] sm:$0xff]
    %v1514 = vld [vmem:[%s1 + $0x2db0] sm:$0xff]
    %v1515 = vld [vmem:[%s1 + $0x2db8] sm:$0xff]
    %v1516 = vld [vmem:[%s1 + $0x2dc0] sm:$0xff]
    %v1517 = vld [vmem:[%s1 + $0x2dc8] sm:$0xff]
    %v1518 = vld [vmem:[%s1 + $0x2dd0] sm:$0xff]
    %v1519 = vld [vmem:[%s1 + $0x2dd8] sm:$0xff]
    %v1520 = vld [vmem:[%s1 + $0x2de0] sm:$0xff]
    %v1521 = vld [vmem:[%s1 + $0x2de8] sm:$0xff]
    %v1522 = vld [vmem:[%s1 + $0x2df0] sm:$0xff]
    %v1523 = vld [vmem:[%s1 + $0x2df8] sm:$0xff]
    %v1524 = vld [vmem:[%s1 + $0x2e00] sm:$0xff]
    %v1525 = vld [vmem:[%s1 + $0x2e08] sm:$0xff]
    %v1526 = vld [vmem:[%s1 + $0x2e10] sm:$0xff]
    %v1527 = vld [vmem:[%s1 + $0x2e18] sm:$0xff]
    %v1528 = vld [vmem:[%s1 + $0x2e20] sm:$0xff]
    %v1529 = vld [vmem:[%s1 + $0x2e28] sm:$0xff]
    %v1530 = vld [vmem:[%s1 + $0x2e30] sm:$0xff]
    %v1531 = vld [vmem:[%s1 + $0x2e38] sm:$0xff]
    %v1532 = vld [vmem:[%s1 + $0x2e40] sm:$0xff]
    %v1533 = vld [vmem:[%s1 + $0x2e48] sm:$0xff]
    %v1534 = vld [vmem:[%s1 + $0x2e50] sm:$0xff]
    %v1535 = vld [vmem:[%s1 + $0x2e58] sm:$0xff]
    %v1536 = vld [vmem:[%s1 + $0x2e60] sm:$0xff]
    %v1537 = vld [vmem:[%s1 + $0x2e68] sm:$0xff]
    %v1538 = vld [vmem:[%s1 + $0x2e70] sm:$0xff]
    %v1539 = vld [vmem:[%s1 + $0x2e78] sm:$0xff]
    %v1540 = vld [vmem:[%s1 + $0x2e80] sm:$0xff]
    %v1541 = vld [vmem:[%s1 + $0x2e88] sm:$0xff]
    %v1542 = vld [vmem:[%s1 + $0x2e90] sm:$0xff]
    %v1543 = vld [vmem:[%s1 + $0x2e98] sm:$0xff]
    %v1544 = vld [vmem:[%s1 + $0x2ea0] sm:$0xff]
    %v1545 = vld [vmem:[%s1 + $0x2ea8] sm:$0xff]
    %v1546 = vld [vmem:[%s1 + $0x2eb0] sm:$0xff]
    %v1547 = vld [vmem:[%s1 + $0x2eb8] sm:$0xff]
    %v1548 = vld [vmem:[%s1 + $0x2ec0] sm:$0xff]
    %v1549 = vld [vmem:[%s1 + $0x2ec8] sm:$0xff]
    %v1550 = vld [vmem:[%s1 + $0x2ed0] sm:$0xff]
    %v1551 = vld [vmem:[%s1 + $0x2ed8] sm:$0xff]
    %v1552 = vld [vmem:[%s1 + $0x2ee0] sm:$0xff]
    %v1553 = vld [vmem:[%s1 + $0x2ee8] sm:$0xff]
    %v1554 = vld [vmem:[%s1 + $0x2ef0] sm:$0xff]
    %v1555 = vld [vmem:[%s1 + $0x2ef8] sm:$0xff]
    %v1556 = vld [vmem:[%s1 + $0x2f00] sm:$0xff]
    %v1557 = vld [vmem:[%s1 + $0x2f08] sm:$0xff]
    %v1558 = vld [vmem:[%s1 + $0x2f10] sm:$0xff]
    %v1559 = vld [vmem:[%s1 + $0x2f18] sm:$0xff]
    %v1560 = vld [vmem:[%s1 + $0x2f20] sm:$0xff]
    %v1561 = vld [vmem:[%s1 + $0x2f28] sm:$0xff]
    %v1562 = vld [vmem:[%s1 + $0x2f30] sm:$0xff]
    %v1563 = vld [vmem:[%s1 + $0x2f38] sm:$0xff]
    %v1564 = vld [vmem:[%s1 + $0x2f40] sm:$0xff]
    %v1565 = vld [vmem:[%s1 + $0x2f48] sm:$0xff]
    %v1566 = vld [vmem:[%s1 + $0x2f50] sm:$0xff]
    %v1567 = vld [vmem:[%s1 + $0x2f58] sm:$0xff]
    %v1568 = vld [vmem:[%s1 + $0x2f60] sm:$0xff]
    %v1569 = vld [vmem:[%s1 + $0x2f68] sm:$0xff]
    %v1570 = vld [vmem:[%s1 + $0x2f70] sm:$0xff]
    %v1571 = vld [vmem:[%s1 + $0x2f78] sm:$0xff]
    %v1572 = vld [vmem:[%s1 + $0x2f80] sm:$0xff]
    %v1573 = vld [vmem:[%s1 + $0x2f88] sm:$0xff]
    %v1574 = vld [vmem:[%s1 + $0x2f90] sm:$0xff]
    %v1575 = vld [vmem:[%s1 + $0x2f98] sm:$0xff]
    %v1576 = vld [vmem:[%s1 + $0x2fa0] sm:$0xff]
    %v1577 = vld [vmem:[%s1 + $0x2fa8] sm:$0xff]
    %v1578 = vld [vmem:[%s1 + $0x2fb0] sm:$0xff]
    %v1579 = vld [vmem:[%s1 + $0x2fb8] sm:$0xff]
    %v1580 = vld [vmem:[%s1 + $0x2fc0] sm:$0xff]
    %v1581 = vld [vmem:[%s1 + $0x2fc8] sm:$0xff]
    %v1582 = vld [vmem:[%s1 + $0x2fd0] sm:$0xff]
    %v1583 = vld [vmem:[%s1 + $0x2fd8] sm:$0xff]
    %v1584 = vld [vmem:[%s1 + $0x2fe0] sm:$0xff]
    %v1585 = vld [vmem:[%s1 + $0x2fe8] sm:$0xff]
    %v1586 = vld [vmem:[%s1 + $0x2ff0] sm:$0xff]
    %v1587 = vld [vmem:[%s1 + $0x2ff8] sm:$0xff]
    %v1588 = vld [vmem:[%s1 + $0x3000] sm:$0xff]
    %v1589 = vld [vmem:[%s1 + $0x3008] sm:$0xff]
    %v1590 = vld [vmem:[%s1 + $0x3010] sm:$0xff]
    %v1591 = vld [vmem:[%s1 + $0x3018] sm:$0xff]
    %v1592 = vld [vmem:[%s1 + $0x3020] sm:$0xff]
    %v1593 = vld [vmem:[%s1 + $0x3028] sm:$0xff]
    %v1594 = vld [vmem:[%s1 + $0x3030] sm:$0xff]
    %v1595 = vld [vmem:[%s1 + $0x3038] sm:$0xff]
    %v1596 = vld [vmem:[%s1 + $0x3040] sm:$0xff]
    %v1597 = vld [vmem:[%s1 + $0x3048] sm:$0xff]
    %v1598 = vld [vmem:[%s1 + $0x3050] sm:$0xff]
    %v1599 = vld [vmem:[%s1 + $0x3058] sm:$0xff]
    %v1600 = vld [vmem:[%s1 + $0x3060] sm:$0xff]
    %v1601 = vld [vmem:[%s1 + $0x3068] sm:$0xff]
    %v1602 = vld [vmem:[%s1 + $0x3070] sm:$0xff]
    %v1603 = vld [vmem:[%s1 + $0x3078] sm:$0xff]
    %v1604 = vld [vmem:[%s1 + $0x3080] sm:$0xff]
    %v1605 = vld [vmem:[%s1 + $0x3088] sm:$0xff]
    %v1606 = vld [vmem:[%s1 + $0x3090] sm:$0xff]
    %v1607 = vld [vmem:[%s1 + $0x3098] sm:$0xff]
    %v1608 = vld [vmem:[%s1 + $0x30a0] sm:$0xff]
    %v1609 = vld [vmem:[%s1 + $0x30a8] sm:$0xff]
    %v1610 = vld [vmem:[%s1 + $0x30b0] sm:$0xff]
    %v1611 = vld [vmem:[%s1 + $0x30b8] sm:$0xff]
    %v1612 = vld [vmem:[%s1 + $0x30c0] sm:$0xff]
    %v1613 = vld [vmem:[%s1 + $0x30c8] sm:$0xff]
    %v1614 = vld [vmem:[%s1 + $0x30d0] sm:$0xff]
    %v1615 = vld [vmem:[%s1 + $0x30d8] sm:$0xff]
    %v1616 = vld [vmem:[%s1 + $0x30e0] sm:$0xff]
    %v1617 = vld [vmem:[%s1 + $0x30e8] sm:$0xff]
    %v1618 = vld [vmem:[%s1 + $0x30f0] sm:$0xff]
    %v1619 = vld [vmem:[%s1 + $0x30f8] sm:$0xff]
    %v1620 = vld [vmem:[%s1 + $0x3100] sm:$0xff]
    %v1621 = vld [vmem:[%s1 + $0x3108] sm:$0xff]
    %v1622 = vld [vmem:[%s1 + $0x3110] sm:$0xff]
    %v1623 = vld [vmem:[%s1 + $0x3118] sm:$0xff]
    %v1624 = vld [vmem:[%s1 + $0x3120] sm:$0xff]
    %v1625 = vld [vmem:[%s1 + $0x3128] sm:$0xff]
    %v1626 = vld [vmem:[%s1 + $0x3130] sm:$0xff]
    %v1627 = vld [vmem:[%s1 + $0x3138] sm:$0xff]
    %v1628 = vld [vmem:[%s1 + $0x3140] sm:$0xff]
    %v1629 = vld [vmem:[%s1 + $0x3148] sm:$0xff]
    %v1630 = vld [vmem:[%s1 + $0x3150] sm:$0xff]
    %v1631 = vld [vmem:[%s1 + $0x3158] sm:$0xff]
    %v1632 = vld [vmem:[%s1 + $0x3160] sm:$0xff]
    %v1633 = vld [vmem:[%s1 + $0x3168] sm:$0xff]
    %v1634 = vld [vmem:[%s1 + $0x3170] sm:$0xff]
    %v1635 = vld [vmem:[%s1 + $0x3178] sm:$0xff]
    %v1636 = vld [vmem:[%s1 + $0x3180] sm:$0xff]
    %v1637 = vld [vmem:[%s1 + $0x3188] sm:$0xff]
    %v1638 = vld [vmem:[%s1 + $0x3190] sm:$0xff]
    %v1639 = vld [vmem:[%s1 + $0x3198] sm:$0xff]
    %v1640 = vld [vmem:[%s1 + $0x31a0] sm:$0xff]
    %v1641 = vld [vmem:[%s1 + $0x31a8] sm:$0xff]
    %v1642 = vld [vmem:[%s1 + $0x31b0] sm:$0xff]
    %v1643 = vld [vmem:[%s1 + $0x31b8] sm:$0xff]
    %v1644 = vld [vmem:[%s1 + $0x31c0] sm:$0xff]
    %v1645 = vld [vmem:[%s1 + $0x31c8] sm:$0xff]
    %v1646 = vld [vmem:[%s1 + $0x31d0] sm:$0xff]
    %v1647 = vld [vmem:[%s1 + $0x31d8] sm:$0xff]
    %v1648 = vld [vmem:[%s1 + $0x31e0] sm:$0xff]
    %v1649 = vld [vmem:[%s1 + $0x31e8] sm:$0xff]
    %v1650 = vld [vmem:[%s1 + $0x31f0] sm:$0xff]
    %v1651 = vld [vmem:[%s1 + $0x31f8] sm:$0xff]
    %v1652 = vld [vmem:[%s2] sm:$0x1]
    %v1654 = vperm.slane %v1652, 0
    %1681 = vst [vmem:[#allocation1] ss:$4 sm:$0xff] %v27
    %s1682 = scalar_lea.vmem [#allocation1], 32
    %1683 = vst [vmem:[%s1682] ss:$4 sm:$0xff] %v28
    %v1684 = vld.sshfl [vmem:[#allocation1] sm:$0xff pattern:$0x73625140]
    %v1685 = vld.sshfl [vmem:[#allocation1 + $0x8] sm:$0xff pattern:$0x73625140]
    %v1686 = vld.sshfl [vmem:[#allocation1 + $0x10] sm:$0xff pattern:$0x73625140]
    %v1687 = vld.sshfl [vmem:[#allocation1 + $0x18] sm:$0xff pattern:$0x73625140]
    %v1688 = vld.sshfl [vmem:[#allocation1 + $0x20] sm:$0xff pattern:$0x73625140]
    %v1689 = vld.sshfl [vmem:[#allocation1 + $0x28] sm:$0xff pattern:$0x73625140]
    %v1690 = vld.sshfl [vmem:[#allocation1 + $0x30] sm:$0xff pattern:$0x73625140]
    %v1691 = vld.sshfl [vmem:[#allocation1 + $0x38] sm:$0xff pattern:$0x73625140]
    %1692 = vst [vmem:[#allocation1] ss:$4 sm:$0xff] %v29
    %1693 = vst [vmem:[%s1682] ss:$4 sm:$0xff] %v30
    %v1694 = vld.sshfl [vmem:[#allocation1] sm:$0xff pattern:$0x73625140]
    %v1695 = vld.sshfl [vmem:[#allocation1 + $0x8] sm:$0xff pattern:$0x73625140]
    %v1696 = vld.sshfl [vmem:[#allocation1 + $0x10] sm:$0xff pattern:$0x73625140]
    %v1697 = vld.sshfl [vmem:[#allocation1 + $0x18] sm:$0xff pattern:$0x73625140]
    %v1698 = vld.sshfl [vmem:[#allocation1 + $0x20] sm:$0xff pattern:$0x73625140]
    %v1699 = vld.sshfl [vmem:[#allocation1 + $0x28] sm:$0xff pattern:$0x73625140]
    %v1700 = vld.sshfl [vmem:[#allocation1 + $0x30] sm:$0xff pattern:$0x73625140]
    %v1701 = vld.sshfl [vmem:[#allocation1 + $0x38] sm:$0xff pattern:$0x73625140]
    %1702 = vst [vmem:[#allocation1] ss:$4 sm:$0xff] %v31
    %1703 = vst [vmem:[%s1682] ss:$4 sm:$0xff] %v32
    %v1704 = vld.sshfl [vmem:[#allocation1] sm:$0xff pattern:$0x73625140]
    %v1705 = vld.sshfl [vmem:[#allocation1 + $0x8] sm:$0xff pattern:$0x73625140]
    %v1706 = vld.sshfl [vmem:[#allocation1 + $0x10] sm:$0xff pattern:$0x73625140]
    %v1707 = vld.sshfl [vmem:[#allocation1 + $0x18] sm:$0xff pattern:$0x73625140]
    %v1708 = vld.sshfl [vmem:[#allocation1 + $0x20] sm:$0xff pattern:$0x73625140]
    %v1709 = vld.sshfl [vmem:[#allocation1 + $0x28] sm:$0xff pattern:$0x73625140]
    %v1710 = vld.sshfl [vmem:[#allocation1 + $0x30] sm:$0xff pattern:$0x73625140]
    %v1711 = vld.sshfl [vmem:[#allocation1 + $0x38] sm:$0xff pattern:$0x73625140]
    %1712 = vst [vmem:[#allocation1] ss:$4 sm:$0xff] %v33
    %1713 = vst [vmem:[%s1682] ss:$4 sm:$0xff] %v34
    %v1714 = vld.sshfl [vmem:[#allocation1] sm:$0xff pattern:$0x73625140]
    %v1715 = vld.sshfl [vmem:[#allocation1 + $0x8] sm:$0xff pattern:$0x73625140]
    %v1716 = vld.sshfl [vmem:[#allocation1 + $0x10] sm:$0xff pattern:$0x73625140]
    %v1717 = vld.sshfl [vmem:[#allocation1 + $0x18] sm:$0xff pattern:$0x73625140]
    %v1718 = vld.sshfl [vmem:[#allocation1 + $0x20] sm:$0xff pattern:$0x73625140]
    %v1719 = vld.sshfl [vmem:[#allocation1 + $0x28] sm:$0xff pattern:$0x73625140]
    %v1720 = vld.sshfl [vmem:[#allocation1 + $0x30] sm:$0xff pattern:$0x73625140]
    %v1721 = vld.sshfl [vmem:[#allocation1 + $0x38] sm:$0xff pattern:$0x73625140]
    %1722 = vst [vmem:[#allocation1] ss:$4 sm:$0xff] %v35
    %1723 = vst [vmem:[%s1682] ss:$4 sm:$0xff] %v36
    %v1724 = vld.sshfl [vmem:[#allocation1] sm:$0xff pattern:$0x73625140]
    %v1725 = vld.sshfl [vmem:[#allocation1 + $0x8] sm:$0xff pattern:$0x73625140]
    %v1726 = vld.sshfl [vmem:[#allocation1 + $0x10] sm:$0xff pattern:$0x73625140]
    %v1727 = vld.sshfl [vmem:[#allocation1 + $0x18] sm:$0xff pattern:$0x73625140]
    %v1728 = vld.sshfl [vmem:[#allocation1 + $0x20] sm:$0xff pattern:$0x73625140]
    %v1729 = vld.sshfl [vmem:[#allocation1 + $0x28] sm:$0xff pattern:$0x73625140]
    %v1730 = vld.sshfl [vmem:[#allocation1 + $0x30] sm:$0xff pattern:$0x73625140]
    %v1731 = vld.sshfl [vmem:[#allocation1 + $0x38] sm:$0xff pattern:$0x73625140]
    %1732 = vst [vmem:[#allocation1] ss:$4 sm:$0xff] %v37
    %1733 = vst [vmem:[%s1682] ss:$4 sm:$0xff] %v38
    %v1734 = vld.sshfl [vmem:[#allocation1] sm:$0xff pattern:$0x73625140]
    %v1735 = vld.sshfl [vmem:[#allocation1 + $0x8] sm:$0xff pattern:$0x73625140]
    %v1736 = vld.sshfl [vmem:[#allocation1 + $0x10] sm:$0xff pattern:$0x73625140]
    %v1737 = vld.sshfl [vmem:[#allocation1 + $0x18] sm:$0xff pattern:$0x73625140]
    %v1738 = vld.sshfl [vmem:[#allocation1 + $0x20] sm:$0xff pattern:$0x73625140]
    %v1739 = vld.sshfl [vmem:[#allocation1 + $0x28] sm:$0xff pattern:$0x73625140]
    %v1740 = vld.sshfl [vmem:[#allocation1 + $0x30] sm:$0xff pattern:$0x73625140]
    %v1741 = vld.sshfl [vmem:[#allocation1 + $0x38] sm:$0xff pattern:$0x73625140]
    %1742 = vst [vmem:[#allocation1] ss:$4 sm:$0xff] %v39
    %1743 = vst [vmem:[%s1682] ss:$4 sm:$0xff] %v40
    %v1744 = vld.sshfl [vmem:[#allocation1] sm:$0xff pattern:$0x73625140]
    %v1745 = vld.sshfl [vmem:[#allocation1 + $0x8] sm:$0xff pattern:$0x73625140]
    %v1746 = vld.sshfl [vmem:[#allocation1 + $0x10] sm:$0xff pattern:$0x73625140]
    %v1747 = vld.sshfl [vmem:[#allocation1 + $0x18] sm:$0xff pattern:$0x73625140]
    %v1748 = vld.sshfl [vmem:[#allocation1 + $0x20] sm:$0xff pattern:$0x73625140]
    %v1749 = vld.sshfl [vmem:[#allocation1 + $0x28] sm:$0xff pattern:$0x73625140]
    %v1750 = vld.sshfl [vmem:[#allocation1 + $0x30] sm:$0xff pattern:$0x73625140]
    %v1751 = vld.sshfl [vmem:[#allocation1 + $0x38] sm:$0xff pattern:$0x73625140]
    %1752 = vst [vmem:[#allocation1] ss:$4 sm:$0xff] %v41
    %1753 = vst [vmem:[%s1682] ss:$4 sm:$0xff] %v42
    %v1754 = vld.sshfl [vmem:[#allocation1] sm:$0xff pattern:$0x73625140]
    %v1755 = vld.sshfl [vmem:[#allocation1 + $0x8] sm:$0xff pattern:$0x73625140]
    %v1756 = vld.sshfl [vmem:[#allocation1 + $0x10] sm:$0xff pattern:$0x73625140]
    %v1757 = vld.sshfl [vmem:[#allocation1 + $0x18] sm:$0xff pattern:$0x73625140]
    %v1758 = vld.sshfl [vmem:[#allocation1 + $0x20] sm:$0xff pattern:$0x73625140]
    %v1759 = vld.sshfl [vmem:[#allocation1 + $0x28] sm:$0xff pattern:$0x73625140]
    %v1760 = vld.sshfl [vmem:[#allocation1 + $0x30] sm:$0xff pattern:$0x73625140]
    %v1761 = vld.sshfl [vmem:[#allocation1 + $0x38] sm:$0xff pattern:$0x73625140]
    %1762 = vst [vmem:[#allocation1] ss:$4 sm:$0xff] %v43
    %1763 = vst [vmem:[%s1682] ss:$4 sm:$0xff] %v44
    %v1764 = vld.sshfl [vmem:[#allocation1] sm:$0xff pattern:$0x73625140]
    %v1765 = vld.sshfl [vmem:[#allocation1 + $0x8] sm:$0xff pattern:$0x73625140]
    %v1766 = vld.sshfl [vmem:[#allocation1 + $0x10] sm:$0xff pattern:$0x73625140]
    %v1767 = vld.sshfl [vmem:[#allocation1 + $0x18] sm:$0xff pattern:$0x73625140]
    %v1768 = vld.sshfl [vmem:[#allocation1 + $0x20] sm:$0xff pattern:$0x73625140]
    %v1769 = vld.sshfl [vmem:[#allocation1 + $0x28] sm:$0xff pattern:$0x73625140]
    %v1770 = vld.sshfl [vmem:[#allocation1 + $0x30] sm:$0xff pattern:$0x73625140]
    %v1771 = vld.sshfl [vmem:[#allocation1 + $0x38] sm:$0xff pattern:$0x73625140]
    %1772 = vst [vmem:[#allocation1] ss:$4 sm:$0xff] %v45
    %1773 = vst [vmem:[%s1682] ss:$4 sm:$0xff] %v46
    %v1774 = vld.sshfl [vmem:[#allocation1] sm:$0xff pattern:$0x73625140]
    %v1775 = vld.sshfl [vmem:[#allocation1 + $0x8] sm:$0xff pattern:$0x73625140]
    %v1776 = vld.sshfl [vmem:[#allocation1 + $0x10] sm:$0xff pattern:$0x73625140]
    %v1777 = vld.sshfl [vmem:[#allocation1 + $0x18] sm:$0xff pattern:$0x73625140]
    %v1778 = vld.sshfl [vmem:[#allocation1 + $0x20] sm:$0xff pattern:$0x73625140]
    %v1779 = vld.sshfl [vmem:[#allocation1 + $0x28] sm:$0xff pattern:$0x73625140]
    %v1780 = vld.sshfl [vmem:[#allocation1 + $0x30] sm:$0xff pattern:$0x73625140]
    %v1781 = vld.sshfl [vmem:[#allocation1 + $0x38] sm:$0xff pattern:$0x73625140]
    %1782 = vst [vmem:[#allocation1] ss:$4 sm:$0xff] %v47
    %1783 = vst [vmem:[%s1682] ss:$4 sm:$0xff] %v48
    %v1784 = vld.sshfl [vmem:[#allocation1] sm:$0xff pattern:$0x73625140]
    %v1785 = vld.sshfl [vmem:[#allocation1 + $0x8] sm:$0xff pattern:$0x73625140]
    %v1786 = vld.sshfl [vmem:[#allocation1 + $0x10] sm:$0xff pattern:$0x73625140]
    %v1787 = vld.sshfl [vmem:[#allocation1 + $0x18] sm:$0xff pattern:$0x73625140]
    %v1788 = vld.sshfl [vmem:[#allocation1 + $0x20] sm:$0xff pattern:$0x73625140]
    %v1789 = vld.sshfl [vmem:[#allocation1 + $0x28] sm:$0xff pattern:$0x73625140]
    %v1790 = vld.sshfl [vmem:[#allocation1 + $0x30] sm:$0xff pattern:$0x73625140]
    %v1791 = vld.sshfl [vmem:[#allocation1 + $0x38] sm:$0xff pattern:$0x73625140]
    %1792 = vst [vmem:[#allocation1] ss:$4 sm:$0xff] %v49
    %1793 = vst [vmem:[%s1682] ss:$4 sm:$0xff] %v50
    %v1794 = vld.sshfl [vmem:[#allocation1] sm:$0xff pattern:$0x73625140]
    %v1795 = vld.sshfl [vmem:[#allocation1 + $0x8] sm:$0xff pattern:$0x73625140]
    %v1796 = vld.sshfl [vmem:[#allocation1 + $0x10] sm:$0xff pattern:$0x73625140]
    %v1797 = vld.sshfl [vmem:[#allocation1 + $0x18] sm:$0xff pattern:$0x73625140]
    %v1798 = vld.sshfl [vmem:[#allocation1 + $0x20] sm:$0xff pattern:$0x73625140]
    %v1799 = vld.sshfl [vmem:[#allocation1 + $0x28] sm:$0xff pattern:$0x73625140]
    %v1800 = vld.sshfl [vmem:[#allocation1 + $0x30] sm:$0xff pattern:$0x73625140]
    %v1801 = vld.sshfl [vmem:[#allocation1 + $0x38] sm:$0xff pattern:$0x73625140]
    %1802 = vst [vmem:[#allocation1] ss:$4 sm:$0xff] %v51
    %v1803 = vld.sshfl [vmem:[#allocation1] sm:$0xff pattern:$0x73625140]
    %v1804 = vld.sshfl [vmem:[#allocation1 + $0x8] sm:$0xff pattern:$0x73625140]
    %v1805 = vld.sshfl [vmem:[#allocation1 + $0x10] sm:$0xff pattern:$0x73625140]
    %v1806 = vld.sshfl [vmem:[#allocation1 + $0x18] sm:$0xff pattern:$0x73625140]
    %1907 = vmatpush.msra.mxu0 %v67
    %1908 = vmatpush.msra.mxu0 %v66
    %1909 = vmatpush.msra.mxu0 %v65
    %1910 = vmatpush.msra.mxu0 %v64
    %1911 = vmatpush.msra.mxu0 %v63
    %1912 = vmatpush.msra.mxu0 %v62
    %1913 = vmatpush.msra.mxu0 %v61
    %1914 = vmatpush.msra.mxu0 %v60
    %1915 = vmatpush.msra.mxu0 %v59
    %1916 = vmatpush.msra.mxu0 %v58
    %1917 = vmatpush.msra.mxu0 %v57
    %1918 = vmatpush.msra.mxu0 %v56
    %1919 = vmatpush.msra.mxu0 %v55
    %1920 = vmatpush.msra.mxu0 %v54
    %1921 = vmatpush.msra.mxu0 %v53
    %1922 = vmatpush.msra.mxu0 %v52
    %1923 = vmatmul.f32.gmra.mxu0 %v1684
    %v1924 = vpop.f32.mrf.mxu0
    %v1925 = vadd.f32 %v1654, %v1924
    %1926 = vdwg.mxu0
    %1927 = vmatpush.msra.mxu0 %v83
    %1928 = vmatpush.msra.mxu0 %v82
    %1929 = vmatpush.msra.mxu0 %v81
    %1930 = vmatpush.msra.mxu0 %v80
    %1931 = vmatpush.msra.mxu0 %v79
    %1932 = vmatpush.msra.mxu0 %v78
    %1933 = vmatpush.msra.mxu0 %v77
    %1934 = vmatpush.msra.mxu0 %v76
    %1935 = vmatpush.msra.mxu0 %v75
    %1936 = vmatpush.msra.mxu0 %v74
    %1937 = vmatpush.msra.mxu0 %v73
    %1938 = vmatpush.msra.mxu0 %v72
    %1939 = vmatpush.msra.mxu0 %v71
    %1940 = vmatpush.msra.mxu0 %v70
    %1941 = vmatpush.msra.mxu0 %v69
    %1942 = vmatpush.msra.mxu0 %v68
    %1943 = vmatmul.f32.gmra.mxu0 %v1685
    %v1944 = vpop.f32.mrf.mxu0
    %v1945 = vadd.f32 %v1925, %v1944
    %1946 = vdwg.mxu0
    %1947 = vmatpush.msra.mxu0 %v99
    %1948 = vmatpush.msra.mxu0 %v98
    %1949 = vmatpush.msra.mxu0 %v97
    %1950 = vmatpush.msra.mxu0 %v96
    %1951 = vmatpush.msra.mxu0 %v95
    %1952 = vmatpush.msra.mxu0 %v94
    %1953 = vmatpush.msra.mxu0 %v93
    %1954 = vmatpush.msra.mxu0 %v92
    %1955 = vmatpush.msra.mxu0 %v91
    %1956 = vmatpush.msra.mxu0 %v90
    %1957 = vmatpush.msra.mxu0 %v89
    %1958 = vmatpush.msra.mxu0 %v88
    %1959 = vmatpush.msra.mxu0 %v87
    %1960 = vmatpush.msra.mxu0 %v86
    %1961 = vmatpush.msra.mxu0 %v85
    %1962 = vmatpush.msra.mxu0 %v84
    %1963 = vmatmul.f32.gmra.mxu0 %v1686
    %v1964 = vpop.f32.mrf.mxu0
    %v1965 = vadd.f32 %v1945, %v1964
    %1966 = vdwg.mxu0
    %1967 = vmatpush.msra.mxu0 %v115
    %1968 = vmatpush.msra.mxu0 %v114
    %1969 = vmatpush.msra.mxu0 %v113
    %1970 = vmatpush.msra.mxu0 %v112
    %1971 = vmatpush.msra.mxu0 %v111
    %1972 = vmatpush.msra.mxu0 %v110
    %1973 = vmatpush.msra.mxu0 %v109
    %1974 = vmatpush.msra.mxu0 %v108
    %1975 = vmatpush.msra.mxu0 %v107
    %1976 = vmatpush.msra.mxu0 %v106
    %1977 = vmatpush.msra.mxu0 %v105
    %1978 = vmatpush.msra.mxu0 %v104
    %1979 = vmatpush.msra.mxu0 %v103
    %1980 = vmatpush.msra.mxu0 %v102
    %1981 = vmatpush.msra.mxu0 %v101
    %1982 = vmatpush.msra.mxu0 %v100
    %1983 = vmatmul.f32.gmra.mxu0 %v1687
    %v1984 = vpop.f32.mrf.mxu0
    %v1985 = vadd.f32 %v1965, %v1984
    %1986 = vdwg.mxu0
    %1987 = vmatpush.msra.mxu0 %v131
    %1988 = vmatpush.msra.mxu0 %v130
    %1989 = vmatpush.msra.mxu0 %v129
    %1990 = vmatpush.msra.mxu0 %v128
    %1991 = vmatpush.msra.mxu0 %v127
    %1992 = vmatpush.msra.mxu0 %v126
    %1993 = vmatpush.msra.mxu0 %v125
    %1994 = vmatpush.msra.mxu0 %v124
    %1995 = vmatpush.msra.mxu0 %v123
    %1996 = vmatpush.msra.mxu0 %v122
    %1997 = vmatpush.msra.mxu0 %v121
    %1998 = vmatpush.msra.mxu0 %v120
    %1999 = vmatpush.msra.mxu0 %v119
    %2000 = vmatpush.msra.mxu0 %v118
    %2001 = vmatpush.msra.mxu0 %v117
    %2002 = vmatpush.msra.mxu0 %v116
    %2003 = vmatmul.f32.gmra.mxu0 %v1688
    %v2004 = vpop.f32.mrf.mxu0
    %v2005 = vadd.f32 %v1985, %v2004
    %2006 = vdwg.mxu0
    %2007 = vmatpush.msra.mxu0 %v147
    %2008 = vmatpush.msra.mxu0 %v146
    %2009 = vmatpush.msra.mxu0 %v145
    %2010 = vmatpush.msra.mxu0 %v144
    %2011 = vmatpush.msra.mxu0 %v143
    %2012 = vmatpush.msra.mxu0 %v142
    %2013 = vmatpush.msra.mxu0 %v141
    %2014 = vmatpush.msra.mxu0 %v140
    %2015 = vmatpush.msra.mxu0 %v139
    %2016 = vmatpush.msra.mxu0 %v138
    %2017 = vmatpush.msra.mxu0 %v137
    %2018 = vmatpush.msra.mxu0 %v136
    %2019 = vmatpush.msra.mxu0 %v135
    %2020 = vmatpush.msra.mxu0 %v134
    %2021 = vmatpush.msra.mxu0 %v133
    %2022 = vmatpush.msra.mxu0 %v132
    %2023 = vmatmul.f32.gmra.mxu0 %v1689
    %v2024 = vpop.f32.mrf.mxu0
    %v2025 = vadd.f32 %v2005, %v2024
    %2026 = vdwg.mxu0
    %2027 = vmatpush.msra.mxu0 %v163
    %2028 = vmatpush.msra.mxu0 %v162
    %2029 = vmatpush.msra.mxu0 %v161
    %2030 = vmatpush.msra.mxu0 %v160
    %2031 = vmatpush.msra.mxu0 %v159
    %2032 = vmatpush.msra.mxu0 %v158
    %2033 = vmatpush.msra.mxu0 %v157
    %2034 = vmatpush.msra.mxu0 %v156
    %2035 = vmatpush.msra.mxu0 %v155
    %2036 = vmatpush.msra.mxu0 %v154
    %2037 = vmatpush.msra.mxu0 %v153
    %2038 = vmatpush.msra.mxu0 %v152
    %2039 = vmatpush.msra.mxu0 %v151
    %2040 = vmatpush.msra.mxu0 %v150
    %2041 = vmatpush.msra.mxu0 %v149
    %2042 = vmatpush.msra.mxu0 %v148
    %2043 = vmatmul.f32.gmra.mxu0 %v1690
    %v2044 = vpop.f32.mrf.mxu0
    %v2045 = vadd.f32 %v2025, %v2044
    %2046 = vdwg.mxu0
    %2047 = vmatpush.msra.mxu0 %v179
    %2048 = vmatpush.msra.mxu0 %v178
    %2049 = vmatpush.msra.mxu0 %v177
    %2050 = vmatpush.msra.mxu0 %v176
    %2051 = vmatpush.msra.mxu0 %v175
    %2052 = vmatpush.msra.mxu0 %v174
    %2053 = vmatpush.msra.mxu0 %v173
    %2054 = vmatpush.msra.mxu0 %v172
    %2055 = vmatpush.msra.mxu0 %v171
    %2056 = vmatpush.msra.mxu0 %v170
    %2057 = vmatpush.msra.mxu0 %v169
    %2058 = vmatpush.msra.mxu0 %v168
    %2059 = vmatpush.msra.mxu0 %v167
    %2060 = vmatpush.msra.mxu0 %v166
    %2061 = vmatpush.msra.mxu0 %v165
    %2062 = vmatpush.msra.mxu0 %v164
    %2063 = vmatmul.f32.gmra.mxu0 %v1691
    %v2064 = vpop.f32.mrf.mxu0
    %v2065 = vadd.f32 %v2045, %v2064
    %2066 = vdwg.mxu0
    %2067 = vmatpush.msra.mxu0 %v195
    %2068 = vmatpush.msra.mxu0 %v194
    %2069 = vmatpush.msra.mxu0 %v193
    %2070 = vmatpush.msra.mxu0 %v192
    %2071 = vmatpush.msra.mxu0 %v191
    %2072 = vmatpush.msra.mxu0 %v190
    %2073 = vmatpush.msra.mxu0 %v189
    %2074 = vmatpush.msra.mxu0 %v188
    %2075 = vmatpush.msra.mxu0 %v187
    %2076 = vmatpush.msra.mxu0 %v186
    %2077 = vmatpush.msra.mxu0 %v185
    %2078 = vmatpush.msra.mxu0 %v184
    %2079 = vmatpush.msra.mxu0 %v183
    %2080 = vmatpush.msra.mxu0 %v182
    %2081 = vmatpush.msra.mxu0 %v181
    %2082 = vmatpush.msra.mxu0 %v180
    %2083 = vmatmul.f32.gmra.mxu0 %v1694
    %v2084 = vpop.f32.mrf.mxu0
    %v2085 = vadd.f32 %v2065, %v2084
    %2086 = vdwg.mxu0
    %2087 = vmatpush.msra.mxu0 %v211
    %2088 = vmatpush.msra.mxu0 %v210
    %2089 = vmatpush.msra.mxu0 %v209
    %2090 = vmatpush.msra.mxu0 %v208
    %2091 = vmatpush.msra.mxu0 %v207
    %2092 = vmatpush.msra.mxu0 %v206
    %2093 = vmatpush.msra.mxu0 %v205
    %2094 = vmatpush.msra.mxu0 %v204
    %2095 = vmatpush.msra.mxu0 %v203
    %2096 = vmatpush.msra.mxu0 %v202
    %2097 = vmatpush.msra.mxu0 %v201
    %2098 = vmatpush.msra.mxu0 %v200
    %2099 = vmatpush.msra.mxu0 %v199
    %2100 = vmatpush.msra.mxu0 %v198
    %2101 = vmatpush.msra.mxu0 %v197
    %2102 = vmatpush.msra.mxu0 %v196
    %2103 = vmatmul.f32.gmra.mxu0 %v1695
    %v2104 = vpop.f32.mrf.mxu0
    %v2105 = vadd.f32 %v2085, %v2104
    %2106 = vdwg.mxu0
    %2107 = vmatpush.msra.mxu0 %v227
    %2108 = vmatpush.msra.mxu0 %v226
    %2109 = vmatpush.msra.mxu0 %v225
    %2110 = vmatpush.msra.mxu0 %v224
    %2111 = vmatpush.msra.mxu0 %v223
    %2112 = vmatpush.msra.mxu0 %v222
    %2113 = vmatpush.msra.mxu0 %v221
    %2114 = vmatpush.msra.mxu0 %v220
    %2115 = vmatpush.msra.mxu0 %v219
    %2116 = vmatpush.msra.mxu0 %v218
    %2117 = vmatpush.msra.mxu0 %v217
    %2118 = vmatpush.msra.mxu0 %v216
    %2119 = vmatpush.msra.mxu0 %v215
    %2120 = vmatpush.msra.mxu0 %v214
    %2121 = vmatpush.msra.mxu0 %v213
    %2122 = vmatpush.msra.mxu0 %v212
    %2123 = vmatmul.f32.gmra.mxu0 %v1696
    %v2124 = vpop.f32.mrf.mxu0
    %v2125 = vadd.f32 %v2105, %v2124
    %2126 = vdwg.mxu0
    %2127 = vmatpush.msra.mxu0 %v243
    %2128 = vmatpush.msra.mxu0 %v242
    %2129 = vmatpush.msra.mxu0 %v241
    %2130 = vmatpush.msra.mxu0 %v240
    %2131 = vmatpush.msra.mxu0 %v239
    %2132 = vmatpush.msra.mxu0 %v238
    %2133 = vmatpush.msra.mxu0 %v237
    %2134 = vmatpush.msra.mxu0 %v236
    %2135 = vmatpush.msra.mxu0 %v235
    %2136 = vmatpush.msra.mxu0 %v234
    %2137 = vmatpush.msra.mxu0 %v233
    %2138 = vmatpush.msra.mxu0 %v232
    %2139 = vmatpush.msra.mxu0 %v231
    %2140 = vmatpush.msra.mxu0 %v230
    %2141 = vmatpush.msra.mxu0 %v229
    %2142 = vmatpush.msra.mxu0 %v228
    %2143 = vmatmul.f32.gmra.mxu0 %v1697
    %v2144 = vpop.f32.mrf.mxu0
    %v2145 = vadd.f32 %v2125, %v2144
    %2146 = vdwg.mxu0
    %2147 = vmatpush.msra.mxu0 %v259
    %2148 = vmatpush.msra.mxu0 %v258
    %2149 = vmatpush.msra.mxu0 %v257
    %2150 = vmatpush.msra.mxu0 %v256
    %2151 = vmatpush.msra.mxu0 %v255
    %2152 = vmatpush.msra.mxu0 %v254
    %2153 = vmatpush.msra.mxu0 %v253
    %2154 = vmatpush.msra.mxu0 %v252
    %2155 = vmatpush.msra.mxu0 %v251
    %2156 = vmatpush.msra.mxu0 %v250
    %2157 = vmatpush.msra.mxu0 %v249
    %2158 = vmatpush.msra.mxu0 %v248
    %2159 = vmatpush.msra.mxu0 %v247
    %2160 = vmatpush.msra.mxu0 %v246
    %2161 = vmatpush.msra.mxu0 %v245
    %2162 = vmatpush.msra.mxu0 %v244
    %2163 = vmatmul.f32.gmra.mxu0 %v1698
    %v2164 = vpop.f32.mrf.mxu0
    %v2165 = vadd.f32 %v2145, %v2164
    %2166 = vdwg.mxu0
    %2167 = vmatpush.msra.mxu0 %v275
    %2168 = vmatpush.msra.mxu0 %v274
    %2169 = vmatpush.msra.mxu0 %v273
    %2170 = vmatpush.msra.mxu0 %v272
    %2171 = vmatpush.msra.mxu0 %v271
    %2172 = vmatpush.msra.mxu0 %v270
    %2173 = vmatpush.msra.mxu0 %v269
    %2174 = vmatpush.msra.mxu0 %v268
    %2175 = vmatpush.msra.mxu0 %v267
    %2176 = vmatpush.msra.mxu0 %v266
    %2177 = vmatpush.msra.mxu0 %v265
    %2178 = vmatpush.msra.mxu0 %v264
    %2179 = vmatpush.msra.mxu0 %v263
    %2180 = vmatpush.msra.mxu0 %v262
    %2181 = vmatpush.msra.mxu0 %v261
    %2182 = vmatpush.msra.mxu0 %v260
    %2183 = vmatmul.f32.gmra.mxu0 %v1699
    %v2184 = vpop.f32.mrf.mxu0
    %v2185 = vadd.f32 %v2165, %v2184
    %2186 = vdwg.mxu0
    %2187 = vmatpush.msra.mxu0 %v291
    %2188 = vmatpush.msra.mxu0 %v290
    %2189 = vmatpush.msra.mxu0 %v289
    %2190 = vmatpush.msra.mxu0 %v288
    %2191 = vmatpush.msra.mxu0 %v287
    %2192 = vmatpush.msra.mxu0 %v286
    %2193 = vmatpush.msra.mxu0 %v285
    %2194 = vmatpush.msra.mxu0 %v284
    %2195 = vmatpush.msra.mxu0 %v283
    %2196 = vmatpush.msra.mxu0 %v282
    %2197 = vmatpush.msra.mxu0 %v281
    %2198 = vmatpush.msra.mxu0 %v280
    %2199 = vmatpush.msra.mxu0 %v279
    %2200 = vmatpush.msra.mxu0 %v278
    %2201 = vmatpush.msra.mxu0 %v277
    %2202 = vmatpush.msra.mxu0 %v276
    %2203 = vmatmul.f32.gmra.mxu0 %v1700
    %v2204 = vpop.f32.mrf.mxu0
    %v2205 = vadd.f32 %v2185, %v2204
    %2206 = vdwg.mxu0
    %2207 = vmatpush.msra.mxu0 %v307
    %2208 = vmatpush.msra.mxu0 %v306
    %2209 = vmatpush.msra.mxu0 %v305
    %2210 = vmatpush.msra.mxu0 %v304
    %2211 = vmatpush.msra.mxu0 %v303
    %2212 = vmatpush.msra.mxu0 %v302
    %2213 = vmatpush.msra.mxu0 %v301
    %2214 = vmatpush.msra.mxu0 %v300
    %2215 = vmatpush.msra.mxu0 %v299
    %2216 = vmatpush.msra.mxu0 %v298
    %2217 = vmatpush.msra.mxu0 %v297
    %2218 = vmatpush.msra.mxu0 %v296
    %2219 = vmatpush.msra.mxu0 %v295
    %2220 = vmatpush.msra.mxu0 %v294
    %2221 = vmatpush.msra.mxu0 %v293
    %2222 = vmatpush.msra.mxu0 %v292
    %2223 = vmatmul.f32.gmra.mxu0 %v1701
    %v2224 = vpop.f32.mrf.mxu0
    %v2225 = vadd.f32 %v2205, %v2224
    %2226 = vdwg.mxu0
    %2227 = vmatpush.msra.mxu0 %v323
    %2228 = vmatpush.msra.mxu0 %v322
    %2229 = vmatpush.msra.mxu0 %v321
    %2230 = vmatpush.msra.mxu0 %v320
    %2231 = vmatpush.msra.mxu0 %v319
    %2232 = vmatpush.msra.mxu0 %v318
    %2233 = vmatpush.msra.mxu0 %v317
    %2234 = vmatpush.msra.mxu0 %v316
    %2235 = vmatpush.msra.mxu0 %v315
    %2236 = vmatpush.msra.mxu0 %v314
    %2237 = vmatpush.msra.mxu0 %v313
    %2238 = vmatpush.msra.mxu0 %v312
    %2239 = vmatpush.msra.mxu0 %v311
    %2240 = vmatpush.msra.mxu0 %v310
    %2241 = vmatpush.msra.mxu0 %v309
    %2242 = vmatpush.msra.mxu0 %v308
    %2243 = vmatmul.f32.gmra.mxu0 %v1704
    %v2244 = vpop.f32.mrf.mxu0
    %v2245 = vadd.f32 %v2225, %v2244
    %2246 = vdwg.mxu0
    %2247 = vmatpush.msra.mxu0 %v339
    %2248 = vmatpush.msra.mxu0 %v338
    %2249 = vmatpush.msra.mxu0 %v337
    %2250 = vmatpush.msra.mxu0 %v336
    %2251 = vmatpush.msra.mxu0 %v335
    %2252 = vmatpush.msra.mxu0 %v334
    %2253 = vmatpush.msra.mxu0 %v333
    %2254 = vmatpush.msra.mxu0 %v332
    %2255 = vmatpush.msra.mxu0 %v331
    %2256 = vmatpush.msra.mxu0 %v330
    %2257 = vmatpush.msra.mxu0 %v329
    %2258 = vmatpush.msra.mxu0 %v328
    %2259 = vmatpush.msra.mxu0 %v327
    %2260 = vmatpush.msra.mxu0 %v326
    %2261 = vmatpush.msra.mxu0 %v325
    %2262 = vmatpush.msra.mxu0 %v324
    %2263 = vmatmul.f32.gmra.mxu0 %v1705
    %v2264 = vpop.f32.mrf.mxu0
    %v2265 = vadd.f32 %v2245, %v2264
    %2266 = vdwg.mxu0
    %2267 = vmatpush.msra.mxu0 %v355
    %2268 = vmatpush.msra.mxu0 %v354
    %2269 = vmatpush.msra.mxu0 %v353
    %2270 = vmatpush.msra.mxu0 %v352
    %2271 = vmatpush.msra.mxu0 %v351
    %2272 = vmatpush.msra.mxu0 %v350
    %2273 = vmatpush.msra.mxu0 %v349
    %2274 = vmatpush.msra.mxu0 %v348
    %2275 = vmatpush.msra.mxu0 %v347
    %2276 = vmatpush.msra.mxu0 %v346
    %2277 = vmatpush.msra.mxu0 %v345
    %2278 = vmatpush.msra.mxu0 %v344
    %2279 = vmatpush.msra.mxu0 %v343
    %2280 = vmatpush.msra.mxu0 %v342
    %2281 = vmatpush.msra.mxu0 %v341
    %2282 = vmatpush.msra.mxu0 %v340
    %2283 = vmatmul.f32.gmra.mxu0 %v1706
    %v2284 = vpop.f32.mrf.mxu0
    %v2285 = vadd.f32 %v2265, %v2284
    %2286 = vdwg.mxu0
    %2287 = vmatpush.msra.mxu0 %v371
    %2288 = vmatpush.msra.mxu0 %v370
    %2289 = vmatpush.msra.mxu0 %v369
    %2290 = vmatpush.msra.mxu0 %v368
    %2291 = vmatpush.msra.mxu0 %v367
    %2292 = vmatpush.msra.mxu0 %v366
    %2293 = vmatpush.msra.mxu0 %v365
    %2294 = vmatpush.msra.mxu0 %v364
    %2295 = vmatpush.msra.mxu0 %v363
    %2296 = vmatpush.msra.mxu0 %v362
    %2297 = vmatpush.msra.mxu0 %v361
    %2298 = vmatpush.msra.mxu0 %v360
    %2299 = vmatpush.msra.mxu0 %v359
    %2300 = vmatpush.msra.mxu0 %v358
    %2301 = vmatpush.msra.mxu0 %v357
    %2302 = vmatpush.msra.mxu0 %v356
    %2303 = vmatmul.f32.gmra.mxu0 %v1707
    %v2304 = vpop.f32.mrf.mxu0
    %v2305 = vadd.f32 %v2285, %v2304
    %2306 = vdwg.mxu0
    %2307 = vmatpush.msra.mxu0 %v387
    %2308 = vmatpush.msra.mxu0 %v386
    %2309 = vmatpush.msra.mxu0 %v385
    %2310 = vmatpush.msra.mxu0 %v384
    %2311 = vmatpush.msra.mxu0 %v383
    %2312 = vmatpush.msra.mxu0 %v382
    %2313 = vmatpush.msra.mxu0 %v381
    %2314 = vmatpush.msra.mxu0 %v380
    %2315 = vmatpush.msra.mxu0 %v379
    %2316 = vmatpush.msra.mxu0 %v378
    %2317 = vmatpush.msra.mxu0 %v377
    %2318 = vmatpush.msra.mxu0 %v376
    %2319 = vmatpush.msra.mxu0 %v375
    %2320 = vmatpush.msra.mxu0 %v374
    %2321 = vmatpush.msra.mxu0 %v373
    %2322 = vmatpush.msra.mxu0 %v372
    %2323 = vmatmul.f32.gmra.mxu0 %v1708
    %v2324 = vpop.f32.mrf.mxu0
    %v2325 = vadd.f32 %v2305, %v2324
    %2326 = vdwg.mxu0
    %2327 = vmatpush.msra.mxu0 %v403
    %2328 = vmatpush.msra.mxu0 %v402
    %2329 = vmatpush.msra.mxu0 %v401
    %2330 = vmatpush.msra.mxu0 %v400
    %2331 = vmatpush.msra.mxu0 %v399
    %2332 = vmatpush.msra.mxu0 %v398
    %2333 = vmatpush.msra.mxu0 %v397
    %2334 = vmatpush.msra.mxu0 %v396
    %2335 = vmatpush.msra.mxu0 %v395
    %2336 = vmatpush.msra.mxu0 %v394
    %2337 = vmatpush.msra.mxu0 %v393
    %2338 = vmatpush.msra.mxu0 %v392
    %2339 = vmatpush.msra.mxu0 %v391
    %2340 = vmatpush.msra.mxu0 %v390
    %2341 = vmatpush.msra.mxu0 %v389
    %2342 = vmatpush.msra.mxu0 %v388
    %2343 = vmatmul.f32.gmra.mxu0 %v1709
    %v2344 = vpop.f32.mrf.mxu0
    %v2345 = vadd.f32 %v2325, %v2344
    %2346 = vdwg.mxu0
    %2347 = vmatpush.msra.mxu0 %v419
    %2348 = vmatpush.msra.mxu0 %v418
    %2349 = vmatpush.msra.mxu0 %v417
    %2350 = vmatpush.msra.mxu0 %v416
    %2351 = vmatpush.msra.mxu0 %v415
    %2352 = vmatpush.msra.mxu0 %v414
    %2353 = vmatpush.msra.mxu0 %v413
    %2354 = vmatpush.msra.mxu0 %v412
    %2355 = vmatpush.msra.mxu0 %v411
    %2356 = vmatpush.msra.mxu0 %v410
    %2357 = vmatpush.msra.mxu0 %v409
    %2358 = vmatpush.msra.mxu0 %v408
    %2359 = vmatpush.msra.mxu0 %v407
    %2360 = vmatpush.msra.mxu0 %v406
    %2361 = vmatpush.msra.mxu0 %v405
    %2362 = vmatpush.msra.mxu0 %v404
    %2363 = vmatmul.f32.gmra.mxu0 %v1710
    %v2364 = vpop.f32.mrf.mxu0
    %v2365 = vadd.f32 %v2345, %v2364
    %2366 = vdwg.mxu0
    %2367 = vmatpush.msra.mxu0 %v435
    %2368 = vmatpush.msra.mxu0 %v434
    %2369 = vmatpush.msra.mxu0 %v433
    %2370 = vmatpush.msra.mxu0 %v432
    %2371 = vmatpush.msra.mxu0 %v431
    %2372 = vmatpush.msra.mxu0 %v430
    %2373 = vmatpush.msra.mxu0 %v429
    %2374 = vmatpush.msra.mxu0 %v428
    %2375 = vmatpush.msra.mxu0 %v427
    %2376 = vmatpush.msra.mxu0 %v426
    %2377 = vmatpush.msra.mxu0 %v425
    %2378 = vmatpush.msra.mxu0 %v424
    %2379 = vmatpush.msra.mxu0 %v423
    %2380 = vmatpush.msra.mxu0 %v422
    %2381 = vmatpush.msra.mxu0 %v421
    %2382 = vmatpush.msra.mxu0 %v420
    %2383 = vmatmul.f32.gmra.mxu0 %v1711
    %v2384 = vpop.f32.mrf.mxu0
    %v2385 = vadd.f32 %v2365, %v2384
    %2386 = vdwg.mxu0
    %2387 = vmatpush.msra.mxu0 %v451
    %2388 = vmatpush.msra.mxu0 %v450
    %2389 = vmatpush.msra.mxu0 %v449
    %2390 = vmatpush.msra.mxu0 %v448
    %2391 = vmatpush.msra.mxu0 %v447
    %2392 = vmatpush.msra.mxu0 %v446
    %2393 = vmatpush.msra.mxu0 %v445
    %2394 = vmatpush.msra.mxu0 %v444
    %2395 = vmatpush.msra.mxu0 %v443
    %2396 = vmatpush.msra.mxu0 %v442
    %2397 = vmatpush.msra.mxu0 %v441
    %2398 = vmatpush.msra.mxu0 %v440
    %2399 = vmatpush.msra.mxu0 %v439
    %2400 = vmatpush.msra.mxu0 %v438
    %2401 = vmatpush.msra.mxu0 %v437
    %2402 = vmatpush.msra.mxu0 %v436
    %2403 = vmatmul.f32.gmra.mxu0 %v1714
    %v2404 = vpop.f32.mrf.mxu0
    %v2405 = vadd.f32 %v2385, %v2404
    %2406 = vdwg.mxu0
    %2407 = vmatpush.msra.mxu0 %v467
    %2408 = vmatpush.msra.mxu0 %v466
    %2409 = vmatpush.msra.mxu0 %v465
    %2410 = vmatpush.msra.mxu0 %v464
    %2411 = vmatpush.msra.mxu0 %v463
    %2412 = vmatpush.msra.mxu0 %v462
    %2413 = vmatpush.msra.mxu0 %v461
    %2414 = vmatpush.msra.mxu0 %v460
    %2415 = vmatpush.msra.mxu0 %v459
    %2416 = vmatpush.msra.mxu0 %v458
    %2417 = vmatpush.msra.mxu0 %v457
    %2418 = vmatpush.msra.mxu0 %v456
    %2419 = vmatpush.msra.mxu0 %v455
    %2420 = vmatpush.msra.mxu0 %v454
    %2421 = vmatpush.msra.mxu0 %v453
    %2422 = vmatpush.msra.mxu0 %v452
    %2423 = vmatmul.f32.gmra.mxu0 %v1715
    %v2424 = vpop.f32.mrf.mxu0
    %v2425 = vadd.f32 %v2405, %v2424
    %2426 = vdwg.mxu0
    %2427 = vmatpush.msra.mxu0 %v483
    %2428 = vmatpush.msra.mxu0 %v482
    %2429 = vmatpush.msra.mxu0 %v481
    %2430 = vmatpush.msra.mxu0 %v480
    %2431 = vmatpush.msra.mxu0 %v479
    %2432 = vmatpush.msra.mxu0 %v478
    %2433 = vmatpush.msra.mxu0 %v477
    %2434 = vmatpush.msra.mxu0 %v476
    %2435 = vmatpush.msra.mxu0 %v475
    %2436 = vmatpush.msra.mxu0 %v474
    %2437 = vmatpush.msra.mxu0 %v473
    %2438 = vmatpush.msra.mxu0 %v472
    %2439 = vmatpush.msra.mxu0 %v471
    %2440 = vmatpush.msra.mxu0 %v470
    %2441 = vmatpush.msra.mxu0 %v469
    %2442 = vmatpush.msra.mxu0 %v468
    %2443 = vmatmul.f32.gmra.mxu0 %v1716
    %v2444 = vpop.f32.mrf.mxu0
    %v2445 = vadd.f32 %v2425, %v2444
    %2446 = vdwg.mxu0
    %2447 = vmatpush.msra.mxu0 %v499
    %2448 = vmatpush.msra.mxu0 %v498
    %2449 = vmatpush.msra.mxu0 %v497
    %2450 = vmatpush.msra.mxu0 %v496
    %2451 = vmatpush.msra.mxu0 %v495
    %2452 = vmatpush.msra.mxu0 %v494
    %2453 = vmatpush.msra.mxu0 %v493
    %2454 = vmatpush.msra.mxu0 %v492
    %2455 = vmatpush.msra.mxu0 %v491
    %2456 = vmatpush.msra.mxu0 %v490
    %2457 = vmatpush.msra.mxu0 %v489
    %2458 = vmatpush.msra.mxu0 %v488
    %2459 = vmatpush.msra.mxu0 %v487
    %2460 = vmatpush.msra.mxu0 %v486
    %2461 = vmatpush.msra.mxu0 %v485
    %2462 = vmatpush.msra.mxu0 %v484
    %2463 = vmatmul.f32.gmra.mxu0 %v1717
    %v2464 = vpop.f32.mrf.mxu0
    %v2465 = vadd.f32 %v2445, %v2464
    %2466 = vdwg.mxu0
    %2467 = vmatpush.msra.mxu0 %v515
    %2468 = vmatpush.msra.mxu0 %v514
    %2469 = vmatpush.msra.mxu0 %v513
    %2470 = vmatpush.msra.mxu0 %v512
    %2471 = vmatpush.msra.mxu0 %v511
    %2472 = vmatpush.msra.mxu0 %v510
    %2473 = vmatpush.msra.mxu0 %v509
    %2474 = vmatpush.msra.mxu0 %v508
    %2475 = vmatpush.msra.mxu0 %v507
    %2476 = vmatpush.msra.mxu0 %v506
    %2477 = vmatpush.msra.mxu0 %v505
    %2478 = vmatpush.msra.mxu0 %v504
    %2479 = vmatpush.msra.mxu0 %v503
    %2480 = vmatpush.msra.mxu0 %v502
    %2481 = vmatpush.msra.mxu0 %v501
    %2482 = vmatpush.msra.mxu0 %v500
    %2483 = vmatmul.f32.gmra.mxu0 %v1718
    %v2484 = vpop.f32.mrf.mxu0
    %v2485 = vadd.f32 %v2465, %v2484
    %2486 = vdwg.mxu0
    %2487 = vmatpush.msra.mxu0 %v531
    %2488 = vmatpush.msra.mxu0 %v530
    %2489 = vmatpush.msra.mxu0 %v529
    %2490 = vmatpush.msra.mxu0 %v528
    %2491 = vmatpush.msra.mxu0 %v527
    %2492 = vmatpush.msra.mxu0 %v526
    %2493 = vmatpush.msra.mxu0 %v525
    %2494 = vmatpush.msra.mxu0 %v524
    %2495 = vmatpush.msra.mxu0 %v523
    %2496 = vmatpush.msra.mxu0 %v522
    %2497 = vmatpush.msra.mxu0 %v521
    %2498 = vmatpush.msra.mxu0 %v520
    %2499 = vmatpush.msra.mxu0 %v519
    %2500 = vmatpush.msra.mxu0 %v518
    %2501 = vmatpush.msra.mxu0 %v517
    %2502 = vmatpush.msra.mxu0 %v516
    %2503 = vmatmul.f32.gmra.mxu0 %v1719
    %v2504 = vpop.f32.mrf.mxu0
    %v2505 = vadd.f32 %v2485, %v2504
    %2506 = vdwg.mxu0
    %2507 = vmatpush.msra.mxu0 %v547
    %2508 = vmatpush.msra.mxu0 %v546
    %2509 = vmatpush.msra.mxu0 %v545
    %2510 = vmatpush.msra.mxu0 %v544
    %2511 = vmatpush.msra.mxu0 %v543
    %2512 = vmatpush.msra.mxu0 %v542
    %2513 = vmatpush.msra.mxu0 %v541
    %2514 = vmatpush.msra.mxu0 %v540
    %2515 = vmatpush.msra.mxu0 %v539
    %2516 = vmatpush.msra.mxu0 %v538
    %2517 = vmatpush.msra.mxu0 %v537
    %2518 = vmatpush.msra.mxu0 %v536
    %2519 = vmatpush.msra.mxu0 %v535
    %2520 = vmatpush.msra.mxu0 %v534
    %2521 = vmatpush.msra.mxu0 %v533
    %2522 = vmatpush.msra.mxu0 %v532
    %2523 = vmatmul.f32.gmra.mxu0 %v1720
    %v2524 = vpop.f32.mrf.mxu0
    %v2525 = vadd.f32 %v2505, %v2524
    %2526 = vdwg.mxu0
    %2527 = vmatpush.msra.mxu0 %v563
    %2528 = vmatpush.msra.mxu0 %v562
    %2529 = vmatpush.msra.mxu0 %v561
    %2530 = vmatpush.msra.mxu0 %v560
    %2531 = vmatpush.msra.mxu0 %v559
    %2532 = vmatpush.msra.mxu0 %v558
    %2533 = vmatpush.msra.mxu0 %v557
    %2534 = vmatpush.msra.mxu0 %v556
    %2535 = vmatpush.msra.mxu0 %v555
    %2536 = vmatpush.msra.mxu0 %v554
    %2537 = vmatpush.msra.mxu0 %v553
    %2538 = vmatpush.msra.mxu0 %v552
    %2539 = vmatpush.msra.mxu0 %v551
    %2540 = vmatpush.msra.mxu0 %v550
    %2541 = vmatpush.msra.mxu0 %v549
    %2542 = vmatpush.msra.mxu0 %v548
    %2543 = vmatmul.f32.gmra.mxu0 %v1721
    %v2544 = vpop.f32.mrf.mxu0
    %v2545 = vadd.f32 %v2525, %v2544
    %2546 = vdwg.mxu0
    %2547 = vmatpush.msra.mxu0 %v579
    %2548 = vmatpush.msra.mxu0 %v578
    %2549 = vmatpush.msra.mxu0 %v577
    %2550 = vmatpush.msra.mxu0 %v576
    %2551 = vmatpush.msra.mxu0 %v575
    %2552 = vmatpush.msra.mxu0 %v574
    %2553 = vmatpush.msra.mxu0 %v573
    %2554 = vmatpush.msra.mxu0 %v572
    %2555 = vmatpush.msra.mxu0 %v571
    %2556 = vmatpush.msra.mxu0 %v570
    %2557 = vmatpush.msra.mxu0 %v569
    %2558 = vmatpush.msra.mxu0 %v568
    %2559 = vmatpush.msra.mxu0 %v567
    %2560 = vmatpush.msra.mxu0 %v566
    %2561 = vmatpush.msra.mxu0 %v565
    %2562 = vmatpush.msra.mxu0 %v564
    %2563 = vmatmul.f32.gmra.mxu0 %v1724
    %v2564 = vpop.f32.mrf.mxu0
    %v2565 = vadd.f32 %v2545, %v2564
    %2566 = vdwg.mxu0
    %2567 = vmatpush.msra.mxu0 %v595
    %2568 = vmatpush.msra.mxu0 %v594
    %2569 = vmatpush.msra.mxu0 %v593
    %2570 = vmatpush.msra.mxu0 %v592
    %2571 = vmatpush.msra.mxu0 %v591
    %2572 = vmatpush.msra.mxu0 %v590
    %2573 = vmatpush.msra.mxu0 %v589
    %2574 = vmatpush.msra.mxu0 %v588
    %2575 = vmatpush.msra.mxu0 %v587
    %2576 = vmatpush.msra.mxu0 %v586
    %2577 = vmatpush.msra.mxu0 %v585
    %2578 = vmatpush.msra.mxu0 %v584
    %2579 = vmatpush.msra.mxu0 %v583
    %2580 = vmatpush.msra.mxu0 %v582
    %2581 = vmatpush.msra.mxu0 %v581
    %2582 = vmatpush.msra.mxu0 %v580
    %2583 = vmatmul.f32.gmra.mxu0 %v1725
    %v2584 = vpop.f32.mrf.mxu0
    %v2585 = vadd.f32 %v2565, %v2584
    %2586 = vdwg.mxu0
    %2587 = vmatpush.msra.mxu0 %v611
    %2588 = vmatpush.msra.mxu0 %v610
    %2589 = vmatpush.msra.mxu0 %v609
    %2590 = vmatpush.msra.mxu0 %v608
    %2591 = vmatpush.msra.mxu0 %v607
    %2592 = vmatpush.msra.mxu0 %v606
    %2593 = vmatpush.msra.mxu0 %v605
    %2594 = vmatpush.msra.mxu0 %v604
    %2595 = vmatpush.msra.mxu0 %v603
    %2596 = vmatpush.msra.mxu0 %v602
    %2597 = vmatpush.msra.mxu0 %v601
    %2598 = vmatpush.msra.mxu0 %v600
    %2599 = vmatpush.msra.mxu0 %v599
    %2600 = vmatpush.msra.mxu0 %v598
    %2601 = vmatpush.msra.mxu0 %v597
    %2602 = vmatpush.msra.mxu0 %v596
    %2603 = vmatmul.f32.gmra.mxu0 %v1726
    %v2604 = vpop.f32.mrf.mxu0
    %v2605 = vadd.f32 %v2585, %v2604
    %2606 = vdwg.mxu0
    %2607 = vmatpush.msra.mxu0 %v627
    %2608 = vmatpush.msra.mxu0 %v626
    %2609 = vmatpush.msra.mxu0 %v625
    %2610 = vmatpush.msra.mxu0 %v624
    %2611 = vmatpush.msra.mxu0 %v623
    %2612 = vmatpush.msra.mxu0 %v622
    %2613 = vmatpush.msra.mxu0 %v621
    %2614 = vmatpush.msra.mxu0 %v620
    %2615 = vmatpush.msra.mxu0 %v619
    %2616 = vmatpush.msra.mxu0 %v618
    %2617 = vmatpush.msra.mxu0 %v617
    %2618 = vmatpush.msra.mxu0 %v616
    %2619 = vmatpush.msra.mxu0 %v615
    %2620 = vmatpush.msra.mxu0 %v614
    %2621 = vmatpush.msra.mxu0 %v613
    %2622 = vmatpush.msra.mxu0 %v612
    %2623 = vmatmul.f32.gmra.mxu0 %v1727
    %v2624 = vpop.f32.mrf.mxu0
    %v2625 = vadd.f32 %v2605, %v2624
    %2626 = vdwg.mxu0
    %2627 = vmatpush.msra.mxu0 %v643
    %2628 = vmatpush.msra.mxu0 %v642
    %2629 = vmatpush.msra.mxu0 %v641
    %2630 = vmatpush.msra.mxu0 %v640
    %2631 = vmatpush.msra.mxu0 %v639
    %2632 = vmatpush.msra.mxu0 %v638
    %2633 = vmatpush.msra.mxu0 %v637
    %2634 = vmatpush.msra.mxu0 %v636
    %2635 = vmatpush.msra.mxu0 %v635
    %2636 = vmatpush.msra.mxu0 %v634
    %2637 = vmatpush.msra.mxu0 %v633
    %2638 = vmatpush.msra.mxu0 %v632
    %2639 = vmatpush.msra.mxu0 %v631
    %2640 = vmatpush.msra.mxu0 %v630
    %2641 = vmatpush.msra.mxu0 %v629
    %2642 = vmatpush.msra.mxu0 %v628
    %2643 = vmatmul.f32.gmra.mxu0 %v1728
    %v2644 = vpop.f32.mrf.mxu0
    %v2645 = vadd.f32 %v2625, %v2644
    %2646 = vdwg.mxu0
    %2647 = vmatpush.msra.mxu0 %v659
    %2648 = vmatpush.msra.mxu0 %v658
    %2649 = vmatpush.msra.mxu0 %v657
    %2650 = vmatpush.msra.mxu0 %v656
    %2651 = vmatpush.msra.mxu0 %v655
    %2652 = vmatpush.msra.mxu0 %v654
    %2653 = vmatpush.msra.mxu0 %v653
    %2654 = vmatpush.msra.mxu0 %v652
    %2655 = vmatpush.msra.mxu0 %v651
    %2656 = vmatpush.msra.mxu0 %v650
    %2657 = vmatpush.msra.mxu0 %v649
    %2658 = vmatpush.msra.mxu0 %v648
    %2659 = vmatpush.msra.mxu0 %v647
    %2660 = vmatpush.msra.mxu0 %v646
    %2661 = vmatpush.msra.mxu0 %v645
    %2662 = vmatpush.msra.mxu0 %v644
    %2663 = vmatmul.f32.gmra.mxu0 %v1729
    %v2664 = vpop.f32.mrf.mxu0
    %v2665 = vadd.f32 %v2645, %v2664
    %2666 = vdwg.mxu0
    %2667 = vmatpush.msra.mxu0 %v675
    %2668 = vmatpush.msra.mxu0 %v674
    %2669 = vmatpush.msra.mxu0 %v673
    %2670 = vmatpush.msra.mxu0 %v672
    %2671 = vmatpush.msra.mxu0 %v671
    %2672 = vmatpush.msra.mxu0 %v670
    %2673 = vmatpush.msra.mxu0 %v669
    %2674 = vmatpush.msra.mxu0 %v668
    %2675 = vmatpush.msra.mxu0 %v667
    %2676 = vmatpush.msra.mxu0 %v666
    %2677 = vmatpush.msra.mxu0 %v665
    %2678 = vmatpush.msra.mxu0 %v664
    %2679 = vmatpush.msra.mxu0 %v663
    %2680 = vmatpush.msra.mxu0 %v662
    %2681 = vmatpush.msra.mxu0 %v661
    %2682 = vmatpush.msra.mxu0 %v660
    %2683 = vmatmul.f32.gmra.mxu0 %v1730
    %v2684 = vpop.f32.mrf.mxu0
    %v2685 = vadd.f32 %v2665, %v2684
    %2686 = vdwg.mxu0
    %2687 = vmatpush.msra.mxu0 %v691
    %2688 = vmatpush.msra.mxu0 %v690
    %2689 = vmatpush.msra.mxu0 %v689
    %2690 = vmatpush.msra.mxu0 %v688
    %2691 = vmatpush.msra.mxu0 %v687
    %2692 = vmatpush.msra.mxu0 %v686
    %2693 = vmatpush.msra.mxu0 %v685
    %2694 = vmatpush.msra.mxu0 %v684
    %2695 = vmatpush.msra.mxu0 %v683
    %2696 = vmatpush.msra.mxu0 %v682
    %2697 = vmatpush.msra.mxu0 %v681
    %2698 = vmatpush.msra.mxu0 %v680
    %2699 = vmatpush.msra.mxu0 %v679
    %2700 = vmatpush.msra.mxu0 %v678
    %2701 = vmatpush.msra.mxu0 %v677
    %2702 = vmatpush.msra.mxu0 %v676
    %2703 = vmatmul.f32.gmra.mxu0 %v1731
    %v2704 = vpop.f32.mrf.mxu0
    %v2705 = vadd.f32 %v2685, %v2704
    %2706 = vdwg.mxu0
    %2707 = vmatpush.msra.mxu0 %v707
    %2708 = vmatpush.msra.mxu0 %v706
    %2709 = vmatpush.msra.mxu0 %v705
    %2710 = vmatpush.msra.mxu0 %v704
    %2711 = vmatpush.msra.mxu0 %v703
    %2712 = vmatpush.msra.mxu0 %v702
    %2713 = vmatpush.msra.mxu0 %v701
    %2714 = vmatpush.msra.mxu0 %v700
    %2715 = vmatpush.msra.mxu0 %v699
    %2716 = vmatpush.msra.mxu0 %v698
    %2717 = vmatpush.msra.mxu0 %v697
    %2718 = vmatpush.msra.mxu0 %v696
    %2719 = vmatpush.msra.mxu0 %v695
    %2720 = vmatpush.msra.mxu0 %v694
    %2721 = vmatpush.msra.mxu0 %v693
    %2722 = vmatpush.msra.mxu0 %v692
    %2723 = vmatmul.f32.gmra.mxu0 %v1734
    %v2724 = vpop.f32.mrf.mxu0
    %v2725 = vadd.f32 %v2705, %v2724
    %2726 = vdwg.mxu0
    %2727 = vmatpush.msra.mxu0 %v723
    %2728 = vmatpush.msra.mxu0 %v722
    %2729 = vmatpush.msra.mxu0 %v721
    %2730 = vmatpush.msra.mxu0 %v720
    %2731 = vmatpush.msra.mxu0 %v719
    %2732 = vmatpush.msra.mxu0 %v718
    %2733 = vmatpush.msra.mxu0 %v717
    %2734 = vmatpush.msra.mxu0 %v716
    %2735 = vmatpush.msra.mxu0 %v715
    %2736 = vmatpush.msra.mxu0 %v714
    %2737 = vmatpush.msra.mxu0 %v713
    %2738 = vmatpush.msra.mxu0 %v712
    %2739 = vmatpush.msra.mxu0 %v711
    %2740 = vmatpush.msra.mxu0 %v710
    %2741 = vmatpush.msra.mxu0 %v709
    %2742 = vmatpush.msra.mxu0 %v708
    %2743 = vmatmul.f32.gmra.mxu0 %v1735
    %v2744 = vpop.f32.mrf.mxu0
    %v2745 = vadd.f32 %v2725, %v2744
    %2746 = vdwg.mxu0
    %2747 = vmatpush.msra.mxu0 %v739
    %2748 = vmatpush.msra.mxu0 %v738
    %2749 = vmatpush.msra.mxu0 %v737
    %2750 = vmatpush.msra.mxu0 %v736
    %2751 = vmatpush.msra.mxu0 %v735
    %2752 = vmatpush.msra.mxu0 %v734
    %2753 = vmatpush.msra.mxu0 %v733
    %2754 = vmatpush.msra.mxu0 %v732
    %2755 = vmatpush.msra.mxu0 %v731
    %2756 = vmatpush.msra.mxu0 %v730
    %2757 = vmatpush.msra.mxu0 %v729
    %2758 = vmatpush.msra.mxu0 %v728
    %2759 = vmatpush.msra.mxu0 %v727
    %2760 = vmatpush.msra.mxu0 %v726
    %2761 = vmatpush.msra.mxu0 %v725
    %2762 = vmatpush.msra.mxu0 %v724
    %2763 = vmatmul.f32.gmra.mxu0 %v1736
    %v2764 = vpop.f32.mrf.mxu0
    %v2765 = vadd.f32 %v2745, %v2764
    %2766 = vdwg.mxu0
    %2767 = vmatpush.msra.mxu0 %v755
    %2768 = vmatpush.msra.mxu0 %v754
    %2769 = vmatpush.msra.mxu0 %v753
    %2770 = vmatpush.msra.mxu0 %v752
    %2771 = vmatpush.msra.mxu0 %v751
    %2772 = vmatpush.msra.mxu0 %v750
    %2773 = vmatpush.msra.mxu0 %v749
    %2774 = vmatpush.msra.mxu0 %v748
    %2775 = vmatpush.msra.mxu0 %v747
    %2776 = vmatpush.msra.mxu0 %v746
    %2777 = vmatpush.msra.mxu0 %v745
    %2778 = vmatpush.msra.mxu0 %v744
    %2779 = vmatpush.msra.mxu0 %v743
    %2780 = vmatpush.msra.mxu0 %v742
    %2781 = vmatpush.msra.mxu0 %v741
    %2782 = vmatpush.msra.mxu0 %v740
    %2783 = vmatmul.f32.gmra.mxu0 %v1737
    %v2784 = vpop.f32.mrf.mxu0
    %v2785 = vadd.f32 %v2765, %v2784
    %2786 = vdwg.mxu0
    %2787 = vmatpush.msra.mxu0 %v771
    %2788 = vmatpush.msra.mxu0 %v770
    %2789 = vmatpush.msra.mxu0 %v769
    %2790 = vmatpush.msra.mxu0 %v768
    %2791 = vmatpush.msra.mxu0 %v767
    %2792 = vmatpush.msra.mxu0 %v766
    %2793 = vmatpush.msra.mxu0 %v765
    %2794 = vmatpush.msra.mxu0 %v764
    %2795 = vmatpush.msra.mxu0 %v763
    %2796 = vmatpush.msra.mxu0 %v762
    %2797 = vmatpush.msra.mxu0 %v761
    %2798 = vmatpush.msra.mxu0 %v760
    %2799 = vmatpush.msra.mxu0 %v759
    %2800 = vmatpush.msra.mxu0 %v758
    %2801 = vmatpush.msra.mxu0 %v757
    %2802 = vmatpush.msra.mxu0 %v756
    %2803 = vmatmul.f32.gmra.mxu0 %v1738
    %v2804 = vpop.f32.mrf.mxu0
    %v2805 = vadd.f32 %v2785, %v2804
    %2806 = vdwg.mxu0
    %2807 = vmatpush.msra.mxu0 %v787
    %2808 = vmatpush.msra.mxu0 %v786
    %2809 = vmatpush.msra.mxu0 %v785
    %2810 = vmatpush.msra.mxu0 %v784
    %2811 = vmatpush.msra.mxu0 %v783
    %2812 = vmatpush.msra.mxu0 %v782
    %2813 = vmatpush.msra.mxu0 %v781
    %2814 = vmatpush.msra.mxu0 %v780
    %2815 = vmatpush.msra.mxu0 %v779
    %2816 = vmatpush.msra.mxu0 %v778
    %2817 = vmatpush.msra.mxu0 %v777
    %2818 = vmatpush.msra.mxu0 %v776
    %2819 = vmatpush.msra.mxu0 %v775
    %2820 = vmatpush.msra.mxu0 %v774
    %2821 = vmatpush.msra.mxu0 %v773
    %2822 = vmatpush.msra.mxu0 %v772
    %2823 = vmatmul.f32.gmra.mxu0 %v1739
    %v2824 = vpop.f32.mrf.mxu0
    %v2825 = vadd.f32 %v2805, %v2824
    %2826 = vdwg.mxu0
    %2827 = vmatpush.msra.mxu0 %v803
    %2828 = vmatpush.msra.mxu0 %v802
    %2829 = vmatpush.msra.mxu0 %v801
    %2830 = vmatpush.msra.mxu0 %v800
    %2831 = vmatpush.msra.mxu0 %v799
    %2832 = vmatpush.msra.mxu0 %v798
    %2833 = vmatpush.msra.mxu0 %v797
    %2834 = vmatpush.msra.mxu0 %v796
    %2835 = vmatpush.msra.mxu0 %v795
    %2836 = vmatpush.msra.mxu0 %v794
    %2837 = vmatpush.msra.mxu0 %v793
    %2838 = vmatpush.msra.mxu0 %v792
    %2839 = vmatpush.msra.mxu0 %v791
    %2840 = vmatpush.msra.mxu0 %v790
    %2841 = vmatpush.msra.mxu0 %v789
    %2842 = vmatpush.msra.mxu0 %v788
    %2843 = vmatmul.f32.gmra.mxu0 %v1740
    %v2844 = vpop.f32.mrf.mxu0
    %v2845 = vadd.f32 %v2825, %v2844
    %2846 = vdwg.mxu0
    %2847 = vmatpush.msra.mxu0 %v819
    %2848 = vmatpush.msra.mxu0 %v818
    %2849 = vmatpush.msra.mxu0 %v817
    %2850 = vmatpush.msra.mxu0 %v816
    %2851 = vmatpush.msra.mxu0 %v815
    %2852 = vmatpush.msra.mxu0 %v814
    %2853 = vmatpush.msra.mxu0 %v813
    %2854 = vmatpush.msra.mxu0 %v812
    %2855 = vmatpush.msra.mxu0 %v811
    %2856 = vmatpush.msra.mxu0 %v810
    %2857 = vmatpush.msra.mxu0 %v809
    %2858 = vmatpush.msra.mxu0 %v808
    %2859 = vmatpush.msra.mxu0 %v807
    %2860 = vmatpush.msra.mxu0 %v806
    %2861 = vmatpush.msra.mxu0 %v805
    %2862 = vmatpush.msra.mxu0 %v804
    %2863 = vmatmul.f32.gmra.mxu0 %v1741
    %v2864 = vpop.f32.mrf.mxu0
    %v2865 = vadd.f32 %v2845, %v2864
    %2866 = vdwg.mxu0
    %2867 = vmatpush.msra.mxu0 %v835
    %2868 = vmatpush.msra.mxu0 %v834
    %2869 = vmatpush.msra.mxu0 %v833
    %2870 = vmatpush.msra.mxu0 %v832
    %2871 = vmatpush.msra.mxu0 %v831
    %2872 = vmatpush.msra.mxu0 %v830
    %2873 = vmatpush.msra.mxu0 %v829
    %2874 = vmatpush.msra.mxu0 %v828
    %2875 = vmatpush.msra.mxu0 %v827
    %2876 = vmatpush.msra.mxu0 %v826
    %2877 = vmatpush.msra.mxu0 %v825
    %2878 = vmatpush.msra.mxu0 %v824
    %2879 = vmatpush.msra.mxu0 %v823
    %2880 = vmatpush.msra.mxu0 %v822
    %2881 = vmatpush.msra.mxu0 %v821
    %2882 = vmatpush.msra.mxu0 %v820
    %2883 = vmatmul.f32.gmra.mxu0 %v1744
    %v2884 = vpop.f32.mrf.mxu0
    %v2885 = vadd.f32 %v2865, %v2884
    %2886 = vdwg.mxu0
    %2887 = vmatpush.msra.mxu0 %v851
    %2888 = vmatpush.msra.mxu0 %v850
    %2889 = vmatpush.msra.mxu0 %v849
    %2890 = vmatpush.msra.mxu0 %v848
    %2891 = vmatpush.msra.mxu0 %v847
    %2892 = vmatpush.msra.mxu0 %v846
    %2893 = vmatpush.msra.mxu0 %v845
    %2894 = vmatpush.msra.mxu0 %v844
    %2895 = vmatpush.msra.mxu0 %v843
    %2896 = vmatpush.msra.mxu0 %v842
    %2897 = vmatpush.msra.mxu0 %v841
    %2898 = vmatpush.msra.mxu0 %v840
    %2899 = vmatpush.msra.mxu0 %v839
    %2900 = vmatpush.msra.mxu0 %v838
    %2901 = vmatpush.msra.mxu0 %v837
    %2902 = vmatpush.msra.mxu0 %v836
    %2903 = vmatmul.f32.gmra.mxu0 %v1745
    %v2904 = vpop.f32.mrf.mxu0
    %v2905 = vadd.f32 %v2885, %v2904
    %2906 = vdwg.mxu0
    %2907 = vmatpush.msra.mxu0 %v867
    %2908 = vmatpush.msra.mxu0 %v866
    %2909 = vmatpush.msra.mxu0 %v865
    %2910 = vmatpush.msra.mxu0 %v864
    %2911 = vmatpush.msra.mxu0 %v863
    %2912 = vmatpush.msra.mxu0 %v862
    %2913 = vmatpush.msra.mxu0 %v861
    %2914 = vmatpush.msra.mxu0 %v860
    %2915 = vmatpush.msra.mxu0 %v859
    %2916 = vmatpush.msra.mxu0 %v858
    %2917 = vmatpush.msra.mxu0 %v857
    %2918 = vmatpush.msra.mxu0 %v856
    %2919 = vmatpush.msra.mxu0 %v855
    %2920 = vmatpush.msra.mxu0 %v854
    %2921 = vmatpush.msra.mxu0 %v853
    %2922 = vmatpush.msra.mxu0 %v852
    %2923 = vmatmul.f32.gmra.mxu0 %v1746
    %v2924 = vpop.f32.mrf.mxu0
    %v2925 = vadd.f32 %v2905, %v2924
    %2926 = vdwg.mxu0
    %2927 = vmatpush.msra.mxu0 %v883
    %2928 = vmatpush.msra.mxu0 %v882
    %2929 = vmatpush.msra.mxu0 %v881
    %2930 = vmatpush.msra.mxu0 %v880
    %2931 = vmatpush.msra.mxu0 %v879
    %2932 = vmatpush.msra.mxu0 %v878
    %2933 = vmatpush.msra.mxu0 %v877
    %2934 = vmatpush.msra.mxu0 %v876
    %2935 = vmatpush.msra.mxu0 %v875
    %2936 = vmatpush.msra.mxu0 %v874
    %2937 = vmatpush.msra.mxu0 %v873
    %2938 = vmatpush.msra.mxu0 %v872
    %2939 = vmatpush.msra.mxu0 %v871
    %2940 = vmatpush.msra.mxu0 %v870
    %2941 = vmatpush.msra.mxu0 %v869
    %2942 = vmatpush.msra.mxu0 %v868
    %2943 = vmatmul.f32.gmra.mxu0 %v1747
    %v2944 = vpop.f32.mrf.mxu0
    %v2945 = vadd.f32 %v2925, %v2944
    %2946 = vdwg.mxu0
    %2947 = vmatpush.msra.mxu0 %v899
    %2948 = vmatpush.msra.mxu0 %v898
    %2949 = vmatpush.msra.mxu0 %v897
    %2950 = vmatpush.msra.mxu0 %v896
    %2951 = vmatpush.msra.mxu0 %v895
    %2952 = vmatpush.msra.mxu0 %v894
    %2953 = vmatpush.msra.mxu0 %v893
    %2954 = vmatpush.msra.mxu0 %v892
    %2955 = vmatpush.msra.mxu0 %v891
    %2956 = vmatpush.msra.mxu0 %v890
    %2957 = vmatpush.msra.mxu0 %v889
    %2958 = vmatpush.msra.mxu0 %v888
    %2959 = vmatpush.msra.mxu0 %v887
    %2960 = vmatpush.msra.mxu0 %v886
    %2961 = vmatpush.msra.mxu0 %v885
    %2962 = vmatpush.msra.mxu0 %v884
    %2963 = vmatmul.f32.gmra.mxu0 %v1748
    %v2964 = vpop.f32.mrf.mxu0
    %v2965 = vadd.f32 %v2945, %v2964
    %2966 = vdwg.mxu0
    %2967 = vmatpush.msra.mxu0 %v915
    %2968 = vmatpush.msra.mxu0 %v914
    %2969 = vmatpush.msra.mxu0 %v913
    %2970 = vmatpush.msra.mxu0 %v912
    %2971 = vmatpush.msra.mxu0 %v911
    %2972 = vmatpush.msra.mxu0 %v910
    %2973 = vmatpush.msra.mxu0 %v909
    %2974 = vmatpush.msra.mxu0 %v908
    %2975 = vmatpush.msra.mxu0 %v907
    %2976 = vmatpush.msra.mxu0 %v906
    %2977 = vmatpush.msra.mxu0 %v905
    %2978 = vmatpush.msra.mxu0 %v904
    %2979 = vmatpush.msra.mxu0 %v903
    %2980 = vmatpush.msra.mxu0 %v902
    %2981 = vmatpush.msra.mxu0 %v901
    %2982 = vmatpush.msra.mxu0 %v900
    %2983 = vmatmul.f32.gmra.mxu0 %v1749
    %v2984 = vpop.f32.mrf.mxu0
    %v2985 = vadd.f32 %v2965, %v2984
    %2986 = vdwg.mxu0
    %2987 = vmatpush.msra.mxu0 %v931
    %2988 = vmatpush.msra.mxu0 %v930
    %2989 = vmatpush.msra.mxu0 %v929
    %2990 = vmatpush.msra.mxu0 %v928
    %2991 = vmatpush.msra.mxu0 %v927
    %2992 = vmatpush.msra.mxu0 %v926
    %2993 = vmatpush.msra.mxu0 %v925
    %2994 = vmatpush.msra.mxu0 %v924
    %2995 = vmatpush.msra.mxu0 %v923
    %2996 = vmatpush.msra.mxu0 %v922
    %2997 = vmatpush.msra.mxu0 %v921
    %2998 = vmatpush.msra.mxu0 %v920
    %2999 = vmatpush.msra.mxu0 %v919
    %3000 = vmatpush.msra.mxu0 %v918
    %3001 = vmatpush.msra.mxu0 %v917
    %3002 = vmatpush.msra.mxu0 %v916
    %3003 = vmatmul.f32.gmra.mxu0 %v1750
    %v3004 = vpop.f32.mrf.mxu0
    %v3005 = vadd.f32 %v2985, %v3004
    %3006 = vdwg.mxu0
    %3007 = vmatpush.msra.mxu0 %v947
    %3008 = vmatpush.msra.mxu0 %v946
    %3009 = vmatpush.msra.mxu0 %v945
    %3010 = vmatpush.msra.mxu0 %v944
    %3011 = vmatpush.msra.mxu0 %v943
    %3012 = vmatpush.msra.mxu0 %v942
    %3013 = vmatpush.msra.mxu0 %v941
    %3014 = vmatpush.msra.mxu0 %v940
    %3015 = vmatpush.msra.mxu0 %v939
    %3016 = vmatpush.msra.mxu0 %v938
    %3017 = vmatpush.msra.mxu0 %v937
    %3018 = vmatpush.msra.mxu0 %v936
    %3019 = vmatpush.msra.mxu0 %v935
    %3020 = vmatpush.msra.mxu0 %v934
    %3021 = vmatpush.msra.mxu0 %v933
    %3022 = vmatpush.msra.mxu0 %v932
    %3023 = vmatmul.f32.gmra.mxu0 %v1751
    %v3024 = vpop.f32.mrf.mxu0
    %v3025 = vadd.f32 %v3005, %v3024
    %3026 = vdwg.mxu0
    %3027 = vmatpush.msra.mxu0 %v963
    %3028 = vmatpush.msra.mxu0 %v962
    %3029 = vmatpush.msra.mxu0 %v961
    %3030 = vmatpush.msra.mxu0 %v960
    %3031 = vmatpush.msra.mxu0 %v959
    %3032 = vmatpush.msra.mxu0 %v958
    %3033 = vmatpush.msra.mxu0 %v957
    %3034 = vmatpush.msra.mxu0 %v956
    %3035 = vmatpush.msra.mxu0 %v955
    %3036 = vmatpush.msra.mxu0 %v954
    %3037 = vmatpush.msra.mxu0 %v953
    %3038 = vmatpush.msra.mxu0 %v952
    %3039 = vmatpush.msra.mxu0 %v951
    %3040 = vmatpush.msra.mxu0 %v950
    %3041 = vmatpush.msra.mxu0 %v949
    %3042 = vmatpush.msra.mxu0 %v948
    %3043 = vmatmul.f32.gmra.mxu0 %v1754
    %v3044 = vpop.f32.mrf.mxu0
    %v3045 = vadd.f32 %v3025, %v3044
    %3046 = vdwg.mxu0
    %3047 = vmatpush.msra.mxu0 %v979
    %3048 = vmatpush.msra.mxu0 %v978
    %3049 = vmatpush.msra.mxu0 %v977
    %3050 = vmatpush.msra.mxu0 %v976
    %3051 = vmatpush.msra.mxu0 %v975
    %3052 = vmatpush.msra.mxu0 %v974
    %3053 = vmatpush.msra.mxu0 %v973
    %3054 = vmatpush.msra.mxu0 %v972
    %3055 = vmatpush.msra.mxu0 %v971
    %3056 = vmatpush.msra.mxu0 %v970
    %3057 = vmatpush.msra.mxu0 %v969
    %3058 = vmatpush.msra.mxu0 %v968
    %3059 = vmatpush.msra.mxu0 %v967
    %3060 = vmatpush.msra.mxu0 %v966
    %3061 = vmatpush.msra.mxu0 %v965
    %3062 = vmatpush.msra.mxu0 %v964
    %3063 = vmatmul.f32.gmra.mxu0 %v1755
    %v3064 = vpop.f32.mrf.mxu0
    %v3065 = vadd.f32 %v3045, %v3064
    %3066 = vdwg.mxu0
    %3067 = vmatpush.msra.mxu0 %v995
    %3068 = vmatpush.msra.mxu0 %v994
    %3069 = vmatpush.msra.mxu0 %v993
    %3070 = vmatpush.msra.mxu0 %v992
    %3071 = vmatpush.msra.mxu0 %v991
    %3072 = vmatpush.msra.mxu0 %v990
    %3073 = vmatpush.msra.mxu0 %v989
    %3074 = vmatpush.msra.mxu0 %v988
    %3075 = vmatpush.msra.mxu0 %v987
    %3076 = vmatpush.msra.mxu0 %v986
    %3077 = vmatpush.msra.mxu0 %v985
    %3078 = vmatpush.msra.mxu0 %v984
    %3079 = vmatpush.msra.mxu0 %v983
    %3080 = vmatpush.msra.mxu0 %v982
    %3081 = vmatpush.msra.mxu0 %v981
    %3082 = vmatpush.msra.mxu0 %v980
    %3083 = vmatmul.f32.gmra.mxu0 %v1756
    %v3084 = vpop.f32.mrf.mxu0
    %v3085 = vadd.f32 %v3065, %v3084
    %3086 = vdwg.mxu0
    %3087 = vmatpush.msra.mxu0 %v1011
    %3088 = vmatpush.msra.mxu0 %v1010
    %3089 = vmatpush.msra.mxu0 %v1009
    %3090 = vmatpush.msra.mxu0 %v1008
    %3091 = vmatpush.msra.mxu0 %v1007
    %3092 = vmatpush.msra.mxu0 %v1006
    %3093 = vmatpush.msra.mxu0 %v1005
    %3094 = vmatpush.msra.mxu0 %v1004
    %3095 = vmatpush.msra.mxu0 %v1003
    %3096 = vmatpush.msra.mxu0 %v1002
    %3097 = vmatpush.msra.mxu0 %v1001
    %3098 = vmatpush.msra.mxu0 %v1000
    %3099 = vmatpush.msra.mxu0 %v999
    %3100 = vmatpush.msra.mxu0 %v998
    %3101 = vmatpush.msra.mxu0 %v997
    %3102 = vmatpush.msra.mxu0 %v996
    %3103 = vmatmul.f32.gmra.mxu0 %v1757
    %v3104 = vpop.f32.mrf.mxu0
    %v3105 = vadd.f32 %v3085, %v3104
    %3106 = vdwg.mxu0
    %3107 = vmatpush.msra.mxu0 %v1027
    %3108 = vmatpush.msra.mxu0 %v1026
    %3109 = vmatpush.msra.mxu0 %v1025
    %3110 = vmatpush.msra.mxu0 %v1024
    %3111 = vmatpush.msra.mxu0 %v1023
    %3112 = vmatpush.msra.mxu0 %v1022
    %3113 = vmatpush.msra.mxu0 %v1021
    %3114 = vmatpush.msra.mxu0 %v1020
    %3115 = vmatpush.msra.mxu0 %v1019
    %3116 = vmatpush.msra.mxu0 %v1018
    %3117 = vmatpush.msra.mxu0 %v1017
    %3118 = vmatpush.msra.mxu0 %v1016
    %3119 = vmatpush.msra.mxu0 %v1015
    %3120 = vmatpush.msra.mxu0 %v1014
    %3121 = vmatpush.msra.mxu0 %v1013
    %3122 = vmatpush.msra.mxu0 %v1012
    %3123 = vmatmul.f32.gmra.mxu0 %v1758
    %v3124 = vpop.f32.mrf.mxu0
    %v3125 = vadd.f32 %v3105, %v3124
    %3126 = vdwg.mxu0
    %3127 = vmatpush.msra.mxu0 %v1043
    %3128 = vmatpush.msra.mxu0 %v1042
    %3129 = vmatpush.msra.mxu0 %v1041
    %3130 = vmatpush.msra.mxu0 %v1040
    %3131 = vmatpush.msra.mxu0 %v1039
    %3132 = vmatpush.msra.mxu0 %v1038
    %3133 = vmatpush.msra.mxu0 %v1037
    %3134 = vmatpush.msra.mxu0 %v1036
    %3135 = vmatpush.msra.mxu0 %v1035
    %3136 = vmatpush.msra.mxu0 %v1034
    %3137 = vmatpush.msra.mxu0 %v1033
    %3138 = vmatpush.msra.mxu0 %v1032
    %3139 = vmatpush.msra.mxu0 %v1031
    %3140 = vmatpush.msra.mxu0 %v1030
    %3141 = vmatpush.msra.mxu0 %v1029
    %3142 = vmatpush.msra.mxu0 %v1028
    %3143 = vmatmul.f32.gmra.mxu0 %v1759
    %v3144 = vpop.f32.mrf.mxu0
    %v3145 = vadd.f32 %v3125, %v3144
    %3146 = vdwg.mxu0
    %3147 = vmatpush.msra.mxu0 %v1059
    %3148 = vmatpush.msra.mxu0 %v1058
    %3149 = vmatpush.msra.mxu0 %v1057
    %3150 = vmatpush.msra.mxu0 %v1056
    %3151 = vmatpush.msra.mxu0 %v1055
    %3152 = vmatpush.msra.mxu0 %v1054
    %3153 = vmatpush.msra.mxu0 %v1053
    %3154 = vmatpush.msra.mxu0 %v1052
    %3155 = vmatpush.msra.mxu0 %v1051
    %3156 = vmatpush.msra.mxu0 %v1050
    %3157 = vmatpush.msra.mxu0 %v1049
    %3158 = vmatpush.msra.mxu0 %v1048
    %3159 = vmatpush.msra.mxu0 %v1047
    %3160 = vmatpush.msra.mxu0 %v1046
    %3161 = vmatpush.msra.mxu0 %v1045
    %3162 = vmatpush.msra.mxu0 %v1044
    %3163 = vmatmul.f32.gmra.mxu0 %v1760
    %v3164 = vpop.f32.mrf.mxu0
    %v3165 = vadd.f32 %v3145, %v3164
    %3166 = vdwg.mxu0
    %3167 = vmatpush.msra.mxu0 %v1075
    %3168 = vmatpush.msra.mxu0 %v1074
    %3169 = vmatpush.msra.mxu0 %v1073
    %3170 = vmatpush.msra.mxu0 %v1072
    %3171 = vmatpush.msra.mxu0 %v1071
    %3172 = vmatpush.msra.mxu0 %v1070
    %3173 = vmatpush.msra.mxu0 %v1069
    %3174 = vmatpush.msra.mxu0 %v1068
    %3175 = vmatpush.msra.mxu0 %v1067
    %3176 = vmatpush.msra.mxu0 %v1066
    %3177 = vmatpush.msra.mxu0 %v1065
    %3178 = vmatpush.msra.mxu0 %v1064
    %3179 = vmatpush.msra.mxu0 %v1063
    %3180 = vmatpush.msra.mxu0 %v1062
    %3181 = vmatpush.msra.mxu0 %v1061
    %3182 = vmatpush.msra.mxu0 %v1060
    %3183 = vmatmul.f32.gmra.mxu0 %v1761
    %v3184 = vpop.f32.mrf.mxu0
    %v3185 = vadd.f32 %v3165, %v3184
    %3186 = vdwg.mxu0
    %3187 = vmatpush.msra.mxu0 %v1091
    %3188 = vmatpush.msra.mxu0 %v1090
    %3189 = vmatpush.msra.mxu0 %v1089
    %3190 = vmatpush.msra.mxu0 %v1088
    %3191 = vmatpush.msra.mxu0 %v1087
    %3192 = vmatpush.msra.mxu0 %v1086
    %3193 = vmatpush.msra.mxu0 %v1085
    %3194 = vmatpush.msra.mxu0 %v1084
    %3195 = vmatpush.msra.mxu0 %v1083
    %3196 = vmatpush.msra.mxu0 %v1082
    %3197 = vmatpush.msra.mxu0 %v1081
    %3198 = vmatpush.msra.mxu0 %v1080
    %3199 = vmatpush.msra.mxu0 %v1079
    %3200 = vmatpush.msra.mxu0 %v1078
    %3201 = vmatpush.msra.mxu0 %v1077
    %3202 = vmatpush.msra.mxu0 %v1076
    %3203 = vmatmul.f32.gmra.mxu0 %v1764
    %v3204 = vpop.f32.mrf.mxu0
    %v3205 = vadd.f32 %v3185, %v3204
    %3206 = vdwg.mxu0
    %3207 = vmatpush.msra.mxu0 %v1107
    %3208 = vmatpush.msra.mxu0 %v1106
    %3209 = vmatpush.msra.mxu0 %v1105
    %3210 = vmatpush.msra.mxu0 %v1104
    %3211 = vmatpush.msra.mxu0 %v1103
    %3212 = vmatpush.msra.mxu0 %v1102
    %3213 = vmatpush.msra.mxu0 %v1101
    %3214 = vmatpush.msra.mxu0 %v1100
    %3215 = vmatpush.msra.mxu0 %v1099
    %3216 = vmatpush.msra.mxu0 %v1098
    %3217 = vmatpush.msra.mxu0 %v1097
    %3218 = vmatpush.msra.mxu0 %v1096
    %3219 = vmatpush.msra.mxu0 %v1095
    %3220 = vmatpush.msra.mxu0 %v1094
    %3221 = vmatpush.msra.mxu0 %v1093
    %3222 = vmatpush.msra.mxu0 %v1092
    %3223 = vmatmul.f32.gmra.mxu0 %v1765
    %v3224 = vpop.f32.mrf.mxu0
    %v3225 = vadd.f32 %v3205, %v3224
    %3226 = vdwg.mxu0
    %3227 = vmatpush.msra.mxu0 %v1123
    %3228 = vmatpush.msra.mxu0 %v1122
    %3229 = vmatpush.msra.mxu0 %v1121
    %3230 = vmatpush.msra.mxu0 %v1120
    %3231 = vmatpush.msra.mxu0 %v1119
    %3232 = vmatpush.msra.mxu0 %v1118
    %3233 = vmatpush.msra.mxu0 %v1117
    %3234 = vmatpush.msra.mxu0 %v1116
    %3235 = vmatpush.msra.mxu0 %v1115
    %3236 = vmatpush.msra.mxu0 %v1114
    %3237 = vmatpush.msra.mxu0 %v1113
    %3238 = vmatpush.msra.mxu0 %v1112
    %3239 = vmatpush.msra.mxu0 %v1111
    %3240 = vmatpush.msra.mxu0 %v1110
    %3241 = vmatpush.msra.mxu0 %v1109
    %3242 = vmatpush.msra.mxu0 %v1108
    %3243 = vmatmul.f32.gmra.mxu0 %v1766
    %v3244 = vpop.f32.mrf.mxu0
    %v3245 = vadd.f32 %v3225, %v3244
    %3246 = vdwg.mxu0
    %3247 = vmatpush.msra.mxu0 %v1139
    %3248 = vmatpush.msra.mxu0 %v1138
    %3249 = vmatpush.msra.mxu0 %v1137
    %3250 = vmatpush.msra.mxu0 %v1136
    %3251 = vmatpush.msra.mxu0 %v1135
    %3252 = vmatpush.msra.mxu0 %v1134
    %3253 = vmatpush.msra.mxu0 %v1133
    %3254 = vmatpush.msra.mxu0 %v1132
    %3255 = vmatpush.msra.mxu0 %v1131
    %3256 = vmatpush.msra.mxu0 %v1130
    %3257 = vmatpush.msra.mxu0 %v1129
    %3258 = vmatpush.msra.mxu0 %v1128
    %3259 = vmatpush.msra.mxu0 %v1127
    %3260 = vmatpush.msra.mxu0 %v1126
    %3261 = vmatpush.msra.mxu0 %v1125
    %3262 = vmatpush.msra.mxu0 %v1124
    %3263 = vmatmul.f32.gmra.mxu0 %v1767
    %v3264 = vpop.f32.mrf.mxu0
    %v3265 = vadd.f32 %v3245, %v3264
    %3266 = vdwg.mxu0
    %3267 = vmatpush.msra.mxu0 %v1155
    %3268 = vmatpush.msra.mxu0 %v1154
    %3269 = vmatpush.msra.mxu0 %v1153
    %3270 = vmatpush.msra.mxu0 %v1152
    %3271 = vmatpush.msra.mxu0 %v1151
    %3272 = vmatpush.msra.mxu0 %v1150
    %3273 = vmatpush.msra.mxu0 %v1149
    %3274 = vmatpush.msra.mxu0 %v1148
    %3275 = vmatpush.msra.mxu0 %v1147
    %3276 = vmatpush.msra.mxu0 %v1146
    %3277 = vmatpush.msra.mxu0 %v1145
    %3278 = vmatpush.msra.mxu0 %v1144
    %3279 = vmatpush.msra.mxu0 %v1143
    %3280 = vmatpush.msra.mxu0 %v1142
    %3281 = vmatpush.msra.mxu0 %v1141
    %3282 = vmatpush.msra.mxu0 %v1140
    %3283 = vmatmul.f32.gmra.mxu0 %v1768
    %v3284 = vpop.f32.mrf.mxu0
    %v3285 = vadd.f32 %v3265, %v3284
    %3286 = vdwg.mxu0
    %3287 = vmatpush.msra.mxu0 %v1171
    %3288 = vmatpush.msra.mxu0 %v1170
    %3289 = vmatpush.msra.mxu0 %v1169
    %3290 = vmatpush.msra.mxu0 %v1168
    %3291 = vmatpush.msra.mxu0 %v1167
    %3292 = vmatpush.msra.mxu0 %v1166
    %3293 = vmatpush.msra.mxu0 %v1165
    %3294 = vmatpush.msra.mxu0 %v1164
    %3295 = vmatpush.msra.mxu0 %v1163
    %3296 = vmatpush.msra.mxu0 %v1162
    %3297 = vmatpush.msra.mxu0 %v1161
    %3298 = vmatpush.msra.mxu0 %v1160
    %3299 = vmatpush.msra.mxu0 %v1159
    %3300 = vmatpush.msra.mxu0 %v1158
    %3301 = vmatpush.msra.mxu0 %v1157
    %3302 = vmatpush.msra.mxu0 %v1156
    %3303 = vmatmul.f32.gmra.mxu0 %v1769
    %v3304 = vpop.f32.mrf.mxu0
    %v3305 = vadd.f32 %v3285, %v3304
    %3306 = vdwg.mxu0
    %3307 = vmatpush.msra.mxu0 %v1187
    %3308 = vmatpush.msra.mxu0 %v1186
    %3309 = vmatpush.msra.mxu0 %v1185
    %3310 = vmatpush.msra.mxu0 %v1184
    %3311 = vmatpush.msra.mxu0 %v1183
    %3312 = vmatpush.msra.mxu0 %v1182
    %3313 = vmatpush.msra.mxu0 %v1181
    %3314 = vmatpush.msra.mxu0 %v1180
    %3315 = vmatpush.msra.mxu0 %v1179
    %3316 = vmatpush.msra.mxu0 %v1178
    %3317 = vmatpush.msra.mxu0 %v1177
    %3318 = vmatpush.msra.mxu0 %v1176
    %3319 = vmatpush.msra.mxu0 %v1175
    %3320 = vmatpush.msra.mxu0 %v1174
    %3321 = vmatpush.msra.mxu0 %v1173
    %3322 = vmatpush.msra.mxu0 %v1172
    %3323 = vmatmul.f32.gmra.mxu0 %v1770
    %v3324 = vpop.f32.mrf.mxu0
    %v3325 = vadd.f32 %v3305, %v3324
    %3326 = vdwg.mxu0
    %3327 = vmatpush.msra.mxu0 %v1203
    %3328 = vmatpush.msra.mxu0 %v1202
    %3329 = vmatpush.msra.mxu0 %v1201
    %3330 = vmatpush.msra.mxu0 %v1200
    %3331 = vmatpush.msra.mxu0 %v1199
    %3332 = vmatpush.msra.mxu0 %v1198
    %3333 = vmatpush.msra.mxu0 %v1197
    %3334 = vmatpush.msra.mxu0 %v1196
    %3335 = vmatpush.msra.mxu0 %v1195
    %3336 = vmatpush.msra.mxu0 %v1194
    %3337 = vmatpush.msra.mxu0 %v1193
    %3338 = vmatpush.msra.mxu0 %v1192
    %3339 = vmatpush.msra.mxu0 %v1191
    %3340 = vmatpush.msra.mxu0 %v1190
    %3341 = vmatpush.msra.mxu0 %v1189
    %3342 = vmatpush.msra.mxu0 %v1188
    %3343 = vmatmul.f32.gmra.mxu0 %v1771
    %v3344 = vpop.f32.mrf.mxu0
    %v3345 = vadd.f32 %v3325, %v3344
    %3346 = vdwg.mxu0
    %3347 = vmatpush.msra.mxu0 %v1219
    %3348 = vmatpush.msra.mxu0 %v1218
    %3349 = vmatpush.msra.mxu0 %v1217
    %3350 = vmatpush.msra.mxu0 %v1216
    %3351 = vmatpush.msra.mxu0 %v1215
    %3352 = vmatpush.msra.mxu0 %v1214
    %3353 = vmatpush.msra.mxu0 %v1213
    %3354 = vmatpush.msra.mxu0 %v1212
    %3355 = vmatpush.msra.mxu0 %v1211
    %3356 = vmatpush.msra.mxu0 %v1210
    %3357 = vmatpush.msra.mxu0 %v1209
    %3358 = vmatpush.msra.mxu0 %v1208
    %3359 = vmatpush.msra.mxu0 %v1207
    %3360 = vmatpush.msra.mxu0 %v1206
    %3361 = vmatpush.msra.mxu0 %v1205
    %3362 = vmatpush.msra.mxu0 %v1204
    %3363 = vmatmul.f32.gmra.mxu0 %v1774
    %v3364 = vpop.f32.mrf.mxu0
    %v3365 = vadd.f32 %v3345, %v3364
    %3366 = vdwg.mxu0
    %3367 = vmatpush.msra.mxu0 %v1235
    %3368 = vmatpush.msra.mxu0 %v1234
    %3369 = vmatpush.msra.mxu0 %v1233
    %3370 = vmatpush.msra.mxu0 %v1232
    %3371 = vmatpush.msra.mxu0 %v1231
    %3372 = vmatpush.msra.mxu0 %v1230
    %3373 = vmatpush.msra.mxu0 %v1229
    %3374 = vmatpush.msra.mxu0 %v1228
    %3375 = vmatpush.msra.mxu0 %v1227
    %3376 = vmatpush.msra.mxu0 %v1226
    %3377 = vmatpush.msra.mxu0 %v1225
    %3378 = vmatpush.msra.mxu0 %v1224
    %3379 = vmatpush.msra.mxu0 %v1223
    %3380 = vmatpush.msra.mxu0 %v1222
    %3381 = vmatpush.msra.mxu0 %v1221
    %3382 = vmatpush.msra.mxu0 %v1220
    %3383 = vmatmul.f32.gmra.mxu0 %v1775
    %v3384 = vpop.f32.mrf.mxu0
    %v3385 = vadd.f32 %v3365, %v3384
    %3386 = vdwg.mxu0
    %3387 = vmatpush.msra.mxu0 %v1251
    %3388 = vmatpush.msra.mxu0 %v1250
    %3389 = vmatpush.msra.mxu0 %v1249
    %3390 = vmatpush.msra.mxu0 %v1248
    %3391 = vmatpush.msra.mxu0 %v1247
    %3392 = vmatpush.msra.mxu0 %v1246
    %3393 = vmatpush.msra.mxu0 %v1245
    %3394 = vmatpush.msra.mxu0 %v1244
    %3395 = vmatpush.msra.mxu0 %v1243
    %3396 = vmatpush.msra.mxu0 %v1242
    %3397 = vmatpush.msra.mxu0 %v1241
    %3398 = vmatpush.msra.mxu0 %v1240
    %3399 = vmatpush.msra.mxu0 %v1239
    %3400 = vmatpush.msra.mxu0 %v1238
    %3401 = vmatpush.msra.mxu0 %v1237
    %3402 = vmatpush.msra.mxu0 %v1236
    %3403 = vmatmul.f32.gmra.mxu0 %v1776
    %v3404 = vpop.f32.mrf.mxu0
    %v3405 = vadd.f32 %v3385, %v3404
    %3406 = vdwg.mxu0
    %3407 = vmatpush.msra.mxu0 %v1267
    %3408 = vmatpush.msra.mxu0 %v1266
    %3409 = vmatpush.msra.mxu0 %v1265
    %3410 = vmatpush.msra.mxu0 %v1264
    %3411 = vmatpush.msra.mxu0 %v1263
    %3412 = vmatpush.msra.mxu0 %v1262
    %3413 = vmatpush.msra.mxu0 %v1261
    %3414 = vmatpush.msra.mxu0 %v1260
    %3415 = vmatpush.msra.mxu0 %v1259
    %3416 = vmatpush.msra.mxu0 %v1258
    %3417 = vmatpush.msra.mxu0 %v1257
    %3418 = vmatpush.msra.mxu0 %v1256
    %3419 = vmatpush.msra.mxu0 %v1255
    %3420 = vmatpush.msra.mxu0 %v1254
    %3421 = vmatpush.msra.mxu0 %v1253
    %3422 = vmatpush.msra.mxu0 %v1252
    %3423 = vmatmul.f32.gmra.mxu0 %v1777
    %v3424 = vpop.f32.mrf.mxu0
    %v3425 = vadd.f32 %v3405, %v3424
    %3426 = vdwg.mxu0
    %3427 = vmatpush.msra.mxu0 %v1283
    %3428 = vmatpush.msra.mxu0 %v1282
    %3429 = vmatpush.msra.mxu0 %v1281
    %3430 = vmatpush.msra.mxu0 %v1280
    %3431 = vmatpush.msra.mxu0 %v1279
    %3432 = vmatpush.msra.mxu0 %v1278
    %3433 = vmatpush.msra.mxu0 %v1277
    %3434 = vmatpush.msra.mxu0 %v1276
    %3435 = vmatpush.msra.mxu0 %v1275
    %3436 = vmatpush.msra.mxu0 %v1274
    %3437 = vmatpush.msra.mxu0 %v1273
    %3438 = vmatpush.msra.mxu0 %v1272
    %3439 = vmatpush.msra.mxu0 %v1271
    %3440 = vmatpush.msra.mxu0 %v1270
    %3441 = vmatpush.msra.mxu0 %v1269
    %3442 = vmatpush.msra.mxu0 %v1268
    %3443 = vmatmul.f32.gmra.mxu0 %v1778
    %v3444 = vpop.f32.mrf.mxu0
    %v3445 = vadd.f32 %v3425, %v3444
    %3446 = vdwg.mxu0
    %3447 = vmatpush.msra.mxu0 %v1299
    %3448 = vmatpush.msra.mxu0 %v1298
    %3449 = vmatpush.msra.mxu0 %v1297
    %3450 = vmatpush.msra.mxu0 %v1296
    %3451 = vmatpush.msra.mxu0 %v1295
    %3452 = vmatpush.msra.mxu0 %v1294
    %3453 = vmatpush.msra.mxu0 %v1293
    %3454 = vmatpush.msra.mxu0 %v1292
    %3455 = vmatpush.msra.mxu0 %v1291
    %3456 = vmatpush.msra.mxu0 %v1290
    %3457 = vmatpush.msra.mxu0 %v1289
    %3458 = vmatpush.msra.mxu0 %v1288
    %3459 = vmatpush.msra.mxu0 %v1287
    %3460 = vmatpush.msra.mxu0 %v1286
    %3461 = vmatpush.msra.mxu0 %v1285
    %3462 = vmatpush.msra.mxu0 %v1284
    %3463 = vmatmul.f32.gmra.mxu0 %v1779
    %v3464 = vpop.f32.mrf.mxu0
    %v3465 = vadd.f32 %v3445, %v3464
    %3466 = vdwg.mxu0
    %3467 = vmatpush.msra.mxu0 %v1315
    %3468 = vmatpush.msra.mxu0 %v1314
    %3469 = vmatpush.msra.mxu0 %v1313
    %3470 = vmatpush.msra.mxu0 %v1312
    %3471 = vmatpush.msra.mxu0 %v1311
    %3472 = vmatpush.msra.mxu0 %v1310
    %3473 = vmatpush.msra.mxu0 %v1309
    %3474 = vmatpush.msra.mxu0 %v1308
    %3475 = vmatpush.msra.mxu0 %v1307
    %3476 = vmatpush.msra.mxu0 %v1306
    %3477 = vmatpush.msra.mxu0 %v1305
    %3478 = vmatpush.msra.mxu0 %v1304
    %3479 = vmatpush.msra.mxu0 %v1303
    %3480 = vmatpush.msra.mxu0 %v1302
    %3481 = vmatpush.msra.mxu0 %v1301
    %3482 = vmatpush.msra.mxu0 %v1300
    %3483 = vmatmul.f32.gmra.mxu0 %v1780
    %v3484 = vpop.f32.mrf.mxu0
    %v3485 = vadd.f32 %v3465, %v3484
    %3486 = vdwg.mxu0
    %3487 = vmatpush.msra.mxu0 %v1331
    %3488 = vmatpush.msra.mxu0 %v1330
    %3489 = vmatpush.msra.mxu0 %v1329
    %3490 = vmatpush.msra.mxu0 %v1328
    %3491 = vmatpush.msra.mxu0 %v1327
    %3492 = vmatpush.msra.mxu0 %v1326
    %3493 = vmatpush.msra.mxu0 %v1325
    %3494 = vmatpush.msra.mxu0 %v1324
    %3495 = vmatpush.msra.mxu0 %v1323
    %3496 = vmatpush.msra.mxu0 %v1322
    %3497 = vmatpush.msra.mxu0 %v1321
    %3498 = vmatpush.msra.mxu0 %v1320
    %3499 = vmatpush.msra.mxu0 %v1319
    %3500 = vmatpush.msra.mxu0 %v1318
    %3501 = vmatpush.msra.mxu0 %v1317
    %3502 = vmatpush.msra.mxu0 %v1316
    %3503 = vmatmul.f32.gmra.mxu0 %v1781
    %v3504 = vpop.f32.mrf.mxu0
    %v3505 = vadd.f32 %v3485, %v3504
    %3506 = vdwg.mxu0
    %3507 = vmatpush.msra.mxu0 %v1347
    %3508 = vmatpush.msra.mxu0 %v1346
    %3509 = vmatpush.msra.mxu0 %v1345
    %3510 = vmatpush.msra.mxu0 %v1344
    %3511 = vmatpush.msra.mxu0 %v1343
    %3512 = vmatpush.msra.mxu0 %v1342
    %3513 = vmatpush.msra.mxu0 %v1341
    %3514 = vmatpush.msra.mxu0 %v1340
    %3515 = vmatpush.msra.mxu0 %v1339
    %3516 = vmatpush.msra.mxu0 %v1338
    %3517 = vmatpush.msra.mxu0 %v1337
    %3518 = vmatpush.msra.mxu0 %v1336
    %3519 = vmatpush.msra.mxu0 %v1335
    %3520 = vmatpush.msra.mxu0 %v1334
    %3521 = vmatpush.msra.mxu0 %v1333
    %3522 = vmatpush.msra.mxu0 %v1332
    %3523 = vmatmul.f32.gmra.mxu0 %v1784
    %v3524 = vpop.f32.mrf.mxu0
    %v3525 = vadd.f32 %v3505, %v3524
    %3526 = vdwg.mxu0
    %3527 = vmatpush.msra.mxu0 %v1363
    %3528 = vmatpush.msra.mxu0 %v1362
    %3529 = vmatpush.msra.mxu0 %v1361
    %3530 = vmatpush.msra.mxu0 %v1360
    %3531 = vmatpush.msra.mxu0 %v1359
    %3532 = vmatpush.msra.mxu0 %v1358
    %3533 = vmatpush.msra.mxu0 %v1357
    %3534 = vmatpush.msra.mxu0 %v1356
    %3535 = vmatpush.msra.mxu0 %v1355
    %3536 = vmatpush.msra.mxu0 %v1354
    %3537 = vmatpush.msra.mxu0 %v1353
    %3538 = vmatpush.msra.mxu0 %v1352
    %3539 = vmatpush.msra.mxu0 %v1351
    %3540 = vmatpush.msra.mxu0 %v1350
    %3541 = vmatpush.msra.mxu0 %v1349
    %3542 = vmatpush.msra.mxu0 %v1348
    %3543 = vmatmul.f32.gmra.mxu0 %v1785
    %v3544 = vpop.f32.mrf.mxu0
    %v3545 = vadd.f32 %v3525, %v3544
    %3546 = vdwg.mxu0
    %3547 = vmatpush.msra.mxu0 %v1379
    %3548 = vmatpush.msra.mxu0 %v1378
    %3549 = vmatpush.msra.mxu0 %v1377
    %3550 = vmatpush.msra.mxu0 %v1376
    %3551 = vmatpush.msra.mxu0 %v1375
    %3552 = vmatpush.msra.mxu0 %v1374
    %3553 = vmatpush.msra.mxu0 %v1373
    %3554 = vmatpush.msra.mxu0 %v1372
    %3555 = vmatpush.msra.mxu0 %v1371
    %3556 = vmatpush.msra.mxu0 %v1370
    %3557 = vmatpush.msra.mxu0 %v1369
    %3558 = vmatpush.msra.mxu0 %v1368
    %3559 = vmatpush.msra.mxu0 %v1367
    %3560 = vmatpush.msra.mxu0 %v1366
    %3561 = vmatpush.msra.mxu0 %v1365
    %3562 = vmatpush.msra.mxu0 %v1364
    %3563 = vmatmul.f32.gmra.mxu0 %v1786
    %v3564 = vpop.f32.mrf.mxu0
    %v3565 = vadd.f32 %v3545, %v3564
    %3566 = vdwg.mxu0
    %3567 = vmatpush.msra.mxu0 %v1395
    %3568 = vmatpush.msra.mxu0 %v1394
    %3569 = vmatpush.msra.mxu0 %v1393
    %3570 = vmatpush.msra.mxu0 %v1392
    %3571 = vmatpush.msra.mxu0 %v1391
    %3572 = vmatpush.msra.mxu0 %v1390
    %3573 = vmatpush.msra.mxu0 %v1389
    %3574 = vmatpush.msra.mxu0 %v1388
    %3575 = vmatpush.msra.mxu0 %v1387
    %3576 = vmatpush.msra.mxu0 %v1386
    %3577 = vmatpush.msra.mxu0 %v1385
    %3578 = vmatpush.msra.mxu0 %v1384
    %3579 = vmatpush.msra.mxu0 %v1383
    %3580 = vmatpush.msra.mxu0 %v1382
    %3581 = vmatpush.msra.mxu0 %v1381
    %3582 = vmatpush.msra.mxu0 %v1380
    %3583 = vmatmul.f32.gmra.mxu0 %v1787
    %v3584 = vpop.f32.mrf.mxu0
    %v3585 = vadd.f32 %v3565, %v3584
    %3586 = vdwg.mxu0
    %3587 = vmatpush.msra.mxu0 %v1411
    %3588 = vmatpush.msra.mxu0 %v1410
    %3589 = vmatpush.msra.mxu0 %v1409
    %3590 = vmatpush.msra.mxu0 %v1408
    %3591 = vmatpush.msra.mxu0 %v1407
    %3592 = vmatpush.msra.mxu0 %v1406
    %3593 = vmatpush.msra.mxu0 %v1405
    %3594 = vmatpush.msra.mxu0 %v1404
    %3595 = vmatpush.msra.mxu0 %v1403
    %3596 = vmatpush.msra.mxu0 %v1402
    %3597 = vmatpush.msra.mxu0 %v1401
    %3598 = vmatpush.msra.mxu0 %v1400
    %3599 = vmatpush.msra.mxu0 %v1399
    %3600 = vmatpush.msra.mxu0 %v1398
    %3601 = vmatpush.msra.mxu0 %v1397
    %3602 = vmatpush.msra.mxu0 %v1396
    %3603 = vmatmul.f32.gmra.mxu0 %v1788
    %v3604 = vpop.f32.mrf.mxu0
    %v3605 = vadd.f32 %v3585, %v3604
    %3606 = vdwg.mxu0
    %3607 = vmatpush.msra.mxu0 %v1427
    %3608 = vmatpush.msra.mxu0 %v1426
    %3609 = vmatpush.msra.mxu0 %v1425
    %3610 = vmatpush.msra.mxu0 %v1424
    %3611 = vmatpush.msra.mxu0 %v1423
    %3612 = vmatpush.msra.mxu0 %v1422
    %3613 = vmatpush.msra.mxu0 %v1421
    %3614 = vmatpush.msra.mxu0 %v1420
    %3615 = vmatpush.msra.mxu0 %v1419
    %3616 = vmatpush.msra.mxu0 %v1418
    %3617 = vmatpush.msra.mxu0 %v1417
    %3618 = vmatpush.msra.mxu0 %v1416
    %3619 = vmatpush.msra.mxu0 %v1415
    %3620 = vmatpush.msra.mxu0 %v1414
    %3621 = vmatpush.msra.mxu0 %v1413
    %3622 = vmatpush.msra.mxu0 %v1412
    %3623 = vmatmul.f32.gmra.mxu0 %v1789
    %v3624 = vpop.f32.mrf.mxu0
    %v3625 = vadd.f32 %v3605, %v3624
    %3626 = vdwg.mxu0
    %3627 = vmatpush.msra.mxu0 %v1443
    %3628 = vmatpush.msra.mxu0 %v1442
    %3629 = vmatpush.msra.mxu0 %v1441
    %3630 = vmatpush.msra.mxu0 %v1440
    %3631 = vmatpush.msra.mxu0 %v1439
    %3632 = vmatpush.msra.mxu0 %v1438
    %3633 = vmatpush.msra.mxu0 %v1437
    %3634 = vmatpush.msra.mxu0 %v1436
    %3635 = vmatpush.msra.mxu0 %v1435
    %3636 = vmatpush.msra.mxu0 %v1434
    %3637 = vmatpush.msra.mxu0 %v1433
    %3638 = vmatpush.msra.mxu0 %v1432
    %3639 = vmatpush.msra.mxu0 %v1431
    %3640 = vmatpush.msra.mxu0 %v1430
    %3641 = vmatpush.msra.mxu0 %v1429
    %3642 = vmatpush.msra.mxu0 %v1428
    %3643 = vmatmul.f32.gmra.mxu0 %v1790
    %v3644 = vpop.f32.mrf.mxu0
    %v3645 = vadd.f32 %v3625, %v3644
    %3646 = vdwg.mxu0
    %3647 = vmatpush.msra.mxu0 %v1459
    %3648 = vmatpush.msra.mxu0 %v1458
    %3649 = vmatpush.msra.mxu0 %v1457
    %3650 = vmatpush.msra.mxu0 %v1456
    %3651 = vmatpush.msra.mxu0 %v1455
    %3652 = vmatpush.msra.mxu0 %v1454
    %3653 = vmatpush.msra.mxu0 %v1453
    %3654 = vmatpush.msra.mxu0 %v1452
    %3655 = vmatpush.msra.mxu0 %v1451
    %3656 = vmatpush.msra.mxu0 %v1450
    %3657 = vmatpush.msra.mxu0 %v1449
    %3658 = vmatpush.msra.mxu0 %v1448
    %3659 = vmatpush.msra.mxu0 %v1447
    %3660 = vmatpush.msra.mxu0 %v1446
    %3661 = vmatpush.msra.mxu0 %v1445
    %3662 = vmatpush.msra.mxu0 %v1444
    %3663 = vmatmul.f32.gmra.mxu0 %v1791
    %v3664 = vpop.f32.mrf.mxu0
    %v3665 = vadd.f32 %v3645, %v3664
    %3666 = vdwg.mxu0
    %3667 = vmatpush.msra.mxu0 %v1475
    %3668 = vmatpush.msra.mxu0 %v1474
    %3669 = vmatpush.msra.mxu0 %v1473
    %3670 = vmatpush.msra.mxu0 %v1472
    %3671 = vmatpush.msra.mxu0 %v1471
    %3672 = vmatpush.msra.mxu0 %v1470
    %3673 = vmatpush.msra.mxu0 %v1469
    %3674 = vmatpush.msra.mxu0 %v1468
    %3675 = vmatpush.msra.mxu0 %v1467
    %3676 = vmatpush.msra.mxu0 %v1466
    %3677 = vmatpush.msra.mxu0 %v1465
    %3678 = vmatpush.msra.mxu0 %v1464
    %3679 = vmatpush.msra.mxu0 %v1463
    %3680 = vmatpush.msra.mxu0 %v1462
    %3681 = vmatpush.msra.mxu0 %v1461
    %3682 = vmatpush.msra.mxu0 %v1460
    %3683 = vmatmul.f32.gmra.mxu0 %v1794
    %v3684 = vpop.f32.mrf.mxu0
    %v3685 = vadd.f32 %v3665, %v3684
    %3686 = vdwg.mxu0
    %3687 = vmatpush.msra.mxu0 %v1491
    %3688 = vmatpush.msra.mxu0 %v1490
    %3689 = vmatpush.msra.mxu0 %v1489
    %3690 = vmatpush.msra.mxu0 %v1488
    %3691 = vmatpush.msra.mxu0 %v1487
    %3692 = vmatpush.msra.mxu0 %v1486
    %3693 = vmatpush.msra.mxu0 %v1485
    %3694 = vmatpush.msra.mxu0 %v1484
    %3695 = vmatpush.msra.mxu0 %v1483
    %3696 = vmatpush.msra.mxu0 %v1482
    %3697 = vmatpush.msra.mxu0 %v1481
    %3698 = vmatpush.msra.mxu0 %v1480
    %3699 = vmatpush.msra.mxu0 %v1479
    %3700 = vmatpush.msra.mxu0 %v1478
    %3701 = vmatpush.msra.mxu0 %v1477
    %3702 = vmatpush.msra.mxu0 %v1476
    %3703 = vmatmul.f32.gmra.mxu0 %v1795
    %v3704 = vpop.f32.mrf.mxu0
    %v3705 = vadd.f32 %v3685, %v3704
    %3706 = vdwg.mxu0
    %3707 = vmatpush.msra.mxu0 %v1507
    %3708 = vmatpush.msra.mxu0 %v1506
    %3709 = vmatpush.msra.mxu0 %v1505
    %3710 = vmatpush.msra.mxu0 %v1504
    %3711 = vmatpush.msra.mxu0 %v1503
    %3712 = vmatpush.msra.mxu0 %v1502
    %3713 = vmatpush.msra.mxu0 %v1501
    %3714 = vmatpush.msra.mxu0 %v1500
    %3715 = vmatpush.msra.mxu0 %v1499
    %3716 = vmatpush.msra.mxu0 %v1498
    %3717 = vmatpush.msra.mxu0 %v1497
    %3718 = vmatpush.msra.mxu0 %v1496
    %3719 = vmatpush.msra.mxu0 %v1495
    %3720 = vmatpush.msra.mxu0 %v1494
    %3721 = vmatpush.msra.mxu0 %v1493
    %3722 = vmatpush.msra.mxu0 %v1492
    %3723 = vmatmul.f32.gmra.mxu0 %v1796
    %v3724 = vpop.f32.mrf.mxu0
    %v3725 = vadd.f32 %v3705, %v3724
    %3726 = vdwg.mxu0
    %3727 = vmatpush.msra.mxu0 %v1523
    %3728 = vmatpush.msra.mxu0 %v1522
    %3729 = vmatpush.msra.mxu0 %v1521
    %3730 = vmatpush.msra.mxu0 %v1520
    %3731 = vmatpush.msra.mxu0 %v1519
    %3732 = vmatpush.msra.mxu0 %v1518
    %3733 = vmatpush.msra.mxu0 %v1517
    %3734 = vmatpush.msra.mxu0 %v1516
    %3735 = vmatpush.msra.mxu0 %v1515
    %3736 = vmatpush.msra.mxu0 %v1514
    %3737 = vmatpush.msra.mxu0 %v1513
    %3738 = vmatpush.msra.mxu0 %v1512
    %3739 = vmatpush.msra.mxu0 %v1511
    %3740 = vmatpush.msra.mxu0 %v1510
    %3741 = vmatpush.msra.mxu0 %v1509
    %3742 = vmatpush.msra.mxu0 %v1508
    %3743 = vmatmul.f32.gmra.mxu0 %v1797
    %v3744 = vpop.f32.mrf.mxu0
    %v3745 = vadd.f32 %v3725, %v3744
    %3746 = vdwg.mxu0
    %3747 = vmatpush.msra.mxu0 %v1539
    %3748 = vmatpush.msra.mxu0 %v1538
    %3749 = vmatpush.msra.mxu0 %v1537
    %3750 = vmatpush.msra.mxu0 %v1536
    %3751 = vmatpush.msra.mxu0 %v1535
    %3752 = vmatpush.msra.mxu0 %v1534
    %3753 = vmatpush.msra.mxu0 %v1533
    %3754 = vmatpush.msra.mxu0 %v1532
    %3755 = vmatpush.msra.mxu0 %v1531
    %3756 = vmatpush.msra.mxu0 %v1530
    %3757 = vmatpush.msra.mxu0 %v1529
    %3758 = vmatpush.msra.mxu0 %v1528
    %3759 = vmatpush.msra.mxu0 %v1527
    %3760 = vmatpush.msra.mxu0 %v1526
    %3761 = vmatpush.msra.mxu0 %v1525
    %3762 = vmatpush.msra.mxu0 %v1524
    %3763 = vmatmul.f32.gmra.mxu0 %v1798
    %v3764 = vpop.f32.mrf.mxu0
    %v3765 = vadd.f32 %v3745, %v3764
    %3766 = vdwg.mxu0
    %3767 = vmatpush.msra.mxu0 %v1555
    %3768 = vmatpush.msra.mxu0 %v1554
    %3769 = vmatpush.msra.mxu0 %v1553
    %3770 = vmatpush.msra.mxu0 %v1552
    %3771 = vmatpush.msra.mxu0 %v1551
    %3772 = vmatpush.msra.mxu0 %v1550
    %3773 = vmatpush.msra.mxu0 %v1549
    %3774 = vmatpush.msra.mxu0 %v1548
    %3775 = vmatpush.msra.mxu0 %v1547
    %3776 = vmatpush.msra.mxu0 %v1546
    %3777 = vmatpush.msra.mxu0 %v1545
    %3778 = vmatpush.msra.mxu0 %v1544
    %3779 = vmatpush.msra.mxu0 %v1543
    %3780 = vmatpush.msra.mxu0 %v1542
    %3781 = vmatpush.msra.mxu0 %v1541
    %3782 = vmatpush.msra.mxu0 %v1540
    %3783 = vmatmul.f32.gmra.mxu0 %v1799
    %v3784 = vpop.f32.mrf.mxu0
    %v3785 = vadd.f32 %v3765, %v3784
    %3786 = vdwg.mxu0
    %3787 = vmatpush.msra.mxu0 %v1571
    %3788 = vmatpush.msra.mxu0 %v1570
    %3789 = vmatpush.msra.mxu0 %v1569
    %3790 = vmatpush.msra.mxu0 %v1568
    %3791 = vmatpush.msra.mxu0 %v1567
    %3792 = vmatpush.msra.mxu0 %v1566
    %3793 = vmatpush.msra.mxu0 %v1565
    %3794 = vmatpush.msra.mxu0 %v1564
    %3795 = vmatpush.msra.mxu0 %v1563
    %3796 = vmatpush.msra.mxu0 %v1562
    %3797 = vmatpush.msra.mxu0 %v1561
    %3798 = vmatpush.msra.mxu0 %v1560
    %3799 = vmatpush.msra.mxu0 %v1559
    %3800 = vmatpush.msra.mxu0 %v1558
    %3801 = vmatpush.msra.mxu0 %v1557
    %3802 = vmatpush.msra.mxu0 %v1556
    %3803 = vmatmul.f32.gmra.mxu0 %v1800
    %v3804 = vpop.f32.mrf.mxu0
    %v3805 = vadd.f32 %v3785, %v3804
    %3806 = vdwg.mxu0
    %3807 = vmatpush.msra.mxu0 %v1587
    %3808 = vmatpush.msra.mxu0 %v1586
    %3809 = vmatpush.msra.mxu0 %v1585
    %3810 = vmatpush.msra.mxu0 %v1584
    %3811 = vmatpush.msra.mxu0 %v1583
    %3812 = vmatpush.msra.mxu0 %v1582
    %3813 = vmatpush.msra.mxu0 %v1581
    %3814 = vmatpush.msra.mxu0 %v1580
    %3815 = vmatpush.msra.mxu0 %v1579
    %3816 = vmatpush.msra.mxu0 %v1578
    %3817 = vmatpush.msra.mxu0 %v1577
    %3818 = vmatpush.msra.mxu0 %v1576
    %3819 = vmatpush.msra.mxu0 %v1575
    %3820 = vmatpush.msra.mxu0 %v1574
    %3821 = vmatpush.msra.mxu0 %v1573
    %3822 = vmatpush.msra.mxu0 %v1572
    %3823 = vmatmul.f32.gmra.mxu0 %v1801
    %v3824 = vpop.f32.mrf.mxu0
    %v3825 = vadd.f32 %v3805, %v3824
    %3826 = vdwg.mxu0
    %3827 = vmatpush.msra.mxu0 %v1603
    %3828 = vmatpush.msra.mxu0 %v1602
    %3829 = vmatpush.msra.mxu0 %v1601
    %3830 = vmatpush.msra.mxu0 %v1600
    %3831 = vmatpush.msra.mxu0 %v1599
    %3832 = vmatpush.msra.mxu0 %v1598
    %3833 = vmatpush.msra.mxu0 %v1597
    %3834 = vmatpush.msra.mxu0 %v1596
    %3835 = vmatpush.msra.mxu0 %v1595
    %3836 = vmatpush.msra.mxu0 %v1594
    %3837 = vmatpush.msra.mxu0 %v1593
    %3838 = vmatpush.msra.mxu0 %v1592
    %3839 = vmatpush.msra.mxu0 %v1591
    %3840 = vmatpush.msra.mxu0 %v1590
    %3841 = vmatpush.msra.mxu0 %v1589
    %3842 = vmatpush.msra.mxu0 %v1588
    %3843 = vmatmul.f32.gmra.mxu0 %v1803
    %v3844 = vpop.f32.mrf.mxu0
    %v3845 = vadd.f32 %v3825, %v3844
    %3846 = vdwg.mxu0
    %3847 = vmatpush.msra.mxu0 %v1619
    %3848 = vmatpush.msra.mxu0 %v1618
    %3849 = vmatpush.msra.mxu0 %v1617
    %3850 = vmatpush.msra.mxu0 %v1616
    %3851 = vmatpush.msra.mxu0 %v1615
    %3852 = vmatpush.msra.mxu0 %v1614
    %3853 = vmatpush.msra.mxu0 %v1613
    %3854 = vmatpush.msra.mxu0 %v1612
    %3855 = vmatpush.msra.mxu0 %v1611
    %3856 = vmatpush.msra.mxu0 %v1610
    %3857 = vmatpush.msra.mxu0 %v1609
    %3858 = vmatpush.msra.mxu0 %v1608
    %3859 = vmatpush.msra.mxu0 %v1607
    %3860 = vmatpush.msra.mxu0 %v1606
    %3861 = vmatpush.msra.mxu0 %v1605
    %3862 = vmatpush.msra.mxu0 %v1604
    %3863 = vmatmul.f32.gmra.mxu0 %v1804
    %v3864 = vpop.f32.mrf.mxu0
    %v3865 = vadd.f32 %v3845, %v3864
    %3866 = vdwg.mxu0
    %3867 = vmatpush.msra.mxu0 %v1635
    %3868 = vmatpush.msra.mxu0 %v1634
    %3869 = vmatpush.msra.mxu0 %v1633
    %3870 = vmatpush.msra.mxu0 %v1632
    %3871 = vmatpush.msra.mxu0 %v1631
    %3872 = vmatpush.msra.mxu0 %v1630
    %3873 = vmatpush.msra.mxu0 %v1629
    %3874 = vmatpush.msra.mxu0 %v1628
    %3875 = vmatpush.msra.mxu0 %v1627
    %3876 = vmatpush.msra.mxu0 %v1626
    %3877 = vmatpush.msra.mxu0 %v1625
    %3878 = vmatpush.msra.mxu0 %v1624
    %3879 = vmatpush.msra.mxu0 %v1623
    %3880 = vmatpush.msra.mxu0 %v1622
    %3881 = vmatpush.msra.mxu0 %v1621
    %3882 = vmatpush.msra.mxu0 %v1620
    %3883 = vmatmul.f32.gmra.mxu0 %v1805
    %v3884 = vpop.f32.mrf.mxu0
    %v3885 = vadd.f32 %v3865, %v3884
    %3886 = vdwg.mxu0
    %3887 = vmatpush.msra.mxu0 %v1651
    %3888 = vmatpush.msra.mxu0 %v1650
    %3889 = vmatpush.msra.mxu0 %v1649
    %3890 = vmatpush.msra.mxu0 %v1648
    %3891 = vmatpush.msra.mxu0 %v1647
    %3892 = vmatpush.msra.mxu0 %v1646
    %3893 = vmatpush.msra.mxu0 %v1645
    %3894 = vmatpush.msra.mxu0 %v1644
    %3895 = vmatpush.msra.mxu0 %v1643
    %3896 = vmatpush.msra.mxu0 %v1642
    %3897 = vmatpush.msra.mxu0 %v1641
    %3898 = vmatpush.msra.mxu0 %v1640
    %3899 = vmatpush.msra.mxu0 %v1639
    %3900 = vmatpush.msra.mxu0 %v1638
    %3901 = vmatpush.msra.mxu0 %v1637
    %3902 = vmatpush.msra.mxu0 %v1636
    %3903 = vmatmul.f32.gmra.mxu0 %v1806
    %v3904 = vpop.f32.mrf.mxu0
    %v3905 = vadd.f32 %v3885, %v3904
    %3906 = vdwg.mxu0
    %v3907 = vmax.f32 %v3905, 0.0
    %v3908 = vld [vmem:[%s3] sm:$0xff]
    %v3909 = vld [vmem:[%s3 + $0x8] sm:$0xff]
    %v3910 = vld [vmem:[%s3 + $0x10] sm:$0xff]
    %v3911 = vld [vmem:[%s3 + $0x18] sm:$0xff]
    %v3912 = vld [vmem:[%s3 + $0x20] sm:$0xff]
    %v3913 = vld [vmem:[%s3 + $0x28] sm:$0xff]
    %v3914 = vld [vmem:[%s3 + $0x30] sm:$0xff]
    %v3915 = vld [vmem:[%s3 + $0x38] sm:$0xff]
    %v3916 = vld [vmem:[%s4] sm:$0x1]
    %v3918 = vperm.slane %v3916, 0
    %vm3920 = vcmask 523264
    %v3922 = vsel %vm3920, %v3907, 0
    %3924 = vmatpush.msra.mxu0 0.0
    %3925 = vmatpush.msra.mxu0 0.0
    %3926 = vmatpush.msra.mxu0 0.0
    %3927 = vmatpush.msra.mxu0 0.0
    %3928 = vmatpush.msra.mxu0 0.0
    %3929 = vmatpush.msra.mxu0 0.0
    %3930 = vmatpush.msra.mxu0 0.0
    %3931 = vmatpush.msra.mxu0 0.0
    %3932 = vmatpush.msra.mxu0 %v3915
    %3933 = vmatpush.msra.mxu0 %v3914
    %3934 = vmatpush.msra.mxu0 %v3913
    %3935 = vmatpush.msra.mxu0 %v3912
    %3936 = vmatpush.msra.mxu0 %v3911
    %3937 = vmatpush.msra.mxu0 %v3910
    %3938 = vmatpush.msra.mxu0 %v3909
    %3939 = vmatpush.msra.mxu0 %v3908
    %3940 = vmatmul.f32.gmra.mxu0 %v3922
    %v3941 = vpop.f32.mrf.mxu0
    %v3942 = vadd.f32 %v3918, %v3941
    %3943 = vdwg.mxu0
    %v3944 = vmax.f32 %v3942, 0.0
    %v3945 = vld [vmem:[%s5] sm:$0xff]
    %v3946 = vld [vmem:[%s5 + $0x8] sm:$0xff]
    %v3947 = vld [vmem:[%s5 + $0x10] sm:$0xff]
    %v3948 = vld [vmem:[%s5 + $0x18] sm:$0xff]
    %v3949 = vld [vmem:[%s5 + $0x20] sm:$0xff]
    %v3950 = vld [vmem:[%s5 + $0x28] sm:$0xff]
    %v3951 = vld [vmem:[%s5 + $0x30] sm:$0xff]
    %v3952 = vld [vmem:[%s5 + $0x38] sm:$0xff]
    %v3953 = vld [vmem:[%s6] sm:$0x1]
    %v3955 = vperm.slane %v3953, 0
    %v3958 = vsel %vm3920, %v3944, 0
    %3960 = vmatpush.msra.mxu0 0.0
    %3961 = vmatpush.msra.mxu0 0.0
    %3962 = vmatpush.msra.mxu0 0.0
    %3963 = vmatpush.msra.mxu0 0.0
    %3964 = vmatpush.msra.mxu0 0.0
    %3965 = vmatpush.msra.mxu0 0.0
    %3966 = vmatpush.msra.mxu0 0.0
    %3967 = vmatpush.msra.mxu0 0.0
    %3968 = vmatpush.msra.mxu0 %v3952
    %3969 = vmatpush.msra.mxu0 %v3951
    %3970 = vmatpush.msra.mxu0 %v3950
    %3971 = vmatpush.msra.mxu0 %v3949
    %3972 = vmatpush.msra.mxu0 %v3948
    %3973 = vmatpush.msra.mxu0 %v3947
    %3974 = vmatpush.msra.mxu0 %v3946
    %3975 = vmatpush.msra.mxu0 %v3945
    %3976 = vmatmul.f32.gmra.mxu0 %v3958
    %v3977 = vpop.f32.mrf.mxu0
    %v3978 = vadd.f32 %v3955, %v3977
    %3979 = vdwg.mxu0
    %3980 = vst [vmem:[#allocation2] sm:$0x3] %v3978
    // Predicated region
    $region30: #{_lambda_.7} parent=1 // pred_check
      _
    $region31: #{_lambda_.7} parent=1 // pred_check_branch
      %3982 = sbr.rel (0) target = $region33
    $region32: #{_lambda_.7} parent=1 // pred_region
      %3984 = vsyncadd [#allocation3], 0
      %s3986 = sshll.u32 [#allocation2], 4
      %s3987 = int_to_ptr.vmem [resolvable:$true] %s3986
      %s3988 = sshll.u32 %s7, 4
      %s3989 = int_to_ptr.hbm [resolvable:$true] %s3988
      %3991 = dma.vmem_to_hbm [thread:$0]  %s3987, 32, %s3989, [#allocation3]
    $region33: #{_lambda_.7} parent=1 // pred_fallthru
      _
    // Predicated region
    $region34: #{_lambda_.7} parent=1 // pred_check
      _
    $region35: #{_lambda_.7} parent=1 // pred_check_branch
      %3993 = sbr.rel (0) target = $region37
    $region36: #{_lambda_.7} parent=1 // pred_region
      %3995 = dma.done [#allocation3], 32
    $region37: #{_lambda_.7} parent=1 // pred_fallthru
      _
    %3996 = vsyncpa [#allocation3], 1

</llo_original>
